<compile_context>
chip_gen: v6e
topology: v6e:2x2x1
jax: 0.10.0
libtpu: 0.0.40
codegen_flags: <defaults>
</compile_context>

<pallas_src>
import functools

import jax
import jax.numpy as jnp
from jax.experimental import pallas as pl
from jax.experimental.pallas import tpu as pltpu


def _fused_mlp_kernel(x_ref, w1_ref, b1_ref, w2_ref, b2_ref, w3_ref, b3_ref,
                      o_ref, h1_ref, acc_ref, *, tk):
    """Fused 3-layer MLP. Grid axis = K slabs of the (4096,4096) layer-2 weight."""
    k = pl.program_id(0)

    # Step 0: layer 1 (x @ w1 + b1, ReLU) -> resident bf16 h1 scratch; zero acc.
    @pl.when(k == 0)
    def _():
        h1 = jnp.dot(x_ref[...], w1_ref[...], preferred_element_type=jnp.float32)
        h1 = jnp.maximum(h1 + b1_ref[...], 0.0)
        h1_ref[...] = h1.astype(h1_ref.dtype)
        acc_ref[...] = jnp.zeros_like(acc_ref)

    # Every step: accumulate one contiguous K-slab of layer 2.
    start = pl.multiple_of(k * tk, tk)
    acc_ref[...] += jnp.dot(
        h1_ref[:, pl.ds(start, tk)], w2_ref[...],
        preferred_element_type=jnp.float32)

    # Last step: bias + ReLU, layer 3, lane-dense (128-wide) output store.
    @pl.when(k == pl.num_programs(0) - 1)
    def _():
        h2 = jnp.maximum(acc_ref[...] + b2_ref[...], 0.0).astype(w3_ref.dtype)
        out = jnp.dot(h2, w3_ref[...], preferred_element_type=jnp.float32)
        o_ref[...] = (out + b3_ref[...]).astype(o_ref.dtype)


def fused_mlp(x, w1, b1, w2, b2, w3, b3, *, tk=512):
    """out = relu(relu(x@w1+b1)@w2+b2)@w3+b3 in one pallas_call."""
    Bp, K1 = x.shape
    H = w2.shape[0]            # 4096
    Np = w3.shape[1]           # padded class dim (128)
    assert w1.shape == (K1, H) and w2.shape == (H, H) and w3.shape == (H, Np)
    assert H % tk == 0

    flops = 2 * Bp * (K1 * H + H * H + H * Np)
    bytes_accessed = (
        x.size * x.dtype.itemsize
        + w1.size * w1.dtype.itemsize
        + w2.size * w2.dtype.itemsize
        + w3.size * w3.dtype.itemsize
        + (b1.size + b2.size + b3.size) * 4
        + Bp * Np * 4)

    kernel = functools.partial(_fused_mlp_kernel, tk=tk)
    return pl.pallas_call(
        kernel,
        out_shape=jax.ShapeDtypeStruct((Bp, Np), jnp.float32),
        grid_spec=pltpu.PrefetchScalarGridSpec(
            num_scalar_prefetch=0,
            grid=(H // tk,),
            in_specs=[
                pl.BlockSpec((Bp, K1), lambda k: (0, 0)),   # x (resident)
                pl.BlockSpec((K1, H), lambda k: (0, 0)),    # w1 (resident, bf16)
                pl.BlockSpec((1, H), lambda k: (0, 0)),     # b1 (f32)
                pl.BlockSpec((tk, H), lambda k: (k, 0)),    # w2 full-row slab (bf16)
                pl.BlockSpec((1, H), lambda k: (0, 0)),     # b2 (f32)
                pl.BlockSpec((H, Np), lambda k: (0, 0)),    # w3 (resident, bf16)
                pl.BlockSpec((1, Np), lambda k: (0, 0)),    # b3 (f32)
            ],
            out_specs=pl.BlockSpec((Bp, Np), lambda k: (0, 0)),
            scratch_shapes=[
                pltpu.VMEM((Bp, H), jnp.bfloat16),   # h1 (resident activations)
                pltpu.VMEM((Bp, H), jnp.float32),    # layer-2 f32 accumulator
            ],
        ),
        compiler_params=pltpu.CompilerParams(
            dimension_semantics=("arbitrary",),      # K-reduction axis
            vmem_limit_bytes=32 * 1024 * 1024,
        ),
        cost_estimate=pl.CostEstimate(
            flops=flops, transcendentals=0, bytes_accessed=bytes_accessed),
    )(x, w1, b1, w2, b2, w3, b3)


class HomeScenesClassifierPallas:
    """Pallas re-implementation of the PyTorch HomeScenesClassifier forward."""

    HIDDEN = 4096

    def __init__(self, num_objs, num_classes=11, key=None, tk=512):
        if key is None:
            key = jax.random.PRNGKey(42)
        k1, k2, k3, k4, k5, k6 = jax.random.split(key, 6)
        H, C = self.HIDDEN, num_classes

        def init_linear(kw, kb, fan_in, fan_out):
            # Deterministic synthetic init (PyTorch-like uniform bound 1/sqrt(fan_in)).
            bound = 1.0 / jnp.sqrt(float(fan_in))
            w = jax.random.uniform(kw, (fan_out, fan_in), jnp.float32, -bound, bound)
            b = jax.random.uniform(kb, (fan_out,), jnp.float32, -bound, bound)
            return w, b

        self.num_objs = num_objs
        self.num_classes = num_classes
        self.tk = tk
        w1, b1 = init_linear(k1, k2, num_objs, H)
        w2, b2 = init_linear(k3, k4, H, H)
        w3, b3 = init_linear(k5, k6, H, C)

        # Transpose to (in, out) for x @ W; weights in bf16 (HBM-BW bound),
        # biases stay f32.
        self.w1 = jnp.asarray(w1.T, jnp.bfloat16)            # (num_objs, 4096)
        self.b1 = jnp.asarray(b1, jnp.float32).reshape(1, H)
        self.w2 = jnp.asarray(w2.T, jnp.bfloat16)            # (4096, 4096)
        self.b2 = jnp.asarray(b2, jnp.float32).reshape(1, H)
        # Pad classifier head out-dim 11 -> 128 lanes (zero columns stay inert).
        self.n_pad = 128
        w3t = jnp.zeros((H, self.n_pad), jnp.float32).at[:, :C].set(w3.T)
        b3p = jnp.zeros((1, self.n_pad), jnp.float32).at[0, :C].set(b3)
        self.w3 = w3t.astype(jnp.bfloat16)                   # (4096, 128)
        self.b3 = b3p

    def __call__(self, x):
        B = x.shape[0]
        # torch.flatten(x, 1)
        x = x.reshape(B, -1).astype(jnp.bfloat16)
        assert x.shape[1] == self.num_objs

        # Pad batch to a sublane multiple of 8.
        Bp = max(8, ((B + 7) // 8) * 8)
        xp = jnp.pad(x, ((0, Bp - B), (0, 0)))

        out = fused_mlp(xp, self.w1, self.b1, self.w2, self.b2,
                        self.w3, self.b3, tk=self.tk)        # (Bp, 128)
        return out[:B, : self.num_classes]                   # (B, num_classes)

    def reference(self, x):
        """f32 reference using the same (bf16-cast) weights, for validation."""
        B = x.shape[0]
        x = x.reshape(B, -1).astype(jnp.bfloat16).astype(jnp.float32)
        w1 = self.w1.astype(jnp.float32)
        w2 = self.w2.astype(jnp.float32)
        w3 = self.w3.astype(jnp.float32)
        h = jnp.maximum(x @ w1 + self.b1, 0.0)
        h = jnp.maximum(h @ w2 + self.b2, 0.0)
        h = h @ w3 + self.b3
        return h[:, : self.num_classes]


if __name__ == "__main__":
    key = jax.random.PRNGKey(0)
    # Input like a flattened object-count feature map: (B, 4, 4, 4) -> 64 features.
    B, num_objs, num_classes = 2, 64, 11
    x = jax.random.normal(key, (B, 4, 4, 4), dtype=jnp.float32)

    model = HomeScenesClassifierPallas(num_objs=num_objs, num_classes=num_classes,
                                       key=jax.random.PRNGKey(42))
    out = model(x)
    out = jax.block_until_ready(out)

    ref = model.reference(x)
    assert out.shape == (B, num_classes)
    # bf16 activations in the kernel vs f32 reference -> loose tolerance.
    assert jnp.allclose(out, ref, atol=3e-2, rtol=3e-2), (
        f"max abs diff {jnp.max(jnp.abs(out - ref))}")
    print("KERNEL_OK")
</pallas_src>

<mosaic_0001>
module attributes {stable_mosaic.version = 11 : i64} {
  func.func @_fused_mlp_kernel(%arg0: i32, %arg1: memref<8x64xbf16, #tpu.memory_space<vmem>>, %arg2: memref<64x4096xbf16, #tpu.memory_space<vmem>>, %arg3: memref<1x4096xf32, #tpu.memory_space<vmem>>, %arg4: memref<512x4096xbf16, #tpu.memory_space<vmem>>, %arg5: memref<1x4096xf32, #tpu.memory_space<vmem>>, %arg6: memref<4096x128xbf16, #tpu.memory_space<vmem>>, %arg7: memref<1x128xf32, #tpu.memory_space<vmem>>, %arg8: memref<8x128xf32, #tpu.memory_space<vmem>>, %arg9: memref<8x4096xbf16, #tpu.memory_space<vmem>>, %arg10: memref<8x4096xf32, #tpu.memory_space<vmem>>) attributes {dimension_semantics = [#tpu.dimension_semantics<arbitrary>], iteration_bounds = array<i64: 8>, scalar_prefetch = 0 : i64, scratch_operands = 2 : i64, tpu.core_type = #tpu.core_type<tc>, window_params = [{pipeline_mode = #tpu.pipeline_mode<synchronous>, transform_indices = @transform_0, window_bounds = array<i64: 8, 64>}, {pipeline_mode = #tpu.pipeline_mode<synchronous>, transform_indices = @transform_1, window_bounds = array<i64: 64, 4096>}, {pipeline_mode = #tpu.pipeline_mode<synchronous>, transform_indices = @transform_2, window_bounds = array<i64: 1, 4096>}, {transform_indices = @transform_3, window_bounds = array<i64: 512, 4096>}, {pipeline_mode = #tpu.pipeline_mode<synchronous>, transform_indices = @transform_4, window_bounds = array<i64: 1, 4096>}, {pipeline_mode = #tpu.pipeline_mode<synchronous>, transform_indices = @transform_5, window_bounds = array<i64: 4096, 128>}, {pipeline_mode = #tpu.pipeline_mode<synchronous>, transform_indices = @transform_6, window_bounds = array<i64: 1, 128>}, {pipeline_mode = #tpu.pipeline_mode<synchronous>, transform_indices = @transform_7, window_bounds = array<i64: 8, 128>}]} {
    %c0_i32 = arith.constant 0 : i32
    %0 = arith.cmpi eq, %arg0, %c0_i32 : i32
    %1 = arith.extui %0 : i1 to i32
    %c0_i32_0 = arith.constant 0 : i32
    %2 = arith.cmpi ne, %1, %c0_i32_0 : i32
    scf.if %2 {
      %c0_8 = arith.constant 0 : index
      %c0_9 = arith.constant 0 : index
      %15 = vector.load %arg1[%c0_8, %c0_9] : memref<8x64xbf16, #tpu.memory_space<vmem>>, vector<8x64xbf16>
      %c0_10 = arith.constant 0 : index
      %c0_11 = arith.constant 0 : index
      %16 = vector.load %arg2[%c0_10, %c0_11] : memref<64x4096xbf16, #tpu.memory_space<vmem>>, vector<64x4096xbf16>
      %cst_12 = arith.constant dense<0.000000e+00> : vector<8x4096xf32>
      %17 = tpu.matmul %15, %16, %cst_12 {dimension_numbers = #tpu.dot_dimension_numbers<[1], [0], [0], [1], [0, 0, 1, 1], [], []>} : vector<8x64xbf16>, vector<64x4096xbf16>, vector<8x4096xf32> -> vector<8x4096xf32>
      %c0_13 = arith.constant 0 : index
      %c0_14 = arith.constant 0 : index
      %18 = vector.load %arg3[%c0_13, %c0_14] : memref<1x4096xf32, #tpu.memory_space<vmem>>, vector<1x4096xf32>
      %19 = vector.broadcast %18 : vector<1x4096xf32> to vector<8x4096xf32>
      %20 = arith.addf %17, %19 : vector<8x4096xf32>
      %cst_15 = arith.constant 0.000000e+00 : f32
      %21 = vector.broadcast %cst_15 : f32 to vector<8x4096xf32>
      %22 = arith.maximumf %20, %21 : vector<8x4096xf32>
      %23 = arith.truncf %22 : vector<8x4096xf32> to vector<8x4096xbf16>
      %c0_16 = arith.constant 0 : index
      %c0_17 = arith.constant 0 : index
      %24 = vector.load %arg9[%c0_16, %c0_17] : memref<8x4096xbf16, #tpu.memory_space<vmem>>, vector<8x4096xbf16>
      tpu.vector_store %arg9[%c0_16, %c0_17], %23 {strides = array<i32>} : memref<8x4096xbf16, #tpu.memory_space<vmem>>, vector<8x4096xbf16>,
      %cst_18 = arith.constant 0.000000e+00 : f32
      %25 = vector.broadcast %cst_18 : f32 to vector<8x4096xf32>
      %c0_19 = arith.constant 0 : index
      %c0_20 = arith.constant 0 : index
      %26 = vector.load %arg10[%c0_19, %c0_20] : memref<8x4096xf32, #tpu.memory_space<vmem>>, vector<8x4096xf32>
      tpu.vector_store %arg10[%c0_19, %c0_20], %25 {strides = array<i32>} : memref<8x4096xf32, #tpu.memory_space<vmem>>, vector<8x4096xf32>,
    } else {
    }
    %c512_i32 = arith.constant 512 : i32
    %3 = arith.muli %arg0, %c512_i32 : i32
    %4 = tpu.assume_multiple %3, 512 : i32
    %c0 = arith.constant 0 : index
    %c0_1 = arith.constant 0 : index
    %5 = vector.load %arg10[%c0, %c0_1] : memref<8x4096xf32, #tpu.memory_space<vmem>>, vector<8x4096xf32>
    %c0_2 = arith.constant 0 : index
    %6 = arith.index_cast %4 : i32 to index
    %7 = vector.load %arg9[%c0_2, %6] : memref<8x4096xbf16, #tpu.memory_space<vmem>>, vector<8x512xbf16>
    %c0_3 = arith.constant 0 : index
    %c0_4 = arith.constant 0 : index
    %8 = vector.load %arg4[%c0_3, %c0_4] : memref<512x4096xbf16, #tpu.memory_space<vmem>>, vector<512x4096xbf16>
    %cst = arith.constant dense<0.000000e+00> : vector<8x4096xf32>
    %9 = tpu.matmul %7, %8, %cst {dimension_numbers = #tpu.dot_dimension_numbers<[1], [0], [0], [1], [0, 0, 1, 1], [], []>} : vector<8x512xbf16>, vector<512x4096xbf16>, vector<8x4096xf32> -> vector<8x4096xf32>
    %10 = arith.addf %5, %9 : vector<8x4096xf32>
    %c0_5 = arith.constant 0 : index
    %c0_6 = arith.constant 0 : index
    %11 = vector.load %arg10[%c0_5, %c0_6] : memref<8x4096xf32, #tpu.memory_space<vmem>>, vector<8x4096xf32>
    tpu.vector_store %arg10[%c0_5, %c0_6], %10 {strides = array<i32>} : memref<8x4096xf32, #tpu.memory_space<vmem>>, vector<8x4096xf32>,
    %c7_i32 = arith.constant 7 : i32
    %12 = arith.cmpi eq, %arg0, %c7_i32 : i32
    %13 = arith.extui %12 : i1 to i32
    %c0_i32_7 = arith.constant 0 : i32
    %14 = arith.cmpi ne, %13, %c0_i32_7 : i32
    scf.if %14 {
      %c0_8 = arith.constant 0 : index
      %c0_9 = arith.constant 0 : index
      %15 = vector.load %arg10[%c0_8, %c0_9] : memref<8x4096xf32, #tpu.memory_space<vmem>>, vector<8x4096xf32>
      %c0_10 = arith.constant 0 : index
      %c0_11 = arith.constant 0 : index
      %16 = vector.load %arg5[%c0_10, %c0_11] : memref<1x4096xf32, #tpu.memory_space<vmem>>, vector<1x4096xf32>
      %17 = vector.broadcast %16 : vector<1x4096xf32> to vector<8x4096xf32>
      %18 = arith.addf %15, %17 : vector<8x4096xf32>
      %cst_12 = arith.constant 0.000000e+00 : f32
      %19 = vector.broadcast %cst_12 : f32 to vector<8x4096xf32>
      %20 = arith.maximumf %18, %19 : vector<8x4096xf32>
      %21 = arith.truncf %20 : vector<8x4096xf32> to vector<8x4096xbf16>
      %c0_13 = arith.constant 0 : index
      %c0_14 = arith.constant 0 : index
      %22 = vector.load %arg6[%c0_13, %c0_14] : memref<4096x128xbf16, #tpu.memory_space<vmem>>, vector<4096x128xbf16>
      %cst_15 = arith.constant dense<0.000000e+00> : vector<8x128xf32>
      %23 = tpu.matmul %21, %22, %cst_15 {dimension_numbers = #tpu.dot_dimension_numbers<[1], [0], [0], [1], [0, 0, 1, 1], [], []>} : vector<8x4096xbf16>, vector<4096x128xbf16>, vector<8x128xf32> -> vector<8x128xf32>
      %c0_16 = arith.constant 0 : index
      %c0_17 = arith.constant 0 : index
      %24 = vector.load %arg7[%c0_16, %c0_17] : memref<1x128xf32, #tpu.memory_space<vmem>>, vector<1x128xf32>
      %25 = vector.broadcast %24 : vector<1x128xf32> to vector<8x128xf32>
      %26 = arith.addf %23, %25 : vector<8x128xf32>
      %c0_18 = arith.constant 0 : index
      %c0_19 = arith.constant 0 : index
      %27 = vector.load %arg8[%c0_18, %c0_19] : memref<8x128xf32, #tpu.memory_space<vmem>>, vector<8x128xf32>
      tpu.vector_store %arg8[%c0_18, %c0_19], %26 {strides = array<i32>} : memref<8x128xf32, #tpu.memory_space<vmem>>, vector<8x128xf32>,
    } else {
    }
    return
  }
  func.func @transform_0(%arg0: i32) -> (i32, i32) {
    %c0_i32 = arith.constant 0 : i32
    %c0_i32_0 = arith.constant 0 : i32
    %c0_i32_1 = arith.constant 0 : i32
    return %c0_i32, %c0_i32_0 : i32, i32
  }
  func.func @transform_1(%arg0: i32) -> (i32, i32) {
    %c0_i32 = arith.constant 0 : i32
    %c0_i32_0 = arith.constant 0 : i32
    %c0_i32_1 = arith.constant 0 : i32
    return %c0_i32, %c0_i32_0 : i32, i32
  }
  func.func @transform_2(%arg0: i32) -> (i32, i32) {
    %c0_i32 = arith.constant 0 : i32
    %c0_i32_0 = arith.constant 0 : i32
    %c0_i32_1 = arith.constant 0 : i32
    return %c0_i32, %c0_i32_0 : i32, i32
  }
  func.func @transform_3(%arg0: i32) -> (i32, i32) {
    %c0_i32 = arith.constant 0 : i32
    %c0_i32_0 = arith.constant 0 : i32
    return %arg0, %c0_i32 : i32, i32
  }
  func.func @transform_4(%arg0: i32) -> (i32, i32) {
    %c0_i32 = arith.constant 0 : i32
    %c0_i32_0 = arith.constant 0 : i32
    %c0_i32_1 = arith.constant 0 : i32
    return %c0_i32, %c0_i32_0 : i32, i32
  }
  func.func @transform_5(%arg0: i32) -> (i32, i32) {
    %c0_i32 = arith.constant 0 : i32
    %c0_i32_0 = arith.constant 0 : i32
    %c0_i32_1 = arith.constant 0 : i32
    return %c0_i32, %c0_i32_0 : i32, i32
  }
  func.func @transform_6(%arg0: i32) -> (i32, i32) {
    %c0_i32 = arith.constant 0 : i32
    %c0_i32_0 = arith.constant 0 : i32
    %c0_i32_1 = arith.constant 0 : i32
    return %c0_i32, %c0_i32_0 : i32, i32
  }
  func.func @transform_7(%arg0: i32) -> (i32, i32) {
    %c0_i32 = arith.constant 0 : i32
    %c0_i32_0 = arith.constant 0 : i32
    %c0_i32_1 = arith.constant 0 : i32
    return %c0_i32, %c0_i32_0 : i32, i32
  }
}

</mosaic_0001>

<llo_original>
// kernel: tpu_custom_call.1
$region0: #{tpu_custom_call.1}
  #allocation0 [shape = 'u32[]', space=smem, size = 0x4, offset = 0x4, fixed_abs, tag = 'smem constant byte address 0x4 - core index']
  #allocation1 [shape = 'u32[144,128]{1,0:T(1,128)}', space=vmem, size = 0x12000, scoped, tag = 'internal scratch']
  #allocation2 [shape = 'bf16[8,4096]{1,0:T(8,128)(2,1)}', space=vmem, size = 0x10000, scoped, tag = 'scratch operand']
  #allocation3 [shape = 'f32[8,4096]{1,0:T(8,128)}', space=vmem, size = 0x20000, scoped, tag = 'scratch operand']
  %s0 = inlined_call_operand.hbm [shape: bf16[8,64], index: 0, kind: input, shape index: {}]
  %s1 = inlined_call_operand.hbm [shape: bf16[64,4096], index: 1, kind: input, shape index: {}]
  %s2 = inlined_call_operand.hbm [shape: f32[1,4096], index: 2, kind: input, shape index: {}]
  %s3 = inlined_call_operand.hbm [shape: bf16[4096,4096], index: 3, kind: input, shape index: {}]
  %s4 = inlined_call_operand.hbm [shape: f32[1,4096], index: 4, kind: input, shape index: {}]
  %s5 = inlined_call_operand.hbm [shape: bf16[4096,128], index: 5, kind: input, shape index: {}]
  %s6 = inlined_call_operand.hbm [shape: f32[1,128], index: 6, kind: input, shape index: {}]
  %s7 = inlined_call_operand.hbm [shape: f32[8,128], index: 7, kind: output, shape index: {}]
  %s8 = sld [smem:[#allocation0]]
  $region97: #{tpu_custom_call.1} parent=0
    _
  %s10 = ssub.s32 1, %s8
  %s11 = scalar_select 0, %s10, %s8
  $region1: #{tpu_custom_call.1} parent=0
    #allocation4 [shape = 'u8[2048]{0}', space=vmem, size = 0x800, scoped, tag = 'input window, operand 0, single buffered']
    #allocation5 [shape = 's32[2]{0}', space=sflag, size = 0x8, scoped, tag = 'scoped memory for tpu_custom_call.1']
    #allocation6 [shape = 's32[2]{0}', space=sflag, size = 0x8, scoped, tag = 'scoped memory for tpu_custom_call.1']
    #allocation7 [shape = 'u8[524288]{0}', space=vmem, size = 0x80000, scoped, tag = 'input window, operand 1, single buffered']
    #allocation8 [shape = 's32[1]{0}', space=sflag, size = 0x4, scoped, tag = 'scoped memory for tpu_custom_call.1']
    #allocation9 [shape = 'u8[16384]{0}', space=vmem, size = 0x4000, scoped, tag = 'input window, operand 2, single buffered']
    #allocation10 [shape = 'u8[8388608]{0}', space=vmem, size = 0x800000, scoped, tag = 'input window, operand 3']
    #allocation11 [shape = 's32[2]{0}', space=sflag, size = 0x8, scoped, tag = 'scoped memory for tpu_custom_call.1']
    #allocation12 [shape = 'u8[16384]{0}', space=vmem, size = 0x4000, scoped, tag = 'input window, operand 4, single buffered']
    #allocation13 [shape = 'u8[1048576]{0}', space=vmem, size = 0x100000, scoped, tag = 'input window, operand 5, single buffered']
    #allocation14 [shape = 's32[1]{0}', space=sflag, size = 0x4, scoped, tag = 'scoped memory for tpu_custom_call.1']
    #allocation15 [shape = 'u8[512]{0}', space=vmem, size = 0x400, scoped, tag = 'input window, operand 6, single buffered']
    #allocation16 [shape = 'u8[4096]{0}', space=vmem, size = 0x1000, scoped, tag = 'output window, operand 0, single buffered']
    %12 = vsyncpa [#allocation5], 0
    %13 = vsyncpa [#allocation8], 0
    %14 = vsyncpa [#allocation11], 0
    %s15 = scalar_lea.sflag [#allocation11], 1
    %16 = vsyncpa %s15, 0
    %17 = vsyncpa [#allocation14], 0
    %18 = vsyncpa [#allocation6], 0
    loop: start=0, step=1, limit=10
    $region2: #{tpu_custom_call.1} parent=1 // loop_pre_header
      _
    $region3: #{tpu_custom_call.1} parent=1 // loop_header
      %s20 = sphi 0, %s24
      %p21 = scmp.ge.s32.totalorder %s20, 10
      %s28 = sphi 0, %s28
      %s30 = sphi 0, %s28
      %s31 = sphi 0, %s30
      %s45 = sphi 0, %s31
      %s49 = sphi 0, %s49
      %s51 = sphi 0, %s49
      %s52 = sphi 0, %s51
      %s66 = sphi 0, %s52
      %s70 = sphi 0, %s70
      %s72 = sphi 0, %s70
      %s73 = sphi 0, %s72
      %s87 = sphi 0, %s73
      %s93 = sphi 0, %s95
      %s96 = sphi 0, %s93
      %s97 = sphi 0, %s96
      %s113 = sphi 0, %s97
      %s117 = sphi 0, %s117
      %s119 = sphi 0, %s117
      %s120 = sphi 0, %s119
      %s134 = sphi 0, %s120
      %s138 = sphi 0, %s138
      %s140 = sphi 0, %s138
      %s141 = sphi 0, %s140
      %s155 = sphi 0, %s141
      %s159 = sphi 0, %s159
      %s161 = sphi 0, %s159
      %s162 = sphi 0, %s161
      %s176 = sphi 0, %s162
      %s180 = sphi 0, %s180
      %s182 = sphi 0, %s180
      %s183 = sphi 0, %s182
      %s197 = sphi 0, %s183
    $region4: #{tpu_custom_call.1} parent=1 // loop_header_branch
      %23 = sbr.rel (%p21) target = $region8
    $region5: #{tpu_custom_call.1} parent=1 // loop_body
      %s25 = ssub.s32 %s20, 1
      %s26 = ssub.s32 %s20, 2
      %s27 = sadd.s32 %s20, 1
      %s29 = sadd.s32 %s28, 1
      %p32 = scmp.eq.s32.totalorder %s20, 7
      %p33 = scmp.ne.s32.totalorder %s28, %s30
      %p34 = scmp.eq.s32.totalorder %s20, 0
      %p35 = por %p33, %p34
      %p36 = scmp.ne.s32.totalorder %s28, %s30
      %p37 = scmp.eq.s32.totalorder %s25, 7
      %p38 = por %p36, %p37
      %p39 = scmp.ne.s32.totalorder %s30, %s31
      %p40 = scmp.eq.s32.totalorder %s25, 0
      %p41 = por %p39, %p40
      %p42 = scmp.ne.s32.totalorder %s30, %s31
      %p43 = scmp.eq.s32.totalorder %s26, 7
      %p44 = por %p42, %p43
      %p46 = scmp.ne.s32.totalorder %s31, %s45
      %p47 = scmp.eq.s32.totalorder %s26, 0
      %p48 = por %p46, %p47
      %s50 = sadd.s32 %s49, 1
      %p53 = scmp.eq.s32.totalorder %s20, 7
      %p54 = scmp.ne.s32.totalorder %s49, %s51
      %p55 = scmp.eq.s32.totalorder %s20, 0
      %p56 = por %p54, %p55
      %p57 = scmp.ne.s32.totalorder %s49, %s51
      %p58 = scmp.eq.s32.totalorder %s25, 7
      %p59 = por %p57, %p58
      %p60 = scmp.ne.s32.totalorder %s51, %s52
      %p61 = scmp.eq.s32.totalorder %s25, 0
      %p62 = por %p60, %p61
      %p63 = scmp.ne.s32.totalorder %s51, %s52
      %p64 = scmp.eq.s32.totalorder %s26, 7
      %p65 = por %p63, %p64
      %p67 = scmp.ne.s32.totalorder %s52, %s66
      %p68 = scmp.eq.s32.totalorder %s26, 0
      %p69 = por %p67, %p68
      %s71 = sadd.s32 %s70, 1
      %p74 = scmp.eq.s32.totalorder %s20, 7
      %p75 = scmp.ne.s32.totalorder %s70, %s72
      %p76 = scmp.eq.s32.totalorder %s20, 0
      %p77 = por %p75, %p76
      %p78 = scmp.ne.s32.totalorder %s70, %s72
      %p79 = scmp.eq.s32.totalorder %s25, 7
      %p80 = por %p78, %p79
      %p81 = scmp.ne.s32.totalorder %s72, %s73
      %p82 = scmp.eq.s32.totalorder %s25, 0
      %p83 = por %p81, %p82
      %p84 = scmp.ne.s32.totalorder %s72, %s73
      %p85 = scmp.eq.s32.totalorder %s26, 7
      %p86 = por %p84, %p85
      %p88 = scmp.ne.s32.totalorder %s73, %s87
      %p89 = scmp.eq.s32.totalorder %s26, 0
      %p90 = por %p88, %p89
      %s91 = ssub.s32 %s20, %s27
      %p92 = scmp.eq.s32.totalorder %s91, 0
      %s94 = sadd.s32 %s93, 1
      %s95 = scalar_select %p92, %s93, %s94
      %p98 = pneg %p92
      %p99 = scmp.eq.s32.totalorder %s20, 7
      %p100 = por %p98, %p99
      %p101 = scmp.ne.s32.totalorder %s93, %s96
      %p102 = scmp.eq.s32.totalorder %s20, 0
      %p103 = por %p101, %p102
      %p104 = scmp.ne.s32.totalorder %s93, %s96
      %p105 = scmp.eq.s32.totalorder %s25, 7
      %p106 = por %p104, %p105
      %p107 = scmp.ne.s32.totalorder %s96, %s97
      %p108 = scmp.eq.s32.totalorder %s25, 0
      %p109 = por %p107, %p108
      %p110 = scmp.ne.s32.totalorder %s96, %s97
      %p111 = scmp.eq.s32.totalorder %s26, 7
      %p112 = por %p110, %p111
      %p114 = scmp.ne.s32.totalorder %s97, %s113
      %p115 = scmp.eq.s32.totalorder %s26, 0
      %p116 = por %p114, %p115
      %s118 = sadd.s32 %s117, 1
      %p121 = scmp.eq.s32.totalorder %s20, 7
      %p122 = scmp.ne.s32.totalorder %s117, %s119
      %p123 = scmp.eq.s32.totalorder %s20, 0
      %p124 = por %p122, %p123
      %p125 = scmp.ne.s32.totalorder %s117, %s119
      %p126 = scmp.eq.s32.totalorder %s25, 7
      %p127 = por %p125, %p126
      %p128 = scmp.ne.s32.totalorder %s119, %s120
      %p129 = scmp.eq.s32.totalorder %s25, 0
      %p130 = por %p128, %p129
      %p131 = scmp.ne.s32.totalorder %s119, %s120
      %p132 = scmp.eq.s32.totalorder %s26, 7
      %p133 = por %p131, %p132
      %p135 = scmp.ne.s32.totalorder %s120, %s134
      %p136 = scmp.eq.s32.totalorder %s26, 0
      %p137 = por %p135, %p136
      %s139 = sadd.s32 %s138, 1
      %p142 = scmp.eq.s32.totalorder %s20, 7
      %p143 = scmp.ne.s32.totalorder %s138, %s140
      %p144 = scmp.eq.s32.totalorder %s20, 0
      %p145 = por %p143, %p144
      %p146 = scmp.ne.s32.totalorder %s138, %s140
      %p147 = scmp.eq.s32.totalorder %s25, 7
      %p148 = por %p146, %p147
      %p149 = scmp.ne.s32.totalorder %s140, %s141
      %p150 = scmp.eq.s32.totalorder %s25, 0
      %p151 = por %p149, %p150
      %p152 = scmp.ne.s32.totalorder %s140, %s141
      %p153 = scmp.eq.s32.totalorder %s26, 7
      %p154 = por %p152, %p153
      %p156 = scmp.ne.s32.totalorder %s141, %s155
      %p157 = scmp.eq.s32.totalorder %s26, 0
      %p158 = por %p156, %p157
      %s160 = sadd.s32 %s159, 1
      %p163 = scmp.eq.s32.totalorder %s20, 7
      %p164 = scmp.ne.s32.totalorder %s159, %s161
      %p165 = scmp.eq.s32.totalorder %s20, 0
      %p166 = por %p164, %p165
      %p167 = scmp.ne.s32.totalorder %s159, %s161
      %p168 = scmp.eq.s32.totalorder %s25, 7
      %p169 = por %p167, %p168
      %p170 = scmp.ne.s32.totalorder %s161, %s162
      %p171 = scmp.eq.s32.totalorder %s25, 0
      %p172 = por %p170, %p171
      %p173 = scmp.ne.s32.totalorder %s161, %s162
      %p174 = scmp.eq.s32.totalorder %s26, 7
      %p175 = por %p173, %p174
      %p177 = scmp.ne.s32.totalorder %s162, %s176
      %p178 = scmp.eq.s32.totalorder %s26, 0
      %p179 = por %p177, %p178
      %s181 = sadd.s32 %s180, 1
      %p184 = scmp.eq.s32.totalorder %s20, 7
      %p185 = scmp.ne.s32.totalorder %s180, %s182
      %p186 = scmp.eq.s32.totalorder %s20, 0
      %p187 = por %p185, %p186
      %p188 = scmp.ne.s32.totalorder %s180, %s182
      %p189 = scmp.eq.s32.totalorder %s25, 7
      %p190 = por %p188, %p189
      %p191 = scmp.ne.s32.totalorder %s182, %s183
      %p192 = scmp.eq.s32.totalorder %s25, 0
      %p193 = por %p191, %p192
      %p194 = scmp.ne.s32.totalorder %s182, %s183
      %p195 = scmp.eq.s32.totalorder %s26, 7
      %p196 = por %p194, %p195
      %p198 = scmp.ne.s32.totalorder %s183, %s197
      %p199 = scmp.eq.s32.totalorder %s26, 0
      %p200 = por %p198, %p199
      %p201 = scmp.le.s32.totalorder 1, %s20
      %p202 = scmp.lt.s32.totalorder %s20, 9
      %p203 = pnand %p201, %p202
      %p204 = pneg %p203
      // Predicated region
      $region9: #{tpu_custom_call.1} parent=5 // pred_check
        _
      $region10: #{tpu_custom_call.1} parent=5 // pred_check_branch
        %206 = sbr.rel (%p203) target = $region12
      $region11: #{tpu_custom_call.1} parent=5 // pred_region
        %s207 = ssub.s32 %s20, 1
        // Predicated region
        $region13: #{tpu_custom_call.1} parent=11 // pred_check
          %p208 = pneg %p41
        $region14: #{tpu_custom_call.1} parent=11 // pred_check_branch
          %210 = sbr.rel (%p208) target = $region16
        $region15: #{tpu_custom_call.1} parent=11 // pred_region
          %s212 = ssub.s32 64, 64
          %213 = vsyncadd [#allocation5], %s212
          %s215 = sshll.u32 [#allocation4], 4
          %s216 = int_to_ptr.vmem [resolvable:$true] %s215
          %218 = dma.hbm_to_vmem [thread:$0]  %s0, 64, %s216, [#allocation5]
        $region16: #{tpu_custom_call.1} parent=11 // pred_fallthru
          _
        // Predicated region
        $region17: #{tpu_custom_call.1} parent=11 // pred_check
          %p219 = pneg %p62
        $region18: #{tpu_custom_call.1} parent=11 // pred_check_branch
          %221 = sbr.rel (%p219) target = $region20
        $region19: #{tpu_custom_call.1} parent=11 // pred_region
          %s223 = ssub.s32 16384, 16384
          %224 = vsyncadd [#allocation8], %s223
          %s225 = sshll.u32 [#allocation7], 4
          %s226 = int_to_ptr.vmem [resolvable:$true] %s225
          %231 = dma.hbm_to_vmem [thread:$0]  %s1, 16384, %s226, [#allocation8], 2048, 2048, 128
        $region20: #{tpu_custom_call.1} parent=11 // pred_fallthru
          _
        // Predicated region
        $region21: #{tpu_custom_call.1} parent=11 // pred_check
          %p232 = pneg %p83
        $region22: #{tpu_custom_call.1} parent=11 // pred_check_branch
          %234 = sbr.rel (%p232) target = $region24
        $region23: #{tpu_custom_call.1} parent=11 // pred_region
          %s236 = ssub.s32 512, 512
          %237 = vsyncadd [#allocation8], %s236
          %s239 = sshll.u32 [#allocation9], 4
          %s240 = int_to_ptr.vmem [resolvable:$true] %s239
          %242 = dma.hbm_to_vmem [thread:$0]  %s2, 512, %s240, [#allocation8]
        $region24: #{tpu_custom_call.1} parent=11 // pred_fallthru
          _
        // Predicated region
        $region25: #{tpu_custom_call.1} parent=11 // pred_check
          %p243 = pneg %p130
        $region26: #{tpu_custom_call.1} parent=11 // pred_check_branch
          %245 = sbr.rel (%p243) target = $region28
        $region27: #{tpu_custom_call.1} parent=11 // pred_region
          %s247 = ssub.s32 512, 512
          %248 = vsyncadd [#allocation11], %s247
          %s250 = sshll.u32 [#allocation12], 4
          %s251 = int_to_ptr.vmem [resolvable:$true] %s250
          %253 = dma.hbm_to_vmem [thread:$0]  %s4, 512, %s251, [#allocation11]
        $region28: #{tpu_custom_call.1} parent=11 // pred_fallthru
          _
        // Predicated region
        $region29: #{tpu_custom_call.1} parent=11 // pred_check
          %p254 = pneg %p151
        $region30: #{tpu_custom_call.1} parent=11 // pred_check_branch
          %256 = sbr.rel (%p254) target = $region32
        $region31: #{tpu_custom_call.1} parent=11 // pred_region
          %s258 = ssub.s32 32768, 32768
          %259 = vsyncadd [#allocation14], %s258
          %s260 = sshll.u32 [#allocation13], 4
          %s261 = int_to_ptr.vmem [resolvable:$true] %s260
          %266 = dma.hbm_to_vmem [thread:$0]  %s5, 32768, %s261, [#allocation14], 64, 64, 4
        $region32: #{tpu_custom_call.1} parent=11 // pred_fallthru
          _
        // Predicated region
        $region33: #{tpu_custom_call.1} parent=11 // pred_check
          %p267 = pneg %p172
        $region34: #{tpu_custom_call.1} parent=11 // pred_check_branch
          %269 = sbr.rel (%p267) target = $region36
        $region35: #{tpu_custom_call.1} parent=11 // pred_region
          %s271 = ssub.s32 16, 16
          %272 = vsyncadd [#allocation14], %s271
          %s274 = sshll.u32 [#allocation15], 4
          %s275 = int_to_ptr.vmem [resolvable:$true] %s274
          %277 = dma.hbm_to_vmem [thread:$0]  %s6, 16, %s275, [#allocation14]
        $region36: #{tpu_custom_call.1} parent=11 // pred_fallthru
          _
      $region12: #{tpu_custom_call.1} parent=5 // pred_fallthru
        _
      %p278 = scmp.lt.s32.totalorder %s20, 8
      // Predicated region
      $region37: #{tpu_custom_call.1} parent=5 // pred_check
        %p279 = pneg %p278
      $region38: #{tpu_custom_call.1} parent=5 // pred_check_branch
        %281 = sbr.rel (%p279) target = $region40
      $region39: #{tpu_custom_call.1} parent=5 // pred_region
        // Predicated region
        $region41: #{tpu_custom_call.1} parent=39 // pred_check
          %p282 = pneg %p103
        $region42: #{tpu_custom_call.1} parent=39 // pred_check_branch
          %284 = sbr.rel (%p282) target = $region44
        $region43: #{tpu_custom_call.1} parent=39 // pred_region
          %s285 = sand.u32 %s20, 1
          %s286 = scalar_lea.sflag [#allocation11], %s285
          %s287 = sand.u32 %s93, 1
          %s288 = smul.addr %s287, 8192
          %s289 = scalar_lea.vmem [#allocation10], %s288
          %s290 = smul.u32 64, %s20
          %s292 = ssub.s32 131072, 131072
          %293 = vsyncadd %s286, %s292
          %s294 = smul.addr %s290, 32
          %s295 = smul.addr %s294, 64
          %s296 = scalar_lea.hbm %s3, %s295
          %s297 = sshll.u32 %s289, 4
          %s298 = int_to_ptr.vmem [resolvable:$true] %s297
          %303 = dma.hbm_to_vmem [thread:$0]  %s296, 131072, %s298, %s286, 2048, 2048, 128
        $region44: #{tpu_custom_call.1} parent=39 // pred_fallthru
          _
      $region40: #{tpu_custom_call.1} parent=5 // pred_fallthru
        _
      %p304 = scmp.le.s32.totalorder 1, %s20
      %p305 = scmp.lt.s32.totalorder %s20, 9
      %p306 = pnand %p304, %p305
      %p307 = pneg %p306
      // Predicated region
      $region45: #{tpu_custom_call.1} parent=5 // pred_check
        _
      $region46: #{tpu_custom_call.1} parent=5 // pred_check_branch
        %309 = sbr.rel (%p306) target = $region48
      $region47: #{tpu_custom_call.1} parent=5 // pred_region
        %s310 = ssub.s32 %s20, 1
        // Predicated region
        $region49: #{tpu_custom_call.1} parent=47 // pred_check
          %p311 = pneg %p41
        $region50: #{tpu_custom_call.1} parent=47 // pred_check_branch
          %313 = sbr.rel (%p311) target = $region52
        $region51: #{tpu_custom_call.1} parent=47 // pred_region
          %314 = dma.done [#allocation5], 64
        $region52: #{tpu_custom_call.1} parent=47 // pred_fallthru
          _
        // Predicated region
        $region53: #{tpu_custom_call.1} parent=47 // pred_check
          %p315 = pneg %p62
        $region54: #{tpu_custom_call.1} parent=47 // pred_check_branch
          %317 = sbr.rel (%p315) target = $region56
        $region55: #{tpu_custom_call.1} parent=47 // pred_region
          %318 = dma.done [#allocation8], 16384
        $region56: #{tpu_custom_call.1} parent=47 // pred_fallthru
          _
        // Predicated region
        $region57: #{tpu_custom_call.1} parent=47 // pred_check
          %p319 = pneg %p83
        $region58: #{tpu_custom_call.1} parent=47 // pred_check_branch
          %321 = sbr.rel (%p319) target = $region60
        $region59: #{tpu_custom_call.1} parent=47 // pred_region
          %322 = dma.done [#allocation8], 512
        $region60: #{tpu_custom_call.1} parent=47 // pred_fallthru
          _
        %s323 = sand.u32 %s25, 1
        %s324 = scalar_lea.sflag [#allocation11], %s323
        %s325 = sand.u32 %s96, 1
        %s326 = smul.addr %s325, 8192
        %s327 = scalar_lea.vmem [#allocation10], %s326
        // Predicated region
        $region61: #{tpu_custom_call.1} parent=47 // pred_check
          %p328 = pneg %p109
        $region62: #{tpu_custom_call.1} parent=47 // pred_check_branch
          %330 = sbr.rel (%p328) target = $region64
        $region63: #{tpu_custom_call.1} parent=47 // pred_region
          %331 = dma.done %s324, 131072
        $region64: #{tpu_custom_call.1} parent=47 // pred_fallthru
          _
        // Predicated region
        $region65: #{tpu_custom_call.1} parent=47 // pred_check
          %p332 = pneg %p130
        $region66: #{tpu_custom_call.1} parent=47 // pred_check_branch
          %334 = sbr.rel (%p332) target = $region68
        $region67: #{tpu_custom_call.1} parent=47 // pred_region
          %335 = dma.done [#allocation11], 512
        $region68: #{tpu_custom_call.1} parent=47 // pred_fallthru
          _
        // Predicated region
        $region69: #{tpu_custom_call.1} parent=47 // pred_check
          %p336 = pneg %p151
        $region70: #{tpu_custom_call.1} parent=47 // pred_check_branch
          %338 = sbr.rel (%p336) target = $region72
        $region71: #{tpu_custom_call.1} parent=47 // pred_region
          %339 = dma.done [#allocation14], 32768
        $region72: #{tpu_custom_call.1} parent=47 // pred_fallthru
          _
        // Predicated region
        $region73: #{tpu_custom_call.1} parent=47 // pred_check
          %p340 = pneg %p172
        $region74: #{tpu_custom_call.1} parent=47 // pred_check_branch
          %342 = sbr.rel (%p340) target = $region76
        $region75: #{tpu_custom_call.1} parent=47 // pred_region
          %343 = dma.done [#allocation14], 16
        $region76: #{tpu_custom_call.1} parent=47 // pred_fallthru
          _
        %p344 = pneg %p41
        %p345 = pneg %p38
        %p346 = pneg %p62
        %p347 = pneg %p59
        %p348 = pneg %p83
        %p349 = pneg %p80
        %s350 = sand.u32 %s25, 1
        %s351 = scalar_lea.sflag [#allocation11], %s350
        %s352 = sand.u32 %s96, 1
        %s353 = smul.addr %s352, 8192
        %s354 = scalar_lea.vmem [#allocation10], %s353
        %p355 = pneg %p109
        %p356 = pneg %p106
        %p357 = pneg %p130
        %p358 = pneg %p127
        %p359 = pneg %p151
        %p360 = pneg %p148
        %p361 = pneg %p172
        %p362 = pneg %p169
        %p363 = pneg %p193
        %p364 = pneg %p190
        %s365 = smul.u32 64, %s25
        %p367 = scmp.eq.s32.totalorder %s25, 0
        // Predicated region
        $region77: #{tpu_custom_call.1} parent=47 // pred_check
          %p368 = pneg %p367
        $region78: #{tpu_custom_call.1} parent=47 // pred_check_branch
          %370 = sbr.rel (%p368) target = $region80
        $region79: #{tpu_custom_call.1} parent=47 // pred_region
          %v371 = vld [vmem:[#allocation4] sm:$0xf]
          %v372 = vld [vmem:[#allocation7] sm:$0xff]
          %v373 = vld [vmem:[#allocation7 + $0x8] sm:$0xff]
          %v374 = vld [vmem:[#allocation7 + $0x10] sm:$0xff]
          %v375 = vld [vmem:[#allocation7 + $0x18] sm:$0xff]
          %v376 = vld [vmem:[#allocation7 + $0x20] sm:$0xff]
          %v377 = vld [vmem:[#allocation7 + $0x28] sm:$0xff]
          %v378 = vld [vmem:[#allocation7 + $0x30] sm:$0xff]
          %v379 = vld [vmem:[#allocation7 + $0x38] sm:$0xff]
          %v380 = vld [vmem:[#allocation7 + $0x40] sm:$0xff]
          %v381 = vld [vmem:[#allocation7 + $0x48] sm:$0xff]
          %v382 = vld [vmem:[#allocation7 + $0x50] sm:$0xff]
          %v383 = vld [vmem:[#allocation7 + $0x58] sm:$0xff]
          %v384 = vld [vmem:[#allocation7 + $0x60] sm:$0xff]
          %v385 = vld [vmem:[#allocation7 + $0x68] sm:$0xff]
          %v386 = vld [vmem:[#allocation7 + $0x70] sm:$0xff]
          %v387 = vld [vmem:[#allocation7 + $0x78] sm:$0xff]
          %v388 = vld [vmem:[#allocation7 + $0x80] sm:$0xff]
          %v389 = vld [vmem:[#allocation7 + $0x88] sm:$0xff]
          %v390 = vld [vmem:[#allocation7 + $0x90] sm:$0xff]
          %v391 = vld [vmem:[#allocation7 + $0x98] sm:$0xff]
          %v392 = vld [vmem:[#allocation7 + $0xa0] sm:$0xff]
          %v393 = vld [vmem:[#allocation7 + $0xa8] sm:$0xff]
          %v394 = vld [vmem:[#allocation7 + $0xb0] sm:$0xff]
          %v395 = vld [vmem:[#allocation7 + $0xb8] sm:$0xff]
          %v396 = vld [vmem:[#allocation7 + $0xc0] sm:$0xff]
          %v397 = vld [vmem:[#allocation7 + $0xc8] sm:$0xff]
          %v398 = vld [vmem:[#allocation7 + $0xd0] sm:$0xff]
          %v399 = vld [vmem:[#allocation7 + $0xd8] sm:$0xff]
          %v400 = vld [vmem:[#allocation7 + $0xe0] sm:$0xff]
          %v401 = vld [vmem:[#allocation7 + $0xe8] sm:$0xff]
          %v402 = vld [vmem:[#allocation7 + $0xf0] sm:$0xff]
          %v403 = vld [vmem:[#allocation7 + $0xf8] sm:$0xff]
          %v404 = vld [vmem:[#allocation7 + $0x100] sm:$0xff]
          %v405 = vld [vmem:[#allocation7 + $0x108] sm:$0xff]
          %v406 = vld [vmem:[#allocation7 + $0x110] sm:$0xff]
          %v407 = vld [vmem:[#allocation7 + $0x118] sm:$0xff]
          %v408 = vld [vmem:[#allocation7 + $0x120] sm:$0xff]
          %v409 = vld [vmem:[#allocation7 + $0x128] sm:$0xff]
          %v410 = vld [vmem:[#allocation7 + $0x130] sm:$0xff]
          %v411 = vld [vmem:[#allocation7 + $0x138] sm:$0xff]
          %v412 = vld [vmem:[#allocation7 + $0x140] sm:$0xff]
          %v413 = vld [vmem:[#allocation7 + $0x148] sm:$0xff]
          %v414 = vld [vmem:[#allocation7 + $0x150] sm:$0xff]
          %v415 = vld [vmem:[#allocation7 + $0x158] sm:$0xff]
          %v416 = vld [vmem:[#allocation7 + $0x160] sm:$0xff]
          %v417 = vld [vmem:[#allocation7 + $0x168] sm:$0xff]
          %v418 = vld [vmem:[#allocation7 + $0x170] sm:$0xff]
          %v419 = vld [vmem:[#allocation7 + $0x178] sm:$0xff]
          %v420 = vld [vmem:[#allocation7 + $0x180] sm:$0xff]
          %v421 = vld [vmem:[#allocation7 + $0x188] sm:$0xff]
          %v422 = vld [vmem:[#allocation7 + $0x190] sm:$0xff]
          %v423 = vld [vmem:[#allocation7 + $0x198] sm:$0xff]
          %v424 = vld [vmem:[#allocation7 + $0x1a0] sm:$0xff]
          %v425 = vld [vmem:[#allocation7 + $0x1a8] sm:$0xff]
          %v426 = vld [vmem:[#allocation7 + $0x1b0] sm:$0xff]
          %v427 = vld [vmem:[#allocation7 + $0x1b8] sm:$0xff]
          %v428 = vld [vmem:[#allocation7 + $0x1c0] sm:$0xff]
          %v429 = vld [vmem:[#allocation7 + $0x1c8] sm:$0xff]
          %v430 = vld [vmem:[#allocation7 + $0x1d0] sm:$0xff]
          %v431 = vld [vmem:[#allocation7 + $0x1d8] sm:$0xff]
          %v432 = vld [vmem:[#allocation7 + $0x1e0] sm:$0xff]
          %v433 = vld [vmem:[#allocation7 + $0x1e8] sm:$0xff]
          %v434 = vld [vmem:[#allocation7 + $0x1f0] sm:$0xff]
          %v435 = vld [vmem:[#allocation7 + $0x1f8] sm:$0xff]
          %v436 = vld [vmem:[#allocation7 + $0x200] sm:$0xff]
          %v437 = vld [vmem:[#allocation7 + $0x208] sm:$0xff]
          %v438 = vld [vmem:[#allocation7 + $0x210] sm:$0xff]
          %v439 = vld [vmem:[#allocation7 + $0x218] sm:$0xff]
          %v440 = vld [vmem:[#allocation7 + $0x220] sm:$0xff]
          %v441 = vld [vmem:[#allocation7 + $0x228] sm:$0xff]
          %v442 = vld [vmem:[#allocation7 + $0x230] sm:$0xff]
          %v443 = vld [vmem:[#allocation7 + $0x238] sm:$0xff]
          %v444 = vld [vmem:[#allocation7 + $0x240] sm:$0xff]
          %v445 = vld [vmem:[#allocation7 + $0x248] sm:$0xff]
          %v446 = vld [vmem:[#allocation7 + $0x250] sm:$0xff]
          %v447 = vld [vmem:[#allocation7 + $0x258] sm:$0xff]
          %v448 = vld [vmem:[#allocation7 + $0x260] sm:$0xff]
          %v449 = vld [vmem:[#allocation7 + $0x268] sm:$0xff]
          %v450 = vld [vmem:[#allocation7 + $0x270] sm:$0xff]
          %v451 = vld [vmem:[#allocation7 + $0x278] sm:$0xff]
          %v452 = vld [vmem:[#allocation7 + $0x280] sm:$0xff]
          %v453 = vld [vmem:[#allocation7 + $0x288] sm:$0xff]
          %v454 = vld [vmem:[#allocation7 + $0x290] sm:$0xff]
          %v455 = vld [vmem:[#allocation7 + $0x298] sm:$0xff]
          %v456 = vld [vmem:[#allocation7 + $0x2a0] sm:$0xff]
          %v457 = vld [vmem:[#allocation7 + $0x2a8] sm:$0xff]
          %v458 = vld [vmem:[#allocation7 + $0x2b0] sm:$0xff]
          %v459 = vld [vmem:[#allocation7 + $0x2b8] sm:$0xff]
          %v460 = vld [vmem:[#allocation7 + $0x2c0] sm:$0xff]
          %v461 = vld [vmem:[#allocation7 + $0x2c8] sm:$0xff]
          %v462 = vld [vmem:[#allocation7 + $0x2d0] sm:$0xff]
          %v463 = vld [vmem:[#allocation7 + $0x2d8] sm:$0xff]
          %v464 = vld [vmem:[#allocation7 + $0x2e0] sm:$0xff]
          %v465 = vld [vmem:[#allocation7 + $0x2e8] sm:$0xff]
          %v466 = vld [vmem:[#allocation7 + $0x2f0] sm:$0xff]
          %v467 = vld [vmem:[#allocation7 + $0x2f8] sm:$0xff]
          %v468 = vld [vmem:[#allocation7 + $0x300] sm:$0xff]
          %v469 = vld [vmem:[#allocation7 + $0x308] sm:$0xff]
          %v470 = vld [vmem:[#allocation7 + $0x310] sm:$0xff]
          %v471 = vld [vmem:[#allocation7 + $0x318] sm:$0xff]
          %v472 = vld [vmem:[#allocation7 + $0x320] sm:$0xff]
          %v473 = vld [vmem:[#allocation7 + $0x328] sm:$0xff]
          %v474 = vld [vmem:[#allocation7 + $0x330] sm:$0xff]
          %v475 = vld [vmem:[#allocation7 + $0x338] sm:$0xff]
          %v476 = vld [vmem:[#allocation7 + $0x340] sm:$0xff]
          %v477 = vld [vmem:[#allocation7 + $0x348] sm:$0xff]
          %v478 = vld [vmem:[#allocation7 + $0x350] sm:$0xff]
          %v479 = vld [vmem:[#allocation7 + $0x358] sm:$0xff]
          %v480 = vld [vmem:[#allocation7 + $0x360] sm:$0xff]
          %v481 = vld [vmem:[#allocation7 + $0x368] sm:$0xff]
          %v482 = vld [vmem:[#allocation7 + $0x370] sm:$0xff]
          %v483 = vld [vmem:[#allocation7 + $0x378] sm:$0xff]
          %v484 = vld [vmem:[#allocation7 + $0x380] sm:$0xff]
          %v485 = vld [vmem:[#allocation7 + $0x388] sm:$0xff]
          %v486 = vld [vmem:[#allocation7 + $0x390] sm:$0xff]
          %v487 = vld [vmem:[#allocation7 + $0x398] sm:$0xff]
          %v488 = vld [vmem:[#allocation7 + $0x3a0] sm:$0xff]
          %v489 = vld [vmem:[#allocation7 + $0x3a8] sm:$0xff]
          %v490 = vld [vmem:[#allocation7 + $0x3b0] sm:$0xff]
          %v491 = vld [vmem:[#allocation7 + $0x3b8] sm:$0xff]
          %v492 = vld [vmem:[#allocation7 + $0x3c0] sm:$0xff]
          %v493 = vld [vmem:[#allocation7 + $0x3c8] sm:$0xff]
          %v494 = vld [vmem:[#allocation7 + $0x3d0] sm:$0xff]
          %v495 = vld [vmem:[#allocation7 + $0x3d8] sm:$0xff]
          %v496 = vld [vmem:[#allocation7 + $0x3e0] sm:$0xff]
          %v497 = vld [vmem:[#allocation7 + $0x3e8] sm:$0xff]
          %v498 = vld [vmem:[#allocation7 + $0x3f0] sm:$0xff]
          %v499 = vld [vmem:[#allocation7 + $0x3f8] sm:$0xff]
          %v500 = vld [vmem:[#allocation9] sm:$0xff]
          %v501 = vld [vmem:[#allocation9 + $0x8] sm:$0xff]
          %v502 = vld [vmem:[#allocation9 + $0x10] sm:$0xff]
          %v503 = vld [vmem:[#allocation9 + $0x18] sm:$0xff]
          %v508 = vlaneseq
          %v509 = vshrl.u32 %v508, 7
          %v510 = vsub.s32 0, %v509
          %v511 = vrot.slane %v500, %v510
          %v512 = vlaneseq
          %v513 = vshrl.u32 %v512, 7
          %v514 = vsub.s32 1, %v513
          %v515 = vrot.slane %v500, %v514
          %v516 = vlaneseq
          %v517 = vshrl.u32 %v516, 7
          %v518 = vsub.s32 2, %v517
          %v519 = vrot.slane %v500, %v518
          %v520 = vlaneseq
          %v521 = vshrl.u32 %v520, 7
          %v522 = vsub.s32 3, %v521
          %v523 = vrot.slane %v500, %v522
          %v524 = vlaneseq
          %v525 = vshrl.u32 %v524, 7
          %v526 = vsub.s32 4, %v525
          %v527 = vrot.slane %v500, %v526
          %v528 = vlaneseq
          %v529 = vshrl.u32 %v528, 7
          %v530 = vsub.s32 5, %v529
          %v531 = vrot.slane %v500, %v530
          %v532 = vlaneseq
          %v533 = vshrl.u32 %v532, 7
          %v534 = vsub.s32 6, %v533
          %v535 = vrot.slane %v500, %v534
          %v536 = vlaneseq
          %v537 = vshrl.u32 %v536, 7
          %v538 = vsub.s32 7, %v537
          %v539 = vrot.slane %v500, %v538
          %v540 = vlaneseq
          %v541 = vshrl.u32 %v540, 7
          %v542 = vsub.s32 0, %v541
          %v543 = vrot.slane %v501, %v542
          %v544 = vlaneseq
          %v545 = vshrl.u32 %v544, 7
          %v546 = vsub.s32 1, %v545
          %v547 = vrot.slane %v501, %v546
          %v548 = vlaneseq
          %v549 = vshrl.u32 %v548, 7
          %v550 = vsub.s32 2, %v549
          %v551 = vrot.slane %v501, %v550
          %v552 = vlaneseq
          %v553 = vshrl.u32 %v552, 7
          %v554 = vsub.s32 3, %v553
          %v555 = vrot.slane %v501, %v554
          %v556 = vlaneseq
          %v557 = vshrl.u32 %v556, 7
          %v558 = vsub.s32 4, %v557
          %v559 = vrot.slane %v501, %v558
          %v560 = vlaneseq
          %v561 = vshrl.u32 %v560, 7
          %v562 = vsub.s32 5, %v561
          %v563 = vrot.slane %v501, %v562
          %v564 = vlaneseq
          %v565 = vshrl.u32 %v564, 7
          %v566 = vsub.s32 6, %v565
          %v567 = vrot.slane %v501, %v566
          %v568 = vlaneseq
          %v569 = vshrl.u32 %v568, 7
          %v570 = vsub.s32 7, %v569
          %v571 = vrot.slane %v501, %v570
          %v572 = vlaneseq
          %v573 = vshrl.u32 %v572, 7
          %v574 = vsub.s32 0, %v573
          %v575 = vrot.slane %v502, %v574
          %v576 = vlaneseq
          %v577 = vshrl.u32 %v576, 7
          %v578 = vsub.s32 1, %v577
          %v579 = vrot.slane %v502, %v578
          %v580 = vlaneseq
          %v581 = vshrl.u32 %v580, 7
          %v582 = vsub.s32 2, %v581
          %v583 = vrot.slane %v502, %v582
          %v584 = vlaneseq
          %v585 = vshrl.u32 %v584, 7
          %v586 = vsub.s32 3, %v585
          %v587 = vrot.slane %v502, %v586
          %v588 = vlaneseq
          %v589 = vshrl.u32 %v588, 7
          %v590 = vsub.s32 4, %v589
          %v591 = vrot.slane %v502, %v590
          %v592 = vlaneseq
          %v593 = vshrl.u32 %v592, 7
          %v594 = vsub.s32 5, %v593
          %v595 = vrot.slane %v502, %v594
          %v596 = vlaneseq
          %v597 = vshrl.u32 %v596, 7
          %v598 = vsub.s32 6, %v597
          %v599 = vrot.slane %v502, %v598
          %v600 = vlaneseq
          %v601 = vshrl.u32 %v600, 7
          %v602 = vsub.s32 7, %v601
          %v603 = vrot.slane %v502, %v602
          %v604 = vlaneseq
          %v605 = vshrl.u32 %v604, 7
          %v606 = vsub.s32 0, %v605
          %v607 = vrot.slane %v503, %v606
          %v608 = vlaneseq
          %v609 = vshrl.u32 %v608, 7
          %v610 = vsub.s32 1, %v609
          %v611 = vrot.slane %v503, %v610
          %v612 = vlaneseq
          %v613 = vshrl.u32 %v612, 7
          %v614 = vsub.s32 2, %v613
          %v615 = vrot.slane %v503, %v614
          %v616 = vlaneseq
          %v617 = vshrl.u32 %v616, 7
          %v618 = vsub.s32 3, %v617
          %v619 = vrot.slane %v503, %v618
          %v620 = vlaneseq
          %v621 = vshrl.u32 %v620, 7
          %v622 = vsub.s32 4, %v621
          %v623 = vrot.slane %v503, %v622
          %v624 = vlaneseq
          %v625 = vshrl.u32 %v624, 7
          %v626 = vsub.s32 5, %v625
          %v627 = vrot.slane %v503, %v626
          %v628 = vlaneseq
          %v629 = vshrl.u32 %v628, 7
          %v630 = vsub.s32 6, %v629
          %v631 = vrot.slane %v503, %v630
          %v632 = vlaneseq
          %v633 = vshrl.u32 %v632, 7
          %v634 = vsub.s32 7, %v633
          %v635 = vrot.slane %v503, %v634
          %v796 = vunpack.c.l.b16 %v372
          %v797 = vunpack.c.h.b16 %v372
          %v798 = vunpack.c.l.b16 %v373
          %v799 = vunpack.c.h.b16 %v373
          %v800 = vunpack.c.l.b16 %v374
          %v801 = vunpack.c.h.b16 %v374
          %v802 = vunpack.c.l.b16 %v375
          %v803 = vunpack.c.h.b16 %v375
          %v804 = vunpack.c.l.b16 %v376
          %v805 = vunpack.c.h.b16 %v376
          %v806 = vunpack.c.l.b16 %v377
          %v807 = vunpack.c.h.b16 %v377
          %v808 = vunpack.c.l.b16 %v378
          %v809 = vunpack.c.h.b16 %v378
          %v810 = vunpack.c.l.b16 %v379
          %v811 = vunpack.c.h.b16 %v379
          %v812 = vunpack.c.l.b16 %v380
          %v813 = vunpack.c.h.b16 %v380
          %v814 = vunpack.c.l.b16 %v381
          %v815 = vunpack.c.h.b16 %v381
          %v816 = vunpack.c.l.b16 %v382
          %v817 = vunpack.c.h.b16 %v382
          %v818 = vunpack.c.l.b16 %v383
          %v819 = vunpack.c.h.b16 %v383
          %v820 = vunpack.c.l.b16 %v384
          %v821 = vunpack.c.h.b16 %v384
          %v822 = vunpack.c.l.b16 %v385
          %v823 = vunpack.c.h.b16 %v385
          %v824 = vunpack.c.l.b16 %v386
          %v825 = vunpack.c.h.b16 %v386
          %v826 = vunpack.c.l.b16 %v387
          %v827 = vunpack.c.h.b16 %v387
          %v828 = vunpack.c.l.b16 %v388
          %v829 = vunpack.c.h.b16 %v388
          %v830 = vunpack.c.l.b16 %v389
          %v831 = vunpack.c.h.b16 %v389
          %v832 = vunpack.c.l.b16 %v390
          %v833 = vunpack.c.h.b16 %v390
          %v834 = vunpack.c.l.b16 %v391
          %v835 = vunpack.c.h.b16 %v391
          %v836 = vunpack.c.l.b16 %v392
          %v837 = vunpack.c.h.b16 %v392
          %v838 = vunpack.c.l.b16 %v393
          %v839 = vunpack.c.h.b16 %v393
          %v840 = vunpack.c.l.b16 %v394
          %v841 = vunpack.c.h.b16 %v394
          %v842 = vunpack.c.l.b16 %v395
          %v843 = vunpack.c.h.b16 %v395
          %v844 = vunpack.c.l.b16 %v396
          %v845 = vunpack.c.h.b16 %v396
          %v846 = vunpack.c.l.b16 %v397
          %v847 = vunpack.c.h.b16 %v397
          %v848 = vunpack.c.l.b16 %v398
          %v849 = vunpack.c.h.b16 %v398
          %v850 = vunpack.c.l.b16 %v399
          %v851 = vunpack.c.h.b16 %v399
          %v852 = vunpack.c.l.b16 %v400
          %v853 = vunpack.c.h.b16 %v400
          %v854 = vunpack.c.l.b16 %v401
          %v855 = vunpack.c.h.b16 %v401
          %v856 = vunpack.c.l.b16 %v402
          %v857 = vunpack.c.h.b16 %v402
          %v858 = vunpack.c.l.b16 %v403
          %v859 = vunpack.c.h.b16 %v403
          %v860 = vunpack.c.l.b16 %v404
          %v861 = vunpack.c.h.b16 %v404
          %v862 = vunpack.c.l.b16 %v405
          %v863 = vunpack.c.h.b16 %v405
          %v864 = vunpack.c.l.b16 %v406
          %v865 = vunpack.c.h.b16 %v406
          %v866 = vunpack.c.l.b16 %v407
          %v867 = vunpack.c.h.b16 %v407
          %v868 = vunpack.c.l.b16 %v408
          %v869 = vunpack.c.h.b16 %v408
          %v870 = vunpack.c.l.b16 %v409
          %v871 = vunpack.c.h.b16 %v409
          %v872 = vunpack.c.l.b16 %v410
          %v873 = vunpack.c.h.b16 %v410
          %v874 = vunpack.c.l.b16 %v411
          %v875 = vunpack.c.h.b16 %v411
          %v876 = vunpack.c.l.b16 %v412
          %v877 = vunpack.c.h.b16 %v412
          %v878 = vunpack.c.l.b16 %v413
          %v879 = vunpack.c.h.b16 %v413
          %v880 = vunpack.c.l.b16 %v414
          %v881 = vunpack.c.h.b16 %v414
          %v882 = vunpack.c.l.b16 %v415
          %v883 = vunpack.c.h.b16 %v415
          %v884 = vunpack.c.l.b16 %v416
          %v885 = vunpack.c.h.b16 %v416
          %v886 = vunpack.c.l.b16 %v417
          %v887 = vunpack.c.h.b16 %v417
          %v888 = vunpack.c.l.b16 %v418
          %v889 = vunpack.c.h.b16 %v418
          %v890 = vunpack.c.l.b16 %v419
          %v891 = vunpack.c.h.b16 %v419
          %v892 = vunpack.c.l.b16 %v420
          %v893 = vunpack.c.h.b16 %v420
          %v894 = vunpack.c.l.b16 %v421
          %v895 = vunpack.c.h.b16 %v421
          %v896 = vunpack.c.l.b16 %v422
          %v897 = vunpack.c.h.b16 %v422
          %v898 = vunpack.c.l.b16 %v423
          %v899 = vunpack.c.h.b16 %v423
          %v900 = vunpack.c.l.b16 %v424
          %v901 = vunpack.c.h.b16 %v424
          %v902 = vunpack.c.l.b16 %v425
          %v903 = vunpack.c.h.b16 %v425
          %v904 = vunpack.c.l.b16 %v426
          %v905 = vunpack.c.h.b16 %v426
          %v906 = vunpack.c.l.b16 %v427
          %v907 = vunpack.c.h.b16 %v427
          %v908 = vunpack.c.l.b16 %v428
          %v909 = vunpack.c.h.b16 %v428
          %v910 = vunpack.c.l.b16 %v429
          %v911 = vunpack.c.h.b16 %v429
          %v912 = vunpack.c.l.b16 %v430
          %v913 = vunpack.c.h.b16 %v430
          %v914 = vunpack.c.l.b16 %v431
          %v915 = vunpack.c.h.b16 %v431
          %v916 = vunpack.c.l.b16 %v432
          %v917 = vunpack.c.h.b16 %v432
          %v918 = vunpack.c.l.b16 %v433
          %v919 = vunpack.c.h.b16 %v433
          %v920 = vunpack.c.l.b16 %v434
          %v921 = vunpack.c.h.b16 %v434
          %v922 = vunpack.c.l.b16 %v435
          %v923 = vunpack.c.h.b16 %v435
          %v924 = vunpack.c.l.b16 %v436
          %v925 = vunpack.c.h.b16 %v436
          %v926 = vunpack.c.l.b16 %v437
          %v927 = vunpack.c.h.b16 %v437
          %v928 = vunpack.c.l.b16 %v438
          %v929 = vunpack.c.h.b16 %v438
          %v930 = vunpack.c.l.b16 %v439
          %v931 = vunpack.c.h.b16 %v439
          %v932 = vunpack.c.l.b16 %v440
          %v933 = vunpack.c.h.b16 %v440
          %v934 = vunpack.c.l.b16 %v441
          %v935 = vunpack.c.h.b16 %v441
          %v936 = vunpack.c.l.b16 %v442
          %v937 = vunpack.c.h.b16 %v442
          %v938 = vunpack.c.l.b16 %v443
          %v939 = vunpack.c.h.b16 %v443
          %v940 = vunpack.c.l.b16 %v444
          %v941 = vunpack.c.h.b16 %v444
          %v942 = vunpack.c.l.b16 %v445
          %v943 = vunpack.c.h.b16 %v445
          %v944 = vunpack.c.l.b16 %v446
          %v945 = vunpack.c.h.b16 %v446
          %v946 = vunpack.c.l.b16 %v447
          %v947 = vunpack.c.h.b16 %v447
          %v948 = vunpack.c.l.b16 %v448
          %v949 = vunpack.c.h.b16 %v448
          %v950 = vunpack.c.l.b16 %v449
          %v951 = vunpack.c.h.b16 %v449
          %v952 = vunpack.c.l.b16 %v450
          %v953 = vunpack.c.h.b16 %v450
          %v954 = vunpack.c.l.b16 %v451
          %v955 = vunpack.c.h.b16 %v451
          %v956 = vunpack.c.l.b16 %v452
          %v957 = vunpack.c.h.b16 %v452
          %v958 = vunpack.c.l.b16 %v453
          %v959 = vunpack.c.h.b16 %v453
          %v960 = vunpack.c.l.b16 %v454
          %v961 = vunpack.c.h.b16 %v454
          %v962 = vunpack.c.l.b16 %v455
          %v963 = vunpack.c.h.b16 %v455
          %v964 = vunpack.c.l.b16 %v456
          %v965 = vunpack.c.h.b16 %v456
          %v966 = vunpack.c.l.b16 %v457
          %v967 = vunpack.c.h.b16 %v457
          %v968 = vunpack.c.l.b16 %v458
          %v969 = vunpack.c.h.b16 %v458
          %v970 = vunpack.c.l.b16 %v459
          %v971 = vunpack.c.h.b16 %v459
          %v972 = vunpack.c.l.b16 %v460
          %v973 = vunpack.c.h.b16 %v460
          %v974 = vunpack.c.l.b16 %v461
          %v975 = vunpack.c.h.b16 %v461
          %v976 = vunpack.c.l.b16 %v462
          %v977 = vunpack.c.h.b16 %v462
          %v978 = vunpack.c.l.b16 %v463
          %v979 = vunpack.c.h.b16 %v463
          %v980 = vunpack.c.l.b16 %v464
          %v981 = vunpack.c.h.b16 %v464
          %v982 = vunpack.c.l.b16 %v465
          %v983 = vunpack.c.h.b16 %v465
          %v984 = vunpack.c.l.b16 %v466
          %v985 = vunpack.c.h.b16 %v466
          %v986 = vunpack.c.l.b16 %v467
          %v987 = vunpack.c.h.b16 %v467
          %v988 = vunpack.c.l.b16 %v468
          %v989 = vunpack.c.h.b16 %v468
          %v990 = vunpack.c.l.b16 %v469
          %v991 = vunpack.c.h.b16 %v469
          %v992 = vunpack.c.l.b16 %v470
          %v993 = vunpack.c.h.b16 %v470
          %v994 = vunpack.c.l.b16 %v471
          %v995 = vunpack.c.h.b16 %v471
          %v996 = vunpack.c.l.b16 %v472
          %v997 = vunpack.c.h.b16 %v472
          %v998 = vunpack.c.l.b16 %v473
          %v999 = vunpack.c.h.b16 %v473
          %v1000 = vunpack.c.l.b16 %v474
          %v1001 = vunpack.c.h.b16 %v474
          %v1002 = vunpack.c.l.b16 %v475
          %v1003 = vunpack.c.h.b16 %v475
          %v1004 = vunpack.c.l.b16 %v476
          %v1005 = vunpack.c.h.b16 %v476
          %v1006 = vunpack.c.l.b16 %v477
          %v1007 = vunpack.c.h.b16 %v477
          %v1008 = vunpack.c.l.b16 %v478
          %v1009 = vunpack.c.h.b16 %v478
          %v1010 = vunpack.c.l.b16 %v479
          %v1011 = vunpack.c.h.b16 %v479
          %v1012 = vunpack.c.l.b16 %v480
          %v1013 = vunpack.c.h.b16 %v480
          %v1014 = vunpack.c.l.b16 %v481
          %v1015 = vunpack.c.h.b16 %v481
          %v1016 = vunpack.c.l.b16 %v482
          %v1017 = vunpack.c.h.b16 %v482
          %v1018 = vunpack.c.l.b16 %v483
          %v1019 = vunpack.c.h.b16 %v483
          %v1020 = vunpack.c.l.b16 %v484
          %v1021 = vunpack.c.h.b16 %v484
          %v1022 = vunpack.c.l.b16 %v485
          %v1023 = vunpack.c.h.b16 %v485
          %v1024 = vunpack.c.l.b16 %v486
          %v1025 = vunpack.c.h.b16 %v486
          %v1026 = vunpack.c.l.b16 %v487
          %v1027 = vunpack.c.h.b16 %v487
          %v1028 = vunpack.c.l.b16 %v488
          %v1029 = vunpack.c.h.b16 %v488
          %v1030 = vunpack.c.l.b16 %v489
          %v1031 = vunpack.c.h.b16 %v489
          %v1032 = vunpack.c.l.b16 %v490
          %v1033 = vunpack.c.h.b16 %v490
          %v1034 = vunpack.c.l.b16 %v491
          %v1035 = vunpack.c.h.b16 %v491
          %v1036 = vunpack.c.l.b16 %v492
          %v1037 = vunpack.c.h.b16 %v492
          %v1038 = vunpack.c.l.b16 %v493
          %v1039 = vunpack.c.h.b16 %v493
          %v1040 = vunpack.c.l.b16 %v494
          %v1041 = vunpack.c.h.b16 %v494
          %v1042 = vunpack.c.l.b16 %v495
          %v1043 = vunpack.c.h.b16 %v495
          %v1044 = vunpack.c.l.b16 %v496
          %v1045 = vunpack.c.h.b16 %v496
          %v1046 = vunpack.c.l.b16 %v497
          %v1047 = vunpack.c.h.b16 %v497
          %v1048 = vunpack.c.l.b16 %v498
          %v1049 = vunpack.c.h.b16 %v498
          %v1050 = vunpack.c.l.b16 %v499
          %v1051 = vunpack.c.h.b16 %v499
          %v1052 = vpack.c.b16 %v828, %v796
          %v1053 = vpack.c.b16 %v829, %v797
          %v1054 = vpack.c.b16 %v830, %v798
          %v1055 = vpack.c.b16 %v831, %v799
          %v1056 = vpack.c.b16 %v832, %v800
          %v1057 = vpack.c.b16 %v833, %v801
          %v1058 = vpack.c.b16 %v834, %v802
          %v1059 = vpack.c.b16 %v835, %v803
          %v1060 = vpack.c.b16 %v836, %v804
          %v1061 = vpack.c.b16 %v837, %v805
          %v1062 = vpack.c.b16 %v838, %v806
          %v1063 = vpack.c.b16 %v839, %v807
          %v1064 = vpack.c.b16 %v840, %v808
          %v1065 = vpack.c.b16 %v841, %v809
          %v1066 = vpack.c.b16 %v842, %v810
          %v1067 = vpack.c.b16 %v843, %v811
          %v1068 = vpack.c.b16 %v844, %v812
          %v1069 = vpack.c.b16 %v845, %v813
          %v1070 = vpack.c.b16 %v846, %v814
          %v1071 = vpack.c.b16 %v847, %v815
          %v1072 = vpack.c.b16 %v848, %v816
          %v1073 = vpack.c.b16 %v849, %v817
          %v1074 = vpack.c.b16 %v850, %v818
          %v1075 = vpack.c.b16 %v851, %v819
          %v1076 = vpack.c.b16 %v852, %v820
          %v1077 = vpack.c.b16 %v853, %v821
          %v1078 = vpack.c.b16 %v854, %v822
          %v1079 = vpack.c.b16 %v855, %v823
          %v1080 = vpack.c.b16 %v856, %v824
          %v1081 = vpack.c.b16 %v857, %v825
          %v1082 = vpack.c.b16 %v858, %v826
          %v1083 = vpack.c.b16 %v859, %v827
          %v1084 = vpack.c.b16 %v892, %v860
          %v1085 = vpack.c.b16 %v893, %v861
          %v1086 = vpack.c.b16 %v894, %v862
          %v1087 = vpack.c.b16 %v895, %v863
          %v1088 = vpack.c.b16 %v896, %v864
          %v1089 = vpack.c.b16 %v897, %v865
          %v1090 = vpack.c.b16 %v898, %v866
          %v1091 = vpack.c.b16 %v899, %v867
          %v1092 = vpack.c.b16 %v900, %v868
          %v1093 = vpack.c.b16 %v901, %v869
          %v1094 = vpack.c.b16 %v902, %v870
          %v1095 = vpack.c.b16 %v903, %v871
          %v1096 = vpack.c.b16 %v904, %v872
          %v1097 = vpack.c.b16 %v905, %v873
          %v1098 = vpack.c.b16 %v906, %v874
          %v1099 = vpack.c.b16 %v907, %v875
          %v1100 = vpack.c.b16 %v908, %v876
          %v1101 = vpack.c.b16 %v909, %v877
          %v1102 = vpack.c.b16 %v910, %v878
          %v1103 = vpack.c.b16 %v911, %v879
          %v1104 = vpack.c.b16 %v912, %v880
          %v1105 = vpack.c.b16 %v913, %v881
          %v1106 = vpack.c.b16 %v914, %v882
          %v1107 = vpack.c.b16 %v915, %v883
          %v1108 = vpack.c.b16 %v916, %v884
          %v1109 = vpack.c.b16 %v917, %v885
          %v1110 = vpack.c.b16 %v918, %v886
          %v1111 = vpack.c.b16 %v919, %v887
          %v1112 = vpack.c.b16 %v920, %v888
          %v1113 = vpack.c.b16 %v921, %v889
          %v1114 = vpack.c.b16 %v922, %v890
          %v1115 = vpack.c.b16 %v923, %v891
          %v1116 = vpack.c.b16 %v956, %v924
          %v1117 = vpack.c.b16 %v957, %v925
          %v1118 = vpack.c.b16 %v958, %v926
          %v1119 = vpack.c.b16 %v959, %v927
          %v1120 = vpack.c.b16 %v960, %v928
          %v1121 = vpack.c.b16 %v961, %v929
          %v1122 = vpack.c.b16 %v962, %v930
          %v1123 = vpack.c.b16 %v963, %v931
          %v1124 = vpack.c.b16 %v964, %v932
          %v1125 = vpack.c.b16 %v965, %v933
          %v1126 = vpack.c.b16 %v966, %v934
          %v1127 = vpack.c.b16 %v967, %v935
          %v1128 = vpack.c.b16 %v968, %v936
          %v1129 = vpack.c.b16 %v969, %v937
          %v1130 = vpack.c.b16 %v970, %v938
          %v1131 = vpack.c.b16 %v971, %v939
          %v1132 = vpack.c.b16 %v972, %v940
          %v1133 = vpack.c.b16 %v973, %v941
          %v1134 = vpack.c.b16 %v974, %v942
          %v1135 = vpack.c.b16 %v975, %v943
          %v1136 = vpack.c.b16 %v976, %v944
          %v1137 = vpack.c.b16 %v977, %v945
          %v1138 = vpack.c.b16 %v978, %v946
          %v1139 = vpack.c.b16 %v979, %v947
          %v1140 = vpack.c.b16 %v980, %v948
          %v1141 = vpack.c.b16 %v981, %v949
          %v1142 = vpack.c.b16 %v982, %v950
          %v1143 = vpack.c.b16 %v983, %v951
          %v1144 = vpack.c.b16 %v984, %v952
          %v1145 = vpack.c.b16 %v985, %v953
          %v1146 = vpack.c.b16 %v986, %v954
          %v1147 = vpack.c.b16 %v987, %v955
          %v1148 = vpack.c.b16 %v1020, %v988
          %v1149 = vpack.c.b16 %v1021, %v989
          %v1150 = vpack.c.b16 %v1022, %v990
          %v1151 = vpack.c.b16 %v1023, %v991
          %v1152 = vpack.c.b16 %v1024, %v992
          %v1153 = vpack.c.b16 %v1025, %v993
          %v1154 = vpack.c.b16 %v1026, %v994
          %v1155 = vpack.c.b16 %v1027, %v995
          %v1156 = vpack.c.b16 %v1028, %v996
          %v1157 = vpack.c.b16 %v1029, %v997
          %v1158 = vpack.c.b16 %v1030, %v998
          %v1159 = vpack.c.b16 %v1031, %v999
          %v1160 = vpack.c.b16 %v1032, %v1000
          %v1161 = vpack.c.b16 %v1033, %v1001
          %v1162 = vpack.c.b16 %v1034, %v1002
          %v1163 = vpack.c.b16 %v1035, %v1003
          %v1164 = vpack.c.b16 %v1036, %v1004
          %v1165 = vpack.c.b16 %v1037, %v1005
          %v1166 = vpack.c.b16 %v1038, %v1006
          %v1167 = vpack.c.b16 %v1039, %v1007
          %v1168 = vpack.c.b16 %v1040, %v1008
          %v1169 = vpack.c.b16 %v1041, %v1009
          %v1170 = vpack.c.b16 %v1042, %v1010
          %v1171 = vpack.c.b16 %v1043, %v1011
          %v1172 = vpack.c.b16 %v1044, %v1012
          %v1173 = vpack.c.b16 %v1045, %v1013
          %v1174 = vpack.c.b16 %v1046, %v1014
          %v1175 = vpack.c.b16 %v1047, %v1015
          %v1176 = vpack.c.b16 %v1048, %v1016
          %v1177 = vpack.c.b16 %v1049, %v1017
          %v1178 = vpack.c.b16 %v1050, %v1018
          %v1179 = vpack.c.b16 %v1051, %v1019
          %vm1308 = vcmask 523264
          %v1310 = vsel %vm1308, %v371, 0
          %1312 = vmatprep.subr.bf16.mxu0 0
          %1313 = vmatpush1.bf16.msra.mxu0 0
          %1314 = vmatprep.subr.bf16.mxu0 0
          %1315 = vmatpush1.bf16.msra.mxu0 0
          %1316 = vmatprep.subr.bf16.mxu0 0
          %1317 = vmatpush1.bf16.msra.mxu0 0
          %1318 = vmatprep.subr.bf16.mxu0 0
          %1319 = vmatpush1.bf16.msra.mxu0 0
          %1320 = vmatprep.subr.bf16.mxu0 %v1149
          %1321 = vmatpush1.bf16.msra.mxu0 %v1148
          %1322 = vmatprep.subr.bf16.mxu0 %v1117
          %1323 = vmatpush1.bf16.msra.mxu0 %v1116
          %1324 = vmatprep.subr.bf16.mxu0 %v1085
          %1325 = vmatpush1.bf16.msra.mxu0 %v1084
          %1326 = vmatprep.subr.bf16.mxu0 %v1053
          %1327 = vmatpush1.bf16.msra.mxu0 %v1052
          %1328 = vmatprep.subr.bf16.mxu0 0
          %1329 = vmatpush2.bf16.msra.mxu0 0
          %1330 = vmatprep.subr.bf16.mxu0 0
          %1331 = vmatpush2.bf16.msra.mxu0 0
          %1332 = vmatprep.subr.bf16.mxu0 0
          %1333 = vmatpush2.bf16.msra.mxu0 0
          %1334 = vmatprep.subr.bf16.mxu0 0
          %1335 = vmatpush2.bf16.msra.mxu0 0
          %1336 = vmatprep.subr.bf16.mxu0 0
          %1337 = vmatpush2.bf16.msra.mxu0 0
          %1338 = vmatprep.subr.bf16.mxu0 0
          %1339 = vmatpush2.bf16.msra.mxu0 0
          %1340 = vmatprep.subr.bf16.mxu0 0
          %1341 = vmatpush2.bf16.msra.mxu0 0
          %1342 = vmatprep.subr.bf16.mxu0 0
          %1343 = vmatpush2.bf16.msra.mxu0 0
          %1344 = vmatprep.mubr.bf16.mxu0 0
          %1345 = vmatmul.mubr.bf16.gmra.mxu0 %v1310
          %v1346 = vpop.f32.mrf.mxu0
          %v1347 = vadd.f32 %v511, %v1346
          %v1348 = vpop.f32.mrf.mxu0
          %v1349 = vadd.f32 %v515, %v1348
          %v1350 = vpop.f32.mrf.mxu0
          %v1351 = vpop.f32.mrf.mxu0
          %1352 = vdwg.mxu0
          %1353 = vmatprep.subr.bf16.mxu0 0
          %1354 = vmatpush1.bf16.msra.mxu0 0
          %1355 = vmatprep.subr.bf16.mxu0 0
          %1356 = vmatpush1.bf16.msra.mxu0 0
          %1357 = vmatprep.subr.bf16.mxu0 0
          %1358 = vmatpush1.bf16.msra.mxu0 0
          %1359 = vmatprep.subr.bf16.mxu0 0
          %1360 = vmatpush1.bf16.msra.mxu0 0
          %1361 = vmatprep.subr.bf16.mxu0 %v1151
          %1362 = vmatpush1.bf16.msra.mxu0 %v1150
          %1363 = vmatprep.subr.bf16.mxu0 %v1119
          %1364 = vmatpush1.bf16.msra.mxu0 %v1118
          %1365 = vmatprep.subr.bf16.mxu0 %v1087
          %1366 = vmatpush1.bf16.msra.mxu0 %v1086
          %1367 = vmatprep.subr.bf16.mxu0 %v1055
          %1368 = vmatpush1.bf16.msra.mxu0 %v1054
          %1369 = vmatprep.subr.bf16.mxu0 0
          %1370 = vmatpush2.bf16.msra.mxu0 0
          %1371 = vmatprep.subr.bf16.mxu0 0
          %1372 = vmatpush2.bf16.msra.mxu0 0
          %1373 = vmatprep.subr.bf16.mxu0 0
          %1374 = vmatpush2.bf16.msra.mxu0 0
          %1375 = vmatprep.subr.bf16.mxu0 0
          %1376 = vmatpush2.bf16.msra.mxu0 0
          %1377 = vmatprep.subr.bf16.mxu0 0
          %1378 = vmatpush2.bf16.msra.mxu0 0
          %1379 = vmatprep.subr.bf16.mxu0 0
          %1380 = vmatpush2.bf16.msra.mxu0 0
          %1381 = vmatprep.subr.bf16.mxu0 0
          %1382 = vmatpush2.bf16.msra.mxu0 0
          %1383 = vmatprep.subr.bf16.mxu0 0
          %1384 = vmatpush2.bf16.msra.mxu0 0
          %1385 = vmatprep.mubr.bf16.mxu0 0
          %1386 = vmatmul.mubr.bf16.gmra.mxu0 %v1310
          %v1387 = vpop.f32.mrf.mxu0
          %v1388 = vadd.f32 %v519, %v1387
          %v1389 = vpop.f32.mrf.mxu0
          %v1390 = vadd.f32 %v523, %v1389
          %v1391 = vpop.f32.mrf.mxu0
          %v1392 = vpop.f32.mrf.mxu0
          %1393 = vdwg.mxu0
          %1394 = vmatprep.subr.bf16.mxu0 0
          %1395 = vmatpush1.bf16.msra.mxu0 0
          %1396 = vmatprep.subr.bf16.mxu0 0
          %1397 = vmatpush1.bf16.msra.mxu0 0
          %1398 = vmatprep.subr.bf16.mxu0 0
          %1399 = vmatpush1.bf16.msra.mxu0 0
          %1400 = vmatprep.subr.bf16.mxu0 0
          %1401 = vmatpush1.bf16.msra.mxu0 0
          %1402 = vmatprep.subr.bf16.mxu0 %v1153
          %1403 = vmatpush1.bf16.msra.mxu0 %v1152
          %1404 = vmatprep.subr.bf16.mxu0 %v1121
          %1405 = vmatpush1.bf16.msra.mxu0 %v1120
          %1406 = vmatprep.subr.bf16.mxu0 %v1089
          %1407 = vmatpush1.bf16.msra.mxu0 %v1088
          %1408 = vmatprep.subr.bf16.mxu0 %v1057
          %1409 = vmatpush1.bf16.msra.mxu0 %v1056
          %1410 = vmatprep.subr.bf16.mxu0 0
          %1411 = vmatpush2.bf16.msra.mxu0 0
          %1412 = vmatprep.subr.bf16.mxu0 0
          %1413 = vmatpush2.bf16.msra.mxu0 0
          %1414 = vmatprep.subr.bf16.mxu0 0
          %1415 = vmatpush2.bf16.msra.mxu0 0
          %1416 = vmatprep.subr.bf16.mxu0 0
          %1417 = vmatpush2.bf16.msra.mxu0 0
          %1418 = vmatprep.subr.bf16.mxu0 0
          %1419 = vmatpush2.bf16.msra.mxu0 0
          %1420 = vmatprep.subr.bf16.mxu0 0
          %1421 = vmatpush2.bf16.msra.mxu0 0
          %1422 = vmatprep.subr.bf16.mxu0 0
          %1423 = vmatpush2.bf16.msra.mxu0 0
          %1424 = vmatprep.subr.bf16.mxu0 0
          %1425 = vmatpush2.bf16.msra.mxu0 0
          %1426 = vmatprep.mubr.bf16.mxu0 0
          %1427 = vmatmul.mubr.bf16.gmra.mxu0 %v1310
          %v1428 = vpop.f32.mrf.mxu0
          %v1429 = vadd.f32 %v527, %v1428
          %v1430 = vpop.f32.mrf.mxu0
          %v1431 = vadd.f32 %v531, %v1430
          %v1432 = vpop.f32.mrf.mxu0
          %v1433 = vpop.f32.mrf.mxu0
          %1434 = vdwg.mxu0
          %1435 = vmatprep.subr.bf16.mxu0 0
          %1436 = vmatpush1.bf16.msra.mxu0 0
          %1437 = vmatprep.subr.bf16.mxu0 0
          %1438 = vmatpush1.bf16.msra.mxu0 0
          %1439 = vmatprep.subr.bf16.mxu0 0
          %1440 = vmatpush1.bf16.msra.mxu0 0
          %1441 = vmatprep.subr.bf16.mxu0 0
          %1442 = vmatpush1.bf16.msra.mxu0 0
          %1443 = vmatprep.subr.bf16.mxu0 %v1155
          %1444 = vmatpush1.bf16.msra.mxu0 %v1154
          %1445 = vmatprep.subr.bf16.mxu0 %v1123
          %1446 = vmatpush1.bf16.msra.mxu0 %v1122
          %1447 = vmatprep.subr.bf16.mxu0 %v1091
          %1448 = vmatpush1.bf16.msra.mxu0 %v1090
          %1449 = vmatprep.subr.bf16.mxu0 %v1059
          %1450 = vmatpush1.bf16.msra.mxu0 %v1058
          %1451 = vmatprep.subr.bf16.mxu0 0
          %1452 = vmatpush2.bf16.msra.mxu0 0
          %1453 = vmatprep.subr.bf16.mxu0 0
          %1454 = vmatpush2.bf16.msra.mxu0 0
          %1455 = vmatprep.subr.bf16.mxu0 0
          %1456 = vmatpush2.bf16.msra.mxu0 0
          %1457 = vmatprep.subr.bf16.mxu0 0
          %1458 = vmatpush2.bf16.msra.mxu0 0
          %1459 = vmatprep.subr.bf16.mxu0 0
          %1460 = vmatpush2.bf16.msra.mxu0 0
          %1461 = vmatprep.subr.bf16.mxu0 0
          %1462 = vmatpush2.bf16.msra.mxu0 0
          %1463 = vmatprep.subr.bf16.mxu0 0
          %1464 = vmatpush2.bf16.msra.mxu0 0
          %1465 = vmatprep.subr.bf16.mxu0 0
          %1466 = vmatpush2.bf16.msra.mxu0 0
          %1467 = vmatprep.mubr.bf16.mxu0 0
          %1468 = vmatmul.mubr.bf16.gmra.mxu0 %v1310
          %v1469 = vpop.f32.mrf.mxu0
          %v1470 = vadd.f32 %v535, %v1469
          %v1471 = vpop.f32.mrf.mxu0
          %v1472 = vadd.f32 %v539, %v1471
          %v1473 = vpop.f32.mrf.mxu0
          %v1474 = vpop.f32.mrf.mxu0
          %1475 = vdwg.mxu0
          %1476 = vmatprep.subr.bf16.mxu0 0
          %1477 = vmatpush1.bf16.msra.mxu0 0
          %1478 = vmatprep.subr.bf16.mxu0 0
          %1479 = vmatpush1.bf16.msra.mxu0 0
          %1480 = vmatprep.subr.bf16.mxu0 0
          %1481 = vmatpush1.bf16.msra.mxu0 0
          %1482 = vmatprep.subr.bf16.mxu0 0
          %1483 = vmatpush1.bf16.msra.mxu0 0
          %1484 = vmatprep.subr.bf16.mxu0 %v1157
          %1485 = vmatpush1.bf16.msra.mxu0 %v1156
          %1486 = vmatprep.subr.bf16.mxu0 %v1125
          %1487 = vmatpush1.bf16.msra.mxu0 %v1124
          %1488 = vmatprep.subr.bf16.mxu0 %v1093
          %1489 = vmatpush1.bf16.msra.mxu0 %v1092
          %1490 = vmatprep.subr.bf16.mxu0 %v1061
          %1491 = vmatpush1.bf16.msra.mxu0 %v1060
          %1492 = vmatprep.subr.bf16.mxu0 0
          %1493 = vmatpush2.bf16.msra.mxu0 0
          %1494 = vmatprep.subr.bf16.mxu0 0
          %1495 = vmatpush2.bf16.msra.mxu0 0
          %1496 = vmatprep.subr.bf16.mxu0 0
          %1497 = vmatpush2.bf16.msra.mxu0 0
          %1498 = vmatprep.subr.bf16.mxu0 0
          %1499 = vmatpush2.bf16.msra.mxu0 0
          %1500 = vmatprep.subr.bf16.mxu0 0
          %1501 = vmatpush2.bf16.msra.mxu0 0
          %1502 = vmatprep.subr.bf16.mxu0 0
          %1503 = vmatpush2.bf16.msra.mxu0 0
          %1504 = vmatprep.subr.bf16.mxu0 0
          %1505 = vmatpush2.bf16.msra.mxu0 0
          %1506 = vmatprep.subr.bf16.mxu0 0
          %1507 = vmatpush2.bf16.msra.mxu0 0
          %1508 = vmatprep.mubr.bf16.mxu0 0
          %1509 = vmatmul.mubr.bf16.gmra.mxu0 %v1310
          %v1510 = vpop.f32.mrf.mxu0
          %v1511 = vadd.f32 %v543, %v1510
          %v1512 = vpop.f32.mrf.mxu0
          %v1513 = vadd.f32 %v547, %v1512
          %v1514 = vpop.f32.mrf.mxu0
          %v1515 = vpop.f32.mrf.mxu0
          %1516 = vdwg.mxu0
          %1517 = vmatprep.subr.bf16.mxu0 0
          %1518 = vmatpush1.bf16.msra.mxu0 0
          %1519 = vmatprep.subr.bf16.mxu0 0
          %1520 = vmatpush1.bf16.msra.mxu0 0
          %1521 = vmatprep.subr.bf16.mxu0 0
          %1522 = vmatpush1.bf16.msra.mxu0 0
          %1523 = vmatprep.subr.bf16.mxu0 0
          %1524 = vmatpush1.bf16.msra.mxu0 0
          %1525 = vmatprep.subr.bf16.mxu0 %v1159
          %1526 = vmatpush1.bf16.msra.mxu0 %v1158
          %1527 = vmatprep.subr.bf16.mxu0 %v1127
          %1528 = vmatpush1.bf16.msra.mxu0 %v1126
          %1529 = vmatprep.subr.bf16.mxu0 %v1095
          %1530 = vmatpush1.bf16.msra.mxu0 %v1094
          %1531 = vmatprep.subr.bf16.mxu0 %v1063
          %1532 = vmatpush1.bf16.msra.mxu0 %v1062
          %1533 = vmatprep.subr.bf16.mxu0 0
          %1534 = vmatpush2.bf16.msra.mxu0 0
          %1535 = vmatprep.subr.bf16.mxu0 0
          %1536 = vmatpush2.bf16.msra.mxu0 0
          %1537 = vmatprep.subr.bf16.mxu0 0
          %1538 = vmatpush2.bf16.msra.mxu0 0
          %1539 = vmatprep.subr.bf16.mxu0 0
          %1540 = vmatpush2.bf16.msra.mxu0 0
          %1541 = vmatprep.subr.bf16.mxu0 0
          %1542 = vmatpush2.bf16.msra.mxu0 0
          %1543 = vmatprep.subr.bf16.mxu0 0
          %1544 = vmatpush2.bf16.msra.mxu0 0
          %1545 = vmatprep.subr.bf16.mxu0 0
          %1546 = vmatpush2.bf16.msra.mxu0 0
          %1547 = vmatprep.subr.bf16.mxu0 0
          %1548 = vmatpush2.bf16.msra.mxu0 0
          %1549 = vmatprep.mubr.bf16.mxu0 0
          %1550 = vmatmul.mubr.bf16.gmra.mxu0 %v1310
          %v1551 = vpop.f32.mrf.mxu0
          %v1552 = vadd.f32 %v551, %v1551
          %v1553 = vpop.f32.mrf.mxu0
          %v1554 = vadd.f32 %v555, %v1553
          %v1555 = vpop.f32.mrf.mxu0
          %v1556 = vpop.f32.mrf.mxu0
          %1557 = vdwg.mxu0
          %1558 = vmatprep.subr.bf16.mxu0 0
          %1559 = vmatpush1.bf16.msra.mxu0 0
          %1560 = vmatprep.subr.bf16.mxu0 0
          %1561 = vmatpush1.bf16.msra.mxu0 0
          %1562 = vmatprep.subr.bf16.mxu0 0
          %1563 = vmatpush1.bf16.msra.mxu0 0
          %1564 = vmatprep.subr.bf16.mxu0 0
          %1565 = vmatpush1.bf16.msra.mxu0 0
          %1566 = vmatprep.subr.bf16.mxu0 %v1161
          %1567 = vmatpush1.bf16.msra.mxu0 %v1160
          %1568 = vmatprep.subr.bf16.mxu0 %v1129
          %1569 = vmatpush1.bf16.msra.mxu0 %v1128
          %1570 = vmatprep.subr.bf16.mxu0 %v1097
          %1571 = vmatpush1.bf16.msra.mxu0 %v1096
          %1572 = vmatprep.subr.bf16.mxu0 %v1065
          %1573 = vmatpush1.bf16.msra.mxu0 %v1064
          %1574 = vmatprep.subr.bf16.mxu0 0
          %1575 = vmatpush2.bf16.msra.mxu0 0
          %1576 = vmatprep.subr.bf16.mxu0 0
          %1577 = vmatpush2.bf16.msra.mxu0 0
          %1578 = vmatprep.subr.bf16.mxu0 0
          %1579 = vmatpush2.bf16.msra.mxu0 0
          %1580 = vmatprep.subr.bf16.mxu0 0
          %1581 = vmatpush2.bf16.msra.mxu0 0
          %1582 = vmatprep.subr.bf16.mxu0 0
          %1583 = vmatpush2.bf16.msra.mxu0 0
          %1584 = vmatprep.subr.bf16.mxu0 0
          %1585 = vmatpush2.bf16.msra.mxu0 0
          %1586 = vmatprep.subr.bf16.mxu0 0
          %1587 = vmatpush2.bf16.msra.mxu0 0
          %1588 = vmatprep.subr.bf16.mxu0 0
          %1589 = vmatpush2.bf16.msra.mxu0 0
          %1590 = vmatprep.mubr.bf16.mxu0 0
          %1591 = vmatmul.mubr.bf16.gmra.mxu0 %v1310
          %v1592 = vpop.f32.mrf.mxu0
          %v1593 = vadd.f32 %v559, %v1592
          %v1594 = vpop.f32.mrf.mxu0
          %v1595 = vadd.f32 %v563, %v1594
          %v1596 = vpop.f32.mrf.mxu0
          %v1597 = vpop.f32.mrf.mxu0
          %1598 = vdwg.mxu0
          %1599 = vmatprep.subr.bf16.mxu0 0
          %1600 = vmatpush1.bf16.msra.mxu0 0
          %1601 = vmatprep.subr.bf16.mxu0 0
          %1602 = vmatpush1.bf16.msra.mxu0 0
          %1603 = vmatprep.subr.bf16.mxu0 0
          %1604 = vmatpush1.bf16.msra.mxu0 0
          %1605 = vmatprep.subr.bf16.mxu0 0
          %1606 = vmatpush1.bf16.msra.mxu0 0
          %1607 = vmatprep.subr.bf16.mxu0 %v1163
          %1608 = vmatpush1.bf16.msra.mxu0 %v1162
          %1609 = vmatprep.subr.bf16.mxu0 %v1131
          %1610 = vmatpush1.bf16.msra.mxu0 %v1130
          %1611 = vmatprep.subr.bf16.mxu0 %v1099
          %1612 = vmatpush1.bf16.msra.mxu0 %v1098
          %1613 = vmatprep.subr.bf16.mxu0 %v1067
          %1614 = vmatpush1.bf16.msra.mxu0 %v1066
          %1615 = vmatprep.subr.bf16.mxu0 0
          %1616 = vmatpush2.bf16.msra.mxu0 0
          %1617 = vmatprep.subr.bf16.mxu0 0
          %1618 = vmatpush2.bf16.msra.mxu0 0
          %1619 = vmatprep.subr.bf16.mxu0 0
          %1620 = vmatpush2.bf16.msra.mxu0 0
          %1621 = vmatprep.subr.bf16.mxu0 0
          %1622 = vmatpush2.bf16.msra.mxu0 0
          %1623 = vmatprep.subr.bf16.mxu0 0
          %1624 = vmatpush2.bf16.msra.mxu0 0
          %1625 = vmatprep.subr.bf16.mxu0 0
          %1626 = vmatpush2.bf16.msra.mxu0 0
          %1627 = vmatprep.subr.bf16.mxu0 0
          %1628 = vmatpush2.bf16.msra.mxu0 0
          %1629 = vmatprep.subr.bf16.mxu0 0
          %1630 = vmatpush2.bf16.msra.mxu0 0
          %1631 = vmatprep.mubr.bf16.mxu0 0
          %1632 = vmatmul.mubr.bf16.gmra.mxu0 %v1310
          %v1633 = vpop.f32.mrf.mxu0
          %v1634 = vadd.f32 %v567, %v1633
          %v1635 = vpop.f32.mrf.mxu0
          %v1636 = vadd.f32 %v571, %v1635
          %v1637 = vpop.f32.mrf.mxu0
          %v1638 = vpop.f32.mrf.mxu0
          %1639 = vdwg.mxu0
          %1640 = vmatprep.subr.bf16.mxu0 0
          %1641 = vmatpush1.bf16.msra.mxu0 0
          %1642 = vmatprep.subr.bf16.mxu0 0
          %1643 = vmatpush1.bf16.msra.mxu0 0
          %1644 = vmatprep.subr.bf16.mxu0 0
          %1645 = vmatpush1.bf16.msra.mxu0 0
          %1646 = vmatprep.subr.bf16.mxu0 0
          %1647 = vmatpush1.bf16.msra.mxu0 0
          %1648 = vmatprep.subr.bf16.mxu0 %v1165
          %1649 = vmatpush1.bf16.msra.mxu0 %v1164
          %1650 = vmatprep.subr.bf16.mxu0 %v1133
          %1651 = vmatpush1.bf16.msra.mxu0 %v1132
          %1652 = vmatprep.subr.bf16.mxu0 %v1101
          %1653 = vmatpush1.bf16.msra.mxu0 %v1100
          %1654 = vmatprep.subr.bf16.mxu0 %v1069
          %1655 = vmatpush1.bf16.msra.mxu0 %v1068
          %1656 = vmatprep.subr.bf16.mxu0 0
          %1657 = vmatpush2.bf16.msra.mxu0 0
          %1658 = vmatprep.subr.bf16.mxu0 0
          %1659 = vmatpush2.bf16.msra.mxu0 0
          %1660 = vmatprep.subr.bf16.mxu0 0
          %1661 = vmatpush2.bf16.msra.mxu0 0
          %1662 = vmatprep.subr.bf16.mxu0 0
          %1663 = vmatpush2.bf16.msra.mxu0 0
          %1664 = vmatprep.subr.bf16.mxu0 0
          %1665 = vmatpush2.bf16.msra.mxu0 0
          %1666 = vmatprep.subr.bf16.mxu0 0
          %1667 = vmatpush2.bf16.msra.mxu0 0
          %1668 = vmatprep.subr.bf16.mxu0 0
          %1669 = vmatpush2.bf16.msra.mxu0 0
          %1670 = vmatprep.subr.bf16.mxu0 0
          %1671 = vmatpush2.bf16.msra.mxu0 0
          %1672 = vmatprep.mubr.bf16.mxu0 0
          %1673 = vmatmul.mubr.bf16.gmra.mxu0 %v1310
          %v1674 = vpop.f32.mrf.mxu0
          %v1675 = vadd.f32 %v575, %v1674
          %v1676 = vpop.f32.mrf.mxu0
          %v1677 = vadd.f32 %v579, %v1676
          %v1678 = vpop.f32.mrf.mxu0
          %v1679 = vpop.f32.mrf.mxu0
          %1680 = vdwg.mxu0
          %1681 = vmatprep.subr.bf16.mxu0 0
          %1682 = vmatpush1.bf16.msra.mxu0 0
          %1683 = vmatprep.subr.bf16.mxu0 0
          %1684 = vmatpush1.bf16.msra.mxu0 0
          %1685 = vmatprep.subr.bf16.mxu0 0
          %1686 = vmatpush1.bf16.msra.mxu0 0
          %1687 = vmatprep.subr.bf16.mxu0 0
          %1688 = vmatpush1.bf16.msra.mxu0 0
          %1689 = vmatprep.subr.bf16.mxu0 %v1167
          %1690 = vmatpush1.bf16.msra.mxu0 %v1166
          %1691 = vmatprep.subr.bf16.mxu0 %v1135
          %1692 = vmatpush1.bf16.msra.mxu0 %v1134
          %1693 = vmatprep.subr.bf16.mxu0 %v1103
          %1694 = vmatpush1.bf16.msra.mxu0 %v1102
          %1695 = vmatprep.subr.bf16.mxu0 %v1071
          %1696 = vmatpush1.bf16.msra.mxu0 %v1070
          %1697 = vmatprep.subr.bf16.mxu0 0
          %1698 = vmatpush2.bf16.msra.mxu0 0
          %1699 = vmatprep.subr.bf16.mxu0 0
          %1700 = vmatpush2.bf16.msra.mxu0 0
          %1701 = vmatprep.subr.bf16.mxu0 0
          %1702 = vmatpush2.bf16.msra.mxu0 0
          %1703 = vmatprep.subr.bf16.mxu0 0
          %1704 = vmatpush2.bf16.msra.mxu0 0
          %1705 = vmatprep.subr.bf16.mxu0 0
          %1706 = vmatpush2.bf16.msra.mxu0 0
          %1707 = vmatprep.subr.bf16.mxu0 0
          %1708 = vmatpush2.bf16.msra.mxu0 0
          %1709 = vmatprep.subr.bf16.mxu0 0
          %1710 = vmatpush2.bf16.msra.mxu0 0
          %1711 = vmatprep.subr.bf16.mxu0 0
          %1712 = vmatpush2.bf16.msra.mxu0 0
          %1713 = vmatprep.mubr.bf16.mxu0 0
          %1714 = vmatmul.mubr.bf16.gmra.mxu0 %v1310
          %v1715 = vpop.f32.mrf.mxu0
          %v1716 = vadd.f32 %v583, %v1715
          %v1717 = vpop.f32.mrf.mxu0
          %v1718 = vadd.f32 %v587, %v1717
          %v1719 = vpop.f32.mrf.mxu0
          %v1720 = vpop.f32.mrf.mxu0
          %1721 = vdwg.mxu0
          %1722 = vmatprep.subr.bf16.mxu0 0
          %1723 = vmatpush1.bf16.msra.mxu0 0
          %1724 = vmatprep.subr.bf16.mxu0 0
          %1725 = vmatpush1.bf16.msra.mxu0 0
          %1726 = vmatprep.subr.bf16.mxu0 0
          %1727 = vmatpush1.bf16.msra.mxu0 0
          %1728 = vmatprep.subr.bf16.mxu0 0
          %1729 = vmatpush1.bf16.msra.mxu0 0
          %1730 = vmatprep.subr.bf16.mxu0 %v1169
          %1731 = vmatpush1.bf16.msra.mxu0 %v1168
          %1732 = vmatprep.subr.bf16.mxu0 %v1137
          %1733 = vmatpush1.bf16.msra.mxu0 %v1136
          %1734 = vmatprep.subr.bf16.mxu0 %v1105
          %1735 = vmatpush1.bf16.msra.mxu0 %v1104
          %1736 = vmatprep.subr.bf16.mxu0 %v1073
          %1737 = vmatpush1.bf16.msra.mxu0 %v1072
          %1738 = vmatprep.subr.bf16.mxu0 0
          %1739 = vmatpush2.bf16.msra.mxu0 0
          %1740 = vmatprep.subr.bf16.mxu0 0
          %1741 = vmatpush2.bf16.msra.mxu0 0
          %1742 = vmatprep.subr.bf16.mxu0 0
          %1743 = vmatpush2.bf16.msra.mxu0 0
          %1744 = vmatprep.subr.bf16.mxu0 0
          %1745 = vmatpush2.bf16.msra.mxu0 0
          %1746 = vmatprep.subr.bf16.mxu0 0
          %1747 = vmatpush2.bf16.msra.mxu0 0
          %1748 = vmatprep.subr.bf16.mxu0 0
          %1749 = vmatpush2.bf16.msra.mxu0 0
          %1750 = vmatprep.subr.bf16.mxu0 0
          %1751 = vmatpush2.bf16.msra.mxu0 0
          %1752 = vmatprep.subr.bf16.mxu0 0
          %1753 = vmatpush2.bf16.msra.mxu0 0
          %1754 = vmatprep.mubr.bf16.mxu0 0
          %1755 = vmatmul.mubr.bf16.gmra.mxu0 %v1310
          %v1756 = vpop.f32.mrf.mxu0
          %v1757 = vadd.f32 %v591, %v1756
          %v1758 = vpop.f32.mrf.mxu0
          %v1759 = vadd.f32 %v595, %v1758
          %v1760 = vpop.f32.mrf.mxu0
          %v1761 = vpop.f32.mrf.mxu0
          %1762 = vdwg.mxu0
          %1763 = vmatprep.subr.bf16.mxu0 0
          %1764 = vmatpush1.bf16.msra.mxu0 0
          %1765 = vmatprep.subr.bf16.mxu0 0
          %1766 = vmatpush1.bf16.msra.mxu0 0
          %1767 = vmatprep.subr.bf16.mxu0 0
          %1768 = vmatpush1.bf16.msra.mxu0 0
          %1769 = vmatprep.subr.bf16.mxu0 0
          %1770 = vmatpush1.bf16.msra.mxu0 0
          %1771 = vmatprep.subr.bf16.mxu0 %v1171
          %1772 = vmatpush1.bf16.msra.mxu0 %v1170
          %1773 = vmatprep.subr.bf16.mxu0 %v1139
          %1774 = vmatpush1.bf16.msra.mxu0 %v1138
          %1775 = vmatprep.subr.bf16.mxu0 %v1107
          %1776 = vmatpush1.bf16.msra.mxu0 %v1106
          %1777 = vmatprep.subr.bf16.mxu0 %v1075
          %1778 = vmatpush1.bf16.msra.mxu0 %v1074
          %1779 = vmatprep.subr.bf16.mxu0 0
          %1780 = vmatpush2.bf16.msra.mxu0 0
          %1781 = vmatprep.subr.bf16.mxu0 0
          %1782 = vmatpush2.bf16.msra.mxu0 0
          %1783 = vmatprep.subr.bf16.mxu0 0
          %1784 = vmatpush2.bf16.msra.mxu0 0
          %1785 = vmatprep.subr.bf16.mxu0 0
          %1786 = vmatpush2.bf16.msra.mxu0 0
          %1787 = vmatprep.subr.bf16.mxu0 0
          %1788 = vmatpush2.bf16.msra.mxu0 0
          %1789 = vmatprep.subr.bf16.mxu0 0
          %1790 = vmatpush2.bf16.msra.mxu0 0
          %1791 = vmatprep.subr.bf16.mxu0 0
          %1792 = vmatpush2.bf16.msra.mxu0 0
          %1793 = vmatprep.subr.bf16.mxu0 0
          %1794 = vmatpush2.bf16.msra.mxu0 0
          %1795 = vmatprep.mubr.bf16.mxu0 0
          %1796 = vmatmul.mubr.bf16.gmra.mxu0 %v1310
          %v1797 = vpop.f32.mrf.mxu0
          %v1798 = vadd.f32 %v599, %v1797
          %v1799 = vpop.f32.mrf.mxu0
          %v1800 = vadd.f32 %v603, %v1799
          %v1801 = vpop.f32.mrf.mxu0
          %v1802 = vpop.f32.mrf.mxu0
          %1803 = vdwg.mxu0
          %1804 = vmatprep.subr.bf16.mxu0 0
          %1805 = vmatpush1.bf16.msra.mxu0 0
          %1806 = vmatprep.subr.bf16.mxu0 0
          %1807 = vmatpush1.bf16.msra.mxu0 0
          %1808 = vmatprep.subr.bf16.mxu0 0
          %1809 = vmatpush1.bf16.msra.mxu0 0
          %1810 = vmatprep.subr.bf16.mxu0 0
          %1811 = vmatpush1.bf16.msra.mxu0 0
          %1812 = vmatprep.subr.bf16.mxu0 %v1173
          %1813 = vmatpush1.bf16.msra.mxu0 %v1172
          %1814 = vmatprep.subr.bf16.mxu0 %v1141
          %1815 = vmatpush1.bf16.msra.mxu0 %v1140
          %1816 = vmatprep.subr.bf16.mxu0 %v1109
          %1817 = vmatpush1.bf16.msra.mxu0 %v1108
          %1818 = vmatprep.subr.bf16.mxu0 %v1077
          %1819 = vmatpush1.bf16.msra.mxu0 %v1076
          %1820 = vmatprep.subr.bf16.mxu0 0
          %1821 = vmatpush2.bf16.msra.mxu0 0
          %1822 = vmatprep.subr.bf16.mxu0 0
          %1823 = vmatpush2.bf16.msra.mxu0 0
          %1824 = vmatprep.subr.bf16.mxu0 0
          %1825 = vmatpush2.bf16.msra.mxu0 0
          %1826 = vmatprep.subr.bf16.mxu0 0
          %1827 = vmatpush2.bf16.msra.mxu0 0
          %1828 = vmatprep.subr.bf16.mxu0 0
          %1829 = vmatpush2.bf16.msra.mxu0 0
          %1830 = vmatprep.subr.bf16.mxu0 0
          %1831 = vmatpush2.bf16.msra.mxu0 0
          %1832 = vmatprep.subr.bf16.mxu0 0
          %1833 = vmatpush2.bf16.msra.mxu0 0
          %1834 = vmatprep.subr.bf16.mxu0 0
          %1835 = vmatpush2.bf16.msra.mxu0 0
          %1836 = vmatprep.mubr.bf16.mxu0 0
          %1837 = vmatmul.mubr.bf16.gmra.mxu0 %v1310
          %v1838 = vpop.f32.mrf.mxu0
          %v1839 = vadd.f32 %v607, %v1838
          %v1840 = vpop.f32.mrf.mxu0
          %v1841 = vadd.f32 %v611, %v1840
          %v1842 = vpop.f32.mrf.mxu0
          %v1843 = vpop.f32.mrf.mxu0
          %1844 = vdwg.mxu0
          %1845 = vmatprep.subr.bf16.mxu0 0
          %1846 = vmatpush1.bf16.msra.mxu0 0
          %1847 = vmatprep.subr.bf16.mxu0 0
          %1848 = vmatpush1.bf16.msra.mxu0 0
          %1849 = vmatprep.subr.bf16.mxu0 0
          %1850 = vmatpush1.bf16.msra.mxu0 0
          %1851 = vmatprep.subr.bf16.mxu0 0
          %1852 = vmatpush1.bf16.msra.mxu0 0
          %1853 = vmatprep.subr.bf16.mxu0 %v1175
          %1854 = vmatpush1.bf16.msra.mxu0 %v1174
          %1855 = vmatprep.subr.bf16.mxu0 %v1143
          %1856 = vmatpush1.bf16.msra.mxu0 %v1142
          %1857 = vmatprep.subr.bf16.mxu0 %v1111
          %1858 = vmatpush1.bf16.msra.mxu0 %v1110
          %1859 = vmatprep.subr.bf16.mxu0 %v1079
          %1860 = vmatpush1.bf16.msra.mxu0 %v1078
          %1861 = vmatprep.subr.bf16.mxu0 0
          %1862 = vmatpush2.bf16.msra.mxu0 0
          %1863 = vmatprep.subr.bf16.mxu0 0
          %1864 = vmatpush2.bf16.msra.mxu0 0
          %1865 = vmatprep.subr.bf16.mxu0 0
          %1866 = vmatpush2.bf16.msra.mxu0 0
          %1867 = vmatprep.subr.bf16.mxu0 0
          %1868 = vmatpush2.bf16.msra.mxu0 0
          %1869 = vmatprep.subr.bf16.mxu0 0
          %1870 = vmatpush2.bf16.msra.mxu0 0
          %1871 = vmatprep.subr.bf16.mxu0 0
          %1872 = vmatpush2.bf16.msra.mxu0 0
          %1873 = vmatprep.subr.bf16.mxu0 0
          %1874 = vmatpush2.bf16.msra.mxu0 0
          %1875 = vmatprep.subr.bf16.mxu0 0
          %1876 = vmatpush2.bf16.msra.mxu0 0
          %1877 = vmatprep.mubr.bf16.mxu0 0
          %1878 = vmatmul.mubr.bf16.gmra.mxu0 %v1310
          %v1879 = vpop.f32.mrf.mxu0
          %v1880 = vadd.f32 %v615, %v1879
          %v1881 = vpop.f32.mrf.mxu0
          %v1882 = vadd.f32 %v619, %v1881
          %v1883 = vpop.f32.mrf.mxu0
          %v1884 = vpop.f32.mrf.mxu0
          %1885 = vdwg.mxu0
          %1886 = vmatprep.subr.bf16.mxu0 0
          %1887 = vmatpush1.bf16.msra.mxu0 0
          %1888 = vmatprep.subr.bf16.mxu0 0
          %1889 = vmatpush1.bf16.msra.mxu0 0
          %1890 = vmatprep.subr.bf16.mxu0 0
          %1891 = vmatpush1.bf16.msra.mxu0 0
          %1892 = vmatprep.subr.bf16.mxu0 0
          %1893 = vmatpush1.bf16.msra.mxu0 0
          %1894 = vmatprep.subr.bf16.mxu0 %v1177
          %1895 = vmatpush1.bf16.msra.mxu0 %v1176
          %1896 = vmatprep.subr.bf16.mxu0 %v1145
          %1897 = vmatpush1.bf16.msra.mxu0 %v1144
          %1898 = vmatprep.subr.bf16.mxu0 %v1113
          %1899 = vmatpush1.bf16.msra.mxu0 %v1112
          %1900 = vmatprep.subr.bf16.mxu0 %v1081
          %1901 = vmatpush1.bf16.msra.mxu0 %v1080
          %1902 = vmatprep.subr.bf16.mxu0 0
          %1903 = vmatpush2.bf16.msra.mxu0 0
          %1904 = vmatprep.subr.bf16.mxu0 0
          %1905 = vmatpush2.bf16.msra.mxu0 0
          %1906 = vmatprep.subr.bf16.mxu0 0
          %1907 = vmatpush2.bf16.msra.mxu0 0
          %1908 = vmatprep.subr.bf16.mxu0 0
          %1909 = vmatpush2.bf16.msra.mxu0 0
          %1910 = vmatprep.subr.bf16.mxu0 0
          %1911 = vmatpush2.bf16.msra.mxu0 0
          %1912 = vmatprep.subr.bf16.mxu0 0
          %1913 = vmatpush2.bf16.msra.mxu0 0
          %1914 = vmatprep.subr.bf16.mxu0 0
          %1915 = vmatpush2.bf16.msra.mxu0 0
          %1916 = vmatprep.subr.bf16.mxu0 0
          %1917 = vmatpush2.bf16.msra.mxu0 0
          %1918 = vmatprep.mubr.bf16.mxu0 0
          %1919 = vmatmul.mubr.bf16.gmra.mxu0 %v1310
          %v1920 = vpop.f32.mrf.mxu0
          %v1921 = vadd.f32 %v623, %v1920
          %v1922 = vpop.f32.mrf.mxu0
          %v1923 = vadd.f32 %v627, %v1922
          %v1924 = vpop.f32.mrf.mxu0
          %v1925 = vpop.f32.mrf.mxu0
          %1926 = vdwg.mxu0
          %1927 = vmatprep.subr.bf16.mxu0 0
          %1928 = vmatpush1.bf16.msra.mxu0 0
          %1929 = vmatprep.subr.bf16.mxu0 0
          %1930 = vmatpush1.bf16.msra.mxu0 0
          %1931 = vmatprep.subr.bf16.mxu0 0
          %1932 = vmatpush1.bf16.msra.mxu0 0
          %1933 = vmatprep.subr.bf16.mxu0 0
          %1934 = vmatpush1.bf16.msra.mxu0 0
          %1935 = vmatprep.subr.bf16.mxu0 %v1179
          %1936 = vmatpush1.bf16.msra.mxu0 %v1178
          %1937 = vmatprep.subr.bf16.mxu0 %v1147
          %1938 = vmatpush1.bf16.msra.mxu0 %v1146
          %1939 = vmatprep.subr.bf16.mxu0 %v1115
          %1940 = vmatpush1.bf16.msra.mxu0 %v1114
          %1941 = vmatprep.subr.bf16.mxu0 %v1083
          %1942 = vmatpush1.bf16.msra.mxu0 %v1082
          %1943 = vmatprep.subr.bf16.mxu0 0
          %1944 = vmatpush2.bf16.msra.mxu0 0
          %1945 = vmatprep.subr.bf16.mxu0 0
          %1946 = vmatpush2.bf16.msra.mxu0 0
          %1947 = vmatprep.subr.bf16.mxu0 0
          %1948 = vmatpush2.bf16.msra.mxu0 0
          %1949 = vmatprep.subr.bf16.mxu0 0
          %1950 = vmatpush2.bf16.msra.mxu0 0
          %1951 = vmatprep.subr.bf16.mxu0 0
          %1952 = vmatpush2.bf16.msra.mxu0 0
          %1953 = vmatprep.subr.bf16.mxu0 0
          %1954 = vmatpush2.bf16.msra.mxu0 0
          %1955 = vmatprep.subr.bf16.mxu0 0
          %1956 = vmatpush2.bf16.msra.mxu0 0
          %1957 = vmatprep.subr.bf16.mxu0 0
          %1958 = vmatpush2.bf16.msra.mxu0 0
          %1959 = vmatprep.mubr.bf16.mxu0 0
          %1960 = vmatmul.mubr.bf16.gmra.mxu0 %v1310
          %v1961 = vpop.f32.mrf.mxu0
          %v1962 = vadd.f32 %v631, %v1961
          %v1963 = vpop.f32.mrf.mxu0
          %v1964 = vadd.f32 %v635, %v1963
          %v1965 = vpop.f32.mrf.mxu0
          %v1966 = vpop.f32.mrf.mxu0
          %1967 = vdwg.mxu0
          %v1968 = vmax.f32 %v1347, 0.0
          %v1969 = vmax.f32 %v1349, 0.0
          %v1970 = vmax.f32 %v1388, 0.0
          %v1971 = vmax.f32 %v1390, 0.0
          %v1972 = vmax.f32 %v1429, 0.0
          %v1973 = vmax.f32 %v1431, 0.0
          %v1974 = vmax.f32 %v1470, 0.0
          %v1975 = vmax.f32 %v1472, 0.0
          %v1976 = vmax.f32 %v1511, 0.0
          %v1977 = vmax.f32 %v1513, 0.0
          %v1978 = vmax.f32 %v1552, 0.0
          %v1979 = vmax.f32 %v1554, 0.0
          %v1980 = vmax.f32 %v1593, 0.0
          %v1981 = vmax.f32 %v1595, 0.0
          %v1982 = vmax.f32 %v1634, 0.0
          %v1983 = vmax.f32 %v1636, 0.0
          %v1984 = vmax.f32 %v1675, 0.0
          %v1985 = vmax.f32 %v1677, 0.0
          %v1986 = vmax.f32 %v1716, 0.0
          %v1987 = vmax.f32 %v1718, 0.0
          %v1988 = vmax.f32 %v1757, 0.0
          %v1989 = vmax.f32 %v1759, 0.0
          %v1990 = vmax.f32 %v1798, 0.0
          %v1991 = vmax.f32 %v1800, 0.0
          %v1992 = vmax.f32 %v1839, 0.0
          %v1993 = vmax.f32 %v1841, 0.0
          %v1994 = vmax.f32 %v1880, 0.0
          %v1995 = vmax.f32 %v1882, 0.0
          %v1996 = vmax.f32 %v1921, 0.0
          %v1997 = vmax.f32 %v1923, 0.0
          %v1998 = vmax.f32 %v1962, 0.0
          %v1999 = vmax.f32 %v1964, 0.0
          %v2000 = vpack.c.bf16 %v1968, %v1968
          %v2001 = vpack.c.bf16 %v1969, %v1969
          %v2002 = vpack.c.bf16 %v1970, %v1970
          %v2003 = vpack.c.bf16 %v1971, %v1971
          %v2004 = vpack.c.bf16 %v1972, %v1972
          %v2005 = vpack.c.bf16 %v1973, %v1973
          %v2006 = vpack.c.bf16 %v1974, %v1974
          %v2007 = vpack.c.bf16 %v1975, %v1975
          %v2008 = vpack.c.bf16 %v1976, %v1976
          %v2009 = vpack.c.bf16 %v1977, %v1977
          %v2010 = vpack.c.bf16 %v1978, %v1978
          %v2011 = vpack.c.bf16 %v1979, %v1979
          %v2012 = vpack.c.bf16 %v1980, %v1980
          %v2013 = vpack.c.bf16 %v1981, %v1981
          %v2014 = vpack.c.bf16 %v1982, %v1982
          %v2015 = vpack.c.bf16 %v1983, %v1983
          %v2016 = vpack.c.bf16 %v1984, %v1984
          %v2017 = vpack.c.bf16 %v1985, %v1985
          %v2018 = vpack.c.bf16 %v1986, %v1986
          %v2019 = vpack.c.bf16 %v1987, %v1987
          %v2020 = vpack.c.bf16 %v1988, %v1988
          %v2021 = vpack.c.bf16 %v1989, %v1989
          %v2022 = vpack.c.bf16 %v1990, %v1990
          %v2023 = vpack.c.bf16 %v1991, %v1991
          %v2024 = vpack.c.bf16 %v1992, %v1992
          %v2025 = vpack.c.bf16 %v1993, %v1993
          %v2026 = vpack.c.bf16 %v1994, %v1994
          %v2027 = vpack.c.bf16 %v1995, %v1995
          %v2028 = vpack.c.bf16 %v1996, %v1996
          %v2029 = vpack.c.bf16 %v1997, %v1997
          %v2030 = vpack.c.bf16 %v1998, %v1998
          %v2031 = vpack.c.bf16 %v1999, %v1999
          %v2064 = vunpack.c.l.b16 %v2000
          %v2065 = vunpack.c.l.b16 %v2001
          %v2066 = vunpack.c.l.b16 %v2002
          %v2067 = vunpack.c.l.b16 %v2003
          %v2068 = vunpack.c.l.b16 %v2004
          %v2069 = vunpack.c.l.b16 %v2005
          %v2070 = vunpack.c.l.b16 %v2006
          %v2071 = vunpack.c.l.b16 %v2007
          %v2072 = vunpack.c.l.b16 %v2008
          %v2073 = vunpack.c.l.b16 %v2009
          %v2074 = vunpack.c.l.b16 %v2010
          %v2075 = vunpack.c.l.b16 %v2011
          %v2076 = vunpack.c.l.b16 %v2012
          %v2077 = vunpack.c.l.b16 %v2013
          %v2078 = vunpack.c.l.b16 %v2014
          %v2079 = vunpack.c.l.b16 %v2015
          %v2080 = vunpack.c.l.b16 %v2016
          %v2081 = vunpack.c.l.b16 %v2017
          %v2082 = vunpack.c.l.b16 %v2018
          %v2083 = vunpack.c.l.b16 %v2019
          %v2084 = vunpack.c.l.b16 %v2020
          %v2085 = vunpack.c.l.b16 %v2021
          %v2086 = vunpack.c.l.b16 %v2022
          %v2087 = vunpack.c.l.b16 %v2023
          %v2088 = vunpack.c.l.b16 %v2024
          %v2089 = vunpack.c.l.b16 %v2025
          %v2090 = vunpack.c.l.b16 %v2026
          %v2091 = vunpack.c.l.b16 %v2027
          %v2092 = vunpack.c.l.b16 %v2028
          %v2093 = vunpack.c.l.b16 %v2029
          %v2094 = vunpack.c.l.b16 %v2030
          %v2095 = vunpack.c.l.b16 %v2031
          %v2096 = vpack.c.b16 %v2065, %v2064
          %v2097 = vpack.c.b16 %v2067, %v2066
          %v2098 = vpack.c.b16 %v2069, %v2068
          %v2099 = vpack.c.b16 %v2071, %v2070
          %v2100 = vpack.c.b16 %v2073, %v2072
          %v2101 = vpack.c.b16 %v2075, %v2074
          %v2102 = vpack.c.b16 %v2077, %v2076
          %v2103 = vpack.c.b16 %v2079, %v2078
          %v2104 = vpack.c.b16 %v2081, %v2080
          %v2105 = vpack.c.b16 %v2083, %v2082
          %v2106 = vpack.c.b16 %v2085, %v2084
          %v2107 = vpack.c.b16 %v2087, %v2086
          %v2108 = vpack.c.b16 %v2089, %v2088
          %v2109 = vpack.c.b16 %v2091, %v2090
          %v2110 = vpack.c.b16 %v2093, %v2092
          %v2111 = vpack.c.b16 %v2095, %v2094
          %2128 = vst [vmem:[#allocation2] sm:$0xff] %v2096
          %2129 = vst [vmem:[#allocation2 + $0x8] sm:$0xff] %v2097
          %2130 = vst [vmem:[#allocation2 + $0x10] sm:$0xff] %v2098
          %2131 = vst [vmem:[#allocation2 + $0x18] sm:$0xff] %v2099
          %2132 = vst [vmem:[#allocation2 + $0x20] sm:$0xff] %v2100
          %2133 = vst [vmem:[#allocation2 + $0x28] sm:$0xff] %v2101
          %2134 = vst [vmem:[#allocation2 + $0x30] sm:$0xff] %v2102
          %2135 = vst [vmem:[#allocation2 + $0x38] sm:$0xff] %v2103
          %2136 = vst [vmem:[#allocation2 + $0x40] sm:$0xff] %v2104
          %2137 = vst [vmem:[#allocation2 + $0x48] sm:$0xff] %v2105
          %2138 = vst [vmem:[#allocation2 + $0x50] sm:$0xff] %v2106
          %2139 = vst [vmem:[#allocation2 + $0x58] sm:$0xff] %v2107
          %2140 = vst [vmem:[#allocation2 + $0x60] sm:$0xff] %v2108
          %2141 = vst [vmem:[#allocation2 + $0x68] sm:$0xff] %v2109
          %2142 = vst [vmem:[#allocation2 + $0x70] sm:$0xff] %v2110
          %2143 = vst [vmem:[#allocation2 + $0x78] sm:$0xff] %v2111
          %2144 = vst [vmem:[#allocation3] sm:$0xff] 0.0
          %2145 = vst [vmem:[#allocation3 + $0x8] sm:$0xff] 0.0
          %2146 = vst [vmem:[#allocation3 + $0x10] sm:$0xff] 0.0
          %2147 = vst [vmem:[#allocation3 + $0x18] sm:$0xff] 0.0
          %2148 = vst [vmem:[#allocation3 + $0x20] sm:$0xff] 0.0
          %2149 = vst [vmem:[#allocation3 + $0x28] sm:$0xff] 0.0
          %2150 = vst [vmem:[#allocation3 + $0x30] sm:$0xff] 0.0
          %2151 = vst [vmem:[#allocation3 + $0x38] sm:$0xff] 0.0
          %2152 = vst [vmem:[#allocation3 + $0x40] sm:$0xff] 0.0
          %2153 = vst [vmem:[#allocation3 + $0x48] sm:$0xff] 0.0
          %2154 = vst [vmem:[#allocation3 + $0x50] sm:$0xff] 0.0
          %2155 = vst [vmem:[#allocation3 + $0x58] sm:$0xff] 0.0
          %2156 = vst [vmem:[#allocation3 + $0x60] sm:$0xff] 0.0
          %2157 = vst [vmem:[#allocation3 + $0x68] sm:$0xff] 0.0
          %2158 = vst [vmem:[#allocation3 + $0x70] sm:$0xff] 0.0
          %2159 = vst [vmem:[#allocation3 + $0x78] sm:$0xff] 0.0
          %2160 = vst [vmem:[#allocation3 + $0x80] sm:$0xff] 0.0
          %2161 = vst [vmem:[#allocation3 + $0x88] sm:$0xff] 0.0
          %2162 = vst [vmem:[#allocation3 + $0x90] sm:$0xff] 0.0
          %2163 = vst [vmem:[#allocation3 + $0x98] sm:$0xff] 0.0
          %2164 = vst [vmem:[#allocation3 + $0xa0] sm:$0xff] 0.0
          %2165 = vst [vmem:[#allocation3 + $0xa8] sm:$0xff] 0.0
          %2166 = vst [vmem:[#allocation3 + $0xb0] sm:$0xff] 0.0
          %2167 = vst [vmem:[#allocation3 + $0xb8] sm:$0xff] 0.0
          %2168 = vst [vmem:[#allocation3 + $0xc0] sm:$0xff] 0.0
          %2169 = vst [vmem:[#allocation3 + $0xc8] sm:$0xff] 0.0
          %2170 = vst [vmem:[#allocation3 + $0xd0] sm:$0xff] 0.0
          %2171 = vst [vmem:[#allocation3 + $0xd8] sm:$0xff] 0.0
          %2172 = vst [vmem:[#allocation3 + $0xe0] sm:$0xff] 0.0
          %2173 = vst [vmem:[#allocation3 + $0xe8] sm:$0xff] 0.0
          %2174 = vst [vmem:[#allocation3 + $0xf0] sm:$0xff] 0.0
          %2175 = vst [vmem:[#allocation3 + $0xf8] sm:$0xff] 0.0
        $region80: #{tpu_custom_call.1} parent=47 // pred_fallthru
          _
        %s2176 = smul.u32 %s25, 512
        %v2177 = vld [vmem:[#allocation3] sm:$0xff]
        %v2178 = vld [vmem:[#allocation3 + $0x8] sm:$0xff]
        %v2179 = vld [vmem:[#allocation3 + $0x10] sm:$0xff]
        %v2180 = vld [vmem:[#allocation3 + $0x18] sm:$0xff]
        %v2181 = vld [vmem:[#allocation3 + $0x20] sm:$0xff]
        %v2182 = vld [vmem:[#allocation3 + $0x28] sm:$0xff]
        %v2183 = vld [vmem:[#allocation3 + $0x30] sm:$0xff]
        %v2184 = vld [vmem:[#allocation3 + $0x38] sm:$0xff]
        %v2185 = vld [vmem:[#allocation3 + $0x40] sm:$0xff]
        %v2186 = vld [vmem:[#allocation3 + $0x48] sm:$0xff]
        %v2187 = vld [vmem:[#allocation3 + $0x50] sm:$0xff]
        %v2188 = vld [vmem:[#allocation3 + $0x58] sm:$0xff]
        %v2189 = vld [vmem:[#allocation3 + $0x60] sm:$0xff]
        %v2190 = vld [vmem:[#allocation3 + $0x68] sm:$0xff]
        %v2191 = vld [vmem:[#allocation3 + $0x70] sm:$0xff]
        %v2192 = vld [vmem:[#allocation3 + $0x78] sm:$0xff]
        %v2193 = vld [vmem:[#allocation3 + $0x80] sm:$0xff]
        %v2194 = vld [vmem:[#allocation3 + $0x88] sm:$0xff]
        %v2195 = vld [vmem:[#allocation3 + $0x90] sm:$0xff]
        %v2196 = vld [vmem:[#allocation3 + $0x98] sm:$0xff]
        %v2197 = vld [vmem:[#allocation3 + $0xa0] sm:$0xff]
        %v2198 = vld [vmem:[#allocation3 + $0xa8] sm:$0xff]
        %v2199 = vld [vmem:[#allocation3 + $0xb0] sm:$0xff]
        %v2200 = vld [vmem:[#allocation3 + $0xb8] sm:$0xff]
        %v2201 = vld [vmem:[#allocation3 + $0xc0] sm:$0xff]
        %v2202 = vld [vmem:[#allocation3 + $0xc8] sm:$0xff]
        %v2203 = vld [vmem:[#allocation3 + $0xd0] sm:$0xff]
        %v2204 = vld [vmem:[#allocation3 + $0xd8] sm:$0xff]
        %v2205 = vld [vmem:[#allocation3 + $0xe0] sm:$0xff]
        %v2206 = vld [vmem:[#allocation3 + $0xe8] sm:$0xff]
        %v2207 = vld [vmem:[#allocation3 + $0xf0] sm:$0xff]
        %v2208 = vld [vmem:[#allocation3 + $0xf8] sm:$0xff]
        %s2209 = sshra.s32 %s2176, 7
        %s2210 = sand.u32 %s2176, 127
        %s2211 = smul.addr %s2209, 4
        %s2212 = scalar_lea.vmem [#allocation2], %s2211
        %v2213 = vld [vmem:[%s2212] sm:$0xff]
        %v2214 = vld [vmem:[%s2212 + $0x8] sm:$0xff]
        %v2215 = vld [vmem:[%s327] sm:$0xff]
        %v2216 = vld [vmem:[%s327 + $0x8] sm:$0xff]
        %v2217 = vld [vmem:[%s327 + $0x10] sm:$0xff]
        %v2218 = vld [vmem:[%s327 + $0x18] sm:$0xff]
        %v2219 = vld [vmem:[%s327 + $0x20] sm:$0xff]
        %v2220 = vld [vmem:[%s327 + $0x28] sm:$0xff]
        %v2221 = vld [vmem:[%s327 + $0x30] sm:$0xff]
        %v2222 = vld [vmem:[%s327 + $0x38] sm:$0xff]
        %v2223 = vld [vmem:[%s327 + $0x40] sm:$0xff]
        %v2224 = vld [vmem:[%s327 + $0x48] sm:$0xff]
        %v2225 = vld [vmem:[%s327 + $0x50] sm:$0xff]
        %v2226 = vld [vmem:[%s327 + $0x58] sm:$0xff]
        %v2227 = vld [vmem:[%s327 + $0x60] sm:$0xff]
        %v2228 = vld [vmem:[%s327 + $0x68] sm:$0xff]
        %v2229 = vld [vmem:[%s327 + $0x70] sm:$0xff]
        %v2230 = vld [vmem:[%s327 + $0x78] sm:$0xff]
        %v2231 = vld [vmem:[%s327 + $0x80] sm:$0xff]
        %v2232 = vld [vmem:[%s327 + $0x88] sm:$0xff]
        %v2233 = vld [vmem:[%s327 + $0x90] sm:$0xff]
        %v2234 = vld [vmem:[%s327 + $0x98] sm:$0xff]
        %v2235 = vld [vmem:[%s327 + $0xa0] sm:$0xff]
        %v2236 = vld [vmem:[%s327 + $0xa8] sm:$0xff]
        %v2237 = vld [vmem:[%s327 + $0xb0] sm:$0xff]
        %v2238 = vld [vmem:[%s327 + $0xb8] sm:$0xff]
        %v2239 = vld [vmem:[%s327 + $0xc0] sm:$0xff]
        %v2240 = vld [vmem:[%s327 + $0xc8] sm:$0xff]
        %v2241 = vld [vmem:[%s327 + $0xd0] sm:$0xff]
        %v2242 = vld [vmem:[%s327 + $0xd8] sm:$0xff]
        %v2243 = vld [vmem:[%s327 + $0xe0] sm:$0xff]
        %v2244 = vld [vmem:[%s327 + $0xe8] sm:$0xff]
        %v2245 = vld [vmem:[%s327 + $0xf0] sm:$0xff]
        %v2246 = vld [vmem:[%s327 + $0xf8] sm:$0xff]
        %v2247 = vld [vmem:[%s327 + $0x100] sm:$0xff]
        %v2248 = vld [vmem:[%s327 + $0x108] sm:$0xff]
        %v2249 = vld [vmem:[%s327 + $0x110] sm:$0xff]
        %v2250 = vld [vmem:[%s327 + $0x118] sm:$0xff]
        %v2251 = vld [vmem:[%s327 + $0x120] sm:$0xff]
        %v2252 = vld [vmem:[%s327 + $0x128] sm:$0xff]
        %v2253 = vld [vmem:[%s327 + $0x130] sm:$0xff]
        %v2254 = vld [vmem:[%s327 + $0x138] sm:$0xff]
        %v2255 = vld [vmem:[%s327 + $0x140] sm:$0xff]
        %v2256 = vld [vmem:[%s327 + $0x148] sm:$0xff]
        %v2257 = vld [vmem:[%s327 + $0x150] sm:$0xff]
        %v2258 = vld [vmem:[%s327 + $0x158] sm:$0xff]
        %v2259 = vld [vmem:[%s327 + $0x160] sm:$0xff]
        %v2260 = vld [vmem:[%s327 + $0x168] sm:$0xff]
        %v2261 = vld [vmem:[%s327 + $0x170] sm:$0xff]
        %v2262 = vld [vmem:[%s327 + $0x178] sm:$0xff]
        %v2263 = vld [vmem:[%s327 + $0x180] sm:$0xff]
        %v2264 = vld [vmem:[%s327 + $0x188] sm:$0xff]
        %v2265 = vld [vmem:[%s327 + $0x190] sm:$0xff]
        %v2266 = vld [vmem:[%s327 + $0x198] sm:$0xff]
        %v2267 = vld [vmem:[%s327 + $0x1a0] sm:$0xff]
        %v2268 = vld [vmem:[%s327 + $0x1a8] sm:$0xff]
        %v2269 = vld [vmem:[%s327 + $0x1b0] sm:$0xff]
        %v2270 = vld [vmem:[%s327 + $0x1b8] sm:$0xff]
        %v2271 = vld [vmem:[%s327 + $0x1c0] sm:$0xff]
        %v2272 = vld [vmem:[%s327 + $0x1c8] sm:$0xff]
        %v2273 = vld [vmem:[%s327 + $0x1d0] sm:$0xff]
        %v2274 = vld [vmem:[%s327 + $0x1d8] sm:$0xff]
        %v2275 = vld [vmem:[%s327 + $0x1e0] sm:$0xff]
        %v2276 = vld [vmem:[%s327 + $0x1e8] sm:$0xff]
        %v2277 = vld [vmem:[%s327 + $0x1f0] sm:$0xff]
        %v2278 = vld [vmem:[%s327 + $0x1f8] sm:$0xff]
        %v2279 = vld [vmem:[%s327 + $0x200] sm:$0xff]
        %v2280 = vld [vmem:[%s327 + $0x208] sm:$0xff]
        %v2281 = vld [vmem:[%s327 + $0x210] sm:$0xff]
        %v2282 = vld [vmem:[%s327 + $0x218] sm:$0xff]
        %v2283 = vld [vmem:[%s327 + $0x220] sm:$0xff]
        %v2284 = vld [vmem:[%s327 + $0x228] sm:$0xff]
        %v2285 = vld [vmem:[%s327 + $0x230] sm:$0xff]
        %v2286 = vld [vmem:[%s327 + $0x238] sm:$0xff]
        %v2287 = vld [vmem:[%s327 + $0x240] sm:$0xff]
        %v2288 = vld [vmem:[%s327 + $0x248] sm:$0xff]
        %v2289 = vld [vmem:[%s327 + $0x250] sm:$0xff]
        %v2290 = vld [vmem:[%s327 + $0x258] sm:$0xff]
        %v2291 = vld [vmem:[%s327 + $0x260] sm:$0xff]
        %v2292 = vld [vmem:[%s327 + $0x268] sm:$0xff]
        %v2293 = vld [vmem:[%s327 + $0x270] sm:$0xff]
        %v2294 = vld [vmem:[%s327 + $0x278] sm:$0xff]
        %v2295 = vld [vmem:[%s327 + $0x280] sm:$0xff]
        %v2296 = vld [vmem:[%s327 + $0x288] sm:$0xff]
        %v2297 = vld [vmem:[%s327 + $0x290] sm:$0xff]
        %v2298 = vld [vmem:[%s327 + $0x298] sm:$0xff]
        %v2299 = vld [vmem:[%s327 + $0x2a0] sm:$0xff]
        %v2300 = vld [vmem:[%s327 + $0x2a8] sm:$0xff]
        %v2301 = vld [vmem:[%s327 + $0x2b0] sm:$0xff]
        %v2302 = vld [vmem:[%s327 + $0x2b8] sm:$0xff]
        %v2303 = vld [vmem:[%s327 + $0x2c0] sm:$0xff]
        %v2304 = vld [vmem:[%s327 + $0x2c8] sm:$0xff]
        %v2305 = vld [vmem:[%s327 + $0x2d0] sm:$0xff]
        %v2306 = vld [vmem:[%s327 + $0x2d8] sm:$0xff]
        %v2307 = vld [vmem:[%s327 + $0x2e0] sm:$0xff]
        %v2308 = vld [vmem:[%s327 + $0x2e8] sm:$0xff]
        %v2309 = vld [vmem:[%s327 + $0x2f0] sm:$0xff]
        %v2310 = vld [vmem:[%s327 + $0x2f8] sm:$0xff]
        %v2311 = vld [vmem:[%s327 + $0x300] sm:$0xff]
        %v2312 = vld [vmem:[%s327 + $0x308] sm:$0xff]
        %v2313 = vld [vmem:[%s327 + $0x310] sm:$0xff]
        %v2314 = vld [vmem:[%s327 + $0x318] sm:$0xff]
        %v2315 = vld [vmem:[%s327 + $0x320] sm:$0xff]
        %v2316 = vld [vmem:[%s327 + $0x328] sm:$0xff]
        %v2317 = vld [vmem:[%s327 + $0x330] sm:$0xff]
        %v2318 = vld [vmem:[%s327 + $0x338] sm:$0xff]
        %v2319 = vld [vmem:[%s327 + $0x340] sm:$0xff]
        %v2320 = vld [vmem:[%s327 + $0x348] sm:$0xff]
        %v2321 = vld [vmem:[%s327 + $0x350] sm:$0xff]
        %v2322 = vld [vmem:[%s327 + $0x358] sm:$0xff]
        %v2323 = vld [vmem:[%s327 + $0x360] sm:$0xff]
        %v2324 = vld [vmem:[%s327 + $0x368] sm:$0xff]
        %v2325 = vld [vmem:[%s327 + $0x370] sm:$0xff]
        %v2326 = vld [vmem:[%s327 + $0x378] sm:$0xff]
        %v2327 = vld [vmem:[%s327 + $0x380] sm:$0xff]
        %v2328 = vld [vmem:[%s327 + $0x388] sm:$0xff]
        %v2329 = vld [vmem:[%s327 + $0x390] sm:$0xff]
        %v2330 = vld [vmem:[%s327 + $0x398] sm:$0xff]
        %v2331 = vld [vmem:[%s327 + $0x3a0] sm:$0xff]
        %v2332 = vld [vmem:[%s327 + $0x3a8] sm:$0xff]
        %v2333 = vld [vmem:[%s327 + $0x3b0] sm:$0xff]
        %v2334 = vld [vmem:[%s327 + $0x3b8] sm:$0xff]
        %v2335 = vld [vmem:[%s327 + $0x3c0] sm:$0xff]
        %v2336 = vld [vmem:[%s327 + $0x3c8] sm:$0xff]
        %v2337 = vld [vmem:[%s327 + $0x3d0] sm:$0xff]
        %v2338 = vld [vmem:[%s327 + $0x3d8] sm:$0xff]
        %v2339 = vld [vmem:[%s327 + $0x3e0] sm:$0xff]
        %v2340 = vld [vmem:[%s327 + $0x3e8] sm:$0xff]
        %v2341 = vld [vmem:[%s327 + $0x3f0] sm:$0xff]
        %v2342 = vld [vmem:[%s327 + $0x3f8] sm:$0xff]
        %v2343 = vld [vmem:[%s327 + $0x400] sm:$0xff]
        %v2344 = vld [vmem:[%s327 + $0x408] sm:$0xff]
        %v2345 = vld [vmem:[%s327 + $0x410] sm:$0xff]
        %v2346 = vld [vmem:[%s327 + $0x418] sm:$0xff]
        %v2347 = vld [vmem:[%s327 + $0x420] sm:$0xff]
        %v2348 = vld [vmem:[%s327 + $0x428] sm:$0xff]
        %v2349 = vld [vmem:[%s327 + $0x430] sm:$0xff]
        %v2350 = vld [vmem:[%s327 + $0x438] sm:$0xff]
        %v2351 = vld [vmem:[%s327 + $0x440] sm:$0xff]
        %v2352 = vld [vmem:[%s327 + $0x448] sm:$0xff]
        %v2353 = vld [vmem:[%s327 + $0x450] sm:$0xff]
        %v2354 = vld [vmem:[%s327 + $0x458] sm:$0xff]
        %v2355 = vld [vmem:[%s327 + $0x460] sm:$0xff]
        %v2356 = vld [vmem:[%s327 + $0x468] sm:$0xff]
        %v2357 = vld [vmem:[%s327 + $0x470] sm:$0xff]
        %v2358 = vld [vmem:[%s327 + $0x478] sm:$0xff]
        %v2359 = vld [vmem:[%s327 + $0x480] sm:$0xff]
        %v2360 = vld [vmem:[%s327 + $0x488] sm:$0xff]
        %v2361 = vld [vmem:[%s327 + $0x490] sm:$0xff]
        %v2362 = vld [vmem:[%s327 + $0x498] sm:$0xff]
        %v2363 = vld [vmem:[%s327 + $0x4a0] sm:$0xff]
        %v2364 = vld [vmem:[%s327 + $0x4a8] sm:$0xff]
        %v2365 = vld [vmem:[%s327 + $0x4b0] sm:$0xff]
        %v2366 = vld [vmem:[%s327 + $0x4b8] sm:$0xff]
        %v2367 = vld [vmem:[%s327 + $0x4c0] sm:$0xff]
        %v2368 = vld [vmem:[%s327 + $0x4c8] sm:$0xff]
        %v2369 = vld [vmem:[%s327 + $0x4d0] sm:$0xff]
        %v2370 = vld [vmem:[%s327 + $0x4d8] sm:$0xff]
        %v2371 = vld [vmem:[%s327 + $0x4e0] sm:$0xff]
        %v2372 = vld [vmem:[%s327 + $0x4e8] sm:$0xff]
        %v2373 = vld [vmem:[%s327 + $0x4f0] sm:$0xff]
        %v2374 = vld [vmem:[%s327 + $0x4f8] sm:$0xff]
        %v2375 = vld [vmem:[%s327 + $0x500] sm:$0xff]
        %v2376 = vld [vmem:[%s327 + $0x508] sm:$0xff]
        %v2377 = vld [vmem:[%s327 + $0x510] sm:$0xff]
        %v2378 = vld [vmem:[%s327 + $0x518] sm:$0xff]
        %v2379 = vld [vmem:[%s327 + $0x520] sm:$0xff]
        %v2380 = vld [vmem:[%s327 + $0x528] sm:$0xff]
        %v2381 = vld [vmem:[%s327 + $0x530] sm:$0xff]
        %v2382 = vld [vmem:[%s327 + $0x538] sm:$0xff]
        %v2383 = vld [vmem:[%s327 + $0x540] sm:$0xff]
        %v2384 = vld [vmem:[%s327 + $0x548] sm:$0xff]
        %v2385 = vld [vmem:[%s327 + $0x550] sm:$0xff]
        %v2386 = vld [vmem:[%s327 + $0x558] sm:$0xff]
        %v2387 = vld [vmem:[%s327 + $0x560] sm:$0xff]
        %v2388 = vld [vmem:[%s327 + $0x568] sm:$0xff]
        %v2389 = vld [vmem:[%s327 + $0x570] sm:$0xff]
        %v2390 = vld [vmem:[%s327 + $0x578] sm:$0xff]
        %v2391 = vld [vmem:[%s327 + $0x580] sm:$0xff]
        %v2392 = vld [vmem:[%s327 + $0x588] sm:$0xff]
        %v2393 = vld [vmem:[%s327 + $0x590] sm:$0xff]
        %v2394 = vld [vmem:[%s327 + $0x598] sm:$0xff]
        %v2395 = vld [vmem:[%s327 + $0x5a0] sm:$0xff]
        %v2396 = vld [vmem:[%s327 + $0x5a8] sm:$0xff]
        %v2397 = vld [vmem:[%s327 + $0x5b0] sm:$0xff]
        %v2398 = vld [vmem:[%s327 + $0x5b8] sm:$0xff]
        %v2399 = vld [vmem:[%s327 + $0x5c0] sm:$0xff]
        %v2400 = vld [vmem:[%s327 + $0x5c8] sm:$0xff]
        %v2401 = vld [vmem:[%s327 + $0x5d0] sm:$0xff]
        %v2402 = vld [vmem:[%s327 + $0x5d8] sm:$0xff]
        %v2403 = vld [vmem:[%s327 + $0x5e0] sm:$0xff]
        %v2404 = vld [vmem:[%s327 + $0x5e8] sm:$0xff]
        %v2405 = vld [vmem:[%s327 + $0x5f0] sm:$0xff]
        %v2406 = vld [vmem:[%s327 + $0x5f8] sm:$0xff]
        %v2407 = vld [vmem:[%s327 + $0x600] sm:$0xff]
        %v2408 = vld [vmem:[%s327 + $0x608] sm:$0xff]
        %v2409 = vld [vmem:[%s327 + $0x610] sm:$0xff]
        %v2410 = vld [vmem:[%s327 + $0x618] sm:$0xff]
        %v2411 = vld [vmem:[%s327 + $0x620] sm:$0xff]
        %v2412 = vld [vmem:[%s327 + $0x628] sm:$0xff]
        %v2413 = vld [vmem:[%s327 + $0x630] sm:$0xff]
        %v2414 = vld [vmem:[%s327 + $0x638] sm:$0xff]
        %v2415 = vld [vmem:[%s327 + $0x640] sm:$0xff]
        %v2416 = vld [vmem:[%s327 + $0x648] sm:$0xff]
        %v2417 = vld [vmem:[%s327 + $0x650] sm:$0xff]
        %v2418 = vld [vmem:[%s327 + $0x658] sm:$0xff]
        %v2419 = vld [vmem:[%s327 + $0x660] sm:$0xff]
        %v2420 = vld [vmem:[%s327 + $0x668] sm:$0xff]
        %v2421 = vld [vmem:[%s327 + $0x670] sm:$0xff]
        %v2422 = vld [vmem:[%s327 + $0x678] sm:$0xff]
        %v2423 = vld [vmem:[%s327 + $0x680] sm:$0xff]
        %v2424 = vld [vmem:[%s327 + $0x688] sm:$0xff]
        %v2425 = vld [vmem:[%s327 + $0x690] sm:$0xff]
        %v2426 = vld [vmem:[%s327 + $0x698] sm:$0xff]
        %v2427 = vld [vmem:[%s327 + $0x6a0] sm:$0xff]
        %v2428 = vld [vmem:[%s327 + $0x6a8] sm:$0xff]
        %v2429 = vld [vmem:[%s327 + $0x6b0] sm:$0xff]
        %v2430 = vld [vmem:[%s327 + $0x6b8] sm:$0xff]
        %v2431 = vld [vmem:[%s327 + $0x6c0] sm:$0xff]
        %v2432 = vld [vmem:[%s327 + $0x6c8] sm:$0xff]
        %v2433 = vld [vmem:[%s327 + $0x6d0] sm:$0xff]
        %v2434 = vld [vmem:[%s327 + $0x6d8] sm:$0xff]
        %v2435 = vld [vmem:[%s327 + $0x6e0] sm:$0xff]
        %v2436 = vld [vmem:[%s327 + $0x6e8] sm:$0xff]
        %v2437 = vld [vmem:[%s327 + $0x6f0] sm:$0xff]
        %v2438 = vld [vmem:[%s327 + $0x6f8] sm:$0xff]
        %v2439 = vld [vmem:[%s327 + $0x700] sm:$0xff]
        %v2440 = vld [vmem:[%s327 + $0x708] sm:$0xff]
        %v2441 = vld [vmem:[%s327 + $0x710] sm:$0xff]
        %v2442 = vld [vmem:[%s327 + $0x718] sm:$0xff]
        %v2443 = vld [vmem:[%s327 + $0x720] sm:$0xff]
        %v2444 = vld [vmem:[%s327 + $0x728] sm:$0xff]
        %v2445 = vld [vmem:[%s327 + $0x730] sm:$0xff]
        %v2446 = vld [vmem:[%s327 + $0x738] sm:$0xff]
        %v2447 = vld [vmem:[%s327 + $0x740] sm:$0xff]
        %v2448 = vld [vmem:[%s327 + $0x748] sm:$0xff]
        %v2449 = vld [vmem:[%s327 + $0x750] sm:$0xff]
        %v2450 = vld [vmem:[%s327 + $0x758] sm:$0xff]
        %v2451 = vld [vmem:[%s327 + $0x760] sm:$0xff]
        %v2452 = vld [vmem:[%s327 + $0x768] sm:$0xff]
        %v2453 = vld [vmem:[%s327 + $0x770] sm:$0xff]
        %v2454 = vld [vmem:[%s327 + $0x778] sm:$0xff]
        %v2455 = vld [vmem:[%s327 + $0x780] sm:$0xff]
        %v2456 = vld [vmem:[%s327 + $0x788] sm:$0xff]
        %v2457 = vld [vmem:[%s327 + $0x790] sm:$0xff]
        %v2458 = vld [vmem:[%s327 + $0x798] sm:$0xff]
        %v2459 = vld [vmem:[%s327 + $0x7a0] sm:$0xff]
        %v2460 = vld [vmem:[%s327 + $0x7a8] sm:$0xff]
        %v2461 = vld [vmem:[%s327 + $0x7b0] sm:$0xff]
        %v2462 = vld [vmem:[%s327 + $0x7b8] sm:$0xff]
        %v2463 = vld [vmem:[%s327 + $0x7c0] sm:$0xff]
        %v2464 = vld [vmem:[%s327 + $0x7c8] sm:$0xff]
        %v2465 = vld [vmem:[%s327 + $0x7d0] sm:$0xff]
        %v2466 = vld [vmem:[%s327 + $0x7d8] sm:$0xff]
        %v2467 = vld [vmem:[%s327 + $0x7e0] sm:$0xff]
        %v2468 = vld [vmem:[%s327 + $0x7e8] sm:$0xff]
        %v2469 = vld [vmem:[%s327 + $0x7f0] sm:$0xff]
        %v2470 = vld [vmem:[%s327 + $0x7f8] sm:$0xff]
        %v2471 = vld [vmem:[%s327 + $0x800] sm:$0xff]
        %v2472 = vld [vmem:[%s327 + $0x808] sm:$0xff]
        %v2473 = vld [vmem:[%s327 + $0x810] sm:$0xff]
        %v2474 = vld [vmem:[%s327 + $0x818] sm:$0xff]
        %v2475 = vld [vmem:[%s327 + $0x820] sm:$0xff]
        %v2476 = vld [vmem:[%s327 + $0x828] sm:$0xff]
        %v2477 = vld [vmem:[%s327 + $0x830] sm:$0xff]
        %v2478 = vld [vmem:[%s327 + $0x838] sm:$0xff]
        %v2479 = vld [vmem:[%s327 + $0x840] sm:$0xff]
        %v2480 = vld [vmem:[%s327 + $0x848] sm:$0xff]
        %v2481 = vld [vmem:[%s327 + $0x850] sm:$0xff]
        %v2482 = vld [vmem:[%s327 + $0x858] sm:$0xff]
        %v2483 = vld [vmem:[%s327 + $0x860] sm:$0xff]
        %v2484 = vld [vmem:[%s327 + $0x868] sm:$0xff]
        %v2485 = vld [vmem:[%s327 + $0x870] sm:$0xff]
        %v2486 = vld [vmem:[%s327 + $0x878] sm:$0xff]
        %v2487 = vld [vmem:[%s327 + $0x880] sm:$0xff]
        %v2488 = vld [vmem:[%s327 + $0x888] sm:$0xff]
        %v2489 = vld [vmem:[%s327 + $0x890] sm:$0xff]
        %v2490 = vld [vmem:[%s327 + $0x898] sm:$0xff]
        %v2491 = vld [vmem:[%s327 + $0x8a0] sm:$0xff]
        %v2492 = vld [vmem:[%s327 + $0x8a8] sm:$0xff]
        %v2493 = vld [vmem:[%s327 + $0x8b0] sm:$0xff]
        %v2494 = vld [vmem:[%s327 + $0x8b8] sm:$0xff]
        %v2495 = vld [vmem:[%s327 + $0x8c0] sm:$0xff]
        %v2496 = vld [vmem:[%s327 + $0x8c8] sm:$0xff]
        %v2497 = vld [vmem:[%s327 + $0x8d0] sm:$0xff]
        %v2498 = vld [vmem:[%s327 + $0x8d8] sm:$0xff]
        %v2499 = vld [vmem:[%s327 + $0x8e0] sm:$0xff]
        %v2500 = vld [vmem:[%s327 + $0x8e8] sm:$0xff]
        %v2501 = vld [vmem:[%s327 + $0x8f0] sm:$0xff]
        %v2502 = vld [vmem:[%s327 + $0x8f8] sm:$0xff]
        %v2503 = vld [vmem:[%s327 + $0x900] sm:$0xff]
        %v2504 = vld [vmem:[%s327 + $0x908] sm:$0xff]
        %v2505 = vld [vmem:[%s327 + $0x910] sm:$0xff]
        %v2506 = vld [vmem:[%s327 + $0x918] sm:$0xff]
        %v2507 = vld [vmem:[%s327 + $0x920] sm:$0xff]
        %v2508 = vld [vmem:[%s327 + $0x928] sm:$0xff]
        %v2509 = vld [vmem:[%s327 + $0x930] sm:$0xff]
        %v2510 = vld [vmem:[%s327 + $0x938] sm:$0xff]
        %v2511 = vld [vmem:[%s327 + $0x940] sm:$0xff]
        %v2512 = vld [vmem:[%s327 + $0x948] sm:$0xff]
        %v2513 = vld [vmem:[%s327 + $0x950] sm:$0xff]
        %v2514 = vld [vmem:[%s327 + $0x958] sm:$0xff]
        %v2515 = vld [vmem:[%s327 + $0x960] sm:$0xff]
        %v2516 = vld [vmem:[%s327 + $0x968] sm:$0xff]
        %v2517 = vld [vmem:[%s327 + $0x970] sm:$0xff]
        %v2518 = vld [vmem:[%s327 + $0x978] sm:$0xff]
        %v2519 = vld [vmem:[%s327 + $0x980] sm:$0xff]
        %v2520 = vld [vmem:[%s327 + $0x988] sm:$0xff]
        %v2521 = vld [vmem:[%s327 + $0x990] sm:$0xff]
        %v2522 = vld [vmem:[%s327 + $0x998] sm:$0xff]
        %v2523 = vld [vmem:[%s327 + $0x9a0] sm:$0xff]
        %v2524 = vld [vmem:[%s327 + $0x9a8] sm:$0xff]
        %v2525 = vld [vmem:[%s327 + $0x9b0] sm:$0xff]
        %v2526 = vld [vmem:[%s327 + $0x9b8] sm:$0xff]
        %v2527 = vld [vmem:[%s327 + $0x9c0] sm:$0xff]
        %v2528 = vld [vmem:[%s327 + $0x9c8] sm:$0xff]
        %v2529 = vld [vmem:[%s327 + $0x9d0] sm:$0xff]
        %v2530 = vld [vmem:[%s327 + $0x9d8] sm:$0xff]
        %v2531 = vld [vmem:[%s327 + $0x9e0] sm:$0xff]
        %v2532 = vld [vmem:[%s327 + $0x9e8] sm:$0xff]
        %v2533 = vld [vmem:[%s327 + $0x9f0] sm:$0xff]
        %v2534 = vld [vmem:[%s327 + $0x9f8] sm:$0xff]
        %v2535 = vld [vmem:[%s327 + $0xa00] sm:$0xff]
        %v2536 = vld [vmem:[%s327 + $0xa08] sm:$0xff]
        %v2537 = vld [vmem:[%s327 + $0xa10] sm:$0xff]
        %v2538 = vld [vmem:[%s327 + $0xa18] sm:$0xff]
        %v2539 = vld [vmem:[%s327 + $0xa20] sm:$0xff]
        %v2540 = vld [vmem:[%s327 + $0xa28] sm:$0xff]
        %v2541 = vld [vmem:[%s327 + $0xa30] sm:$0xff]
        %v2542 = vld [vmem:[%s327 + $0xa38] sm:$0xff]
        %v2543 = vld [vmem:[%s327 + $0xa40] sm:$0xff]
        %v2544 = vld [vmem:[%s327 + $0xa48] sm:$0xff]
        %v2545 = vld [vmem:[%s327 + $0xa50] sm:$0xff]
        %v2546 = vld [vmem:[%s327 + $0xa58] sm:$0xff]
        %v2547 = vld [vmem:[%s327 + $0xa60] sm:$0xff]
        %v2548 = vld [vmem:[%s327 + $0xa68] sm:$0xff]
        %v2549 = vld [vmem:[%s327 + $0xa70] sm:$0xff]
        %v2550 = vld [vmem:[%s327 + $0xa78] sm:$0xff]
        %v2551 = vld [vmem:[%s327 + $0xa80] sm:$0xff]
        %v2552 = vld [vmem:[%s327 + $0xa88] sm:$0xff]
        %v2553 = vld [vmem:[%s327 + $0xa90] sm:$0xff]
        %v2554 = vld [vmem:[%s327 + $0xa98] sm:$0xff]
        %v2555 = vld [vmem:[%s327 + $0xaa0] sm:$0xff]
        %v2556 = vld [vmem:[%s327 + $0xaa8] sm:$0xff]
        %v2557 = vld [vmem:[%s327 + $0xab0] sm:$0xff]
        %v2558 = vld [vmem:[%s327 + $0xab8] sm:$0xff]
        %v2559 = vld [vmem:[%s327 + $0xac0] sm:$0xff]
        %v2560 = vld [vmem:[%s327 + $0xac8] sm:$0xff]
        %v2561 = vld [vmem:[%s327 + $0xad0] sm:$0xff]
        %v2562 = vld [vmem:[%s327 + $0xad8] sm:$0xff]
        %v2563 = vld [vmem:[%s327 + $0xae0] sm:$0xff]
        %v2564 = vld [vmem:[%s327 + $0xae8] sm:$0xff]
        %v2565 = vld [vmem:[%s327 + $0xaf0] sm:$0xff]
        %v2566 = vld [vmem:[%s327 + $0xaf8] sm:$0xff]
        %v2567 = vld [vmem:[%s327 + $0xb00] sm:$0xff]
        %v2568 = vld [vmem:[%s327 + $0xb08] sm:$0xff]
        %v2569 = vld [vmem:[%s327 + $0xb10] sm:$0xff]
        %v2570 = vld [vmem:[%s327 + $0xb18] sm:$0xff]
        %v2571 = vld [vmem:[%s327 + $0xb20] sm:$0xff]
        %v2572 = vld [vmem:[%s327 + $0xb28] sm:$0xff]
        %v2573 = vld [vmem:[%s327 + $0xb30] sm:$0xff]
        %v2574 = vld [vmem:[%s327 + $0xb38] sm:$0xff]
        %v2575 = vld [vmem:[%s327 + $0xb40] sm:$0xff]
        %v2576 = vld [vmem:[%s327 + $0xb48] sm:$0xff]
        %v2577 = vld [vmem:[%s327 + $0xb50] sm:$0xff]
        %v2578 = vld [vmem:[%s327 + $0xb58] sm:$0xff]
        %v2579 = vld [vmem:[%s327 + $0xb60] sm:$0xff]
        %v2580 = vld [vmem:[%s327 + $0xb68] sm:$0xff]
        %v2581 = vld [vmem:[%s327 + $0xb70] sm:$0xff]
        %v2582 = vld [vmem:[%s327 + $0xb78] sm:$0xff]
        %v2583 = vld [vmem:[%s327 + $0xb80] sm:$0xff]
        %v2584 = vld [vmem:[%s327 + $0xb88] sm:$0xff]
        %v2585 = vld [vmem:[%s327 + $0xb90] sm:$0xff]
        %v2586 = vld [vmem:[%s327 + $0xb98] sm:$0xff]
        %v2587 = vld [vmem:[%s327 + $0xba0] sm:$0xff]
        %v2588 = vld [vmem:[%s327 + $0xba8] sm:$0xff]
        %v2589 = vld [vmem:[%s327 + $0xbb0] sm:$0xff]
        %v2590 = vld [vmem:[%s327 + $0xbb8] sm:$0xff]
        %v2591 = vld [vmem:[%s327 + $0xbc0] sm:$0xff]
        %v2592 = vld [vmem:[%s327 + $0xbc8] sm:$0xff]
        %v2593 = vld [vmem:[%s327 + $0xbd0] sm:$0xff]
        %v2594 = vld [vmem:[%s327 + $0xbd8] sm:$0xff]
        %v2595 = vld [vmem:[%s327 + $0xbe0] sm:$0xff]
        %v2596 = vld [vmem:[%s327 + $0xbe8] sm:$0xff]
        %v2597 = vld [vmem:[%s327 + $0xbf0] sm:$0xff]
        %v2598 = vld [vmem:[%s327 + $0xbf8] sm:$0xff]
        %v2599 = vld [vmem:[%s327 + $0xc00] sm:$0xff]
        %v2600 = vld [vmem:[%s327 + $0xc08] sm:$0xff]
        %v2601 = vld [vmem:[%s327 + $0xc10] sm:$0xff]
        %v2602 = vld [vmem:[%s327 + $0xc18] sm:$0xff]
        %v2603 = vld [vmem:[%s327 + $0xc20] sm:$0xff]
        %v2604 = vld [vmem:[%s327 + $0xc28] sm:$0xff]
        %v2605 = vld [vmem:[%s327 + $0xc30] sm:$0xff]
        %v2606 = vld [vmem:[%s327 + $0xc38] sm:$0xff]
        %v2607 = vld [vmem:[%s327 + $0xc40] sm:$0xff]
        %v2608 = vld [vmem:[%s327 + $0xc48] sm:$0xff]
        %v2609 = vld [vmem:[%s327 + $0xc50] sm:$0xff]
        %v2610 = vld [vmem:[%s327 + $0xc58] sm:$0xff]
        %v2611 = vld [vmem:[%s327 + $0xc60] sm:$0xff]
        %v2612 = vld [vmem:[%s327 + $0xc68] sm:$0xff]
        %v2613 = vld [vmem:[%s327 + $0xc70] sm:$0xff]
        %v2614 = vld [vmem:[%s327 + $0xc78] sm:$0xff]
        %v2615 = vld [vmem:[%s327 + $0xc80] sm:$0xff]
        %v2616 = vld [vmem:[%s327 + $0xc88] sm:$0xff]
        %v2617 = vld [vmem:[%s327 + $0xc90] sm:$0xff]
        %v2618 = vld [vmem:[%s327 + $0xc98] sm:$0xff]
        %v2619 = vld [vmem:[%s327 + $0xca0] sm:$0xff]
        %v2620 = vld [vmem:[%s327 + $0xca8] sm:$0xff]
        %v2621 = vld [vmem:[%s327 + $0xcb0] sm:$0xff]
        %v2622 = vld [vmem:[%s327 + $0xcb8] sm:$0xff]
        %v2623 = vld [vmem:[%s327 + $0xcc0] sm:$0xff]
        %v2624 = vld [vmem:[%s327 + $0xcc8] sm:$0xff]
        %v2625 = vld [vmem:[%s327 + $0xcd0] sm:$0xff]
        %v2626 = vld [vmem:[%s327 + $0xcd8] sm:$0xff]
        %v2627 = vld [vmem:[%s327 + $0xce0] sm:$0xff]
        %v2628 = vld [vmem:[%s327 + $0xce8] sm:$0xff]
        %v2629 = vld [vmem:[%s327 + $0xcf0] sm:$0xff]
        %v2630 = vld [vmem:[%s327 + $0xcf8] sm:$0xff]
        %v2631 = vld [vmem:[%s327 + $0xd00] sm:$0xff]
        %v2632 = vld [vmem:[%s327 + $0xd08] sm:$0xff]
        %v2633 = vld [vmem:[%s327 + $0xd10] sm:$0xff]
        %v2634 = vld [vmem:[%s327 + $0xd18] sm:$0xff]
        %v2635 = vld [vmem:[%s327 + $0xd20] sm:$0xff]
        %v2636 = vld [vmem:[%s327 + $0xd28] sm:$0xff]
        %v2637 = vld [vmem:[%s327 + $0xd30] sm:$0xff]
        %v2638 = vld [vmem:[%s327 + $0xd38] sm:$0xff]
        %v2639 = vld [vmem:[%s327 + $0xd40] sm:$0xff]
        %v2640 = vld [vmem:[%s327 + $0xd48] sm:$0xff]
        %v2641 = vld [vmem:[%s327 + $0xd50] sm:$0xff]
        %v2642 = vld [vmem:[%s327 + $0xd58] sm:$0xff]
        %v2643 = vld [vmem:[%s327 + $0xd60] sm:$0xff]
        %v2644 = vld [vmem:[%s327 + $0xd68] sm:$0xff]
        %v2645 = vld [vmem:[%s327 + $0xd70] sm:$0xff]
        %v2646 = vld [vmem:[%s327 + $0xd78] sm:$0xff]
        %v2647 = vld [vmem:[%s327 + $0xd80] sm:$0xff]
        %v2648 = vld [vmem:[%s327 + $0xd88] sm:$0xff]
        %v2649 = vld [vmem:[%s327 + $0xd90] sm:$0xff]
        %v2650 = vld [vmem:[%s327 + $0xd98] sm:$0xff]
        %v2651 = vld [vmem:[%s327 + $0xda0] sm:$0xff]
        %v2652 = vld [vmem:[%s327 + $0xda8] sm:$0xff]
        %v2653 = vld [vmem:[%s327 + $0xdb0] sm:$0xff]
        %v2654 = vld [vmem:[%s327 + $0xdb8] sm:$0xff]
        %v2655 = vld [vmem:[%s327 + $0xdc0] sm:$0xff]
        %v2656 = vld [vmem:[%s327 + $0xdc8] sm:$0xff]
        %v2657 = vld [vmem:[%s327 + $0xdd0] sm:$0xff]
        %v2658 = vld [vmem:[%s327 + $0xdd8] sm:$0xff]
        %v2659 = vld [vmem:[%s327 + $0xde0] sm:$0xff]
        %v2660 = vld [vmem:[%s327 + $0xde8] sm:$0xff]
        %v2661 = vld [vmem:[%s327 + $0xdf0] sm:$0xff]
        %v2662 = vld [vmem:[%s327 + $0xdf8] sm:$0xff]
        %v2663 = vld [vmem:[%s327 + $0xe00] sm:$0xff]
        %v2664 = vld [vmem:[%s327 + $0xe08] sm:$0xff]
        %v2665 = vld [vmem:[%s327 + $0xe10] sm:$0xff]
        %v2666 = vld [vmem:[%s327 + $0xe18] sm:$0xff]
        %v2667 = vld [vmem:[%s327 + $0xe20] sm:$0xff]
        %v2668 = vld [vmem:[%s327 + $0xe28] sm:$0xff]
        %v2669 = vld [vmem:[%s327 + $0xe30] sm:$0xff]
        %v2670 = vld [vmem:[%s327 + $0xe38] sm:$0xff]
        %v2671 = vld [vmem:[%s327 + $0xe40] sm:$0xff]
        %v2672 = vld [vmem:[%s327 + $0xe48] sm:$0xff]
        %v2673 = vld [vmem:[%s327 + $0xe50] sm:$0xff]
        %v2674 = vld [vmem:[%s327 + $0xe58] sm:$0xff]
        %v2675 = vld [vmem:[%s327 + $0xe60] sm:$0xff]
        %v2676 = vld [vmem:[%s327 + $0xe68] sm:$0xff]
        %v2677 = vld [vmem:[%s327 + $0xe70] sm:$0xff]
        %v2678 = vld [vmem:[%s327 + $0xe78] sm:$0xff]
        %v2679 = vld [vmem:[%s327 + $0xe80] sm:$0xff]
        %v2680 = vld [vmem:[%s327 + $0xe88] sm:$0xff]
        %v2681 = vld [vmem:[%s327 + $0xe90] sm:$0xff]
        %v2682 = vld [vmem:[%s327 + $0xe98] sm:$0xff]
        %v2683 = vld [vmem:[%s327 + $0xea0] sm:$0xff]
        %v2684 = vld [vmem:[%s327 + $0xea8] sm:$0xff]
        %v2685 = vld [vmem:[%s327 + $0xeb0] sm:$0xff]
        %v2686 = vld [vmem:[%s327 + $0xeb8] sm:$0xff]
        %v2687 = vld [vmem:[%s327 + $0xec0] sm:$0xff]
        %v2688 = vld [vmem:[%s327 + $0xec8] sm:$0xff]
        %v2689 = vld [vmem:[%s327 + $0xed0] sm:$0xff]
        %v2690 = vld [vmem:[%s327 + $0xed8] sm:$0xff]
        %v2691 = vld [vmem:[%s327 + $0xee0] sm:$0xff]
        %v2692 = vld [vmem:[%s327 + $0xee8] sm:$0xff]
        %v2693 = vld [vmem:[%s327 + $0xef0] sm:$0xff]
        %v2694 = vld [vmem:[%s327 + $0xef8] sm:$0xff]
        %v2695 = vld [vmem:[%s327 + $0xf00] sm:$0xff]
        %v2696 = vld [vmem:[%s327 + $0xf08] sm:$0xff]
        %v2697 = vld [vmem:[%s327 + $0xf10] sm:$0xff]
        %v2698 = vld [vmem:[%s327 + $0xf18] sm:$0xff]
        %v2699 = vld [vmem:[%s327 + $0xf20] sm:$0xff]
        %v2700 = vld [vmem:[%s327 + $0xf28] sm:$0xff]
        %v2701 = vld [vmem:[%s327 + $0xf30] sm:$0xff]
        %v2702 = vld [vmem:[%s327 + $0xf38] sm:$0xff]
        %v2703 = vld [vmem:[%s327 + $0xf40] sm:$0xff]
        %v2704 = vld [vmem:[%s327 + $0xf48] sm:$0xff]
        %v2705 = vld [vmem:[%s327 + $0xf50] sm:$0xff]
        %v2706 = vld [vmem:[%s327 + $0xf58] sm:$0xff]
        %v2707 = vld [vmem:[%s327 + $0xf60] sm:$0xff]
        %v2708 = vld [vmem:[%s327 + $0xf68] sm:$0xff]
        %v2709 = vld [vmem:[%s327 + $0xf70] sm:$0xff]
        %v2710 = vld [vmem:[%s327 + $0xf78] sm:$0xff]
        %v2711 = vld [vmem:[%s327 + $0xf80] sm:$0xff]
        %v2712 = vld [vmem:[%s327 + $0xf88] sm:$0xff]
        %v2713 = vld [vmem:[%s327 + $0xf90] sm:$0xff]
        %v2714 = vld [vmem:[%s327 + $0xf98] sm:$0xff]
        %v2715 = vld [vmem:[%s327 + $0xfa0] sm:$0xff]
        %v2716 = vld [vmem:[%s327 + $0xfa8] sm:$0xff]
        %v2717 = vld [vmem:[%s327 + $0xfb0] sm:$0xff]
        %v2718 = vld [vmem:[%s327 + $0xfb8] sm:$0xff]
        %v2719 = vld [vmem:[%s327 + $0xfc0] sm:$0xff]
        %v2720 = vld [vmem:[%s327 + $0xfc8] sm:$0xff]
        %v2721 = vld [vmem:[%s327 + $0xfd0] sm:$0xff]
        %v2722 = vld [vmem:[%s327 + $0xfd8] sm:$0xff]
        %v2723 = vld [vmem:[%s327 + $0xfe0] sm:$0xff]
        %v2724 = vld [vmem:[%s327 + $0xfe8] sm:$0xff]
        %v2725 = vld [vmem:[%s327 + $0xff0] sm:$0xff]
        %v2726 = vld [vmem:[%s327 + $0xff8] sm:$0xff]
        %v2727 = vld [vmem:[%s327 + $0x1000] sm:$0xff]
        %v2728 = vld [vmem:[%s327 + $0x1008] sm:$0xff]
        %v2729 = vld [vmem:[%s327 + $0x1010] sm:$0xff]
        %v2730 = vld [vmem:[%s327 + $0x1018] sm:$0xff]
        %v2731 = vld [vmem:[%s327 + $0x1020] sm:$0xff]
        %v2732 = vld [vmem:[%s327 + $0x1028] sm:$0xff]
        %v2733 = vld [vmem:[%s327 + $0x1030] sm:$0xff]
        %v2734 = vld [vmem:[%s327 + $0x1038] sm:$0xff]
        %v2735 = vld [vmem:[%s327 + $0x1040] sm:$0xff]
        %v2736 = vld [vmem:[%s327 + $0x1048] sm:$0xff]
        %v2737 = vld [vmem:[%s327 + $0x1050] sm:$0xff]
        %v2738 = vld [vmem:[%s327 + $0x1058] sm:$0xff]
        %v2739 = vld [vmem:[%s327 + $0x1060] sm:$0xff]
        %v2740 = vld [vmem:[%s327 + $0x1068] sm:$0xff]
        %v2741 = vld [vmem:[%s327 + $0x1070] sm:$0xff]
        %v2742 = vld [vmem:[%s327 + $0x1078] sm:$0xff]
        %v2743 = vld [vmem:[%s327 + $0x1080] sm:$0xff]
        %v2744 = vld [vmem:[%s327 + $0x1088] sm:$0xff]
        %v2745 = vld [vmem:[%s327 + $0x1090] sm:$0xff]
        %v2746 = vld [vmem:[%s327 + $0x1098] sm:$0xff]
        %v2747 = vld [vmem:[%s327 + $0x10a0] sm:$0xff]
        %v2748 = vld [vmem:[%s327 + $0x10a8] sm:$0xff]
        %v2749 = vld [vmem:[%s327 + $0x10b0] sm:$0xff]
        %v2750 = vld [vmem:[%s327 + $0x10b8] sm:$0xff]
        %v2751 = vld [vmem:[%s327 + $0x10c0] sm:$0xff]
        %v2752 = vld [vmem:[%s327 + $0x10c8] sm:$0xff]
        %v2753 = vld [vmem:[%s327 + $0x10d0] sm:$0xff]
        %v2754 = vld [vmem:[%s327 + $0x10d8] sm:$0xff]
        %v2755 = vld [vmem:[%s327 + $0x10e0] sm:$0xff]
        %v2756 = vld [vmem:[%s327 + $0x10e8] sm:$0xff]
        %v2757 = vld [vmem:[%s327 + $0x10f0] sm:$0xff]
        %v2758 = vld [vmem:[%s327 + $0x10f8] sm:$0xff]
        %v2759 = vld [vmem:[%s327 + $0x1100] sm:$0xff]
        %v2760 = vld [vmem:[%s327 + $0x1108] sm:$0xff]
        %v2761 = vld [vmem:[%s327 + $0x1110] sm:$0xff]
        %v2762 = vld [vmem:[%s327 + $0x1118] sm:$0xff]
        %v2763 = vld [vmem:[%s327 + $0x1120] sm:$0xff]
        %v2764 = vld [vmem:[%s327 + $0x1128] sm:$0xff]
        %v2765 = vld [vmem:[%s327 + $0x1130] sm:$0xff]
        %v2766 = vld [vmem:[%s327 + $0x1138] sm:$0xff]
        %v2767 = vld [vmem:[%s327 + $0x1140] sm:$0xff]
        %v2768 = vld [vmem:[%s327 + $0x1148] sm:$0xff]
        %v2769 = vld [vmem:[%s327 + $0x1150] sm:$0xff]
        %v2770 = vld [vmem:[%s327 + $0x1158] sm:$0xff]
        %v2771 = vld [vmem:[%s327 + $0x1160] sm:$0xff]
        %v2772 = vld [vmem:[%s327 + $0x1168] sm:$0xff]
        %v2773 = vld [vmem:[%s327 + $0x1170] sm:$0xff]
        %v2774 = vld [vmem:[%s327 + $0x1178] sm:$0xff]
        %v2775 = vld [vmem:[%s327 + $0x1180] sm:$0xff]
        %v2776 = vld [vmem:[%s327 + $0x1188] sm:$0xff]
        %v2777 = vld [vmem:[%s327 + $0x1190] sm:$0xff]
        %v2778 = vld [vmem:[%s327 + $0x1198] sm:$0xff]
        %v2779 = vld [vmem:[%s327 + $0x11a0] sm:$0xff]
        %v2780 = vld [vmem:[%s327 + $0x11a8] sm:$0xff]
        %v2781 = vld [vmem:[%s327 + $0x11b0] sm:$0xff]
        %v2782 = vld [vmem:[%s327 + $0x11b8] sm:$0xff]
        %v2783 = vld [vmem:[%s327 + $0x11c0] sm:$0xff]
        %v2784 = vld [vmem:[%s327 + $0x11c8] sm:$0xff]
        %v2785 = vld [vmem:[%s327 + $0x11d0] sm:$0xff]
        %v2786 = vld [vmem:[%s327 + $0x11d8] sm:$0xff]
        %v2787 = vld [vmem:[%s327 + $0x11e0] sm:$0xff]
        %v2788 = vld [vmem:[%s327 + $0x11e8] sm:$0xff]
        %v2789 = vld [vmem:[%s327 + $0x11f0] sm:$0xff]
        %v2790 = vld [vmem:[%s327 + $0x11f8] sm:$0xff]
        %v2791 = vld [vmem:[%s327 + $0x1200] sm:$0xff]
        %v2792 = vld [vmem:[%s327 + $0x1208] sm:$0xff]
        %v2793 = vld [vmem:[%s327 + $0x1210] sm:$0xff]
        %v2794 = vld [vmem:[%s327 + $0x1218] sm:$0xff]
        %v2795 = vld [vmem:[%s327 + $0x1220] sm:$0xff]
        %v2796 = vld [vmem:[%s327 + $0x1228] sm:$0xff]
        %v2797 = vld [vmem:[%s327 + $0x1230] sm:$0xff]
        %v2798 = vld [vmem:[%s327 + $0x1238] sm:$0xff]
        %v2799 = vld [vmem:[%s327 + $0x1240] sm:$0xff]
        %v2800 = vld [vmem:[%s327 + $0x1248] sm:$0xff]
        %v2801 = vld [vmem:[%s327 + $0x1250] sm:$0xff]
        %v2802 = vld [vmem:[%s327 + $0x1258] sm:$0xff]
        %v2803 = vld [vmem:[%s327 + $0x1260] sm:$0xff]
        %v2804 = vld [vmem:[%s327 + $0x1268] sm:$0xff]
        %v2805 = vld [vmem:[%s327 + $0x1270] sm:$0xff]
        %v2806 = vld [vmem:[%s327 + $0x1278] sm:$0xff]
        %v2807 = vld [vmem:[%s327 + $0x1280] sm:$0xff]
        %v2808 = vld [vmem:[%s327 + $0x1288] sm:$0xff]
        %v2809 = vld [vmem:[%s327 + $0x1290] sm:$0xff]
        %v2810 = vld [vmem:[%s327 + $0x1298] sm:$0xff]
        %v2811 = vld [vmem:[%s327 + $0x12a0] sm:$0xff]
        %v2812 = vld [vmem:[%s327 + $0x12a8] sm:$0xff]
        %v2813 = vld [vmem:[%s327 + $0x12b0] sm:$0xff]
        %v2814 = vld [vmem:[%s327 + $0x12b8] sm:$0xff]
        %v2815 = vld [vmem:[%s327 + $0x12c0] sm:$0xff]
        %v2816 = vld [vmem:[%s327 + $0x12c8] sm:$0xff]
        %v2817 = vld [vmem:[%s327 + $0x12d0] sm:$0xff]
        %v2818 = vld [vmem:[%s327 + $0x12d8] sm:$0xff]
        %v2819 = vld [vmem:[%s327 + $0x12e0] sm:$0xff]
        %v2820 = vld [vmem:[%s327 + $0x12e8] sm:$0xff]
        %v2821 = vld [vmem:[%s327 + $0x12f0] sm:$0xff]
        %v2822 = vld [vmem:[%s327 + $0x12f8] sm:$0xff]
        %v2823 = vld [vmem:[%s327 + $0x1300] sm:$0xff]
        %v2824 = vld [vmem:[%s327 + $0x1308] sm:$0xff]
        %v2825 = vld [vmem:[%s327 + $0x1310] sm:$0xff]
        %v2826 = vld [vmem:[%s327 + $0x1318] sm:$0xff]
        %v2827 = vld [vmem:[%s327 + $0x1320] sm:$0xff]
        %v2828 = vld [vmem:[%s327 + $0x1328] sm:$0xff]
        %v2829 = vld [vmem:[%s327 + $0x1330] sm:$0xff]
        %v2830 = vld [vmem:[%s327 + $0x1338] sm:$0xff]
        %v2831 = vld [vmem:[%s327 + $0x1340] sm:$0xff]
        %v2832 = vld [vmem:[%s327 + $0x1348] sm:$0xff]
        %v2833 = vld [vmem:[%s327 + $0x1350] sm:$0xff]
        %v2834 = vld [vmem:[%s327 + $0x1358] sm:$0xff]
        %v2835 = vld [vmem:[%s327 + $0x1360] sm:$0xff]
        %v2836 = vld [vmem:[%s327 + $0x1368] sm:$0xff]
        %v2837 = vld [vmem:[%s327 + $0x1370] sm:$0xff]
        %v2838 = vld [vmem:[%s327 + $0x1378] sm:$0xff]
        %v2839 = vld [vmem:[%s327 + $0x1380] sm:$0xff]
        %v2840 = vld [vmem:[%s327 + $0x1388] sm:$0xff]
        %v2841 = vld [vmem:[%s327 + $0x1390] sm:$0xff]
        %v2842 = vld [vmem:[%s327 + $0x1398] sm:$0xff]
        %v2843 = vld [vmem:[%s327 + $0x13a0] sm:$0xff]
        %v2844 = vld [vmem:[%s327 + $0x13a8] sm:$0xff]
        %v2845 = vld [vmem:[%s327 + $0x13b0] sm:$0xff]
        %v2846 = vld [vmem:[%s327 + $0x13b8] sm:$0xff]
        %v2847 = vld [vmem:[%s327 + $0x13c0] sm:$0xff]
        %v2848 = vld [vmem:[%s327 + $0x13c8] sm:$0xff]
        %v2849 = vld [vmem:[%s327 + $0x13d0] sm:$0xff]
        %v2850 = vld [vmem:[%s327 + $0x13d8] sm:$0xff]
        %v2851 = vld [vmem:[%s327 + $0x13e0] sm:$0xff]
        %v2852 = vld [vmem:[%s327 + $0x13e8] sm:$0xff]
        %v2853 = vld [vmem:[%s327 + $0x13f0] sm:$0xff]
        %v2854 = vld [vmem:[%s327 + $0x13f8] sm:$0xff]
        %v2855 = vld [vmem:[%s327 + $0x1400] sm:$0xff]
        %v2856 = vld [vmem:[%s327 + $0x1408] sm:$0xff]
        %v2857 = vld [vmem:[%s327 + $0x1410] sm:$0xff]
        %v2858 = vld [vmem:[%s327 + $0x1418] sm:$0xff]
        %v2859 = vld [vmem:[%s327 + $0x1420] sm:$0xff]
        %v2860 = vld [vmem:[%s327 + $0x1428] sm:$0xff]
        %v2861 = vld [vmem:[%s327 + $0x1430] sm:$0xff]
        %v2862 = vld [vmem:[%s327 + $0x1438] sm:$0xff]
        %v2863 = vld [vmem:[%s327 + $0x1440] sm:$0xff]
        %v2864 = vld [vmem:[%s327 + $0x1448] sm:$0xff]
        %v2865 = vld [vmem:[%s327 + $0x1450] sm:$0xff]
        %v2866 = vld [vmem:[%s327 + $0x1458] sm:$0xff]
        %v2867 = vld [vmem:[%s327 + $0x1460] sm:$0xff]
        %v2868 = vld [vmem:[%s327 + $0x1468] sm:$0xff]
        %v2869 = vld [vmem:[%s327 + $0x1470] sm:$0xff]
        %v2870 = vld [vmem:[%s327 + $0x1478] sm:$0xff]
        %v2871 = vld [vmem:[%s327 + $0x1480] sm:$0xff]
        %v2872 = vld [vmem:[%s327 + $0x1488] sm:$0xff]
        %v2873 = vld [vmem:[%s327 + $0x1490] sm:$0xff]
        %v2874 = vld [vmem:[%s327 + $0x1498] sm:$0xff]
        %v2875 = vld [vmem:[%s327 + $0x14a0] sm:$0xff]
        %v2876 = vld [vmem:[%s327 + $0x14a8] sm:$0xff]
        %v2877 = vld [vmem:[%s327 + $0x14b0] sm:$0xff]
        %v2878 = vld [vmem:[%s327 + $0x14b8] sm:$0xff]
        %v2879 = vld [vmem:[%s327 + $0x14c0] sm:$0xff]
        %v2880 = vld [vmem:[%s327 + $0x14c8] sm:$0xff]
        %v2881 = vld [vmem:[%s327 + $0x14d0] sm:$0xff]
        %v2882 = vld [vmem:[%s327 + $0x14d8] sm:$0xff]
        %v2883 = vld [vmem:[%s327 + $0x14e0] sm:$0xff]
        %v2884 = vld [vmem:[%s327 + $0x14e8] sm:$0xff]
        %v2885 = vld [vmem:[%s327 + $0x14f0] sm:$0xff]
        %v2886 = vld [vmem:[%s327 + $0x14f8] sm:$0xff]
        %v2887 = vld [vmem:[%s327 + $0x1500] sm:$0xff]
        %v2888 = vld [vmem:[%s327 + $0x1508] sm:$0xff]
        %v2889 = vld [vmem:[%s327 + $0x1510] sm:$0xff]
        %v2890 = vld [vmem:[%s327 + $0x1518] sm:$0xff]
        %v2891 = vld [vmem:[%s327 + $0x1520] sm:$0xff]
        %v2892 = vld [vmem:[%s327 + $0x1528] sm:$0xff]
        %v2893 = vld [vmem:[%s327 + $0x1530] sm:$0xff]
        %v2894 = vld [vmem:[%s327 + $0x1538] sm:$0xff]
        %v2895 = vld [vmem:[%s327 + $0x1540] sm:$0xff]
        %v2896 = vld [vmem:[%s327 + $0x1548] sm:$0xff]
        %v2897 = vld [vmem:[%s327 + $0x1550] sm:$0xff]
        %v2898 = vld [vmem:[%s327 + $0x1558] sm:$0xff]
        %v2899 = vld [vmem:[%s327 + $0x1560] sm:$0xff]
        %v2900 = vld [vmem:[%s327 + $0x1568] sm:$0xff]
        %v2901 = vld [vmem:[%s327 + $0x1570] sm:$0xff]
        %v2902 = vld [vmem:[%s327 + $0x1578] sm:$0xff]
        %v2903 = vld [vmem:[%s327 + $0x1580] sm:$0xff]
        %v2904 = vld [vmem:[%s327 + $0x1588] sm:$0xff]
        %v2905 = vld [vmem:[%s327 + $0x1590] sm:$0xff]
        %v2906 = vld [vmem:[%s327 + $0x1598] sm:$0xff]
        %v2907 = vld [vmem:[%s327 + $0x15a0] sm:$0xff]
        %v2908 = vld [vmem:[%s327 + $0x15a8] sm:$0xff]
        %v2909 = vld [vmem:[%s327 + $0x15b0] sm:$0xff]
        %v2910 = vld [vmem:[%s327 + $0x15b8] sm:$0xff]
        %v2911 = vld [vmem:[%s327 + $0x15c0] sm:$0xff]
        %v2912 = vld [vmem:[%s327 + $0x15c8] sm:$0xff]
        %v2913 = vld [vmem:[%s327 + $0x15d0] sm:$0xff]
        %v2914 = vld [vmem:[%s327 + $0x15d8] sm:$0xff]
        %v2915 = vld [vmem:[%s327 + $0x15e0] sm:$0xff]
        %v2916 = vld [vmem:[%s327 + $0x15e8] sm:$0xff]
        %v2917 = vld [vmem:[%s327 + $0x15f0] sm:$0xff]
        %v2918 = vld [vmem:[%s327 + $0x15f8] sm:$0xff]
        %v2919 = vld [vmem:[%s327 + $0x1600] sm:$0xff]
        %v2920 = vld [vmem:[%s327 + $0x1608] sm:$0xff]
        %v2921 = vld [vmem:[%s327 + $0x1610] sm:$0xff]
        %v2922 = vld [vmem:[%s327 + $0x1618] sm:$0xff]
        %v2923 = vld [vmem:[%s327 + $0x1620] sm:$0xff]
        %v2924 = vld [vmem:[%s327 + $0x1628] sm:$0xff]
        %v2925 = vld [vmem:[%s327 + $0x1630] sm:$0xff]
        %v2926 = vld [vmem:[%s327 + $0x1638] sm:$0xff]
        %v2927 = vld [vmem:[%s327 + $0x1640] sm:$0xff]
        %v2928 = vld [vmem:[%s327 + $0x1648] sm:$0xff]
        %v2929 = vld [vmem:[%s327 + $0x1650] sm:$0xff]
        %v2930 = vld [vmem:[%s327 + $0x1658] sm:$0xff]
        %v2931 = vld [vmem:[%s327 + $0x1660] sm:$0xff]
        %v2932 = vld [vmem:[%s327 + $0x1668] sm:$0xff]
        %v2933 = vld [vmem:[%s327 + $0x1670] sm:$0xff]
        %v2934 = vld [vmem:[%s327 + $0x1678] sm:$0xff]
        %v2935 = vld [vmem:[%s327 + $0x1680] sm:$0xff]
        %v2936 = vld [vmem:[%s327 + $0x1688] sm:$0xff]
        %v2937 = vld [vmem:[%s327 + $0x1690] sm:$0xff]
        %v2938 = vld [vmem:[%s327 + $0x1698] sm:$0xff]
        %v2939 = vld [vmem:[%s327 + $0x16a0] sm:$0xff]
        %v2940 = vld [vmem:[%s327 + $0x16a8] sm:$0xff]
        %v2941 = vld [vmem:[%s327 + $0x16b0] sm:$0xff]
        %v2942 = vld [vmem:[%s327 + $0x16b8] sm:$0xff]
        %v2943 = vld [vmem:[%s327 + $0x16c0] sm:$0xff]
        %v2944 = vld [vmem:[%s327 + $0x16c8] sm:$0xff]
        %v2945 = vld [vmem:[%s327 + $0x16d0] sm:$0xff]
        %v2946 = vld [vmem:[%s327 + $0x16d8] sm:$0xff]
        %v2947 = vld [vmem:[%s327 + $0x16e0] sm:$0xff]
        %v2948 = vld [vmem:[%s327 + $0x16e8] sm:$0xff]
        %v2949 = vld [vmem:[%s327 + $0x16f0] sm:$0xff]
        %v2950 = vld [vmem:[%s327 + $0x16f8] sm:$0xff]
        %v2951 = vld [vmem:[%s327 + $0x1700] sm:$0xff]
        %v2952 = vld [vmem:[%s327 + $0x1708] sm:$0xff]
        %v2953 = vld [vmem:[%s327 + $0x1710] sm:$0xff]
        %v2954 = vld [vmem:[%s327 + $0x1718] sm:$0xff]
        %v2955 = vld [vmem:[%s327 + $0x1720] sm:$0xff]
        %v2956 = vld [vmem:[%s327 + $0x1728] sm:$0xff]
        %v2957 = vld [vmem:[%s327 + $0x1730] sm:$0xff]
        %v2958 = vld [vmem:[%s327 + $0x1738] sm:$0xff]
        %v2959 = vld [vmem:[%s327 + $0x1740] sm:$0xff]
        %v2960 = vld [vmem:[%s327 + $0x1748] sm:$0xff]
        %v2961 = vld [vmem:[%s327 + $0x1750] sm:$0xff]
        %v2962 = vld [vmem:[%s327 + $0x1758] sm:$0xff]
        %v2963 = vld [vmem:[%s327 + $0x1760] sm:$0xff]
        %v2964 = vld [vmem:[%s327 + $0x1768] sm:$0xff]
        %v2965 = vld [vmem:[%s327 + $0x1770] sm:$0xff]
        %v2966 = vld [vmem:[%s327 + $0x1778] sm:$0xff]
        %v2967 = vld [vmem:[%s327 + $0x1780] sm:$0xff]
        %v2968 = vld [vmem:[%s327 + $0x1788] sm:$0xff]
        %v2969 = vld [vmem:[%s327 + $0x1790] sm:$0xff]
        %v2970 = vld [vmem:[%s327 + $0x1798] sm:$0xff]
        %v2971 = vld [vmem:[%s327 + $0x17a0] sm:$0xff]
        %v2972 = vld [vmem:[%s327 + $0x17a8] sm:$0xff]
        %v2973 = vld [vmem:[%s327 + $0x17b0] sm:$0xff]
        %v2974 = vld [vmem:[%s327 + $0x17b8] sm:$0xff]
        %v2975 = vld [vmem:[%s327 + $0x17c0] sm:$0xff]
        %v2976 = vld [vmem:[%s327 + $0x17c8] sm:$0xff]
        %v2977 = vld [vmem:[%s327 + $0x17d0] sm:$0xff]
        %v2978 = vld [vmem:[%s327 + $0x17d8] sm:$0xff]
        %v2979 = vld [vmem:[%s327 + $0x17e0] sm:$0xff]
        %v2980 = vld [vmem:[%s327 + $0x17e8] sm:$0xff]
        %v2981 = vld [vmem:[%s327 + $0x17f0] sm:$0xff]
        %v2982 = vld [vmem:[%s327 + $0x17f8] sm:$0xff]
        %v2983 = vld [vmem:[%s327 + $0x1800] sm:$0xff]
        %v2984 = vld [vmem:[%s327 + $0x1808] sm:$0xff]
        %v2985 = vld [vmem:[%s327 + $0x1810] sm:$0xff]
        %v2986 = vld [vmem:[%s327 + $0x1818] sm:$0xff]
        %v2987 = vld [vmem:[%s327 + $0x1820] sm:$0xff]
        %v2988 = vld [vmem:[%s327 + $0x1828] sm:$0xff]
        %v2989 = vld [vmem:[%s327 + $0x1830] sm:$0xff]
        %v2990 = vld [vmem:[%s327 + $0x1838] sm:$0xff]
        %v2991 = vld [vmem:[%s327 + $0x1840] sm:$0xff]
        %v2992 = vld [vmem:[%s327 + $0x1848] sm:$0xff]
        %v2993 = vld [vmem:[%s327 + $0x1850] sm:$0xff]
        %v2994 = vld [vmem:[%s327 + $0x1858] sm:$0xff]
        %v2995 = vld [vmem:[%s327 + $0x1860] sm:$0xff]
        %v2996 = vld [vmem:[%s327 + $0x1868] sm:$0xff]
        %v2997 = vld [vmem:[%s327 + $0x1870] sm:$0xff]
        %v2998 = vld [vmem:[%s327 + $0x1878] sm:$0xff]
        %v2999 = vld [vmem:[%s327 + $0x1880] sm:$0xff]
        %v3000 = vld [vmem:[%s327 + $0x1888] sm:$0xff]
        %v3001 = vld [vmem:[%s327 + $0x1890] sm:$0xff]
        %v3002 = vld [vmem:[%s327 + $0x1898] sm:$0xff]
        %v3003 = vld [vmem:[%s327 + $0x18a0] sm:$0xff]
        %v3004 = vld [vmem:[%s327 + $0x18a8] sm:$0xff]
        %v3005 = vld [vmem:[%s327 + $0x18b0] sm:$0xff]
        %v3006 = vld [vmem:[%s327 + $0x18b8] sm:$0xff]
        %v3007 = vld [vmem:[%s327 + $0x18c0] sm:$0xff]
        %v3008 = vld [vmem:[%s327 + $0x18c8] sm:$0xff]
        %v3009 = vld [vmem:[%s327 + $0x18d0] sm:$0xff]
        %v3010 = vld [vmem:[%s327 + $0x18d8] sm:$0xff]
        %v3011 = vld [vmem:[%s327 + $0x18e0] sm:$0xff]
        %v3012 = vld [vmem:[%s327 + $0x18e8] sm:$0xff]
        %v3013 = vld [vmem:[%s327 + $0x18f0] sm:$0xff]
        %v3014 = vld [vmem:[%s327 + $0x18f8] sm:$0xff]
        %v3015 = vld [vmem:[%s327 + $0x1900] sm:$0xff]
        %v3016 = vld [vmem:[%s327 + $0x1908] sm:$0xff]
        %v3017 = vld [vmem:[%s327 + $0x1910] sm:$0xff]
        %v3018 = vld [vmem:[%s327 + $0x1918] sm:$0xff]
        %v3019 = vld [vmem:[%s327 + $0x1920] sm:$0xff]
        %v3020 = vld [vmem:[%s327 + $0x1928] sm:$0xff]
        %v3021 = vld [vmem:[%s327 + $0x1930] sm:$0xff]
        %v3022 = vld [vmem:[%s327 + $0x1938] sm:$0xff]
        %v3023 = vld [vmem:[%s327 + $0x1940] sm:$0xff]
        %v3024 = vld [vmem:[%s327 + $0x1948] sm:$0xff]
        %v3025 = vld [vmem:[%s327 + $0x1950] sm:$0xff]
        %v3026 = vld [vmem:[%s327 + $0x1958] sm:$0xff]
        %v3027 = vld [vmem:[%s327 + $0x1960] sm:$0xff]
        %v3028 = vld [vmem:[%s327 + $0x1968] sm:$0xff]
        %v3029 = vld [vmem:[%s327 + $0x1970] sm:$0xff]
        %v3030 = vld [vmem:[%s327 + $0x1978] sm:$0xff]
        %v3031 = vld [vmem:[%s327 + $0x1980] sm:$0xff]
        %v3032 = vld [vmem:[%s327 + $0x1988] sm:$0xff]
        %v3033 = vld [vmem:[%s327 + $0x1990] sm:$0xff]
        %v3034 = vld [vmem:[%s327 + $0x1998] sm:$0xff]
        %v3035 = vld [vmem:[%s327 + $0x19a0] sm:$0xff]
        %v3036 = vld [vmem:[%s327 + $0x19a8] sm:$0xff]
        %v3037 = vld [vmem:[%s327 + $0x19b0] sm:$0xff]
        %v3038 = vld [vmem:[%s327 + $0x19b8] sm:$0xff]
        %v3039 = vld [vmem:[%s327 + $0x19c0] sm:$0xff]
        %v3040 = vld [vmem:[%s327 + $0x19c8] sm:$0xff]
        %v3041 = vld [vmem:[%s327 + $0x19d0] sm:$0xff]
        %v3042 = vld [vmem:[%s327 + $0x19d8] sm:$0xff]
        %v3043 = vld [vmem:[%s327 + $0x19e0] sm:$0xff]
        %v3044 = vld [vmem:[%s327 + $0x19e8] sm:$0xff]
        %v3045 = vld [vmem:[%s327 + $0x19f0] sm:$0xff]
        %v3046 = vld [vmem:[%s327 + $0x19f8] sm:$0xff]
        %v3047 = vld [vmem:[%s327 + $0x1a00] sm:$0xff]
        %v3048 = vld [vmem:[%s327 + $0x1a08] sm:$0xff]
        %v3049 = vld [vmem:[%s327 + $0x1a10] sm:$0xff]
        %v3050 = vld [vmem:[%s327 + $0x1a18] sm:$0xff]
        %v3051 = vld [vmem:[%s327 + $0x1a20] sm:$0xff]
        %v3052 = vld [vmem:[%s327 + $0x1a28] sm:$0xff]
        %v3053 = vld [vmem:[%s327 + $0x1a30] sm:$0xff]
        %v3054 = vld [vmem:[%s327 + $0x1a38] sm:$0xff]
        %v3055 = vld [vmem:[%s327 + $0x1a40] sm:$0xff]
        %v3056 = vld [vmem:[%s327 + $0x1a48] sm:$0xff]
        %v3057 = vld [vmem:[%s327 + $0x1a50] sm:$0xff]
        %v3058 = vld [vmem:[%s327 + $0x1a58] sm:$0xff]
        %v3059 = vld [vmem:[%s327 + $0x1a60] sm:$0xff]
        %v3060 = vld [vmem:[%s327 + $0x1a68] sm:$0xff]
        %v3061 = vld [vmem:[%s327 + $0x1a70] sm:$0xff]
        %v3062 = vld [vmem:[%s327 + $0x1a78] sm:$0xff]
        %v3063 = vld [vmem:[%s327 + $0x1a80] sm:$0xff]
        %v3064 = vld [vmem:[%s327 + $0x1a88] sm:$0xff]
        %v3065 = vld [vmem:[%s327 + $0x1a90] sm:$0xff]
        %v3066 = vld [vmem:[%s327 + $0x1a98] sm:$0xff]
        %v3067 = vld [vmem:[%s327 + $0x1aa0] sm:$0xff]
        %v3068 = vld [vmem:[%s327 + $0x1aa8] sm:$0xff]
        %v3069 = vld [vmem:[%s327 + $0x1ab0] sm:$0xff]
        %v3070 = vld [vmem:[%s327 + $0x1ab8] sm:$0xff]
        %v3071 = vld [vmem:[%s327 + $0x1ac0] sm:$0xff]
        %v3072 = vld [vmem:[%s327 + $0x1ac8] sm:$0xff]
        %v3073 = vld [vmem:[%s327 + $0x1ad0] sm:$0xff]
        %v3074 = vld [vmem:[%s327 + $0x1ad8] sm:$0xff]
        %v3075 = vld [vmem:[%s327 + $0x1ae0] sm:$0xff]
        %v3076 = vld [vmem:[%s327 + $0x1ae8] sm:$0xff]
        %v3077 = vld [vmem:[%s327 + $0x1af0] sm:$0xff]
        %v3078 = vld [vmem:[%s327 + $0x1af8] sm:$0xff]
        %v3079 = vld [vmem:[%s327 + $0x1b00] sm:$0xff]
        %v3080 = vld [vmem:[%s327 + $0x1b08] sm:$0xff]
        %v3081 = vld [vmem:[%s327 + $0x1b10] sm:$0xff]
        %v3082 = vld [vmem:[%s327 + $0x1b18] sm:$0xff]
        %v3083 = vld [vmem:[%s327 + $0x1b20] sm:$0xff]
        %v3084 = vld [vmem:[%s327 + $0x1b28] sm:$0xff]
        %v3085 = vld [vmem:[%s327 + $0x1b30] sm:$0xff]
        %v3086 = vld [vmem:[%s327 + $0x1b38] sm:$0xff]
        %v3087 = vld [vmem:[%s327 + $0x1b40] sm:$0xff]
        %v3088 = vld [vmem:[%s327 + $0x1b48] sm:$0xff]
        %v3089 = vld [vmem:[%s327 + $0x1b50] sm:$0xff]
        %v3090 = vld [vmem:[%s327 + $0x1b58] sm:$0xff]
        %v3091 = vld [vmem:[%s327 + $0x1b60] sm:$0xff]
        %v3092 = vld [vmem:[%s327 + $0x1b68] sm:$0xff]
        %v3093 = vld [vmem:[%s327 + $0x1b70] sm:$0xff]
        %v3094 = vld [vmem:[%s327 + $0x1b78] sm:$0xff]
        %v3095 = vld [vmem:[%s327 + $0x1b80] sm:$0xff]
        %v3096 = vld [vmem:[%s327 + $0x1b88] sm:$0xff]
        %v3097 = vld [vmem:[%s327 + $0x1b90] sm:$0xff]
        %v3098 = vld [vmem:[%s327 + $0x1b98] sm:$0xff]
        %v3099 = vld [vmem:[%s327 + $0x1ba0] sm:$0xff]
        %v3100 = vld [vmem:[%s327 + $0x1ba8] sm:$0xff]
        %v3101 = vld [vmem:[%s327 + $0x1bb0] sm:$0xff]
        %v3102 = vld [vmem:[%s327 + $0x1bb8] sm:$0xff]
        %v3103 = vld [vmem:[%s327 + $0x1bc0] sm:$0xff]
        %v3104 = vld [vmem:[%s327 + $0x1bc8] sm:$0xff]
        %v3105 = vld [vmem:[%s327 + $0x1bd0] sm:$0xff]
        %v3106 = vld [vmem:[%s327 + $0x1bd8] sm:$0xff]
        %v3107 = vld [vmem:[%s327 + $0x1be0] sm:$0xff]
        %v3108 = vld [vmem:[%s327 + $0x1be8] sm:$0xff]
        %v3109 = vld [vmem:[%s327 + $0x1bf0] sm:$0xff]
        %v3110 = vld [vmem:[%s327 + $0x1bf8] sm:$0xff]
        %v3111 = vld [vmem:[%s327 + $0x1c00] sm:$0xff]
        %v3112 = vld [vmem:[%s327 + $0x1c08] sm:$0xff]
        %v3113 = vld [vmem:[%s327 + $0x1c10] sm:$0xff]
        %v3114 = vld [vmem:[%s327 + $0x1c18] sm:$0xff]
        %v3115 = vld [vmem:[%s327 + $0x1c20] sm:$0xff]
        %v3116 = vld [vmem:[%s327 + $0x1c28] sm:$0xff]
        %v3117 = vld [vmem:[%s327 + $0x1c30] sm:$0xff]
        %v3118 = vld [vmem:[%s327 + $0x1c38] sm:$0xff]
        %v3119 = vld [vmem:[%s327 + $0x1c40] sm:$0xff]
        %v3120 = vld [vmem:[%s327 + $0x1c48] sm:$0xff]
        %v3121 = vld [vmem:[%s327 + $0x1c50] sm:$0xff]
        %v3122 = vld [vmem:[%s327 + $0x1c58] sm:$0xff]
        %v3123 = vld [vmem:[%s327 + $0x1c60] sm:$0xff]
        %v3124 = vld [vmem:[%s327 + $0x1c68] sm:$0xff]
        %v3125 = vld [vmem:[%s327 + $0x1c70] sm:$0xff]
        %v3126 = vld [vmem:[%s327 + $0x1c78] sm:$0xff]
        %v3127 = vld [vmem:[%s327 + $0x1c80] sm:$0xff]
        %v3128 = vld [vmem:[%s327 + $0x1c88] sm:$0xff]
        %v3129 = vld [vmem:[%s327 + $0x1c90] sm:$0xff]
        %v3130 = vld [vmem:[%s327 + $0x1c98] sm:$0xff]
        %v3131 = vld [vmem:[%s327 + $0x1ca0] sm:$0xff]
        %v3132 = vld [vmem:[%s327 + $0x1ca8] sm:$0xff]
        %v3133 = vld [vmem:[%s327 + $0x1cb0] sm:$0xff]
        %v3134 = vld [vmem:[%s327 + $0x1cb8] sm:$0xff]
        %v3135 = vld [vmem:[%s327 + $0x1cc0] sm:$0xff]
        %v3136 = vld [vmem:[%s327 + $0x1cc8] sm:$0xff]
        %v3137 = vld [vmem:[%s327 + $0x1cd0] sm:$0xff]
        %v3138 = vld [vmem:[%s327 + $0x1cd8] sm:$0xff]
        %v3139 = vld [vmem:[%s327 + $0x1ce0] sm:$0xff]
        %v3140 = vld [vmem:[%s327 + $0x1ce8] sm:$0xff]
        %v3141 = vld [vmem:[%s327 + $0x1cf0] sm:$0xff]
        %v3142 = vld [vmem:[%s327 + $0x1cf8] sm:$0xff]
        %v3143 = vld [vmem:[%s327 + $0x1d00] sm:$0xff]
        %v3144 = vld [vmem:[%s327 + $0x1d08] sm:$0xff]
        %v3145 = vld [vmem:[%s327 + $0x1d10] sm:$0xff]
        %v3146 = vld [vmem:[%s327 + $0x1d18] sm:$0xff]
        %v3147 = vld [vmem:[%s327 + $0x1d20] sm:$0xff]
        %v3148 = vld [vmem:[%s327 + $0x1d28] sm:$0xff]
        %v3149 = vld [vmem:[%s327 + $0x1d30] sm:$0xff]
        %v3150 = vld [vmem:[%s327 + $0x1d38] sm:$0xff]
        %v3151 = vld [vmem:[%s327 + $0x1d40] sm:$0xff]
        %v3152 = vld [vmem:[%s327 + $0x1d48] sm:$0xff]
        %v3153 = vld [vmem:[%s327 + $0x1d50] sm:$0xff]
        %v3154 = vld [vmem:[%s327 + $0x1d58] sm:$0xff]
        %v3155 = vld [vmem:[%s327 + $0x1d60] sm:$0xff]
        %v3156 = vld [vmem:[%s327 + $0x1d68] sm:$0xff]
        %v3157 = vld [vmem:[%s327 + $0x1d70] sm:$0xff]
        %v3158 = vld [vmem:[%s327 + $0x1d78] sm:$0xff]
        %v3159 = vld [vmem:[%s327 + $0x1d80] sm:$0xff]
        %v3160 = vld [vmem:[%s327 + $0x1d88] sm:$0xff]
        %v3161 = vld [vmem:[%s327 + $0x1d90] sm:$0xff]
        %v3162 = vld [vmem:[%s327 + $0x1d98] sm:$0xff]
        %v3163 = vld [vmem:[%s327 + $0x1da0] sm:$0xff]
        %v3164 = vld [vmem:[%s327 + $0x1da8] sm:$0xff]
        %v3165 = vld [vmem:[%s327 + $0x1db0] sm:$0xff]
        %v3166 = vld [vmem:[%s327 + $0x1db8] sm:$0xff]
        %v3167 = vld [vmem:[%s327 + $0x1dc0] sm:$0xff]
        %v3168 = vld [vmem:[%s327 + $0x1dc8] sm:$0xff]
        %v3169 = vld [vmem:[%s327 + $0x1dd0] sm:$0xff]
        %v3170 = vld [vmem:[%s327 + $0x1dd8] sm:$0xff]
        %v3171 = vld [vmem:[%s327 + $0x1de0] sm:$0xff]
        %v3172 = vld [vmem:[%s327 + $0x1de8] sm:$0xff]
        %v3173 = vld [vmem:[%s327 + $0x1df0] sm:$0xff]
        %v3174 = vld [vmem:[%s327 + $0x1df8] sm:$0xff]
        %v3175 = vld [vmem:[%s327 + $0x1e00] sm:$0xff]
        %v3176 = vld [vmem:[%s327 + $0x1e08] sm:$0xff]
        %v3177 = vld [vmem:[%s327 + $0x1e10] sm:$0xff]
        %v3178 = vld [vmem:[%s327 + $0x1e18] sm:$0xff]
        %v3179 = vld [vmem:[%s327 + $0x1e20] sm:$0xff]
        %v3180 = vld [vmem:[%s327 + $0x1e28] sm:$0xff]
        %v3181 = vld [vmem:[%s327 + $0x1e30] sm:$0xff]
        %v3182 = vld [vmem:[%s327 + $0x1e38] sm:$0xff]
        %v3183 = vld [vmem:[%s327 + $0x1e40] sm:$0xff]
        %v3184 = vld [vmem:[%s327 + $0x1e48] sm:$0xff]
        %v3185 = vld [vmem:[%s327 + $0x1e50] sm:$0xff]
        %v3186 = vld [vmem:[%s327 + $0x1e58] sm:$0xff]
        %v3187 = vld [vmem:[%s327 + $0x1e60] sm:$0xff]
        %v3188 = vld [vmem:[%s327 + $0x1e68] sm:$0xff]
        %v3189 = vld [vmem:[%s327 + $0x1e70] sm:$0xff]
        %v3190 = vld [vmem:[%s327 + $0x1e78] sm:$0xff]
        %v3191 = vld [vmem:[%s327 + $0x1e80] sm:$0xff]
        %v3192 = vld [vmem:[%s327 + $0x1e88] sm:$0xff]
        %v3193 = vld [vmem:[%s327 + $0x1e90] sm:$0xff]
        %v3194 = vld [vmem:[%s327 + $0x1e98] sm:$0xff]
        %v3195 = vld [vmem:[%s327 + $0x1ea0] sm:$0xff]
        %v3196 = vld [vmem:[%s327 + $0x1ea8] sm:$0xff]
        %v3197 = vld [vmem:[%s327 + $0x1eb0] sm:$0xff]
        %v3198 = vld [vmem:[%s327 + $0x1eb8] sm:$0xff]
        %v3199 = vld [vmem:[%s327 + $0x1ec0] sm:$0xff]
        %v3200 = vld [vmem:[%s327 + $0x1ec8] sm:$0xff]
        %v3201 = vld [vmem:[%s327 + $0x1ed0] sm:$0xff]
        %v3202 = vld [vmem:[%s327 + $0x1ed8] sm:$0xff]
        %v3203 = vld [vmem:[%s327 + $0x1ee0] sm:$0xff]
        %v3204 = vld [vmem:[%s327 + $0x1ee8] sm:$0xff]
        %v3205 = vld [vmem:[%s327 + $0x1ef0] sm:$0xff]
        %v3206 = vld [vmem:[%s327 + $0x1ef8] sm:$0xff]
        %v3207 = vld [vmem:[%s327 + $0x1f00] sm:$0xff]
        %v3208 = vld [vmem:[%s327 + $0x1f08] sm:$0xff]
        %v3209 = vld [vmem:[%s327 + $0x1f10] sm:$0xff]
        %v3210 = vld [vmem:[%s327 + $0x1f18] sm:$0xff]
        %v3211 = vld [vmem:[%s327 + $0x1f20] sm:$0xff]
        %v3212 = vld [vmem:[%s327 + $0x1f28] sm:$0xff]
        %v3213 = vld [vmem:[%s327 + $0x1f30] sm:$0xff]
        %v3214 = vld [vmem:[%s327 + $0x1f38] sm:$0xff]
        %v3215 = vld [vmem:[%s327 + $0x1f40] sm:$0xff]
        %v3216 = vld [vmem:[%s327 + $0x1f48] sm:$0xff]
        %v3217 = vld [vmem:[%s327 + $0x1f50] sm:$0xff]
        %v3218 = vld [vmem:[%s327 + $0x1f58] sm:$0xff]
        %v3219 = vld [vmem:[%s327 + $0x1f60] sm:$0xff]
        %v3220 = vld [vmem:[%s327 + $0x1f68] sm:$0xff]
        %v3221 = vld [vmem:[%s327 + $0x1f70] sm:$0xff]
        %v3222 = vld [vmem:[%s327 + $0x1f78] sm:$0xff]
        %v3223 = vld [vmem:[%s327 + $0x1f80] sm:$0xff]
        %v3224 = vld [vmem:[%s327 + $0x1f88] sm:$0xff]
        %v3225 = vld [vmem:[%s327 + $0x1f90] sm:$0xff]
        %v3226 = vld [vmem:[%s327 + $0x1f98] sm:$0xff]
        %v3227 = vld [vmem:[%s327 + $0x1fa0] sm:$0xff]
        %v3228 = vld [vmem:[%s327 + $0x1fa8] sm:$0xff]
        %v3229 = vld [vmem:[%s327 + $0x1fb0] sm:$0xff]
        %v3230 = vld [vmem:[%s327 + $0x1fb8] sm:$0xff]
        %v3231 = vld [vmem:[%s327 + $0x1fc0] sm:$0xff]
        %v3232 = vld [vmem:[%s327 + $0x1fc8] sm:$0xff]
        %v3233 = vld [vmem:[%s327 + $0x1fd0] sm:$0xff]
        %v3234 = vld [vmem:[%s327 + $0x1fd8] sm:$0xff]
        %v3235 = vld [vmem:[%s327 + $0x1fe0] sm:$0xff]
        %v3236 = vld [vmem:[%s327 + $0x1fe8] sm:$0xff]
        %v3237 = vld [vmem:[%s327 + $0x1ff0] sm:$0xff]
        %v3238 = vld [vmem:[%s327 + $0x1ff8] sm:$0xff]
        %v3241 = vunpack.c.l.b16 %v2213
        %v3242 = vunpack.c.h.b16 %v2213
        %v3243 = vunpack.c.l.b16 %v2214
        %v3244 = vunpack.c.h.b16 %v2214
        %v3245 = vpack.c.b16 %v3241, %v3241
        %v3246 = vpack.c.b16 %v3242, %v3242
        %v3247 = vpack.c.b16 %v3243, %v3243
        %v3248 = vpack.c.b16 %v3244, %v3244
        %v4277 = vunpack.c.l.b16 %v2215
        %v4278 = vunpack.c.h.b16 %v2215
        %v4279 = vunpack.c.l.b16 %v2216
        %v4280 = vunpack.c.h.b16 %v2216
        %v4281 = vunpack.c.l.b16 %v2217
        %v4282 = vunpack.c.h.b16 %v2217
        %v4283 = vunpack.c.l.b16 %v2218
        %v4284 = vunpack.c.h.b16 %v2218
        %v4285 = vunpack.c.l.b16 %v2219
        %v4286 = vunpack.c.h.b16 %v2219
        %v4287 = vunpack.c.l.b16 %v2220
        %v4288 = vunpack.c.h.b16 %v2220
        %v4289 = vunpack.c.l.b16 %v2221
        %v4290 = vunpack.c.h.b16 %v2221
        %v4291 = vunpack.c.l.b16 %v2222
        %v4292 = vunpack.c.h.b16 %v2222
        %v4293 = vunpack.c.l.b16 %v2223
        %v4294 = vunpack.c.h.b16 %v2223
        %v4295 = vunpack.c.l.b16 %v2224
        %v4296 = vunpack.c.h.b16 %v2224
        %v4297 = vunpack.c.l.b16 %v2225
        %v4298 = vunpack.c.h.b16 %v2225
        %v4299 = vunpack.c.l.b16 %v2226
        %v4300 = vunpack.c.h.b16 %v2226
        %v4301 = vunpack.c.l.b16 %v2227
        %v4302 = vunpack.c.h.b16 %v2227
        %v4303 = vunpack.c.l.b16 %v2228
        %v4304 = vunpack.c.h.b16 %v2228
        %v4305 = vunpack.c.l.b16 %v2229
        %v4306 = vunpack.c.h.b16 %v2229
        %v4307 = vunpack.c.l.b16 %v2230
        %v4308 = vunpack.c.h.b16 %v2230
        %v4309 = vunpack.c.l.b16 %v2231
        %v4310 = vunpack.c.h.b16 %v2231
        %v4311 = vunpack.c.l.b16 %v2232
        %v4312 = vunpack.c.h.b16 %v2232
        %v4313 = vunpack.c.l.b16 %v2233
        %v4314 = vunpack.c.h.b16 %v2233
        %v4315 = vunpack.c.l.b16 %v2234
        %v4316 = vunpack.c.h.b16 %v2234
        %v4317 = vunpack.c.l.b16 %v2235
        %v4318 = vunpack.c.h.b16 %v2235
        %v4319 = vunpack.c.l.b16 %v2236
        %v4320 = vunpack.c.h.b16 %v2236
        %v4321 = vunpack.c.l.b16 %v2237
        %v4322 = vunpack.c.h.b16 %v2237
        %v4323 = vunpack.c.l.b16 %v2238
        %v4324 = vunpack.c.h.b16 %v2238
        %v4325 = vunpack.c.l.b16 %v2239
        %v4326 = vunpack.c.h.b16 %v2239
        %v4327 = vunpack.c.l.b16 %v2240
        %v4328 = vunpack.c.h.b16 %v2240
        %v4329 = vunpack.c.l.b16 %v2241
        %v4330 = vunpack.c.h.b16 %v2241
        %v4331 = vunpack.c.l.b16 %v2242
        %v4332 = vunpack.c.h.b16 %v2242
        %v4333 = vunpack.c.l.b16 %v2243
        %v4334 = vunpack.c.h.b16 %v2243
        %v4335 = vunpack.c.l.b16 %v2244
        %v4336 = vunpack.c.h.b16 %v2244
        %v4337 = vunpack.c.l.b16 %v2245
        %v4338 = vunpack.c.h.b16 %v2245
        %v4339 = vunpack.c.l.b16 %v2246
        %v4340 = vunpack.c.h.b16 %v2246
        %v4341 = vunpack.c.l.b16 %v2247
        %v4342 = vunpack.c.h.b16 %v2247
        %v4343 = vunpack.c.l.b16 %v2248
        %v4344 = vunpack.c.h.b16 %v2248
        %v4345 = vunpack.c.l.b16 %v2249
        %v4346 = vunpack.c.h.b16 %v2249
        %v4347 = vunpack.c.l.b16 %v2250
        %v4348 = vunpack.c.h.b16 %v2250
        %v4349 = vunpack.c.l.b16 %v2251
        %v4350 = vunpack.c.h.b16 %v2251
        %v4351 = vunpack.c.l.b16 %v2252
        %v4352 = vunpack.c.h.b16 %v2252
        %v4353 = vunpack.c.l.b16 %v2253
        %v4354 = vunpack.c.h.b16 %v2253
        %v4355 = vunpack.c.l.b16 %v2254
        %v4356 = vunpack.c.h.b16 %v2254
        %v4357 = vunpack.c.l.b16 %v2255
        %v4358 = vunpack.c.h.b16 %v2255
        %v4359 = vunpack.c.l.b16 %v2256
        %v4360 = vunpack.c.h.b16 %v2256
        %v4361 = vunpack.c.l.b16 %v2257
        %v4362 = vunpack.c.h.b16 %v2257
        %v4363 = vunpack.c.l.b16 %v2258
        %v4364 = vunpack.c.h.b16 %v2258
        %v4365 = vunpack.c.l.b16 %v2259
        %v4366 = vunpack.c.h.b16 %v2259
        %v4367 = vunpack.c.l.b16 %v2260
        %v4368 = vunpack.c.h.b16 %v2260
        %v4369 = vunpack.c.l.b16 %v2261
        %v4370 = vunpack.c.h.b16 %v2261
        %v4371 = vunpack.c.l.b16 %v2262
        %v4372 = vunpack.c.h.b16 %v2262
        %v4373 = vunpack.c.l.b16 %v2263
        %v4374 = vunpack.c.h.b16 %v2263
        %v4375 = vunpack.c.l.b16 %v2264
        %v4376 = vunpack.c.h.b16 %v2264
        %v4377 = vunpack.c.l.b16 %v2265
        %v4378 = vunpack.c.h.b16 %v2265
        %v4379 = vunpack.c.l.b16 %v2266
        %v4380 = vunpack.c.h.b16 %v2266
        %v4381 = vunpack.c.l.b16 %v2267
        %v4382 = vunpack.c.h.b16 %v2267
        %v4383 = vunpack.c.l.b16 %v2268
        %v4384 = vunpack.c.h.b16 %v2268
        %v4385 = vunpack.c.l.b16 %v2269
        %v4386 = vunpack.c.h.b16 %v2269
        %v4387 = vunpack.c.l.b16 %v2270
        %v4388 = vunpack.c.h.b16 %v2270
        %v4389 = vunpack.c.l.b16 %v2271
        %v4390 = vunpack.c.h.b16 %v2271
        %v4391 = vunpack.c.l.b16 %v2272
        %v4392 = vunpack.c.h.b16 %v2272
        %v4393 = vunpack.c.l.b16 %v2273
        %v4394 = vunpack.c.h.b16 %v2273
        %v4395 = vunpack.c.l.b16 %v2274
        %v4396 = vunpack.c.h.b16 %v2274
        %v4397 = vunpack.c.l.b16 %v2275
        %v4398 = vunpack.c.h.b16 %v2275
        %v4399 = vunpack.c.l.b16 %v2276
        %v4400 = vunpack.c.h.b16 %v2276
        %v4401 = vunpack.c.l.b16 %v2277
        %v4402 = vunpack.c.h.b16 %v2277
        %v4403 = vunpack.c.l.b16 %v2278
        %v4404 = vunpack.c.h.b16 %v2278
        %v4405 = vunpack.c.l.b16 %v2279
        %v4406 = vunpack.c.h.b16 %v2279
        %v4407 = vunpack.c.l.b16 %v2280
        %v4408 = vunpack.c.h.b16 %v2280
        %v4409 = vunpack.c.l.b16 %v2281
        %v4410 = vunpack.c.h.b16 %v2281
        %v4411 = vunpack.c.l.b16 %v2282
        %v4412 = vunpack.c.h.b16 %v2282
        %v4413 = vunpack.c.l.b16 %v2283
        %v4414 = vunpack.c.h.b16 %v2283
        %v4415 = vunpack.c.l.b16 %v2284
        %v4416 = vunpack.c.h.b16 %v2284
        %v4417 = vunpack.c.l.b16 %v2285
        %v4418 = vunpack.c.h.b16 %v2285
        %v4419 = vunpack.c.l.b16 %v2286
        %v4420 = vunpack.c.h.b16 %v2286
        %v4421 = vunpack.c.l.b16 %v2287
        %v4422 = vunpack.c.h.b16 %v2287
        %v4423 = vunpack.c.l.b16 %v2288
        %v4424 = vunpack.c.h.b16 %v2288
        %v4425 = vunpack.c.l.b16 %v2289
        %v4426 = vunpack.c.h.b16 %v2289
        %v4427 = vunpack.c.l.b16 %v2290
        %v4428 = vunpack.c.h.b16 %v2290
        %v4429 = vunpack.c.l.b16 %v2291
        %v4430 = vunpack.c.h.b16 %v2291
        %v4431 = vunpack.c.l.b16 %v2292
        %v4432 = vunpack.c.h.b16 %v2292
        %v4433 = vunpack.c.l.b16 %v2293
        %v4434 = vunpack.c.h.b16 %v2293
        %v4435 = vunpack.c.l.b16 %v2294
        %v4436 = vunpack.c.h.b16 %v2294
        %v4437 = vunpack.c.l.b16 %v2295
        %v4438 = vunpack.c.h.b16 %v2295
        %v4439 = vunpack.c.l.b16 %v2296
        %v4440 = vunpack.c.h.b16 %v2296
        %v4441 = vunpack.c.l.b16 %v2297
        %v4442 = vunpack.c.h.b16 %v2297
        %v4443 = vunpack.c.l.b16 %v2298
        %v4444 = vunpack.c.h.b16 %v2298
        %v4445 = vunpack.c.l.b16 %v2299
        %v4446 = vunpack.c.h.b16 %v2299
        %v4447 = vunpack.c.l.b16 %v2300
        %v4448 = vunpack.c.h.b16 %v2300
        %v4449 = vunpack.c.l.b16 %v2301
        %v4450 = vunpack.c.h.b16 %v2301
        %v4451 = vunpack.c.l.b16 %v2302
        %v4452 = vunpack.c.h.b16 %v2302
        %v4453 = vunpack.c.l.b16 %v2303
        %v4454 = vunpack.c.h.b16 %v2303
        %v4455 = vunpack.c.l.b16 %v2304
        %v4456 = vunpack.c.h.b16 %v2304
        %v4457 = vunpack.c.l.b16 %v2305
        %v4458 = vunpack.c.h.b16 %v2305
        %v4459 = vunpack.c.l.b16 %v2306
        %v4460 = vunpack.c.h.b16 %v2306
        %v4461 = vunpack.c.l.b16 %v2307
        %v4462 = vunpack.c.h.b16 %v2307
        %v4463 = vunpack.c.l.b16 %v2308
        %v4464 = vunpack.c.h.b16 %v2308
        %v4465 = vunpack.c.l.b16 %v2309
        %v4466 = vunpack.c.h.b16 %v2309
        %v4467 = vunpack.c.l.b16 %v2310
        %v4468 = vunpack.c.h.b16 %v2310
        %v4469 = vunpack.c.l.b16 %v2311
        %v4470 = vunpack.c.h.b16 %v2311
        %v4471 = vunpack.c.l.b16 %v2312
        %v4472 = vunpack.c.h.b16 %v2312
        %v4473 = vunpack.c.l.b16 %v2313
        %v4474 = vunpack.c.h.b16 %v2313
        %v4475 = vunpack.c.l.b16 %v2314
        %v4476 = vunpack.c.h.b16 %v2314
        %v4477 = vunpack.c.l.b16 %v2315
        %v4478 = vunpack.c.h.b16 %v2315
        %v4479 = vunpack.c.l.b16 %v2316
        %v4480 = vunpack.c.h.b16 %v2316
        %v4481 = vunpack.c.l.b16 %v2317
        %v4482 = vunpack.c.h.b16 %v2317
        %v4483 = vunpack.c.l.b16 %v2318
        %v4484 = vunpack.c.h.b16 %v2318
        %v4485 = vunpack.c.l.b16 %v2319
        %v4486 = vunpack.c.h.b16 %v2319
        %v4487 = vunpack.c.l.b16 %v2320
        %v4488 = vunpack.c.h.b16 %v2320
        %v4489 = vunpack.c.l.b16 %v2321
        %v4490 = vunpack.c.h.b16 %v2321
        %v4491 = vunpack.c.l.b16 %v2322
        %v4492 = vunpack.c.h.b16 %v2322
        %v4493 = vunpack.c.l.b16 %v2323
        %v4494 = vunpack.c.h.b16 %v2323
        %v4495 = vunpack.c.l.b16 %v2324
        %v4496 = vunpack.c.h.b16 %v2324
        %v4497 = vunpack.c.l.b16 %v2325
        %v4498 = vunpack.c.h.b16 %v2325
        %v4499 = vunpack.c.l.b16 %v2326
        %v4500 = vunpack.c.h.b16 %v2326
        %v4501 = vunpack.c.l.b16 %v2327
        %v4502 = vunpack.c.h.b16 %v2327
        %v4503 = vunpack.c.l.b16 %v2328
        %v4504 = vunpack.c.h.b16 %v2328
        %v4505 = vunpack.c.l.b16 %v2329
        %v4506 = vunpack.c.h.b16 %v2329
        %v4507 = vunpack.c.l.b16 %v2330
        %v4508 = vunpack.c.h.b16 %v2330
        %v4509 = vunpack.c.l.b16 %v2331
        %v4510 = vunpack.c.h.b16 %v2331
        %v4511 = vunpack.c.l.b16 %v2332
        %v4512 = vunpack.c.h.b16 %v2332
        %v4513 = vunpack.c.l.b16 %v2333
        %v4514 = vunpack.c.h.b16 %v2333
        %v4515 = vunpack.c.l.b16 %v2334
        %v4516 = vunpack.c.h.b16 %v2334
        %v4517 = vunpack.c.l.b16 %v2335
        %v4518 = vunpack.c.h.b16 %v2335
        %v4519 = vunpack.c.l.b16 %v2336
        %v4520 = vunpack.c.h.b16 %v2336
        %v4521 = vunpack.c.l.b16 %v2337
        %v4522 = vunpack.c.h.b16 %v2337
        %v4523 = vunpack.c.l.b16 %v2338
        %v4524 = vunpack.c.h.b16 %v2338
        %v4525 = vunpack.c.l.b16 %v2339
        %v4526 = vunpack.c.h.b16 %v2339
        %v4527 = vunpack.c.l.b16 %v2340
        %v4528 = vunpack.c.h.b16 %v2340
        %v4529 = vunpack.c.l.b16 %v2341
        %v4530 = vunpack.c.h.b16 %v2341
        %v4531 = vunpack.c.l.b16 %v2342
        %v4532 = vunpack.c.h.b16 %v2342
        %v4533 = vunpack.c.l.b16 %v2343
        %v4534 = vunpack.c.h.b16 %v2343
        %v4535 = vunpack.c.l.b16 %v2344
        %v4536 = vunpack.c.h.b16 %v2344
        %v4537 = vunpack.c.l.b16 %v2345
        %v4538 = vunpack.c.h.b16 %v2345
        %v4539 = vunpack.c.l.b16 %v2346
        %v4540 = vunpack.c.h.b16 %v2346
        %v4541 = vunpack.c.l.b16 %v2347
        %v4542 = vunpack.c.h.b16 %v2347
        %v4543 = vunpack.c.l.b16 %v2348
        %v4544 = vunpack.c.h.b16 %v2348
        %v4545 = vunpack.c.l.b16 %v2349
        %v4546 = vunpack.c.h.b16 %v2349
        %v4547 = vunpack.c.l.b16 %v2350
        %v4548 = vunpack.c.h.b16 %v2350
        %v4549 = vunpack.c.l.b16 %v2351
        %v4550 = vunpack.c.h.b16 %v2351
        %v4551 = vunpack.c.l.b16 %v2352
        %v4552 = vunpack.c.h.b16 %v2352
        %v4553 = vunpack.c.l.b16 %v2353
        %v4554 = vunpack.c.h.b16 %v2353
        %v4555 = vunpack.c.l.b16 %v2354
        %v4556 = vunpack.c.h.b16 %v2354
        %v4557 = vunpack.c.l.b16 %v2355
        %v4558 = vunpack.c.h.b16 %v2355
        %v4559 = vunpack.c.l.b16 %v2356
        %v4560 = vunpack.c.h.b16 %v2356
        %v4561 = vunpack.c.l.b16 %v2357
        %v4562 = vunpack.c.h.b16 %v2357
        %v4563 = vunpack.c.l.b16 %v2358
        %v4564 = vunpack.c.h.b16 %v2358
        %v4565 = vunpack.c.l.b16 %v2359
        %v4566 = vunpack.c.h.b16 %v2359
        %v4567 = vunpack.c.l.b16 %v2360
        %v4568 = vunpack.c.h.b16 %v2360
        %v4569 = vunpack.c.l.b16 %v2361
        %v4570 = vunpack.c.h.b16 %v2361
        %v4571 = vunpack.c.l.b16 %v2362
        %v4572 = vunpack.c.h.b16 %v2362
        %v4573 = vunpack.c.l.b16 %v2363
        %v4574 = vunpack.c.h.b16 %v2363
        %v4575 = vunpack.c.l.b16 %v2364
        %v4576 = vunpack.c.h.b16 %v2364
        %v4577 = vunpack.c.l.b16 %v2365
        %v4578 = vunpack.c.h.b16 %v2365
        %v4579 = vunpack.c.l.b16 %v2366
        %v4580 = vunpack.c.h.b16 %v2366
        %v4581 = vunpack.c.l.b16 %v2367
        %v4582 = vunpack.c.h.b16 %v2367
        %v4583 = vunpack.c.l.b16 %v2368
        %v4584 = vunpack.c.h.b16 %v2368
        %v4585 = vunpack.c.l.b16 %v2369
        %v4586 = vunpack.c.h.b16 %v2369
        %v4587 = vunpack.c.l.b16 %v2370
        %v4588 = vunpack.c.h.b16 %v2370
        %v4589 = vunpack.c.l.b16 %v2371
        %v4590 = vunpack.c.h.b16 %v2371
        %v4591 = vunpack.c.l.b16 %v2372
        %v4592 = vunpack.c.h.b16 %v2372
        %v4593 = vunpack.c.l.b16 %v2373
        %v4594 = vunpack.c.h.b16 %v2373
        %v4595 = vunpack.c.l.b16 %v2374
        %v4596 = vunpack.c.h.b16 %v2374
        %v4597 = vunpack.c.l.b16 %v2375
        %v4598 = vunpack.c.h.b16 %v2375
        %v4599 = vunpack.c.l.b16 %v2376
        %v4600 = vunpack.c.h.b16 %v2376
        %v4601 = vunpack.c.l.b16 %v2377
        %v4602 = vunpack.c.h.b16 %v2377
        %v4603 = vunpack.c.l.b16 %v2378
        %v4604 = vunpack.c.h.b16 %v2378
        %v4605 = vunpack.c.l.b16 %v2379
        %v4606 = vunpack.c.h.b16 %v2379
        %v4607 = vunpack.c.l.b16 %v2380
        %v4608 = vunpack.c.h.b16 %v2380
        %v4609 = vunpack.c.l.b16 %v2381
        %v4610 = vunpack.c.h.b16 %v2381
        %v4611 = vunpack.c.l.b16 %v2382
        %v4612 = vunpack.c.h.b16 %v2382
        %v4613 = vunpack.c.l.b16 %v2383
        %v4614 = vunpack.c.h.b16 %v2383
        %v4615 = vunpack.c.l.b16 %v2384
        %v4616 = vunpack.c.h.b16 %v2384
        %v4617 = vunpack.c.l.b16 %v2385
        %v4618 = vunpack.c.h.b16 %v2385
        %v4619 = vunpack.c.l.b16 %v2386
        %v4620 = vunpack.c.h.b16 %v2386
        %v4621 = vunpack.c.l.b16 %v2387
        %v4622 = vunpack.c.h.b16 %v2387
        %v4623 = vunpack.c.l.b16 %v2388
        %v4624 = vunpack.c.h.b16 %v2388
        %v4625 = vunpack.c.l.b16 %v2389
        %v4626 = vunpack.c.h.b16 %v2389
        %v4627 = vunpack.c.l.b16 %v2390
        %v4628 = vunpack.c.h.b16 %v2390
        %v4629 = vunpack.c.l.b16 %v2391
        %v4630 = vunpack.c.h.b16 %v2391
        %v4631 = vunpack.c.l.b16 %v2392
        %v4632 = vunpack.c.h.b16 %v2392
        %v4633 = vunpack.c.l.b16 %v2393
        %v4634 = vunpack.c.h.b16 %v2393
        %v4635 = vunpack.c.l.b16 %v2394
        %v4636 = vunpack.c.h.b16 %v2394
        %v4637 = vunpack.c.l.b16 %v2395
        %v4638 = vunpack.c.h.b16 %v2395
        %v4639 = vunpack.c.l.b16 %v2396
        %v4640 = vunpack.c.h.b16 %v2396
        %v4641 = vunpack.c.l.b16 %v2397
        %v4642 = vunpack.c.h.b16 %v2397
        %v4643 = vunpack.c.l.b16 %v2398
        %v4644 = vunpack.c.h.b16 %v2398
        %v4645 = vunpack.c.l.b16 %v2399
        %v4646 = vunpack.c.h.b16 %v2399
        %v4647 = vunpack.c.l.b16 %v2400
        %v4648 = vunpack.c.h.b16 %v2400
        %v4649 = vunpack.c.l.b16 %v2401
        %v4650 = vunpack.c.h.b16 %v2401
        %v4651 = vunpack.c.l.b16 %v2402
        %v4652 = vunpack.c.h.b16 %v2402
        %v4653 = vunpack.c.l.b16 %v2403
        %v4654 = vunpack.c.h.b16 %v2403
        %v4655 = vunpack.c.l.b16 %v2404
        %v4656 = vunpack.c.h.b16 %v2404
        %v4657 = vunpack.c.l.b16 %v2405
        %v4658 = vunpack.c.h.b16 %v2405
        %v4659 = vunpack.c.l.b16 %v2406
        %v4660 = vunpack.c.h.b16 %v2406
        %v4661 = vunpack.c.l.b16 %v2407
        %v4662 = vunpack.c.h.b16 %v2407
        %v4663 = vunpack.c.l.b16 %v2408
        %v4664 = vunpack.c.h.b16 %v2408
        %v4665 = vunpack.c.l.b16 %v2409
        %v4666 = vunpack.c.h.b16 %v2409
        %v4667 = vunpack.c.l.b16 %v2410
        %v4668 = vunpack.c.h.b16 %v2410
        %v4669 = vunpack.c.l.b16 %v2411
        %v4670 = vunpack.c.h.b16 %v2411
        %v4671 = vunpack.c.l.b16 %v2412
        %v4672 = vunpack.c.h.b16 %v2412
        %v4673 = vunpack.c.l.b16 %v2413
        %v4674 = vunpack.c.h.b16 %v2413
        %v4675 = vunpack.c.l.b16 %v2414
        %v4676 = vunpack.c.h.b16 %v2414
        %v4677 = vunpack.c.l.b16 %v2415
        %v4678 = vunpack.c.h.b16 %v2415
        %v4679 = vunpack.c.l.b16 %v2416
        %v4680 = vunpack.c.h.b16 %v2416
        %v4681 = vunpack.c.l.b16 %v2417
        %v4682 = vunpack.c.h.b16 %v2417
        %v4683 = vunpack.c.l.b16 %v2418
        %v4684 = vunpack.c.h.b16 %v2418
        %v4685 = vunpack.c.l.b16 %v2419
        %v4686 = vunpack.c.h.b16 %v2419
        %v4687 = vunpack.c.l.b16 %v2420
        %v4688 = vunpack.c.h.b16 %v2420
        %v4689 = vunpack.c.l.b16 %v2421
        %v4690 = vunpack.c.h.b16 %v2421
        %v4691 = vunpack.c.l.b16 %v2422
        %v4692 = vunpack.c.h.b16 %v2422
        %v4693 = vunpack.c.l.b16 %v2423
        %v4694 = vunpack.c.h.b16 %v2423
        %v4695 = vunpack.c.l.b16 %v2424
        %v4696 = vunpack.c.h.b16 %v2424
        %v4697 = vunpack.c.l.b16 %v2425
        %v4698 = vunpack.c.h.b16 %v2425
        %v4699 = vunpack.c.l.b16 %v2426
        %v4700 = vunpack.c.h.b16 %v2426
        %v4701 = vunpack.c.l.b16 %v2427
        %v4702 = vunpack.c.h.b16 %v2427
        %v4703 = vunpack.c.l.b16 %v2428
        %v4704 = vunpack.c.h.b16 %v2428
        %v4705 = vunpack.c.l.b16 %v2429
        %v4706 = vunpack.c.h.b16 %v2429
        %v4707 = vunpack.c.l.b16 %v2430
        %v4708 = vunpack.c.h.b16 %v2430
        %v4709 = vunpack.c.l.b16 %v2431
        %v4710 = vunpack.c.h.b16 %v2431
        %v4711 = vunpack.c.l.b16 %v2432
        %v4712 = vunpack.c.h.b16 %v2432
        %v4713 = vunpack.c.l.b16 %v2433
        %v4714 = vunpack.c.h.b16 %v2433
        %v4715 = vunpack.c.l.b16 %v2434
        %v4716 = vunpack.c.h.b16 %v2434
        %v4717 = vunpack.c.l.b16 %v2435
        %v4718 = vunpack.c.h.b16 %v2435
        %v4719 = vunpack.c.l.b16 %v2436
        %v4720 = vunpack.c.h.b16 %v2436
        %v4721 = vunpack.c.l.b16 %v2437
        %v4722 = vunpack.c.h.b16 %v2437
        %v4723 = vunpack.c.l.b16 %v2438
        %v4724 = vunpack.c.h.b16 %v2438
        %v4725 = vunpack.c.l.b16 %v2439
        %v4726 = vunpack.c.h.b16 %v2439
        %v4727 = vunpack.c.l.b16 %v2440
        %v4728 = vunpack.c.h.b16 %v2440
        %v4729 = vunpack.c.l.b16 %v2441
        %v4730 = vunpack.c.h.b16 %v2441
        %v4731 = vunpack.c.l.b16 %v2442
        %v4732 = vunpack.c.h.b16 %v2442
        %v4733 = vunpack.c.l.b16 %v2443
        %v4734 = vunpack.c.h.b16 %v2443
        %v4735 = vunpack.c.l.b16 %v2444
        %v4736 = vunpack.c.h.b16 %v2444
        %v4737 = vunpack.c.l.b16 %v2445
        %v4738 = vunpack.c.h.b16 %v2445
        %v4739 = vunpack.c.l.b16 %v2446
        %v4740 = vunpack.c.h.b16 %v2446
        %v4741 = vunpack.c.l.b16 %v2447
        %v4742 = vunpack.c.h.b16 %v2447
        %v4743 = vunpack.c.l.b16 %v2448
        %v4744 = vunpack.c.h.b16 %v2448
        %v4745 = vunpack.c.l.b16 %v2449
        %v4746 = vunpack.c.h.b16 %v2449
        %v4747 = vunpack.c.l.b16 %v2450
        %v4748 = vunpack.c.h.b16 %v2450
        %v4749 = vunpack.c.l.b16 %v2451
        %v4750 = vunpack.c.h.b16 %v2451
        %v4751 = vunpack.c.l.b16 %v2452
        %v4752 = vunpack.c.h.b16 %v2452
        %v4753 = vunpack.c.l.b16 %v2453
        %v4754 = vunpack.c.h.b16 %v2453
        %v4755 = vunpack.c.l.b16 %v2454
        %v4756 = vunpack.c.h.b16 %v2454
        %v4757 = vunpack.c.l.b16 %v2455
        %v4758 = vunpack.c.h.b16 %v2455
        %v4759 = vunpack.c.l.b16 %v2456
        %v4760 = vunpack.c.h.b16 %v2456
        %v4761 = vunpack.c.l.b16 %v2457
        %v4762 = vunpack.c.h.b16 %v2457
        %v4763 = vunpack.c.l.b16 %v2458
        %v4764 = vunpack.c.h.b16 %v2458
        %v4765 = vunpack.c.l.b16 %v2459
        %v4766 = vunpack.c.h.b16 %v2459
        %v4767 = vunpack.c.l.b16 %v2460
        %v4768 = vunpack.c.h.b16 %v2460
        %v4769 = vunpack.c.l.b16 %v2461
        %v4770 = vunpack.c.h.b16 %v2461
        %v4771 = vunpack.c.l.b16 %v2462
        %v4772 = vunpack.c.h.b16 %v2462
        %v4773 = vunpack.c.l.b16 %v2463
        %v4774 = vunpack.c.h.b16 %v2463
        %v4775 = vunpack.c.l.b16 %v2464
        %v4776 = vunpack.c.h.b16 %v2464
        %v4777 = vunpack.c.l.b16 %v2465
        %v4778 = vunpack.c.h.b16 %v2465
        %v4779 = vunpack.c.l.b16 %v2466
        %v4780 = vunpack.c.h.b16 %v2466
        %v4781 = vunpack.c.l.b16 %v2467
        %v4782 = vunpack.c.h.b16 %v2467
        %v4783 = vunpack.c.l.b16 %v2468
        %v4784 = vunpack.c.h.b16 %v2468
        %v4785 = vunpack.c.l.b16 %v2469
        %v4786 = vunpack.c.h.b16 %v2469
        %v4787 = vunpack.c.l.b16 %v2470
        %v4788 = vunpack.c.h.b16 %v2470
        %v4789 = vunpack.c.l.b16 %v2471
        %v4790 = vunpack.c.h.b16 %v2471
        %v4791 = vunpack.c.l.b16 %v2472
        %v4792 = vunpack.c.h.b16 %v2472
        %v4793 = vunpack.c.l.b16 %v2473
        %v4794 = vunpack.c.h.b16 %v2473
        %v4795 = vunpack.c.l.b16 %v2474
        %v4796 = vunpack.c.h.b16 %v2474
        %v4797 = vunpack.c.l.b16 %v2475
        %v4798 = vunpack.c.h.b16 %v2475
        %v4799 = vunpack.c.l.b16 %v2476
        %v4800 = vunpack.c.h.b16 %v2476
        %v4801 = vunpack.c.l.b16 %v2477
        %v4802 = vunpack.c.h.b16 %v2477
        %v4803 = vunpack.c.l.b16 %v2478
        %v4804 = vunpack.c.h.b16 %v2478
        %v4805 = vunpack.c.l.b16 %v2479
        %v4806 = vunpack.c.h.b16 %v2479
        %v4807 = vunpack.c.l.b16 %v2480
        %v4808 = vunpack.c.h.b16 %v2480
        %v4809 = vunpack.c.l.b16 %v2481
        %v4810 = vunpack.c.h.b16 %v2481
        %v4811 = vunpack.c.l.b16 %v2482
        %v4812 = vunpack.c.h.b16 %v2482
        %v4813 = vunpack.c.l.b16 %v2483
        %v4814 = vunpack.c.h.b16 %v2483
        %v4815 = vunpack.c.l.b16 %v2484
        %v4816 = vunpack.c.h.b16 %v2484
        %v4817 = vunpack.c.l.b16 %v2485
        %v4818 = vunpack.c.h.b16 %v2485
        %v4819 = vunpack.c.l.b16 %v2486
        %v4820 = vunpack.c.h.b16 %v2486
        %v4821 = vunpack.c.l.b16 %v2487
        %v4822 = vunpack.c.h.b16 %v2487
        %v4823 = vunpack.c.l.b16 %v2488
        %v4824 = vunpack.c.h.b16 %v2488
        %v4825 = vunpack.c.l.b16 %v2489
        %v4826 = vunpack.c.h.b16 %v2489
        %v4827 = vunpack.c.l.b16 %v2490
        %v4828 = vunpack.c.h.b16 %v2490
        %v4829 = vunpack.c.l.b16 %v2491
        %v4830 = vunpack.c.h.b16 %v2491
        %v4831 = vunpack.c.l.b16 %v2492
        %v4832 = vunpack.c.h.b16 %v2492
        %v4833 = vunpack.c.l.b16 %v2493
        %v4834 = vunpack.c.h.b16 %v2493
        %v4835 = vunpack.c.l.b16 %v2494
        %v4836 = vunpack.c.h.b16 %v2494
        %v4837 = vunpack.c.l.b16 %v2495
        %v4838 = vunpack.c.h.b16 %v2495
        %v4839 = vunpack.c.l.b16 %v2496
        %v4840 = vunpack.c.h.b16 %v2496
        %v4841 = vunpack.c.l.b16 %v2497
        %v4842 = vunpack.c.h.b16 %v2497
        %v4843 = vunpack.c.l.b16 %v2498
        %v4844 = vunpack.c.h.b16 %v2498
        %v4845 = vunpack.c.l.b16 %v2499
        %v4846 = vunpack.c.h.b16 %v2499
        %v4847 = vunpack.c.l.b16 %v2500
        %v4848 = vunpack.c.h.b16 %v2500
        %v4849 = vunpack.c.l.b16 %v2501
        %v4850 = vunpack.c.h.b16 %v2501
        %v4851 = vunpack.c.l.b16 %v2502
        %v4852 = vunpack.c.h.b16 %v2502
        %v4853 = vunpack.c.l.b16 %v2503
        %v4854 = vunpack.c.h.b16 %v2503
        %v4855 = vunpack.c.l.b16 %v2504
        %v4856 = vunpack.c.h.b16 %v2504
        %v4857 = vunpack.c.l.b16 %v2505
        %v4858 = vunpack.c.h.b16 %v2505
        %v4859 = vunpack.c.l.b16 %v2506
        %v4860 = vunpack.c.h.b16 %v2506
        %v4861 = vunpack.c.l.b16 %v2507
        %v4862 = vunpack.c.h.b16 %v2507
        %v4863 = vunpack.c.l.b16 %v2508
        %v4864 = vunpack.c.h.b16 %v2508
        %v4865 = vunpack.c.l.b16 %v2509
        %v4866 = vunpack.c.h.b16 %v2509
        %v4867 = vunpack.c.l.b16 %v2510
        %v4868 = vunpack.c.h.b16 %v2510
        %v4869 = vunpack.c.l.b16 %v2511
        %v4870 = vunpack.c.h.b16 %v2511
        %v4871 = vunpack.c.l.b16 %v2512
        %v4872 = vunpack.c.h.b16 %v2512
        %v4873 = vunpack.c.l.b16 %v2513
        %v4874 = vunpack.c.h.b16 %v2513
        %v4875 = vunpack.c.l.b16 %v2514
        %v4876 = vunpack.c.h.b16 %v2514
        %v4877 = vunpack.c.l.b16 %v2515
        %v4878 = vunpack.c.h.b16 %v2515
        %v4879 = vunpack.c.l.b16 %v2516
        %v4880 = vunpack.c.h.b16 %v2516
        %v4881 = vunpack.c.l.b16 %v2517
        %v4882 = vunpack.c.h.b16 %v2517
        %v4883 = vunpack.c.l.b16 %v2518
        %v4884 = vunpack.c.h.b16 %v2518
        %v4885 = vunpack.c.l.b16 %v2519
        %v4886 = vunpack.c.h.b16 %v2519
        %v4887 = vunpack.c.l.b16 %v2520
        %v4888 = vunpack.c.h.b16 %v2520
        %v4889 = vunpack.c.l.b16 %v2521
        %v4890 = vunpack.c.h.b16 %v2521
        %v4891 = vunpack.c.l.b16 %v2522
        %v4892 = vunpack.c.h.b16 %v2522
        %v4893 = vunpack.c.l.b16 %v2523
        %v4894 = vunpack.c.h.b16 %v2523
        %v4895 = vunpack.c.l.b16 %v2524
        %v4896 = vunpack.c.h.b16 %v2524
        %v4897 = vunpack.c.l.b16 %v2525
        %v4898 = vunpack.c.h.b16 %v2525
        %v4899 = vunpack.c.l.b16 %v2526
        %v4900 = vunpack.c.h.b16 %v2526
        %v4901 = vunpack.c.l.b16 %v2527
        %v4902 = vunpack.c.h.b16 %v2527
        %v4903 = vunpack.c.l.b16 %v2528
        %v4904 = vunpack.c.h.b16 %v2528
        %v4905 = vunpack.c.l.b16 %v2529
        %v4906 = vunpack.c.h.b16 %v2529
        %v4907 = vunpack.c.l.b16 %v2530
        %v4908 = vunpack.c.h.b16 %v2530
        %v4909 = vunpack.c.l.b16 %v2531
        %v4910 = vunpack.c.h.b16 %v2531
        %v4911 = vunpack.c.l.b16 %v2532
        %v4912 = vunpack.c.h.b16 %v2532
        %v4913 = vunpack.c.l.b16 %v2533
        %v4914 = vunpack.c.h.b16 %v2533
        %v4915 = vunpack.c.l.b16 %v2534
        %v4916 = vunpack.c.h.b16 %v2534
        %v4917 = vunpack.c.l.b16 %v2535
        %v4918 = vunpack.c.h.b16 %v2535
        %v4919 = vunpack.c.l.b16 %v2536
        %v4920 = vunpack.c.h.b16 %v2536
        %v4921 = vunpack.c.l.b16 %v2537
        %v4922 = vunpack.c.h.b16 %v2537
        %v4923 = vunpack.c.l.b16 %v2538
        %v4924 = vunpack.c.h.b16 %v2538
        %v4925 = vunpack.c.l.b16 %v2539
        %v4926 = vunpack.c.h.b16 %v2539
        %v4927 = vunpack.c.l.b16 %v2540
        %v4928 = vunpack.c.h.b16 %v2540
        %v4929 = vunpack.c.l.b16 %v2541
        %v4930 = vunpack.c.h.b16 %v2541
        %v4931 = vunpack.c.l.b16 %v2542
        %v4932 = vunpack.c.h.b16 %v2542
        %v4933 = vunpack.c.l.b16 %v2543
        %v4934 = vunpack.c.h.b16 %v2543
        %v4935 = vunpack.c.l.b16 %v2544
        %v4936 = vunpack.c.h.b16 %v2544
        %v4937 = vunpack.c.l.b16 %v2545
        %v4938 = vunpack.c.h.b16 %v2545
        %v4939 = vunpack.c.l.b16 %v2546
        %v4940 = vunpack.c.h.b16 %v2546
        %v4941 = vunpack.c.l.b16 %v2547
        %v4942 = vunpack.c.h.b16 %v2547
        %v4943 = vunpack.c.l.b16 %v2548
        %v4944 = vunpack.c.h.b16 %v2548
        %v4945 = vunpack.c.l.b16 %v2549
        %v4946 = vunpack.c.h.b16 %v2549
        %v4947 = vunpack.c.l.b16 %v2550
        %v4948 = vunpack.c.h.b16 %v2550
        %v4949 = vunpack.c.l.b16 %v2551
        %v4950 = vunpack.c.h.b16 %v2551
        %v4951 = vunpack.c.l.b16 %v2552
        %v4952 = vunpack.c.h.b16 %v2552
        %v4953 = vunpack.c.l.b16 %v2553
        %v4954 = vunpack.c.h.b16 %v2553
        %v4955 = vunpack.c.l.b16 %v2554
        %v4956 = vunpack.c.h.b16 %v2554
        %v4957 = vunpack.c.l.b16 %v2555
        %v4958 = vunpack.c.h.b16 %v2555
        %v4959 = vunpack.c.l.b16 %v2556
        %v4960 = vunpack.c.h.b16 %v2556
        %v4961 = vunpack.c.l.b16 %v2557
        %v4962 = vunpack.c.h.b16 %v2557
        %v4963 = vunpack.c.l.b16 %v2558
        %v4964 = vunpack.c.h.b16 %v2558
        %v4965 = vunpack.c.l.b16 %v2559
        %v4966 = vunpack.c.h.b16 %v2559
        %v4967 = vunpack.c.l.b16 %v2560
        %v4968 = vunpack.c.h.b16 %v2560
        %v4969 = vunpack.c.l.b16 %v2561
        %v4970 = vunpack.c.h.b16 %v2561
        %v4971 = vunpack.c.l.b16 %v2562
        %v4972 = vunpack.c.h.b16 %v2562
        %v4973 = vunpack.c.l.b16 %v2563
        %v4974 = vunpack.c.h.b16 %v2563
        %v4975 = vunpack.c.l.b16 %v2564
        %v4976 = vunpack.c.h.b16 %v2564
        %v4977 = vunpack.c.l.b16 %v2565
        %v4978 = vunpack.c.h.b16 %v2565
        %v4979 = vunpack.c.l.b16 %v2566
        %v4980 = vunpack.c.h.b16 %v2566
        %v4981 = vunpack.c.l.b16 %v2567
        %v4982 = vunpack.c.h.b16 %v2567
        %v4983 = vunpack.c.l.b16 %v2568
        %v4984 = vunpack.c.h.b16 %v2568
        %v4985 = vunpack.c.l.b16 %v2569
        %v4986 = vunpack.c.h.b16 %v2569
        %v4987 = vunpack.c.l.b16 %v2570
        %v4988 = vunpack.c.h.b16 %v2570
        %v4989 = vunpack.c.l.b16 %v2571
        %v4990 = vunpack.c.h.b16 %v2571
        %v4991 = vunpack.c.l.b16 %v2572
        %v4992 = vunpack.c.h.b16 %v2572
        %v4993 = vunpack.c.l.b16 %v2573
        %v4994 = vunpack.c.h.b16 %v2573
        %v4995 = vunpack.c.l.b16 %v2574
        %v4996 = vunpack.c.h.b16 %v2574
        %v4997 = vunpack.c.l.b16 %v2575
        %v4998 = vunpack.c.h.b16 %v2575
        %v4999 = vunpack.c.l.b16 %v2576
        %v5000 = vunpack.c.h.b16 %v2576
        %v5001 = vunpack.c.l.b16 %v2577
        %v5002 = vunpack.c.h.b16 %v2577
        %v5003 = vunpack.c.l.b16 %v2578
        %v5004 = vunpack.c.h.b16 %v2578
        %v5005 = vunpack.c.l.b16 %v2579
        %v5006 = vunpack.c.h.b16 %v2579
        %v5007 = vunpack.c.l.b16 %v2580
        %v5008 = vunpack.c.h.b16 %v2580
        %v5009 = vunpack.c.l.b16 %v2581
        %v5010 = vunpack.c.h.b16 %v2581
        %v5011 = vunpack.c.l.b16 %v2582
        %v5012 = vunpack.c.h.b16 %v2582
        %v5013 = vunpack.c.l.b16 %v2583
        %v5014 = vunpack.c.h.b16 %v2583
        %v5015 = vunpack.c.l.b16 %v2584
        %v5016 = vunpack.c.h.b16 %v2584
        %v5017 = vunpack.c.l.b16 %v2585
        %v5018 = vunpack.c.h.b16 %v2585
        %v5019 = vunpack.c.l.b16 %v2586
        %v5020 = vunpack.c.h.b16 %v2586
        %v5021 = vunpack.c.l.b16 %v2587
        %v5022 = vunpack.c.h.b16 %v2587
        %v5023 = vunpack.c.l.b16 %v2588
        %v5024 = vunpack.c.h.b16 %v2588
        %v5025 = vunpack.c.l.b16 %v2589
        %v5026 = vunpack.c.h.b16 %v2589
        %v5027 = vunpack.c.l.b16 %v2590
        %v5028 = vunpack.c.h.b16 %v2590
        %v5029 = vunpack.c.l.b16 %v2591
        %v5030 = vunpack.c.h.b16 %v2591
        %v5031 = vunpack.c.l.b16 %v2592
        %v5032 = vunpack.c.h.b16 %v2592
        %v5033 = vunpack.c.l.b16 %v2593
        %v5034 = vunpack.c.h.b16 %v2593
        %v5035 = vunpack.c.l.b16 %v2594
        %v5036 = vunpack.c.h.b16 %v2594
        %v5037 = vunpack.c.l.b16 %v2595
        %v5038 = vunpack.c.h.b16 %v2595
        %v5039 = vunpack.c.l.b16 %v2596
        %v5040 = vunpack.c.h.b16 %v2596
        %v5041 = vunpack.c.l.b16 %v2597
        %v5042 = vunpack.c.h.b16 %v2597
        %v5043 = vunpack.c.l.b16 %v2598
        %v5044 = vunpack.c.h.b16 %v2598
        %v5045 = vunpack.c.l.b16 %v2599
        %v5046 = vunpack.c.h.b16 %v2599
        %v5047 = vunpack.c.l.b16 %v2600
        %v5048 = vunpack.c.h.b16 %v2600
        %v5049 = vunpack.c.l.b16 %v2601
        %v5050 = vunpack.c.h.b16 %v2601
        %v5051 = vunpack.c.l.b16 %v2602
        %v5052 = vunpack.c.h.b16 %v2602
        %v5053 = vunpack.c.l.b16 %v2603
        %v5054 = vunpack.c.h.b16 %v2603
        %v5055 = vunpack.c.l.b16 %v2604
        %v5056 = vunpack.c.h.b16 %v2604
        %v5057 = vunpack.c.l.b16 %v2605
        %v5058 = vunpack.c.h.b16 %v2605
        %v5059 = vunpack.c.l.b16 %v2606
        %v5060 = vunpack.c.h.b16 %v2606
        %v5061 = vunpack.c.l.b16 %v2607
        %v5062 = vunpack.c.h.b16 %v2607
        %v5063 = vunpack.c.l.b16 %v2608
        %v5064 = vunpack.c.h.b16 %v2608
        %v5065 = vunpack.c.l.b16 %v2609
        %v5066 = vunpack.c.h.b16 %v2609
        %v5067 = vunpack.c.l.b16 %v2610
        %v5068 = vunpack.c.h.b16 %v2610
        %v5069 = vunpack.c.l.b16 %v2611
        %v5070 = vunpack.c.h.b16 %v2611
        %v5071 = vunpack.c.l.b16 %v2612
        %v5072 = vunpack.c.h.b16 %v2612
        %v5073 = vunpack.c.l.b16 %v2613
        %v5074 = vunpack.c.h.b16 %v2613
        %v5075 = vunpack.c.l.b16 %v2614
        %v5076 = vunpack.c.h.b16 %v2614
        %v5077 = vunpack.c.l.b16 %v2615
        %v5078 = vunpack.c.h.b16 %v2615
        %v5079 = vunpack.c.l.b16 %v2616
        %v5080 = vunpack.c.h.b16 %v2616
        %v5081 = vunpack.c.l.b16 %v2617
        %v5082 = vunpack.c.h.b16 %v2617
        %v5083 = vunpack.c.l.b16 %v2618
        %v5084 = vunpack.c.h.b16 %v2618
        %v5085 = vunpack.c.l.b16 %v2619
        %v5086 = vunpack.c.h.b16 %v2619
        %v5087 = vunpack.c.l.b16 %v2620
        %v5088 = vunpack.c.h.b16 %v2620
        %v5089 = vunpack.c.l.b16 %v2621
        %v5090 = vunpack.c.h.b16 %v2621
        %v5091 = vunpack.c.l.b16 %v2622
        %v5092 = vunpack.c.h.b16 %v2622
        %v5093 = vunpack.c.l.b16 %v2623
        %v5094 = vunpack.c.h.b16 %v2623
        %v5095 = vunpack.c.l.b16 %v2624
        %v5096 = vunpack.c.h.b16 %v2624
        %v5097 = vunpack.c.l.b16 %v2625
        %v5098 = vunpack.c.h.b16 %v2625
        %v5099 = vunpack.c.l.b16 %v2626
        %v5100 = vunpack.c.h.b16 %v2626
        %v5101 = vunpack.c.l.b16 %v2627
        %v5102 = vunpack.c.h.b16 %v2627
        %v5103 = vunpack.c.l.b16 %v2628
        %v5104 = vunpack.c.h.b16 %v2628
        %v5105 = vunpack.c.l.b16 %v2629
        %v5106 = vunpack.c.h.b16 %v2629
        %v5107 = vunpack.c.l.b16 %v2630
        %v5108 = vunpack.c.h.b16 %v2630
        %v5109 = vunpack.c.l.b16 %v2631
        %v5110 = vunpack.c.h.b16 %v2631
        %v5111 = vunpack.c.l.b16 %v2632
        %v5112 = vunpack.c.h.b16 %v2632
        %v5113 = vunpack.c.l.b16 %v2633
        %v5114 = vunpack.c.h.b16 %v2633
        %v5115 = vunpack.c.l.b16 %v2634
        %v5116 = vunpack.c.h.b16 %v2634
        %v5117 = vunpack.c.l.b16 %v2635
        %v5118 = vunpack.c.h.b16 %v2635
        %v5119 = vunpack.c.l.b16 %v2636
        %v5120 = vunpack.c.h.b16 %v2636
        %v5121 = vunpack.c.l.b16 %v2637
        %v5122 = vunpack.c.h.b16 %v2637
        %v5123 = vunpack.c.l.b16 %v2638
        %v5124 = vunpack.c.h.b16 %v2638
        %v5125 = vunpack.c.l.b16 %v2639
        %v5126 = vunpack.c.h.b16 %v2639
        %v5127 = vunpack.c.l.b16 %v2640
        %v5128 = vunpack.c.h.b16 %v2640
        %v5129 = vunpack.c.l.b16 %v2641
        %v5130 = vunpack.c.h.b16 %v2641
        %v5131 = vunpack.c.l.b16 %v2642
        %v5132 = vunpack.c.h.b16 %v2642
        %v5133 = vunpack.c.l.b16 %v2643
        %v5134 = vunpack.c.h.b16 %v2643
        %v5135 = vunpack.c.l.b16 %v2644
        %v5136 = vunpack.c.h.b16 %v2644
        %v5137 = vunpack.c.l.b16 %v2645
        %v5138 = vunpack.c.h.b16 %v2645
        %v5139 = vunpack.c.l.b16 %v2646
        %v5140 = vunpack.c.h.b16 %v2646
        %v5141 = vunpack.c.l.b16 %v2647
        %v5142 = vunpack.c.h.b16 %v2647
        %v5143 = vunpack.c.l.b16 %v2648
        %v5144 = vunpack.c.h.b16 %v2648
        %v5145 = vunpack.c.l.b16 %v2649
        %v5146 = vunpack.c.h.b16 %v2649
        %v5147 = vunpack.c.l.b16 %v2650
        %v5148 = vunpack.c.h.b16 %v2650
        %v5149 = vunpack.c.l.b16 %v2651
        %v5150 = vunpack.c.h.b16 %v2651
        %v5151 = vunpack.c.l.b16 %v2652
        %v5152 = vunpack.c.h.b16 %v2652
        %v5153 = vunpack.c.l.b16 %v2653
        %v5154 = vunpack.c.h.b16 %v2653
        %v5155 = vunpack.c.l.b16 %v2654
        %v5156 = vunpack.c.h.b16 %v2654
        %v5157 = vunpack.c.l.b16 %v2655
        %v5158 = vunpack.c.h.b16 %v2655
        %v5159 = vunpack.c.l.b16 %v2656
        %v5160 = vunpack.c.h.b16 %v2656
        %v5161 = vunpack.c.l.b16 %v2657
        %v5162 = vunpack.c.h.b16 %v2657
        %v5163 = vunpack.c.l.b16 %v2658
        %v5164 = vunpack.c.h.b16 %v2658
        %v5165 = vunpack.c.l.b16 %v2659
        %v5166 = vunpack.c.h.b16 %v2659
        %v5167 = vunpack.c.l.b16 %v2660
        %v5168 = vunpack.c.h.b16 %v2660
        %v5169 = vunpack.c.l.b16 %v2661
        %v5170 = vunpack.c.h.b16 %v2661
        %v5171 = vunpack.c.l.b16 %v2662
        %v5172 = vunpack.c.h.b16 %v2662
        %v5173 = vunpack.c.l.b16 %v2663
        %v5174 = vunpack.c.h.b16 %v2663
        %v5175 = vunpack.c.l.b16 %v2664
        %v5176 = vunpack.c.h.b16 %v2664
        %v5177 = vunpack.c.l.b16 %v2665
        %v5178 = vunpack.c.h.b16 %v2665
        %v5179 = vunpack.c.l.b16 %v2666
        %v5180 = vunpack.c.h.b16 %v2666
        %v5181 = vunpack.c.l.b16 %v2667
        %v5182 = vunpack.c.h.b16 %v2667
        %v5183 = vunpack.c.l.b16 %v2668
        %v5184 = vunpack.c.h.b16 %v2668
        %v5185 = vunpack.c.l.b16 %v2669
        %v5186 = vunpack.c.h.b16 %v2669
        %v5187 = vunpack.c.l.b16 %v2670
        %v5188 = vunpack.c.h.b16 %v2670
        %v5189 = vunpack.c.l.b16 %v2671
        %v5190 = vunpack.c.h.b16 %v2671
        %v5191 = vunpack.c.l.b16 %v2672
        %v5192 = vunpack.c.h.b16 %v2672
        %v5193 = vunpack.c.l.b16 %v2673
        %v5194 = vunpack.c.h.b16 %v2673
        %v5195 = vunpack.c.l.b16 %v2674
        %v5196 = vunpack.c.h.b16 %v2674
        %v5197 = vunpack.c.l.b16 %v2675
        %v5198 = vunpack.c.h.b16 %v2675
        %v5199 = vunpack.c.l.b16 %v2676
        %v5200 = vunpack.c.h.b16 %v2676
        %v5201 = vunpack.c.l.b16 %v2677
        %v5202 = vunpack.c.h.b16 %v2677
        %v5203 = vunpack.c.l.b16 %v2678
        %v5204 = vunpack.c.h.b16 %v2678
        %v5205 = vunpack.c.l.b16 %v2679
        %v5206 = vunpack.c.h.b16 %v2679
        %v5207 = vunpack.c.l.b16 %v2680
        %v5208 = vunpack.c.h.b16 %v2680
        %v5209 = vunpack.c.l.b16 %v2681
        %v5210 = vunpack.c.h.b16 %v2681
        %v5211 = vunpack.c.l.b16 %v2682
        %v5212 = vunpack.c.h.b16 %v2682
        %v5213 = vunpack.c.l.b16 %v2683
        %v5214 = vunpack.c.h.b16 %v2683
        %v5215 = vunpack.c.l.b16 %v2684
        %v5216 = vunpack.c.h.b16 %v2684
        %v5217 = vunpack.c.l.b16 %v2685
        %v5218 = vunpack.c.h.b16 %v2685
        %v5219 = vunpack.c.l.b16 %v2686
        %v5220 = vunpack.c.h.b16 %v2686
        %v5221 = vunpack.c.l.b16 %v2687
        %v5222 = vunpack.c.h.b16 %v2687
        %v5223 = vunpack.c.l.b16 %v2688
        %v5224 = vunpack.c.h.b16 %v2688
        %v5225 = vunpack.c.l.b16 %v2689
        %v5226 = vunpack.c.h.b16 %v2689
        %v5227 = vunpack.c.l.b16 %v2690
        %v5228 = vunpack.c.h.b16 %v2690
        %v5229 = vunpack.c.l.b16 %v2691
        %v5230 = vunpack.c.h.b16 %v2691
        %v5231 = vunpack.c.l.b16 %v2692
        %v5232 = vunpack.c.h.b16 %v2692
        %v5233 = vunpack.c.l.b16 %v2693
        %v5234 = vunpack.c.h.b16 %v2693
        %v5235 = vunpack.c.l.b16 %v2694
        %v5236 = vunpack.c.h.b16 %v2694
        %v5237 = vunpack.c.l.b16 %v2695
        %v5238 = vunpack.c.h.b16 %v2695
        %v5239 = vunpack.c.l.b16 %v2696
        %v5240 = vunpack.c.h.b16 %v2696
        %v5241 = vunpack.c.l.b16 %v2697
        %v5242 = vunpack.c.h.b16 %v2697
        %v5243 = vunpack.c.l.b16 %v2698
        %v5244 = vunpack.c.h.b16 %v2698
        %v5245 = vunpack.c.l.b16 %v2699
        %v5246 = vunpack.c.h.b16 %v2699
        %v5247 = vunpack.c.l.b16 %v2700
        %v5248 = vunpack.c.h.b16 %v2700
        %v5249 = vunpack.c.l.b16 %v2701
        %v5250 = vunpack.c.h.b16 %v2701
        %v5251 = vunpack.c.l.b16 %v2702
        %v5252 = vunpack.c.h.b16 %v2702
        %v5253 = vunpack.c.l.b16 %v2703
        %v5254 = vunpack.c.h.b16 %v2703
        %v5255 = vunpack.c.l.b16 %v2704
        %v5256 = vunpack.c.h.b16 %v2704
        %v5257 = vunpack.c.l.b16 %v2705
        %v5258 = vunpack.c.h.b16 %v2705
        %v5259 = vunpack.c.l.b16 %v2706
        %v5260 = vunpack.c.h.b16 %v2706
        %v5261 = vunpack.c.l.b16 %v2707
        %v5262 = vunpack.c.h.b16 %v2707
        %v5263 = vunpack.c.l.b16 %v2708
        %v5264 = vunpack.c.h.b16 %v2708
        %v5265 = vunpack.c.l.b16 %v2709
        %v5266 = vunpack.c.h.b16 %v2709
        %v5267 = vunpack.c.l.b16 %v2710
        %v5268 = vunpack.c.h.b16 %v2710
        %v5269 = vunpack.c.l.b16 %v2711
        %v5270 = vunpack.c.h.b16 %v2711
        %v5271 = vunpack.c.l.b16 %v2712
        %v5272 = vunpack.c.h.b16 %v2712
        %v5273 = vunpack.c.l.b16 %v2713
        %v5274 = vunpack.c.h.b16 %v2713
        %v5275 = vunpack.c.l.b16 %v2714
        %v5276 = vunpack.c.h.b16 %v2714
        %v5277 = vunpack.c.l.b16 %v2715
        %v5278 = vunpack.c.h.b16 %v2715
        %v5279 = vunpack.c.l.b16 %v2716
        %v5280 = vunpack.c.h.b16 %v2716
        %v5281 = vunpack.c.l.b16 %v2717
        %v5282 = vunpack.c.h.b16 %v2717
        %v5283 = vunpack.c.l.b16 %v2718
        %v5284 = vunpack.c.h.b16 %v2718
        %v5285 = vunpack.c.l.b16 %v2719
        %v5286 = vunpack.c.h.b16 %v2719
        %v5287 = vunpack.c.l.b16 %v2720
        %v5288 = vunpack.c.h.b16 %v2720
        %v5289 = vunpack.c.l.b16 %v2721
        %v5290 = vunpack.c.h.b16 %v2721
        %v5291 = vunpack.c.l.b16 %v2722
        %v5292 = vunpack.c.h.b16 %v2722
        %v5293 = vunpack.c.l.b16 %v2723
        %v5294 = vunpack.c.h.b16 %v2723
        %v5295 = vunpack.c.l.b16 %v2724
        %v5296 = vunpack.c.h.b16 %v2724
        %v5297 = vunpack.c.l.b16 %v2725
        %v5298 = vunpack.c.h.b16 %v2725
        %v5299 = vunpack.c.l.b16 %v2726
        %v5300 = vunpack.c.h.b16 %v2726
        %v5301 = vunpack.c.l.b16 %v2727
        %v5302 = vunpack.c.h.b16 %v2727
        %v5303 = vunpack.c.l.b16 %v2728
        %v5304 = vunpack.c.h.b16 %v2728
        %v5305 = vunpack.c.l.b16 %v2729
        %v5306 = vunpack.c.h.b16 %v2729
        %v5307 = vunpack.c.l.b16 %v2730
        %v5308 = vunpack.c.h.b16 %v2730
        %v5309 = vunpack.c.l.b16 %v2731
        %v5310 = vunpack.c.h.b16 %v2731
        %v5311 = vunpack.c.l.b16 %v2732
        %v5312 = vunpack.c.h.b16 %v2732
        %v5313 = vunpack.c.l.b16 %v2733
        %v5314 = vunpack.c.h.b16 %v2733
        %v5315 = vunpack.c.l.b16 %v2734
        %v5316 = vunpack.c.h.b16 %v2734
        %v5317 = vunpack.c.l.b16 %v2735
        %v5318 = vunpack.c.h.b16 %v2735
        %v5319 = vunpack.c.l.b16 %v2736
        %v5320 = vunpack.c.h.b16 %v2736
        %v5321 = vunpack.c.l.b16 %v2737
        %v5322 = vunpack.c.h.b16 %v2737
        %v5323 = vunpack.c.l.b16 %v2738
        %v5324 = vunpack.c.h.b16 %v2738
        %v5325 = vunpack.c.l.b16 %v2739
        %v5326 = vunpack.c.h.b16 %v2739
        %v5327 = vunpack.c.l.b16 %v2740
        %v5328 = vunpack.c.h.b16 %v2740
        %v5329 = vunpack.c.l.b16 %v2741
        %v5330 = vunpack.c.h.b16 %v2741
        %v5331 = vunpack.c.l.b16 %v2742
        %v5332 = vunpack.c.h.b16 %v2742
        %v5333 = vunpack.c.l.b16 %v2743
        %v5334 = vunpack.c.h.b16 %v2743
        %v5335 = vunpack.c.l.b16 %v2744
        %v5336 = vunpack.c.h.b16 %v2744
        %v5337 = vunpack.c.l.b16 %v2745
        %v5338 = vunpack.c.h.b16 %v2745
        %v5339 = vunpack.c.l.b16 %v2746
        %v5340 = vunpack.c.h.b16 %v2746
        %v5341 = vunpack.c.l.b16 %v2747
        %v5342 = vunpack.c.h.b16 %v2747
        %v5343 = vunpack.c.l.b16 %v2748
        %v5344 = vunpack.c.h.b16 %v2748
        %v5345 = vunpack.c.l.b16 %v2749
        %v5346 = vunpack.c.h.b16 %v2749
        %v5347 = vunpack.c.l.b16 %v2750
        %v5348 = vunpack.c.h.b16 %v2750
        %v5349 = vunpack.c.l.b16 %v2751
        %v5350 = vunpack.c.h.b16 %v2751
        %v5351 = vunpack.c.l.b16 %v2752
        %v5352 = vunpack.c.h.b16 %v2752
        %v5353 = vunpack.c.l.b16 %v2753
        %v5354 = vunpack.c.h.b16 %v2753
        %v5355 = vunpack.c.l.b16 %v2754
        %v5356 = vunpack.c.h.b16 %v2754
        %v5357 = vunpack.c.l.b16 %v2755
        %v5358 = vunpack.c.h.b16 %v2755
        %v5359 = vunpack.c.l.b16 %v2756
        %v5360 = vunpack.c.h.b16 %v2756
        %v5361 = vunpack.c.l.b16 %v2757
        %v5362 = vunpack.c.h.b16 %v2757
        %v5363 = vunpack.c.l.b16 %v2758
        %v5364 = vunpack.c.h.b16 %v2758
        %v5365 = vunpack.c.l.b16 %v2759
        %v5366 = vunpack.c.h.b16 %v2759
        %v5367 = vunpack.c.l.b16 %v2760
        %v5368 = vunpack.c.h.b16 %v2760
        %v5369 = vunpack.c.l.b16 %v2761
        %v5370 = vunpack.c.h.b16 %v2761
        %v5371 = vunpack.c.l.b16 %v2762
        %v5372 = vunpack.c.h.b16 %v2762
        %v5373 = vunpack.c.l.b16 %v2763
        %v5374 = vunpack.c.h.b16 %v2763
        %v5375 = vunpack.c.l.b16 %v2764
        %v5376 = vunpack.c.h.b16 %v2764
        %v5377 = vunpack.c.l.b16 %v2765
        %v5378 = vunpack.c.h.b16 %v2765
        %v5379 = vunpack.c.l.b16 %v2766
        %v5380 = vunpack.c.h.b16 %v2766
        %v5381 = vunpack.c.l.b16 %v2767
        %v5382 = vunpack.c.h.b16 %v2767
        %v5383 = vunpack.c.l.b16 %v2768
        %v5384 = vunpack.c.h.b16 %v2768
        %v5385 = vunpack.c.l.b16 %v2769
        %v5386 = vunpack.c.h.b16 %v2769
        %v5387 = vunpack.c.l.b16 %v2770
        %v5388 = vunpack.c.h.b16 %v2770
        %v5389 = vunpack.c.l.b16 %v2771
        %v5390 = vunpack.c.h.b16 %v2771
        %v5391 = vunpack.c.l.b16 %v2772
        %v5392 = vunpack.c.h.b16 %v2772
        %v5393 = vunpack.c.l.b16 %v2773
        %v5394 = vunpack.c.h.b16 %v2773
        %v5395 = vunpack.c.l.b16 %v2774
        %v5396 = vunpack.c.h.b16 %v2774
        %v5397 = vunpack.c.l.b16 %v2775
        %v5398 = vunpack.c.h.b16 %v2775
        %v5399 = vunpack.c.l.b16 %v2776
        %v5400 = vunpack.c.h.b16 %v2776
        %v5401 = vunpack.c.l.b16 %v2777
        %v5402 = vunpack.c.h.b16 %v2777
        %v5403 = vunpack.c.l.b16 %v2778
        %v5404 = vunpack.c.h.b16 %v2778
        %v5405 = vunpack.c.l.b16 %v2779
        %v5406 = vunpack.c.h.b16 %v2779
        %v5407 = vunpack.c.l.b16 %v2780
        %v5408 = vunpack.c.h.b16 %v2780
        %v5409 = vunpack.c.l.b16 %v2781
        %v5410 = vunpack.c.h.b16 %v2781
        %v5411 = vunpack.c.l.b16 %v2782
        %v5412 = vunpack.c.h.b16 %v2782
        %v5413 = vunpack.c.l.b16 %v2783
        %v5414 = vunpack.c.h.b16 %v2783
        %v5415 = vunpack.c.l.b16 %v2784
        %v5416 = vunpack.c.h.b16 %v2784
        %v5417 = vunpack.c.l.b16 %v2785
        %v5418 = vunpack.c.h.b16 %v2785
        %v5419 = vunpack.c.l.b16 %v2786
        %v5420 = vunpack.c.h.b16 %v2786
        %v5421 = vunpack.c.l.b16 %v2787
        %v5422 = vunpack.c.h.b16 %v2787
        %v5423 = vunpack.c.l.b16 %v2788
        %v5424 = vunpack.c.h.b16 %v2788
        %v5425 = vunpack.c.l.b16 %v2789
        %v5426 = vunpack.c.h.b16 %v2789
        %v5427 = vunpack.c.l.b16 %v2790
        %v5428 = vunpack.c.h.b16 %v2790
        %v5429 = vunpack.c.l.b16 %v2791
        %v5430 = vunpack.c.h.b16 %v2791
        %v5431 = vunpack.c.l.b16 %v2792
        %v5432 = vunpack.c.h.b16 %v2792
        %v5433 = vunpack.c.l.b16 %v2793
        %v5434 = vunpack.c.h.b16 %v2793
        %v5435 = vunpack.c.l.b16 %v2794
        %v5436 = vunpack.c.h.b16 %v2794
        %v5437 = vunpack.c.l.b16 %v2795
        %v5438 = vunpack.c.h.b16 %v2795
        %v5439 = vunpack.c.l.b16 %v2796
        %v5440 = vunpack.c.h.b16 %v2796
        %v5441 = vunpack.c.l.b16 %v2797
        %v5442 = vunpack.c.h.b16 %v2797
        %v5443 = vunpack.c.l.b16 %v2798
        %v5444 = vunpack.c.h.b16 %v2798
        %v5445 = vunpack.c.l.b16 %v2799
        %v5446 = vunpack.c.h.b16 %v2799
        %v5447 = vunpack.c.l.b16 %v2800
        %v5448 = vunpack.c.h.b16 %v2800
        %v5449 = vunpack.c.l.b16 %v2801
        %v5450 = vunpack.c.h.b16 %v2801
        %v5451 = vunpack.c.l.b16 %v2802
        %v5452 = vunpack.c.h.b16 %v2802
        %v5453 = vunpack.c.l.b16 %v2803
        %v5454 = vunpack.c.h.b16 %v2803
        %v5455 = vunpack.c.l.b16 %v2804
        %v5456 = vunpack.c.h.b16 %v2804
        %v5457 = vunpack.c.l.b16 %v2805
        %v5458 = vunpack.c.h.b16 %v2805
        %v5459 = vunpack.c.l.b16 %v2806
        %v5460 = vunpack.c.h.b16 %v2806
        %v5461 = vunpack.c.l.b16 %v2807
        %v5462 = vunpack.c.h.b16 %v2807
        %v5463 = vunpack.c.l.b16 %v2808
        %v5464 = vunpack.c.h.b16 %v2808
        %v5465 = vunpack.c.l.b16 %v2809
        %v5466 = vunpack.c.h.b16 %v2809
        %v5467 = vunpack.c.l.b16 %v2810
        %v5468 = vunpack.c.h.b16 %v2810
        %v5469 = vunpack.c.l.b16 %v2811
        %v5470 = vunpack.c.h.b16 %v2811
        %v5471 = vunpack.c.l.b16 %v2812
        %v5472 = vunpack.c.h.b16 %v2812
        %v5473 = vunpack.c.l.b16 %v2813
        %v5474 = vunpack.c.h.b16 %v2813
        %v5475 = vunpack.c.l.b16 %v2814
        %v5476 = vunpack.c.h.b16 %v2814
        %v5477 = vunpack.c.l.b16 %v2815
        %v5478 = vunpack.c.h.b16 %v2815
        %v5479 = vunpack.c.l.b16 %v2816
        %v5480 = vunpack.c.h.b16 %v2816
        %v5481 = vunpack.c.l.b16 %v2817
        %v5482 = vunpack.c.h.b16 %v2817
        %v5483 = vunpack.c.l.b16 %v2818
        %v5484 = vunpack.c.h.b16 %v2818
        %v5485 = vunpack.c.l.b16 %v2819
        %v5486 = vunpack.c.h.b16 %v2819
        %v5487 = vunpack.c.l.b16 %v2820
        %v5488 = vunpack.c.h.b16 %v2820
        %v5489 = vunpack.c.l.b16 %v2821
        %v5490 = vunpack.c.h.b16 %v2821
        %v5491 = vunpack.c.l.b16 %v2822
        %v5492 = vunpack.c.h.b16 %v2822
        %v5493 = vunpack.c.l.b16 %v2823
        %v5494 = vunpack.c.h.b16 %v2823
        %v5495 = vunpack.c.l.b16 %v2824
        %v5496 = vunpack.c.h.b16 %v2824
        %v5497 = vunpack.c.l.b16 %v2825
        %v5498 = vunpack.c.h.b16 %v2825
        %v5499 = vunpack.c.l.b16 %v2826
        %v5500 = vunpack.c.h.b16 %v2826
        %v5501 = vunpack.c.l.b16 %v2827
        %v5502 = vunpack.c.h.b16 %v2827
        %v5503 = vunpack.c.l.b16 %v2828
        %v5504 = vunpack.c.h.b16 %v2828
        %v5505 = vunpack.c.l.b16 %v2829
        %v5506 = vunpack.c.h.b16 %v2829
        %v5507 = vunpack.c.l.b16 %v2830
        %v5508 = vunpack.c.h.b16 %v2830
        %v5509 = vunpack.c.l.b16 %v2831
        %v5510 = vunpack.c.h.b16 %v2831
        %v5511 = vunpack.c.l.b16 %v2832
        %v5512 = vunpack.c.h.b16 %v2832
        %v5513 = vunpack.c.l.b16 %v2833
        %v5514 = vunpack.c.h.b16 %v2833
        %v5515 = vunpack.c.l.b16 %v2834
        %v5516 = vunpack.c.h.b16 %v2834
        %v5517 = vunpack.c.l.b16 %v2835
        %v5518 = vunpack.c.h.b16 %v2835
        %v5519 = vunpack.c.l.b16 %v2836
        %v5520 = vunpack.c.h.b16 %v2836
        %v5521 = vunpack.c.l.b16 %v2837
        %v5522 = vunpack.c.h.b16 %v2837
        %v5523 = vunpack.c.l.b16 %v2838
        %v5524 = vunpack.c.h.b16 %v2838
        %v5525 = vunpack.c.l.b16 %v2839
        %v5526 = vunpack.c.h.b16 %v2839
        %v5527 = vunpack.c.l.b16 %v2840
        %v5528 = vunpack.c.h.b16 %v2840
        %v5529 = vunpack.c.l.b16 %v2841
        %v5530 = vunpack.c.h.b16 %v2841
        %v5531 = vunpack.c.l.b16 %v2842
        %v5532 = vunpack.c.h.b16 %v2842
        %v5533 = vunpack.c.l.b16 %v2843
        %v5534 = vunpack.c.h.b16 %v2843
        %v5535 = vunpack.c.l.b16 %v2844
        %v5536 = vunpack.c.h.b16 %v2844
        %v5537 = vunpack.c.l.b16 %v2845
        %v5538 = vunpack.c.h.b16 %v2845
        %v5539 = vunpack.c.l.b16 %v2846
        %v5540 = vunpack.c.h.b16 %v2846
        %v5541 = vunpack.c.l.b16 %v2847
        %v5542 = vunpack.c.h.b16 %v2847
        %v5543 = vunpack.c.l.b16 %v2848
        %v5544 = vunpack.c.h.b16 %v2848
        %v5545 = vunpack.c.l.b16 %v2849
        %v5546 = vunpack.c.h.b16 %v2849
        %v5547 = vunpack.c.l.b16 %v2850
        %v5548 = vunpack.c.h.b16 %v2850
        %v5549 = vunpack.c.l.b16 %v2851
        %v5550 = vunpack.c.h.b16 %v2851
        %v5551 = vunpack.c.l.b16 %v2852
        %v5552 = vunpack.c.h.b16 %v2852
        %v5553 = vunpack.c.l.b16 %v2853
        %v5554 = vunpack.c.h.b16 %v2853
        %v5555 = vunpack.c.l.b16 %v2854
        %v5556 = vunpack.c.h.b16 %v2854
        %v5557 = vunpack.c.l.b16 %v2855
        %v5558 = vunpack.c.h.b16 %v2855
        %v5559 = vunpack.c.l.b16 %v2856
        %v5560 = vunpack.c.h.b16 %v2856
        %v5561 = vunpack.c.l.b16 %v2857
        %v5562 = vunpack.c.h.b16 %v2857
        %v5563 = vunpack.c.l.b16 %v2858
        %v5564 = vunpack.c.h.b16 %v2858
        %v5565 = vunpack.c.l.b16 %v2859
        %v5566 = vunpack.c.h.b16 %v2859
        %v5567 = vunpack.c.l.b16 %v2860
        %v5568 = vunpack.c.h.b16 %v2860
        %v5569 = vunpack.c.l.b16 %v2861
        %v5570 = vunpack.c.h.b16 %v2861
        %v5571 = vunpack.c.l.b16 %v2862
        %v5572 = vunpack.c.h.b16 %v2862
        %v5573 = vunpack.c.l.b16 %v2863
        %v5574 = vunpack.c.h.b16 %v2863
        %v5575 = vunpack.c.l.b16 %v2864
        %v5576 = vunpack.c.h.b16 %v2864
        %v5577 = vunpack.c.l.b16 %v2865
        %v5578 = vunpack.c.h.b16 %v2865
        %v5579 = vunpack.c.l.b16 %v2866
        %v5580 = vunpack.c.h.b16 %v2866
        %v5581 = vunpack.c.l.b16 %v2867
        %v5582 = vunpack.c.h.b16 %v2867
        %v5583 = vunpack.c.l.b16 %v2868
        %v5584 = vunpack.c.h.b16 %v2868
        %v5585 = vunpack.c.l.b16 %v2869
        %v5586 = vunpack.c.h.b16 %v2869
        %v5587 = vunpack.c.l.b16 %v2870
        %v5588 = vunpack.c.h.b16 %v2870
        %v5589 = vunpack.c.l.b16 %v2871
        %v5590 = vunpack.c.h.b16 %v2871
        %v5591 = vunpack.c.l.b16 %v2872
        %v5592 = vunpack.c.h.b16 %v2872
        %v5593 = vunpack.c.l.b16 %v2873
        %v5594 = vunpack.c.h.b16 %v2873
        %v5595 = vunpack.c.l.b16 %v2874
        %v5596 = vunpack.c.h.b16 %v2874
        %v5597 = vunpack.c.l.b16 %v2875
        %v5598 = vunpack.c.h.b16 %v2875
        %v5599 = vunpack.c.l.b16 %v2876
        %v5600 = vunpack.c.h.b16 %v2876
        %v5601 = vunpack.c.l.b16 %v2877
        %v5602 = vunpack.c.h.b16 %v2877
        %v5603 = vunpack.c.l.b16 %v2878
        %v5604 = vunpack.c.h.b16 %v2878
        %v5605 = vunpack.c.l.b16 %v2879
        %v5606 = vunpack.c.h.b16 %v2879
        %v5607 = vunpack.c.l.b16 %v2880
        %v5608 = vunpack.c.h.b16 %v2880
        %v5609 = vunpack.c.l.b16 %v2881
        %v5610 = vunpack.c.h.b16 %v2881
        %v5611 = vunpack.c.l.b16 %v2882
        %v5612 = vunpack.c.h.b16 %v2882
        %v5613 = vunpack.c.l.b16 %v2883
        %v5614 = vunpack.c.h.b16 %v2883
        %v5615 = vunpack.c.l.b16 %v2884
        %v5616 = vunpack.c.h.b16 %v2884
        %v5617 = vunpack.c.l.b16 %v2885
        %v5618 = vunpack.c.h.b16 %v2885
        %v5619 = vunpack.c.l.b16 %v2886
        %v5620 = vunpack.c.h.b16 %v2886
        %v5621 = vunpack.c.l.b16 %v2887
        %v5622 = vunpack.c.h.b16 %v2887
        %v5623 = vunpack.c.l.b16 %v2888
        %v5624 = vunpack.c.h.b16 %v2888
        %v5625 = vunpack.c.l.b16 %v2889
        %v5626 = vunpack.c.h.b16 %v2889
        %v5627 = vunpack.c.l.b16 %v2890
        %v5628 = vunpack.c.h.b16 %v2890
        %v5629 = vunpack.c.l.b16 %v2891
        %v5630 = vunpack.c.h.b16 %v2891
        %v5631 = vunpack.c.l.b16 %v2892
        %v5632 = vunpack.c.h.b16 %v2892
        %v5633 = vunpack.c.l.b16 %v2893
        %v5634 = vunpack.c.h.b16 %v2893
        %v5635 = vunpack.c.l.b16 %v2894
        %v5636 = vunpack.c.h.b16 %v2894
        %v5637 = vunpack.c.l.b16 %v2895
        %v5638 = vunpack.c.h.b16 %v2895
        %v5639 = vunpack.c.l.b16 %v2896
        %v5640 = vunpack.c.h.b16 %v2896
        %v5641 = vunpack.c.l.b16 %v2897
        %v5642 = vunpack.c.h.b16 %v2897
        %v5643 = vunpack.c.l.b16 %v2898
        %v5644 = vunpack.c.h.b16 %v2898
        %v5645 = vunpack.c.l.b16 %v2899
        %v5646 = vunpack.c.h.b16 %v2899
        %v5647 = vunpack.c.l.b16 %v2900
        %v5648 = vunpack.c.h.b16 %v2900
        %v5649 = vunpack.c.l.b16 %v2901
        %v5650 = vunpack.c.h.b16 %v2901
        %v5651 = vunpack.c.l.b16 %v2902
        %v5652 = vunpack.c.h.b16 %v2902
        %v5653 = vunpack.c.l.b16 %v2903
        %v5654 = vunpack.c.h.b16 %v2903
        %v5655 = vunpack.c.l.b16 %v2904
        %v5656 = vunpack.c.h.b16 %v2904
        %v5657 = vunpack.c.l.b16 %v2905
        %v5658 = vunpack.c.h.b16 %v2905
        %v5659 = vunpack.c.l.b16 %v2906
        %v5660 = vunpack.c.h.b16 %v2906
        %v5661 = vunpack.c.l.b16 %v2907
        %v5662 = vunpack.c.h.b16 %v2907
        %v5663 = vunpack.c.l.b16 %v2908
        %v5664 = vunpack.c.h.b16 %v2908
        %v5665 = vunpack.c.l.b16 %v2909
        %v5666 = vunpack.c.h.b16 %v2909
        %v5667 = vunpack.c.l.b16 %v2910
        %v5668 = vunpack.c.h.b16 %v2910
        %v5669 = vunpack.c.l.b16 %v2911
        %v5670 = vunpack.c.h.b16 %v2911
        %v5671 = vunpack.c.l.b16 %v2912
        %v5672 = vunpack.c.h.b16 %v2912
        %v5673 = vunpack.c.l.b16 %v2913
        %v5674 = vunpack.c.h.b16 %v2913
        %v5675 = vunpack.c.l.b16 %v2914
        %v5676 = vunpack.c.h.b16 %v2914
        %v5677 = vunpack.c.l.b16 %v2915
        %v5678 = vunpack.c.h.b16 %v2915
        %v5679 = vunpack.c.l.b16 %v2916
        %v5680 = vunpack.c.h.b16 %v2916
        %v5681 = vunpack.c.l.b16 %v2917
        %v5682 = vunpack.c.h.b16 %v2917
        %v5683 = vunpack.c.l.b16 %v2918
        %v5684 = vunpack.c.h.b16 %v2918
        %v5685 = vunpack.c.l.b16 %v2919
        %v5686 = vunpack.c.h.b16 %v2919
        %v5687 = vunpack.c.l.b16 %v2920
        %v5688 = vunpack.c.h.b16 %v2920
        %v5689 = vunpack.c.l.b16 %v2921
        %v5690 = vunpack.c.h.b16 %v2921
        %v5691 = vunpack.c.l.b16 %v2922
        %v5692 = vunpack.c.h.b16 %v2922
        %v5693 = vunpack.c.l.b16 %v2923
        %v5694 = vunpack.c.h.b16 %v2923
        %v5695 = vunpack.c.l.b16 %v2924
        %v5696 = vunpack.c.h.b16 %v2924
        %v5697 = vunpack.c.l.b16 %v2925
        %v5698 = vunpack.c.h.b16 %v2925
        %v5699 = vunpack.c.l.b16 %v2926
        %v5700 = vunpack.c.h.b16 %v2926
        %v5701 = vunpack.c.l.b16 %v2927
        %v5702 = vunpack.c.h.b16 %v2927
        %v5703 = vunpack.c.l.b16 %v2928
        %v5704 = vunpack.c.h.b16 %v2928
        %v5705 = vunpack.c.l.b16 %v2929
        %v5706 = vunpack.c.h.b16 %v2929
        %v5707 = vunpack.c.l.b16 %v2930
        %v5708 = vunpack.c.h.b16 %v2930
        %v5709 = vunpack.c.l.b16 %v2931
        %v5710 = vunpack.c.h.b16 %v2931
        %v5711 = vunpack.c.l.b16 %v2932
        %v5712 = vunpack.c.h.b16 %v2932
        %v5713 = vunpack.c.l.b16 %v2933
        %v5714 = vunpack.c.h.b16 %v2933
        %v5715 = vunpack.c.l.b16 %v2934
        %v5716 = vunpack.c.h.b16 %v2934
        %v5717 = vunpack.c.l.b16 %v2935
        %v5718 = vunpack.c.h.b16 %v2935
        %v5719 = vunpack.c.l.b16 %v2936
        %v5720 = vunpack.c.h.b16 %v2936
        %v5721 = vunpack.c.l.b16 %v2937
        %v5722 = vunpack.c.h.b16 %v2937
        %v5723 = vunpack.c.l.b16 %v2938
        %v5724 = vunpack.c.h.b16 %v2938
        %v5725 = vunpack.c.l.b16 %v2939
        %v5726 = vunpack.c.h.b16 %v2939
        %v5727 = vunpack.c.l.b16 %v2940
        %v5728 = vunpack.c.h.b16 %v2940
        %v5729 = vunpack.c.l.b16 %v2941
        %v5730 = vunpack.c.h.b16 %v2941
        %v5731 = vunpack.c.l.b16 %v2942
        %v5732 = vunpack.c.h.b16 %v2942
        %v5733 = vunpack.c.l.b16 %v2943
        %v5734 = vunpack.c.h.b16 %v2943
        %v5735 = vunpack.c.l.b16 %v2944
        %v5736 = vunpack.c.h.b16 %v2944
        %v5737 = vunpack.c.l.b16 %v2945
        %v5738 = vunpack.c.h.b16 %v2945
        %v5739 = vunpack.c.l.b16 %v2946
        %v5740 = vunpack.c.h.b16 %v2946
        %v5741 = vunpack.c.l.b16 %v2947
        %v5742 = vunpack.c.h.b16 %v2947
        %v5743 = vunpack.c.l.b16 %v2948
        %v5744 = vunpack.c.h.b16 %v2948
        %v5745 = vunpack.c.l.b16 %v2949
        %v5746 = vunpack.c.h.b16 %v2949
        %v5747 = vunpack.c.l.b16 %v2950
        %v5748 = vunpack.c.h.b16 %v2950
        %v5749 = vunpack.c.l.b16 %v2951
        %v5750 = vunpack.c.h.b16 %v2951
        %v5751 = vunpack.c.l.b16 %v2952
        %v5752 = vunpack.c.h.b16 %v2952
        %v5753 = vunpack.c.l.b16 %v2953
        %v5754 = vunpack.c.h.b16 %v2953
        %v5755 = vunpack.c.l.b16 %v2954
        %v5756 = vunpack.c.h.b16 %v2954
        %v5757 = vunpack.c.l.b16 %v2955
        %v5758 = vunpack.c.h.b16 %v2955
        %v5759 = vunpack.c.l.b16 %v2956
        %v5760 = vunpack.c.h.b16 %v2956
        %v5761 = vunpack.c.l.b16 %v2957
        %v5762 = vunpack.c.h.b16 %v2957
        %v5763 = vunpack.c.l.b16 %v2958
        %v5764 = vunpack.c.h.b16 %v2958
        %v5765 = vunpack.c.l.b16 %v2959
        %v5766 = vunpack.c.h.b16 %v2959
        %v5767 = vunpack.c.l.b16 %v2960
        %v5768 = vunpack.c.h.b16 %v2960
        %v5769 = vunpack.c.l.b16 %v2961
        %v5770 = vunpack.c.h.b16 %v2961
        %v5771 = vunpack.c.l.b16 %v2962
        %v5772 = vunpack.c.h.b16 %v2962
        %v5773 = vunpack.c.l.b16 %v2963
        %v5774 = vunpack.c.h.b16 %v2963
        %v5775 = vunpack.c.l.b16 %v2964
        %v5776 = vunpack.c.h.b16 %v2964
        %v5777 = vunpack.c.l.b16 %v2965
        %v5778 = vunpack.c.h.b16 %v2965
        %v5779 = vunpack.c.l.b16 %v2966
        %v5780 = vunpack.c.h.b16 %v2966
        %v5781 = vunpack.c.l.b16 %v2967
        %v5782 = vunpack.c.h.b16 %v2967
        %v5783 = vunpack.c.l.b16 %v2968
        %v5784 = vunpack.c.h.b16 %v2968
        %v5785 = vunpack.c.l.b16 %v2969
        %v5786 = vunpack.c.h.b16 %v2969
        %v5787 = vunpack.c.l.b16 %v2970
        %v5788 = vunpack.c.h.b16 %v2970
        %v5789 = vunpack.c.l.b16 %v2971
        %v5790 = vunpack.c.h.b16 %v2971
        %v5791 = vunpack.c.l.b16 %v2972
        %v5792 = vunpack.c.h.b16 %v2972
        %v5793 = vunpack.c.l.b16 %v2973
        %v5794 = vunpack.c.h.b16 %v2973
        %v5795 = vunpack.c.l.b16 %v2974
        %v5796 = vunpack.c.h.b16 %v2974
        %v5797 = vunpack.c.l.b16 %v2975
        %v5798 = vunpack.c.h.b16 %v2975
        %v5799 = vunpack.c.l.b16 %v2976
        %v5800 = vunpack.c.h.b16 %v2976
        %v5801 = vunpack.c.l.b16 %v2977
        %v5802 = vunpack.c.h.b16 %v2977
        %v5803 = vunpack.c.l.b16 %v2978
        %v5804 = vunpack.c.h.b16 %v2978
        %v5805 = vunpack.c.l.b16 %v2979
        %v5806 = vunpack.c.h.b16 %v2979
        %v5807 = vunpack.c.l.b16 %v2980
        %v5808 = vunpack.c.h.b16 %v2980
        %v5809 = vunpack.c.l.b16 %v2981
        %v5810 = vunpack.c.h.b16 %v2981
        %v5811 = vunpack.c.l.b16 %v2982
        %v5812 = vunpack.c.h.b16 %v2982
        %v5813 = vunpack.c.l.b16 %v2983
        %v5814 = vunpack.c.h.b16 %v2983
        %v5815 = vunpack.c.l.b16 %v2984
        %v5816 = vunpack.c.h.b16 %v2984
        %v5817 = vunpack.c.l.b16 %v2985
        %v5818 = vunpack.c.h.b16 %v2985
        %v5819 = vunpack.c.l.b16 %v2986
        %v5820 = vunpack.c.h.b16 %v2986
        %v5821 = vunpack.c.l.b16 %v2987
        %v5822 = vunpack.c.h.b16 %v2987
        %v5823 = vunpack.c.l.b16 %v2988
        %v5824 = vunpack.c.h.b16 %v2988
        %v5825 = vunpack.c.l.b16 %v2989
        %v5826 = vunpack.c.h.b16 %v2989
        %v5827 = vunpack.c.l.b16 %v2990
        %v5828 = vunpack.c.h.b16 %v2990
        %v5829 = vunpack.c.l.b16 %v2991
        %v5830 = vunpack.c.h.b16 %v2991
        %v5831 = vunpack.c.l.b16 %v2992
        %v5832 = vunpack.c.h.b16 %v2992
        %v5833 = vunpack.c.l.b16 %v2993
        %v5834 = vunpack.c.h.b16 %v2993
        %v5835 = vunpack.c.l.b16 %v2994
        %v5836 = vunpack.c.h.b16 %v2994
        %v5837 = vunpack.c.l.b16 %v2995
        %v5838 = vunpack.c.h.b16 %v2995
        %v5839 = vunpack.c.l.b16 %v2996
        %v5840 = vunpack.c.h.b16 %v2996
        %v5841 = vunpack.c.l.b16 %v2997
        %v5842 = vunpack.c.h.b16 %v2997
        %v5843 = vunpack.c.l.b16 %v2998
        %v5844 = vunpack.c.h.b16 %v2998
        %v5845 = vunpack.c.l.b16 %v2999
        %v5846 = vunpack.c.h.b16 %v2999
        %v5847 = vunpack.c.l.b16 %v3000
        %v5848 = vunpack.c.h.b16 %v3000
        %v5849 = vunpack.c.l.b16 %v3001
        %v5850 = vunpack.c.h.b16 %v3001
        %v5851 = vunpack.c.l.b16 %v3002
        %v5852 = vunpack.c.h.b16 %v3002
        %v5853 = vunpack.c.l.b16 %v3003
        %v5854 = vunpack.c.h.b16 %v3003
        %v5855 = vunpack.c.l.b16 %v3004
        %v5856 = vunpack.c.h.b16 %v3004
        %v5857 = vunpack.c.l.b16 %v3005
        %v5858 = vunpack.c.h.b16 %v3005
        %v5859 = vunpack.c.l.b16 %v3006
        %v5860 = vunpack.c.h.b16 %v3006
        %v5861 = vunpack.c.l.b16 %v3007
        %v5862 = vunpack.c.h.b16 %v3007
        %v5863 = vunpack.c.l.b16 %v3008
        %v5864 = vunpack.c.h.b16 %v3008
        %v5865 = vunpack.c.l.b16 %v3009
        %v5866 = vunpack.c.h.b16 %v3009
        %v5867 = vunpack.c.l.b16 %v3010
        %v5868 = vunpack.c.h.b16 %v3010
        %v5869 = vunpack.c.l.b16 %v3011
        %v5870 = vunpack.c.h.b16 %v3011
        %v5871 = vunpack.c.l.b16 %v3012
        %v5872 = vunpack.c.h.b16 %v3012
        %v5873 = vunpack.c.l.b16 %v3013
        %v5874 = vunpack.c.h.b16 %v3013
        %v5875 = vunpack.c.l.b16 %v3014
        %v5876 = vunpack.c.h.b16 %v3014
        %v5877 = vunpack.c.l.b16 %v3015
        %v5878 = vunpack.c.h.b16 %v3015
        %v5879 = vunpack.c.l.b16 %v3016
        %v5880 = vunpack.c.h.b16 %v3016
        %v5881 = vunpack.c.l.b16 %v3017
        %v5882 = vunpack.c.h.b16 %v3017
        %v5883 = vunpack.c.l.b16 %v3018
        %v5884 = vunpack.c.h.b16 %v3018
        %v5885 = vunpack.c.l.b16 %v3019
        %v5886 = vunpack.c.h.b16 %v3019
        %v5887 = vunpack.c.l.b16 %v3020
        %v5888 = vunpack.c.h.b16 %v3020
        %v5889 = vunpack.c.l.b16 %v3021
        %v5890 = vunpack.c.h.b16 %v3021
        %v5891 = vunpack.c.l.b16 %v3022
        %v5892 = vunpack.c.h.b16 %v3022
        %v5893 = vunpack.c.l.b16 %v3023
        %v5894 = vunpack.c.h.b16 %v3023
        %v5895 = vunpack.c.l.b16 %v3024
        %v5896 = vunpack.c.h.b16 %v3024
        %v5897 = vunpack.c.l.b16 %v3025
        %v5898 = vunpack.c.h.b16 %v3025
        %v5899 = vunpack.c.l.b16 %v3026
        %v5900 = vunpack.c.h.b16 %v3026
        %v5901 = vunpack.c.l.b16 %v3027
        %v5902 = vunpack.c.h.b16 %v3027
        %v5903 = vunpack.c.l.b16 %v3028
        %v5904 = vunpack.c.h.b16 %v3028
        %v5905 = vunpack.c.l.b16 %v3029
        %v5906 = vunpack.c.h.b16 %v3029
        %v5907 = vunpack.c.l.b16 %v3030
        %v5908 = vunpack.c.h.b16 %v3030
        %v5909 = vunpack.c.l.b16 %v3031
        %v5910 = vunpack.c.h.b16 %v3031
        %v5911 = vunpack.c.l.b16 %v3032
        %v5912 = vunpack.c.h.b16 %v3032
        %v5913 = vunpack.c.l.b16 %v3033
        %v5914 = vunpack.c.h.b16 %v3033
        %v5915 = vunpack.c.l.b16 %v3034
        %v5916 = vunpack.c.h.b16 %v3034
        %v5917 = vunpack.c.l.b16 %v3035
        %v5918 = vunpack.c.h.b16 %v3035
        %v5919 = vunpack.c.l.b16 %v3036
        %v5920 = vunpack.c.h.b16 %v3036
        %v5921 = vunpack.c.l.b16 %v3037
        %v5922 = vunpack.c.h.b16 %v3037
        %v5923 = vunpack.c.l.b16 %v3038
        %v5924 = vunpack.c.h.b16 %v3038
        %v5925 = vunpack.c.l.b16 %v3039
        %v5926 = vunpack.c.h.b16 %v3039
        %v5927 = vunpack.c.l.b16 %v3040
        %v5928 = vunpack.c.h.b16 %v3040
        %v5929 = vunpack.c.l.b16 %v3041
        %v5930 = vunpack.c.h.b16 %v3041
        %v5931 = vunpack.c.l.b16 %v3042
        %v5932 = vunpack.c.h.b16 %v3042
        %v5933 = vunpack.c.l.b16 %v3043
        %v5934 = vunpack.c.h.b16 %v3043
        %v5935 = vunpack.c.l.b16 %v3044
        %v5936 = vunpack.c.h.b16 %v3044
        %v5937 = vunpack.c.l.b16 %v3045
        %v5938 = vunpack.c.h.b16 %v3045
        %v5939 = vunpack.c.l.b16 %v3046
        %v5940 = vunpack.c.h.b16 %v3046
        %v5941 = vunpack.c.l.b16 %v3047
        %v5942 = vunpack.c.h.b16 %v3047
        %v5943 = vunpack.c.l.b16 %v3048
        %v5944 = vunpack.c.h.b16 %v3048
        %v5945 = vunpack.c.l.b16 %v3049
        %v5946 = vunpack.c.h.b16 %v3049
        %v5947 = vunpack.c.l.b16 %v3050
        %v5948 = vunpack.c.h.b16 %v3050
        %v5949 = vunpack.c.l.b16 %v3051
        %v5950 = vunpack.c.h.b16 %v3051
        %v5951 = vunpack.c.l.b16 %v3052
        %v5952 = vunpack.c.h.b16 %v3052
        %v5953 = vunpack.c.l.b16 %v3053
        %v5954 = vunpack.c.h.b16 %v3053
        %v5955 = vunpack.c.l.b16 %v3054
        %v5956 = vunpack.c.h.b16 %v3054
        %v5957 = vunpack.c.l.b16 %v3055
        %v5958 = vunpack.c.h.b16 %v3055
        %v5959 = vunpack.c.l.b16 %v3056
        %v5960 = vunpack.c.h.b16 %v3056
        %v5961 = vunpack.c.l.b16 %v3057
        %v5962 = vunpack.c.h.b16 %v3057
        %v5963 = vunpack.c.l.b16 %v3058
        %v5964 = vunpack.c.h.b16 %v3058
        %v5965 = vunpack.c.l.b16 %v3059
        %v5966 = vunpack.c.h.b16 %v3059
        %v5967 = vunpack.c.l.b16 %v3060
        %v5968 = vunpack.c.h.b16 %v3060
        %v5969 = vunpack.c.l.b16 %v3061
        %v5970 = vunpack.c.h.b16 %v3061
        %v5971 = vunpack.c.l.b16 %v3062
        %v5972 = vunpack.c.h.b16 %v3062
        %v5973 = vunpack.c.l.b16 %v3063
        %v5974 = vunpack.c.h.b16 %v3063
        %v5975 = vunpack.c.l.b16 %v3064
        %v5976 = vunpack.c.h.b16 %v3064
        %v5977 = vunpack.c.l.b16 %v3065
        %v5978 = vunpack.c.h.b16 %v3065
        %v5979 = vunpack.c.l.b16 %v3066
        %v5980 = vunpack.c.h.b16 %v3066
        %v5981 = vunpack.c.l.b16 %v3067
        %v5982 = vunpack.c.h.b16 %v3067
        %v5983 = vunpack.c.l.b16 %v3068
        %v5984 = vunpack.c.h.b16 %v3068
        %v5985 = vunpack.c.l.b16 %v3069
        %v5986 = vunpack.c.h.b16 %v3069
        %v5987 = vunpack.c.l.b16 %v3070
        %v5988 = vunpack.c.h.b16 %v3070
        %v5989 = vunpack.c.l.b16 %v3071
        %v5990 = vunpack.c.h.b16 %v3071
        %v5991 = vunpack.c.l.b16 %v3072
        %v5992 = vunpack.c.h.b16 %v3072
        %v5993 = vunpack.c.l.b16 %v3073
        %v5994 = vunpack.c.h.b16 %v3073
        %v5995 = vunpack.c.l.b16 %v3074
        %v5996 = vunpack.c.h.b16 %v3074
        %v5997 = vunpack.c.l.b16 %v3075
        %v5998 = vunpack.c.h.b16 %v3075
        %v5999 = vunpack.c.l.b16 %v3076
        %v6000 = vunpack.c.h.b16 %v3076
        %v6001 = vunpack.c.l.b16 %v3077
        %v6002 = vunpack.c.h.b16 %v3077
        %v6003 = vunpack.c.l.b16 %v3078
        %v6004 = vunpack.c.h.b16 %v3078
        %v6005 = vunpack.c.l.b16 %v3079
        %v6006 = vunpack.c.h.b16 %v3079
        %v6007 = vunpack.c.l.b16 %v3080
        %v6008 = vunpack.c.h.b16 %v3080
        %v6009 = vunpack.c.l.b16 %v3081
        %v6010 = vunpack.c.h.b16 %v3081
        %v6011 = vunpack.c.l.b16 %v3082
        %v6012 = vunpack.c.h.b16 %v3082
        %v6013 = vunpack.c.l.b16 %v3083
        %v6014 = vunpack.c.h.b16 %v3083
        %v6015 = vunpack.c.l.b16 %v3084
        %v6016 = vunpack.c.h.b16 %v3084
        %v6017 = vunpack.c.l.b16 %v3085
        %v6018 = vunpack.c.h.b16 %v3085
        %v6019 = vunpack.c.l.b16 %v3086
        %v6020 = vunpack.c.h.b16 %v3086
        %v6021 = vunpack.c.l.b16 %v3087
        %v6022 = vunpack.c.h.b16 %v3087
        %v6023 = vunpack.c.l.b16 %v3088
        %v6024 = vunpack.c.h.b16 %v3088
        %v6025 = vunpack.c.l.b16 %v3089
        %v6026 = vunpack.c.h.b16 %v3089
        %v6027 = vunpack.c.l.b16 %v3090
        %v6028 = vunpack.c.h.b16 %v3090
        %v6029 = vunpack.c.l.b16 %v3091
        %v6030 = vunpack.c.h.b16 %v3091
        %v6031 = vunpack.c.l.b16 %v3092
        %v6032 = vunpack.c.h.b16 %v3092
        %v6033 = vunpack.c.l.b16 %v3093
        %v6034 = vunpack.c.h.b16 %v3093
        %v6035 = vunpack.c.l.b16 %v3094
        %v6036 = vunpack.c.h.b16 %v3094
        %v6037 = vunpack.c.l.b16 %v3095
        %v6038 = vunpack.c.h.b16 %v3095
        %v6039 = vunpack.c.l.b16 %v3096
        %v6040 = vunpack.c.h.b16 %v3096
        %v6041 = vunpack.c.l.b16 %v3097
        %v6042 = vunpack.c.h.b16 %v3097
        %v6043 = vunpack.c.l.b16 %v3098
        %v6044 = vunpack.c.h.b16 %v3098
        %v6045 = vunpack.c.l.b16 %v3099
        %v6046 = vunpack.c.h.b16 %v3099
        %v6047 = vunpack.c.l.b16 %v3100
        %v6048 = vunpack.c.h.b16 %v3100
        %v6049 = vunpack.c.l.b16 %v3101
        %v6050 = vunpack.c.h.b16 %v3101
        %v6051 = vunpack.c.l.b16 %v3102
        %v6052 = vunpack.c.h.b16 %v3102
        %v6053 = vunpack.c.l.b16 %v3103
        %v6054 = vunpack.c.h.b16 %v3103
        %v6055 = vunpack.c.l.b16 %v3104
        %v6056 = vunpack.c.h.b16 %v3104
        %v6057 = vunpack.c.l.b16 %v3105
        %v6058 = vunpack.c.h.b16 %v3105
        %v6059 = vunpack.c.l.b16 %v3106
        %v6060 = vunpack.c.h.b16 %v3106
        %v6061 = vunpack.c.l.b16 %v3107
        %v6062 = vunpack.c.h.b16 %v3107
        %v6063 = vunpack.c.l.b16 %v3108
        %v6064 = vunpack.c.h.b16 %v3108
        %v6065 = vunpack.c.l.b16 %v3109
        %v6066 = vunpack.c.h.b16 %v3109
        %v6067 = vunpack.c.l.b16 %v3110
        %v6068 = vunpack.c.h.b16 %v3110
        %v6069 = vunpack.c.l.b16 %v3111
        %v6070 = vunpack.c.h.b16 %v3111
        %v6071 = vunpack.c.l.b16 %v3112
        %v6072 = vunpack.c.h.b16 %v3112
        %v6073 = vunpack.c.l.b16 %v3113
        %v6074 = vunpack.c.h.b16 %v3113
        %v6075 = vunpack.c.l.b16 %v3114
        %v6076 = vunpack.c.h.b16 %v3114
        %v6077 = vunpack.c.l.b16 %v3115
        %v6078 = vunpack.c.h.b16 %v3115
        %v6079 = vunpack.c.l.b16 %v3116
        %v6080 = vunpack.c.h.b16 %v3116
        %v6081 = vunpack.c.l.b16 %v3117
        %v6082 = vunpack.c.h.b16 %v3117
        %v6083 = vunpack.c.l.b16 %v3118
        %v6084 = vunpack.c.h.b16 %v3118
        %v6085 = vunpack.c.l.b16 %v3119
        %v6086 = vunpack.c.h.b16 %v3119
        %v6087 = vunpack.c.l.b16 %v3120
        %v6088 = vunpack.c.h.b16 %v3120
        %v6089 = vunpack.c.l.b16 %v3121
        %v6090 = vunpack.c.h.b16 %v3121
        %v6091 = vunpack.c.l.b16 %v3122
        %v6092 = vunpack.c.h.b16 %v3122
        %v6093 = vunpack.c.l.b16 %v3123
        %v6094 = vunpack.c.h.b16 %v3123
        %v6095 = vunpack.c.l.b16 %v3124
        %v6096 = vunpack.c.h.b16 %v3124
        %v6097 = vunpack.c.l.b16 %v3125
        %v6098 = vunpack.c.h.b16 %v3125
        %v6099 = vunpack.c.l.b16 %v3126
        %v6100 = vunpack.c.h.b16 %v3126
        %v6101 = vunpack.c.l.b16 %v3127
        %v6102 = vunpack.c.h.b16 %v3127
        %v6103 = vunpack.c.l.b16 %v3128
        %v6104 = vunpack.c.h.b16 %v3128
        %v6105 = vunpack.c.l.b16 %v3129
        %v6106 = vunpack.c.h.b16 %v3129
        %v6107 = vunpack.c.l.b16 %v3130
        %v6108 = vunpack.c.h.b16 %v3130
        %v6109 = vunpack.c.l.b16 %v3131
        %v6110 = vunpack.c.h.b16 %v3131
        %v6111 = vunpack.c.l.b16 %v3132
        %v6112 = vunpack.c.h.b16 %v3132
        %v6113 = vunpack.c.l.b16 %v3133
        %v6114 = vunpack.c.h.b16 %v3133
        %v6115 = vunpack.c.l.b16 %v3134
        %v6116 = vunpack.c.h.b16 %v3134
        %v6117 = vunpack.c.l.b16 %v3135
        %v6118 = vunpack.c.h.b16 %v3135
        %v6119 = vunpack.c.l.b16 %v3136
        %v6120 = vunpack.c.h.b16 %v3136
        %v6121 = vunpack.c.l.b16 %v3137
        %v6122 = vunpack.c.h.b16 %v3137
        %v6123 = vunpack.c.l.b16 %v3138
        %v6124 = vunpack.c.h.b16 %v3138
        %v6125 = vunpack.c.l.b16 %v3139
        %v6126 = vunpack.c.h.b16 %v3139
        %v6127 = vunpack.c.l.b16 %v3140
        %v6128 = vunpack.c.h.b16 %v3140
        %v6129 = vunpack.c.l.b16 %v3141
        %v6130 = vunpack.c.h.b16 %v3141
        %v6131 = vunpack.c.l.b16 %v3142
        %v6132 = vunpack.c.h.b16 %v3142
        %v6133 = vunpack.c.l.b16 %v3143
        %v6134 = vunpack.c.h.b16 %v3143
        %v6135 = vunpack.c.l.b16 %v3144
        %v6136 = vunpack.c.h.b16 %v3144
        %v6137 = vunpack.c.l.b16 %v3145
        %v6138 = vunpack.c.h.b16 %v3145
        %v6139 = vunpack.c.l.b16 %v3146
        %v6140 = vunpack.c.h.b16 %v3146
        %v6141 = vunpack.c.l.b16 %v3147
        %v6142 = vunpack.c.h.b16 %v3147
        %v6143 = vunpack.c.l.b16 %v3148
        %v6144 = vunpack.c.h.b16 %v3148
        %v6145 = vunpack.c.l.b16 %v3149
        %v6146 = vunpack.c.h.b16 %v3149
        %v6147 = vunpack.c.l.b16 %v3150
        %v6148 = vunpack.c.h.b16 %v3150
        %v6149 = vunpack.c.l.b16 %v3151
        %v6150 = vunpack.c.h.b16 %v3151
        %v6151 = vunpack.c.l.b16 %v3152
        %v6152 = vunpack.c.h.b16 %v3152
        %v6153 = vunpack.c.l.b16 %v3153
        %v6154 = vunpack.c.h.b16 %v3153
        %v6155 = vunpack.c.l.b16 %v3154
        %v6156 = vunpack.c.h.b16 %v3154
        %v6157 = vunpack.c.l.b16 %v3155
        %v6158 = vunpack.c.h.b16 %v3155
        %v6159 = vunpack.c.l.b16 %v3156
        %v6160 = vunpack.c.h.b16 %v3156
        %v6161 = vunpack.c.l.b16 %v3157
        %v6162 = vunpack.c.h.b16 %v3157
        %v6163 = vunpack.c.l.b16 %v3158
        %v6164 = vunpack.c.h.b16 %v3158
        %v6165 = vunpack.c.l.b16 %v3159
        %v6166 = vunpack.c.h.b16 %v3159
        %v6167 = vunpack.c.l.b16 %v3160
        %v6168 = vunpack.c.h.b16 %v3160
        %v6169 = vunpack.c.l.b16 %v3161
        %v6170 = vunpack.c.h.b16 %v3161
        %v6171 = vunpack.c.l.b16 %v3162
        %v6172 = vunpack.c.h.b16 %v3162
        %v6173 = vunpack.c.l.b16 %v3163
        %v6174 = vunpack.c.h.b16 %v3163
        %v6175 = vunpack.c.l.b16 %v3164
        %v6176 = vunpack.c.h.b16 %v3164
        %v6177 = vunpack.c.l.b16 %v3165
        %v6178 = vunpack.c.h.b16 %v3165
        %v6179 = vunpack.c.l.b16 %v3166
        %v6180 = vunpack.c.h.b16 %v3166
        %v6181 = vunpack.c.l.b16 %v3167
        %v6182 = vunpack.c.h.b16 %v3167
        %v6183 = vunpack.c.l.b16 %v3168
        %v6184 = vunpack.c.h.b16 %v3168
        %v6185 = vunpack.c.l.b16 %v3169
        %v6186 = vunpack.c.h.b16 %v3169
        %v6187 = vunpack.c.l.b16 %v3170
        %v6188 = vunpack.c.h.b16 %v3170
        %v6189 = vunpack.c.l.b16 %v3171
        %v6190 = vunpack.c.h.b16 %v3171
        %v6191 = vunpack.c.l.b16 %v3172
        %v6192 = vunpack.c.h.b16 %v3172
        %v6193 = vunpack.c.l.b16 %v3173
        %v6194 = vunpack.c.h.b16 %v3173
        %v6195 = vunpack.c.l.b16 %v3174
        %v6196 = vunpack.c.h.b16 %v3174
        %v6197 = vunpack.c.l.b16 %v3175
        %v6198 = vunpack.c.h.b16 %v3175
        %v6199 = vunpack.c.l.b16 %v3176
        %v6200 = vunpack.c.h.b16 %v3176
        %v6201 = vunpack.c.l.b16 %v3177
        %v6202 = vunpack.c.h.b16 %v3177
        %v6203 = vunpack.c.l.b16 %v3178
        %v6204 = vunpack.c.h.b16 %v3178
        %v6205 = vunpack.c.l.b16 %v3179
        %v6206 = vunpack.c.h.b16 %v3179
        %v6207 = vunpack.c.l.b16 %v3180
        %v6208 = vunpack.c.h.b16 %v3180
        %v6209 = vunpack.c.l.b16 %v3181
        %v6210 = vunpack.c.h.b16 %v3181
        %v6211 = vunpack.c.l.b16 %v3182
        %v6212 = vunpack.c.h.b16 %v3182
        %v6213 = vunpack.c.l.b16 %v3183
        %v6214 = vunpack.c.h.b16 %v3183
        %v6215 = vunpack.c.l.b16 %v3184
        %v6216 = vunpack.c.h.b16 %v3184
        %v6217 = vunpack.c.l.b16 %v3185
        %v6218 = vunpack.c.h.b16 %v3185
        %v6219 = vunpack.c.l.b16 %v3186
        %v6220 = vunpack.c.h.b16 %v3186
        %v6221 = vunpack.c.l.b16 %v3187
        %v6222 = vunpack.c.h.b16 %v3187
        %v6223 = vunpack.c.l.b16 %v3188
        %v6224 = vunpack.c.h.b16 %v3188
        %v6225 = vunpack.c.l.b16 %v3189
        %v6226 = vunpack.c.h.b16 %v3189
        %v6227 = vunpack.c.l.b16 %v3190
        %v6228 = vunpack.c.h.b16 %v3190
        %v6229 = vunpack.c.l.b16 %v3191
        %v6230 = vunpack.c.h.b16 %v3191
        %v6231 = vunpack.c.l.b16 %v3192
        %v6232 = vunpack.c.h.b16 %v3192
        %v6233 = vunpack.c.l.b16 %v3193
        %v6234 = vunpack.c.h.b16 %v3193
        %v6235 = vunpack.c.l.b16 %v3194
        %v6236 = vunpack.c.h.b16 %v3194
        %v6237 = vunpack.c.l.b16 %v3195
        %v6238 = vunpack.c.h.b16 %v3195
        %v6239 = vunpack.c.l.b16 %v3196
        %v6240 = vunpack.c.h.b16 %v3196
        %v6241 = vunpack.c.l.b16 %v3197
        %v6242 = vunpack.c.h.b16 %v3197
        %v6243 = vunpack.c.l.b16 %v3198
        %v6244 = vunpack.c.h.b16 %v3198
        %v6245 = vunpack.c.l.b16 %v3199
        %v6246 = vunpack.c.h.b16 %v3199
        %v6247 = vunpack.c.l.b16 %v3200
        %v6248 = vunpack.c.h.b16 %v3200
        %v6249 = vunpack.c.l.b16 %v3201
        %v6250 = vunpack.c.h.b16 %v3201
        %v6251 = vunpack.c.l.b16 %v3202
        %v6252 = vunpack.c.h.b16 %v3202
        %v6253 = vunpack.c.l.b16 %v3203
        %v6254 = vunpack.c.h.b16 %v3203
        %v6255 = vunpack.c.l.b16 %v3204
        %v6256 = vunpack.c.h.b16 %v3204
        %v6257 = vunpack.c.l.b16 %v3205
        %v6258 = vunpack.c.h.b16 %v3205
        %v6259 = vunpack.c.l.b16 %v3206
        %v6260 = vunpack.c.h.b16 %v3206
        %v6261 = vunpack.c.l.b16 %v3207
        %v6262 = vunpack.c.h.b16 %v3207
        %v6263 = vunpack.c.l.b16 %v3208
        %v6264 = vunpack.c.h.b16 %v3208
        %v6265 = vunpack.c.l.b16 %v3209
        %v6266 = vunpack.c.h.b16 %v3209
        %v6267 = vunpack.c.l.b16 %v3210
        %v6268 = vunpack.c.h.b16 %v3210
        %v6269 = vunpack.c.l.b16 %v3211
        %v6270 = vunpack.c.h.b16 %v3211
        %v6271 = vunpack.c.l.b16 %v3212
        %v6272 = vunpack.c.h.b16 %v3212
        %v6273 = vunpack.c.l.b16 %v3213
        %v6274 = vunpack.c.h.b16 %v3213
        %v6275 = vunpack.c.l.b16 %v3214
        %v6276 = vunpack.c.h.b16 %v3214
        %v6277 = vunpack.c.l.b16 %v3215
        %v6278 = vunpack.c.h.b16 %v3215
        %v6279 = vunpack.c.l.b16 %v3216
        %v6280 = vunpack.c.h.b16 %v3216
        %v6281 = vunpack.c.l.b16 %v3217
        %v6282 = vunpack.c.h.b16 %v3217
        %v6283 = vunpack.c.l.b16 %v3218
        %v6284 = vunpack.c.h.b16 %v3218
        %v6285 = vunpack.c.l.b16 %v3219
        %v6286 = vunpack.c.h.b16 %v3219
        %v6287 = vunpack.c.l.b16 %v3220
        %v6288 = vunpack.c.h.b16 %v3220
        %v6289 = vunpack.c.l.b16 %v3221
        %v6290 = vunpack.c.h.b16 %v3221
        %v6291 = vunpack.c.l.b16 %v3222
        %v6292 = vunpack.c.h.b16 %v3222
        %v6293 = vunpack.c.l.b16 %v3223
        %v6294 = vunpack.c.h.b16 %v3223
        %v6295 = vunpack.c.l.b16 %v3224
        %v6296 = vunpack.c.h.b16 %v3224
        %v6297 = vunpack.c.l.b16 %v3225
        %v6298 = vunpack.c.h.b16 %v3225
        %v6299 = vunpack.c.l.b16 %v3226
        %v6300 = vunpack.c.h.b16 %v3226
        %v6301 = vunpack.c.l.b16 %v3227
        %v6302 = vunpack.c.h.b16 %v3227
        %v6303 = vunpack.c.l.b16 %v3228
        %v6304 = vunpack.c.h.b16 %v3228
        %v6305 = vunpack.c.l.b16 %v3229
        %v6306 = vunpack.c.h.b16 %v3229
        %v6307 = vunpack.c.l.b16 %v3230
        %v6308 = vunpack.c.h.b16 %v3230
        %v6309 = vunpack.c.l.b16 %v3231
        %v6310 = vunpack.c.h.b16 %v3231
        %v6311 = vunpack.c.l.b16 %v3232
        %v6312 = vunpack.c.h.b16 %v3232
        %v6313 = vunpack.c.l.b16 %v3233
        %v6314 = vunpack.c.h.b16 %v3233
        %v6315 = vunpack.c.l.b16 %v3234
        %v6316 = vunpack.c.h.b16 %v3234
        %v6317 = vunpack.c.l.b16 %v3235
        %v6318 = vunpack.c.h.b16 %v3235
        %v6319 = vunpack.c.l.b16 %v3236
        %v6320 = vunpack.c.h.b16 %v3236
        %v6321 = vunpack.c.l.b16 %v3237
        %v6322 = vunpack.c.h.b16 %v3237
        %v6323 = vunpack.c.l.b16 %v3238
        %v6324 = vunpack.c.h.b16 %v3238
        %v6325 = vpack.c.b16 %v4309, %v4277
        %v6326 = vpack.c.b16 %v4310, %v4278
        %v6327 = vpack.c.b16 %v4311, %v4279
        %v6328 = vpack.c.b16 %v4312, %v4280
        %v6329 = vpack.c.b16 %v4313, %v4281
        %v6330 = vpack.c.b16 %v4314, %v4282
        %v6331 = vpack.c.b16 %v4315, %v4283
        %v6332 = vpack.c.b16 %v4316, %v4284
        %v6333 = vpack.c.b16 %v4317, %v4285
        %v6334 = vpack.c.b16 %v4318, %v4286
        %v6335 = vpack.c.b16 %v4319, %v4287
        %v6336 = vpack.c.b16 %v4320, %v4288
        %v6337 = vpack.c.b16 %v4321, %v4289
        %v6338 = vpack.c.b16 %v4322, %v4290
        %v6339 = vpack.c.b16 %v4323, %v4291
        %v6340 = vpack.c.b16 %v4324, %v4292
        %v6341 = vpack.c.b16 %v4325, %v4293
        %v6342 = vpack.c.b16 %v4326, %v4294
        %v6343 = vpack.c.b16 %v4327, %v4295
        %v6344 = vpack.c.b16 %v4328, %v4296
        %v6345 = vpack.c.b16 %v4329, %v4297
        %v6346 = vpack.c.b16 %v4330, %v4298
        %v6347 = vpack.c.b16 %v4331, %v4299
        %v6348 = vpack.c.b16 %v4332, %v4300
        %v6349 = vpack.c.b16 %v4333, %v4301
        %v6350 = vpack.c.b16 %v4334, %v4302
        %v6351 = vpack.c.b16 %v4335, %v4303
        %v6352 = vpack.c.b16 %v4336, %v4304
        %v6353 = vpack.c.b16 %v4337, %v4305
        %v6354 = vpack.c.b16 %v4338, %v4306
        %v6355 = vpack.c.b16 %v4339, %v4307
        %v6356 = vpack.c.b16 %v4340, %v4308
        %v6357 = vpack.c.b16 %v4373, %v4341
        %v6358 = vpack.c.b16 %v4374, %v4342
        %v6359 = vpack.c.b16 %v4375, %v4343
        %v6360 = vpack.c.b16 %v4376, %v4344
        %v6361 = vpack.c.b16 %v4377, %v4345
        %v6362 = vpack.c.b16 %v4378, %v4346
        %v6363 = vpack.c.b16 %v4379, %v4347
        %v6364 = vpack.c.b16 %v4380, %v4348
        %v6365 = vpack.c.b16 %v4381, %v4349
        %v6366 = vpack.c.b16 %v4382, %v4350
        %v6367 = vpack.c.b16 %v4383, %v4351
        %v6368 = vpack.c.b16 %v4384, %v4352
        %v6369 = vpack.c.b16 %v4385, %v4353
        %v6370 = vpack.c.b16 %v4386, %v4354
        %v6371 = vpack.c.b16 %v4387, %v4355
        %v6372 = vpack.c.b16 %v4388, %v4356
        %v6373 = vpack.c.b16 %v4389, %v4357
        %v6374 = vpack.c.b16 %v4390, %v4358
        %v6375 = vpack.c.b16 %v4391, %v4359
        %v6376 = vpack.c.b16 %v4392, %v4360
        %v6377 = vpack.c.b16 %v4393, %v4361
        %v6378 = vpack.c.b16 %v4394, %v4362
        %v6379 = vpack.c.b16 %v4395, %v4363
        %v6380 = vpack.c.b16 %v4396, %v4364
        %v6381 = vpack.c.b16 %v4397, %v4365
        %v6382 = vpack.c.b16 %v4398, %v4366
        %v6383 = vpack.c.b16 %v4399, %v4367
        %v6384 = vpack.c.b16 %v4400, %v4368
        %v6385 = vpack.c.b16 %v4401, %v4369
        %v6386 = vpack.c.b16 %v4402, %v4370
        %v6387 = vpack.c.b16 %v4403, %v4371
        %v6388 = vpack.c.b16 %v4404, %v4372
        %v6389 = vpack.c.b16 %v4437, %v4405
        %v6390 = vpack.c.b16 %v4438, %v4406
        %v6391 = vpack.c.b16 %v4439, %v4407
        %v6392 = vpack.c.b16 %v4440, %v4408
        %v6393 = vpack.c.b16 %v4441, %v4409
        %v6394 = vpack.c.b16 %v4442, %v4410
        %v6395 = vpack.c.b16 %v4443, %v4411
        %v6396 = vpack.c.b16 %v4444, %v4412
        %v6397 = vpack.c.b16 %v4445, %v4413
        %v6398 = vpack.c.b16 %v4446, %v4414
        %v6399 = vpack.c.b16 %v4447, %v4415
        %v6400 = vpack.c.b16 %v4448, %v4416
        %v6401 = vpack.c.b16 %v4449, %v4417
        %v6402 = vpack.c.b16 %v4450, %v4418
        %v6403 = vpack.c.b16 %v4451, %v4419
        %v6404 = vpack.c.b16 %v4452, %v4420
        %v6405 = vpack.c.b16 %v4453, %v4421
        %v6406 = vpack.c.b16 %v4454, %v4422
        %v6407 = vpack.c.b16 %v4455, %v4423
        %v6408 = vpack.c.b16 %v4456, %v4424
        %v6409 = vpack.c.b16 %v4457, %v4425
        %v6410 = vpack.c.b16 %v4458, %v4426
        %v6411 = vpack.c.b16 %v4459, %v4427
        %v6412 = vpack.c.b16 %v4460, %v4428
        %v6413 = vpack.c.b16 %v4461, %v4429
        %v6414 = vpack.c.b16 %v4462, %v4430
        %v6415 = vpack.c.b16 %v4463, %v4431
        %v6416 = vpack.c.b16 %v4464, %v4432
        %v6417 = vpack.c.b16 %v4465, %v4433
        %v6418 = vpack.c.b16 %v4466, %v4434
        %v6419 = vpack.c.b16 %v4467, %v4435
        %v6420 = vpack.c.b16 %v4468, %v4436
        %v6421 = vpack.c.b16 %v4501, %v4469
        %v6422 = vpack.c.b16 %v4502, %v4470
        %v6423 = vpack.c.b16 %v4503, %v4471
        %v6424 = vpack.c.b16 %v4504, %v4472
        %v6425 = vpack.c.b16 %v4505, %v4473
        %v6426 = vpack.c.b16 %v4506, %v4474
        %v6427 = vpack.c.b16 %v4507, %v4475
        %v6428 = vpack.c.b16 %v4508, %v4476
        %v6429 = vpack.c.b16 %v4509, %v4477
        %v6430 = vpack.c.b16 %v4510, %v4478
        %v6431 = vpack.c.b16 %v4511, %v4479
        %v6432 = vpack.c.b16 %v4512, %v4480
        %v6433 = vpack.c.b16 %v4513, %v4481
        %v6434 = vpack.c.b16 %v4514, %v4482
        %v6435 = vpack.c.b16 %v4515, %v4483
        %v6436 = vpack.c.b16 %v4516, %v4484
        %v6437 = vpack.c.b16 %v4517, %v4485
        %v6438 = vpack.c.b16 %v4518, %v4486
        %v6439 = vpack.c.b16 %v4519, %v4487
        %v6440 = vpack.c.b16 %v4520, %v4488
        %v6441 = vpack.c.b16 %v4521, %v4489
        %v6442 = vpack.c.b16 %v4522, %v4490
        %v6443 = vpack.c.b16 %v4523, %v4491
        %v6444 = vpack.c.b16 %v4524, %v4492
        %v6445 = vpack.c.b16 %v4525, %v4493
        %v6446 = vpack.c.b16 %v4526, %v4494
        %v6447 = vpack.c.b16 %v4527, %v4495
        %v6448 = vpack.c.b16 %v4528, %v4496
        %v6449 = vpack.c.b16 %v4529, %v4497
        %v6450 = vpack.c.b16 %v4530, %v4498
        %v6451 = vpack.c.b16 %v4531, %v4499
        %v6452 = vpack.c.b16 %v4532, %v4500
        %v6453 = vpack.c.b16 %v4565, %v4533
        %v6454 = vpack.c.b16 %v4566, %v4534
        %v6455 = vpack.c.b16 %v4567, %v4535
        %v6456 = vpack.c.b16 %v4568, %v4536
        %v6457 = vpack.c.b16 %v4569, %v4537
        %v6458 = vpack.c.b16 %v4570, %v4538
        %v6459 = vpack.c.b16 %v4571, %v4539
        %v6460 = vpack.c.b16 %v4572, %v4540
        %v6461 = vpack.c.b16 %v4573, %v4541
        %v6462 = vpack.c.b16 %v4574, %v4542
        %v6463 = vpack.c.b16 %v4575, %v4543
        %v6464 = vpack.c.b16 %v4576, %v4544
        %v6465 = vpack.c.b16 %v4577, %v4545
        %v6466 = vpack.c.b16 %v4578, %v4546
        %v6467 = vpack.c.b16 %v4579, %v4547
        %v6468 = vpack.c.b16 %v4580, %v4548
        %v6469 = vpack.c.b16 %v4581, %v4549
        %v6470 = vpack.c.b16 %v4582, %v4550
        %v6471 = vpack.c.b16 %v4583, %v4551
        %v6472 = vpack.c.b16 %v4584, %v4552
        %v6473 = vpack.c.b16 %v4585, %v4553
        %v6474 = vpack.c.b16 %v4586, %v4554
        %v6475 = vpack.c.b16 %v4587, %v4555
        %v6476 = vpack.c.b16 %v4588, %v4556
        %v6477 = vpack.c.b16 %v4589, %v4557
        %v6478 = vpack.c.b16 %v4590, %v4558
        %v6479 = vpack.c.b16 %v4591, %v4559
        %v6480 = vpack.c.b16 %v4592, %v4560
        %v6481 = vpack.c.b16 %v4593, %v4561
        %v6482 = vpack.c.b16 %v4594, %v4562
        %v6483 = vpack.c.b16 %v4595, %v4563
        %v6484 = vpack.c.b16 %v4596, %v4564
        %v6485 = vpack.c.b16 %v4629, %v4597
        %v6486 = vpack.c.b16 %v4630, %v4598
        %v6487 = vpack.c.b16 %v4631, %v4599
        %v6488 = vpack.c.b16 %v4632, %v4600
        %v6489 = vpack.c.b16 %v4633, %v4601
        %v6490 = vpack.c.b16 %v4634, %v4602
        %v6491 = vpack.c.b16 %v4635, %v4603
        %v6492 = vpack.c.b16 %v4636, %v4604
        %v6493 = vpack.c.b16 %v4637, %v4605
        %v6494 = vpack.c.b16 %v4638, %v4606
        %v6495 = vpack.c.b16 %v4639, %v4607
        %v6496 = vpack.c.b16 %v4640, %v4608
        %v6497 = vpack.c.b16 %v4641, %v4609
        %v6498 = vpack.c.b16 %v4642, %v4610
        %v6499 = vpack.c.b16 %v4643, %v4611
        %v6500 = vpack.c.b16 %v4644, %v4612
        %v6501 = vpack.c.b16 %v4645, %v4613
        %v6502 = vpack.c.b16 %v4646, %v4614
        %v6503 = vpack.c.b16 %v4647, %v4615
        %v6504 = vpack.c.b16 %v4648, %v4616
        %v6505 = vpack.c.b16 %v4649, %v4617
        %v6506 = vpack.c.b16 %v4650, %v4618
        %v6507 = vpack.c.b16 %v4651, %v4619
        %v6508 = vpack.c.b16 %v4652, %v4620
        %v6509 = vpack.c.b16 %v4653, %v4621
        %v6510 = vpack.c.b16 %v4654, %v4622
        %v6511 = vpack.c.b16 %v4655, %v4623
        %v6512 = vpack.c.b16 %v4656, %v4624
        %v6513 = vpack.c.b16 %v4657, %v4625
        %v6514 = vpack.c.b16 %v4658, %v4626
        %v6515 = vpack.c.b16 %v4659, %v4627
        %v6516 = vpack.c.b16 %v4660, %v4628
        %v6517 = vpack.c.b16 %v4693, %v4661
        %v6518 = vpack.c.b16 %v4694, %v4662
        %v6519 = vpack.c.b16 %v4695, %v4663
        %v6520 = vpack.c.b16 %v4696, %v4664
        %v6521 = vpack.c.b16 %v4697, %v4665
        %v6522 = vpack.c.b16 %v4698, %v4666
        %v6523 = vpack.c.b16 %v4699, %v4667
        %v6524 = vpack.c.b16 %v4700, %v4668
        %v6525 = vpack.c.b16 %v4701, %v4669
        %v6526 = vpack.c.b16 %v4702, %v4670
        %v6527 = vpack.c.b16 %v4703, %v4671
        %v6528 = vpack.c.b16 %v4704, %v4672
        %v6529 = vpack.c.b16 %v4705, %v4673
        %v6530 = vpack.c.b16 %v4706, %v4674
        %v6531 = vpack.c.b16 %v4707, %v4675
        %v6532 = vpack.c.b16 %v4708, %v4676
        %v6533 = vpack.c.b16 %v4709, %v4677
        %v6534 = vpack.c.b16 %v4710, %v4678
        %v6535 = vpack.c.b16 %v4711, %v4679
        %v6536 = vpack.c.b16 %v4712, %v4680
        %v6537 = vpack.c.b16 %v4713, %v4681
        %v6538 = vpack.c.b16 %v4714, %v4682
        %v6539 = vpack.c.b16 %v4715, %v4683
        %v6540 = vpack.c.b16 %v4716, %v4684
        %v6541 = vpack.c.b16 %v4717, %v4685
        %v6542 = vpack.c.b16 %v4718, %v4686
        %v6543 = vpack.c.b16 %v4719, %v4687
        %v6544 = vpack.c.b16 %v4720, %v4688
        %v6545 = vpack.c.b16 %v4721, %v4689
        %v6546 = vpack.c.b16 %v4722, %v4690
        %v6547 = vpack.c.b16 %v4723, %v4691
        %v6548 = vpack.c.b16 %v4724, %v4692
        %v6549 = vpack.c.b16 %v4757, %v4725
        %v6550 = vpack.c.b16 %v4758, %v4726
        %v6551 = vpack.c.b16 %v4759, %v4727
        %v6552 = vpack.c.b16 %v4760, %v4728
        %v6553 = vpack.c.b16 %v4761, %v4729
        %v6554 = vpack.c.b16 %v4762, %v4730
        %v6555 = vpack.c.b16 %v4763, %v4731
        %v6556 = vpack.c.b16 %v4764, %v4732
        %v6557 = vpack.c.b16 %v4765, %v4733
        %v6558 = vpack.c.b16 %v4766, %v4734
        %v6559 = vpack.c.b16 %v4767, %v4735
        %v6560 = vpack.c.b16 %v4768, %v4736
        %v6561 = vpack.c.b16 %v4769, %v4737
        %v6562 = vpack.c.b16 %v4770, %v4738
        %v6563 = vpack.c.b16 %v4771, %v4739
        %v6564 = vpack.c.b16 %v4772, %v4740
        %v6565 = vpack.c.b16 %v4773, %v4741
        %v6566 = vpack.c.b16 %v4774, %v4742
        %v6567 = vpack.c.b16 %v4775, %v4743
        %v6568 = vpack.c.b16 %v4776, %v4744
        %v6569 = vpack.c.b16 %v4777, %v4745
        %v6570 = vpack.c.b16 %v4778, %v4746
        %v6571 = vpack.c.b16 %v4779, %v4747
        %v6572 = vpack.c.b16 %v4780, %v4748
        %v6573 = vpack.c.b16 %v4781, %v4749
        %v6574 = vpack.c.b16 %v4782, %v4750
        %v6575 = vpack.c.b16 %v4783, %v4751
        %v6576 = vpack.c.b16 %v4784, %v4752
        %v6577 = vpack.c.b16 %v4785, %v4753
        %v6578 = vpack.c.b16 %v4786, %v4754
        %v6579 = vpack.c.b16 %v4787, %v4755
        %v6580 = vpack.c.b16 %v4788, %v4756
        %v6581 = vpack.c.b16 %v4821, %v4789
        %v6582 = vpack.c.b16 %v4822, %v4790
        %v6583 = vpack.c.b16 %v4823, %v4791
        %v6584 = vpack.c.b16 %v4824, %v4792
        %v6585 = vpack.c.b16 %v4825, %v4793
        %v6586 = vpack.c.b16 %v4826, %v4794
        %v6587 = vpack.c.b16 %v4827, %v4795
        %v6588 = vpack.c.b16 %v4828, %v4796
        %v6589 = vpack.c.b16 %v4829, %v4797
        %v6590 = vpack.c.b16 %v4830, %v4798
        %v6591 = vpack.c.b16 %v4831, %v4799
        %v6592 = vpack.c.b16 %v4832, %v4800
        %v6593 = vpack.c.b16 %v4833, %v4801
        %v6594 = vpack.c.b16 %v4834, %v4802
        %v6595 = vpack.c.b16 %v4835, %v4803
        %v6596 = vpack.c.b16 %v4836, %v4804
        %v6597 = vpack.c.b16 %v4837, %v4805
        %v6598 = vpack.c.b16 %v4838, %v4806
        %v6599 = vpack.c.b16 %v4839, %v4807
        %v6600 = vpack.c.b16 %v4840, %v4808
        %v6601 = vpack.c.b16 %v4841, %v4809
        %v6602 = vpack.c.b16 %v4842, %v4810
        %v6603 = vpack.c.b16 %v4843, %v4811
        %v6604 = vpack.c.b16 %v4844, %v4812
        %v6605 = vpack.c.b16 %v4845, %v4813
        %v6606 = vpack.c.b16 %v4846, %v4814
        %v6607 = vpack.c.b16 %v4847, %v4815
        %v6608 = vpack.c.b16 %v4848, %v4816
        %v6609 = vpack.c.b16 %v4849, %v4817
        %v6610 = vpack.c.b16 %v4850, %v4818
        %v6611 = vpack.c.b16 %v4851, %v4819
        %v6612 = vpack.c.b16 %v4852, %v4820
        %v6613 = vpack.c.b16 %v4885, %v4853
        %v6614 = vpack.c.b16 %v4886, %v4854
        %v6615 = vpack.c.b16 %v4887, %v4855
        %v6616 = vpack.c.b16 %v4888, %v4856
        %v6617 = vpack.c.b16 %v4889, %v4857
        %v6618 = vpack.c.b16 %v4890, %v4858
        %v6619 = vpack.c.b16 %v4891, %v4859
        %v6620 = vpack.c.b16 %v4892, %v4860
        %v6621 = vpack.c.b16 %v4893, %v4861
        %v6622 = vpack.c.b16 %v4894, %v4862
        %v6623 = vpack.c.b16 %v4895, %v4863
        %v6624 = vpack.c.b16 %v4896, %v4864
        %v6625 = vpack.c.b16 %v4897, %v4865
        %v6626 = vpack.c.b16 %v4898, %v4866
        %v6627 = vpack.c.b16 %v4899, %v4867
        %v6628 = vpack.c.b16 %v4900, %v4868
        %v6629 = vpack.c.b16 %v4901, %v4869
        %v6630 = vpack.c.b16 %v4902, %v4870
        %v6631 = vpack.c.b16 %v4903, %v4871
        %v6632 = vpack.c.b16 %v4904, %v4872
        %v6633 = vpack.c.b16 %v4905, %v4873
        %v6634 = vpack.c.b16 %v4906, %v4874
        %v6635 = vpack.c.b16 %v4907, %v4875
        %v6636 = vpack.c.b16 %v4908, %v4876
        %v6637 = vpack.c.b16 %v4909, %v4877
        %v6638 = vpack.c.b16 %v4910, %v4878
        %v6639 = vpack.c.b16 %v4911, %v4879
        %v6640 = vpack.c.b16 %v4912, %v4880
        %v6641 = vpack.c.b16 %v4913, %v4881
        %v6642 = vpack.c.b16 %v4914, %v4882
        %v6643 = vpack.c.b16 %v4915, %v4883
        %v6644 = vpack.c.b16 %v4916, %v4884
        %v6645 = vpack.c.b16 %v4949, %v4917
        %v6646 = vpack.c.b16 %v4950, %v4918
        %v6647 = vpack.c.b16 %v4951, %v4919
        %v6648 = vpack.c.b16 %v4952, %v4920
        %v6649 = vpack.c.b16 %v4953, %v4921
        %v6650 = vpack.c.b16 %v4954, %v4922
        %v6651 = vpack.c.b16 %v4955, %v4923
        %v6652 = vpack.c.b16 %v4956, %v4924
        %v6653 = vpack.c.b16 %v4957, %v4925
        %v6654 = vpack.c.b16 %v4958, %v4926
        %v6655 = vpack.c.b16 %v4959, %v4927
        %v6656 = vpack.c.b16 %v4960, %v4928
        %v6657 = vpack.c.b16 %v4961, %v4929
        %v6658 = vpack.c.b16 %v4962, %v4930
        %v6659 = vpack.c.b16 %v4963, %v4931
        %v6660 = vpack.c.b16 %v4964, %v4932
        %v6661 = vpack.c.b16 %v4965, %v4933
        %v6662 = vpack.c.b16 %v4966, %v4934
        %v6663 = vpack.c.b16 %v4967, %v4935
        %v6664 = vpack.c.b16 %v4968, %v4936
        %v6665 = vpack.c.b16 %v4969, %v4937
        %v6666 = vpack.c.b16 %v4970, %v4938
        %v6667 = vpack.c.b16 %v4971, %v4939
        %v6668 = vpack.c.b16 %v4972, %v4940
        %v6669 = vpack.c.b16 %v4973, %v4941
        %v6670 = vpack.c.b16 %v4974, %v4942
        %v6671 = vpack.c.b16 %v4975, %v4943
        %v6672 = vpack.c.b16 %v4976, %v4944
        %v6673 = vpack.c.b16 %v4977, %v4945
        %v6674 = vpack.c.b16 %v4978, %v4946
        %v6675 = vpack.c.b16 %v4979, %v4947
        %v6676 = vpack.c.b16 %v4980, %v4948
        %v6677 = vpack.c.b16 %v5013, %v4981
        %v6678 = vpack.c.b16 %v5014, %v4982
        %v6679 = vpack.c.b16 %v5015, %v4983
        %v6680 = vpack.c.b16 %v5016, %v4984
        %v6681 = vpack.c.b16 %v5017, %v4985
        %v6682 = vpack.c.b16 %v5018, %v4986
        %v6683 = vpack.c.b16 %v5019, %v4987
        %v6684 = vpack.c.b16 %v5020, %v4988
        %v6685 = vpack.c.b16 %v5021, %v4989
        %v6686 = vpack.c.b16 %v5022, %v4990
        %v6687 = vpack.c.b16 %v5023, %v4991
        %v6688 = vpack.c.b16 %v5024, %v4992
        %v6689 = vpack.c.b16 %v5025, %v4993
        %v6690 = vpack.c.b16 %v5026, %v4994
        %v6691 = vpack.c.b16 %v5027, %v4995
        %v6692 = vpack.c.b16 %v5028, %v4996
        %v6693 = vpack.c.b16 %v5029, %v4997
        %v6694 = vpack.c.b16 %v5030, %v4998
        %v6695 = vpack.c.b16 %v5031, %v4999
        %v6696 = vpack.c.b16 %v5032, %v5000
        %v6697 = vpack.c.b16 %v5033, %v5001
        %v6698 = vpack.c.b16 %v5034, %v5002
        %v6699 = vpack.c.b16 %v5035, %v5003
        %v6700 = vpack.c.b16 %v5036, %v5004
        %v6701 = vpack.c.b16 %v5037, %v5005
        %v6702 = vpack.c.b16 %v5038, %v5006
        %v6703 = vpack.c.b16 %v5039, %v5007
        %v6704 = vpack.c.b16 %v5040, %v5008
        %v6705 = vpack.c.b16 %v5041, %v5009
        %v6706 = vpack.c.b16 %v5042, %v5010
        %v6707 = vpack.c.b16 %v5043, %v5011
        %v6708 = vpack.c.b16 %v5044, %v5012
        %v6709 = vpack.c.b16 %v5077, %v5045
        %v6710 = vpack.c.b16 %v5078, %v5046
        %v6711 = vpack.c.b16 %v5079, %v5047
        %v6712 = vpack.c.b16 %v5080, %v5048
        %v6713 = vpack.c.b16 %v5081, %v5049
        %v6714 = vpack.c.b16 %v5082, %v5050
        %v6715 = vpack.c.b16 %v5083, %v5051
        %v6716 = vpack.c.b16 %v5084, %v5052
        %v6717 = vpack.c.b16 %v5085, %v5053
        %v6718 = vpack.c.b16 %v5086, %v5054
        %v6719 = vpack.c.b16 %v5087, %v5055
        %v6720 = vpack.c.b16 %v5088, %v5056
        %v6721 = vpack.c.b16 %v5089, %v5057
        %v6722 = vpack.c.b16 %v5090, %v5058
        %v6723 = vpack.c.b16 %v5091, %v5059
        %v6724 = vpack.c.b16 %v5092, %v5060
        %v6725 = vpack.c.b16 %v5093, %v5061
        %v6726 = vpack.c.b16 %v5094, %v5062
        %v6727 = vpack.c.b16 %v5095, %v5063
        %v6728 = vpack.c.b16 %v5096, %v5064
        %v6729 = vpack.c.b16 %v5097, %v5065
        %v6730 = vpack.c.b16 %v5098, %v5066
        %v6731 = vpack.c.b16 %v5099, %v5067
        %v6732 = vpack.c.b16 %v5100, %v5068
        %v6733 = vpack.c.b16 %v5101, %v5069
        %v6734 = vpack.c.b16 %v5102, %v5070
        %v6735 = vpack.c.b16 %v5103, %v5071
        %v6736 = vpack.c.b16 %v5104, %v5072
        %v6737 = vpack.c.b16 %v5105, %v5073
        %v6738 = vpack.c.b16 %v5106, %v5074
        %v6739 = vpack.c.b16 %v5107, %v5075
        %v6740 = vpack.c.b16 %v5108, %v5076
        %v6741 = vpack.c.b16 %v5141, %v5109
        %v6742 = vpack.c.b16 %v5142, %v5110
        %v6743 = vpack.c.b16 %v5143, %v5111
        %v6744 = vpack.c.b16 %v5144, %v5112
        %v6745 = vpack.c.b16 %v5145, %v5113
        %v6746 = vpack.c.b16 %v5146, %v5114
        %v6747 = vpack.c.b16 %v5147, %v5115
        %v6748 = vpack.c.b16 %v5148, %v5116
        %v6749 = vpack.c.b16 %v5149, %v5117
        %v6750 = vpack.c.b16 %v5150, %v5118
        %v6751 = vpack.c.b16 %v5151, %v5119
        %v6752 = vpack.c.b16 %v5152, %v5120
        %v6753 = vpack.c.b16 %v5153, %v5121
        %v6754 = vpack.c.b16 %v5154, %v5122
        %v6755 = vpack.c.b16 %v5155, %v5123
        %v6756 = vpack.c.b16 %v5156, %v5124
        %v6757 = vpack.c.b16 %v5157, %v5125
        %v6758 = vpack.c.b16 %v5158, %v5126
        %v6759 = vpack.c.b16 %v5159, %v5127
        %v6760 = vpack.c.b16 %v5160, %v5128
        %v6761 = vpack.c.b16 %v5161, %v5129
        %v6762 = vpack.c.b16 %v5162, %v5130
        %v6763 = vpack.c.b16 %v5163, %v5131
        %v6764 = vpack.c.b16 %v5164, %v5132
        %v6765 = vpack.c.b16 %v5165, %v5133
        %v6766 = vpack.c.b16 %v5166, %v5134
        %v6767 = vpack.c.b16 %v5167, %v5135
        %v6768 = vpack.c.b16 %v5168, %v5136
        %v6769 = vpack.c.b16 %v5169, %v5137
        %v6770 = vpack.c.b16 %v5170, %v5138
        %v6771 = vpack.c.b16 %v5171, %v5139
        %v6772 = vpack.c.b16 %v5172, %v5140
        %v6773 = vpack.c.b16 %v5205, %v5173
        %v6774 = vpack.c.b16 %v5206, %v5174
        %v6775 = vpack.c.b16 %v5207, %v5175
        %v6776 = vpack.c.b16 %v5208, %v5176
        %v6777 = vpack.c.b16 %v5209, %v5177
        %v6778 = vpack.c.b16 %v5210, %v5178
        %v6779 = vpack.c.b16 %v5211, %v5179
        %v6780 = vpack.c.b16 %v5212, %v5180
        %v6781 = vpack.c.b16 %v5213, %v5181
        %v6782 = vpack.c.b16 %v5214, %v5182
        %v6783 = vpack.c.b16 %v5215, %v5183
        %v6784 = vpack.c.b16 %v5216, %v5184
        %v6785 = vpack.c.b16 %v5217, %v5185
        %v6786 = vpack.c.b16 %v5218, %v5186
        %v6787 = vpack.c.b16 %v5219, %v5187
        %v6788 = vpack.c.b16 %v5220, %v5188
        %v6789 = vpack.c.b16 %v5221, %v5189
        %v6790 = vpack.c.b16 %v5222, %v5190
        %v6791 = vpack.c.b16 %v5223, %v5191
        %v6792 = vpack.c.b16 %v5224, %v5192
        %v6793 = vpack.c.b16 %v5225, %v5193
        %v6794 = vpack.c.b16 %v5226, %v5194
        %v6795 = vpack.c.b16 %v5227, %v5195
        %v6796 = vpack.c.b16 %v5228, %v5196
        %v6797 = vpack.c.b16 %v5229, %v5197
        %v6798 = vpack.c.b16 %v5230, %v5198
        %v6799 = vpack.c.b16 %v5231, %v5199
        %v6800 = vpack.c.b16 %v5232, %v5200
        %v6801 = vpack.c.b16 %v5233, %v5201
        %v6802 = vpack.c.b16 %v5234, %v5202
        %v6803 = vpack.c.b16 %v5235, %v5203
        %v6804 = vpack.c.b16 %v5236, %v5204
        %v6805 = vpack.c.b16 %v5269, %v5237
        %v6806 = vpack.c.b16 %v5270, %v5238
        %v6807 = vpack.c.b16 %v5271, %v5239
        %v6808 = vpack.c.b16 %v5272, %v5240
        %v6809 = vpack.c.b16 %v5273, %v5241
        %v6810 = vpack.c.b16 %v5274, %v5242
        %v6811 = vpack.c.b16 %v5275, %v5243
        %v6812 = vpack.c.b16 %v5276, %v5244
        %v6813 = vpack.c.b16 %v5277, %v5245
        %v6814 = vpack.c.b16 %v5278, %v5246
        %v6815 = vpack.c.b16 %v5279, %v5247
        %v6816 = vpack.c.b16 %v5280, %v5248
        %v6817 = vpack.c.b16 %v5281, %v5249
        %v6818 = vpack.c.b16 %v5282, %v5250
        %v6819 = vpack.c.b16 %v5283, %v5251
        %v6820 = vpack.c.b16 %v5284, %v5252
        %v6821 = vpack.c.b16 %v5285, %v5253
        %v6822 = vpack.c.b16 %v5286, %v5254
        %v6823 = vpack.c.b16 %v5287, %v5255
        %v6824 = vpack.c.b16 %v5288, %v5256
        %v6825 = vpack.c.b16 %v5289, %v5257
        %v6826 = vpack.c.b16 %v5290, %v5258
        %v6827 = vpack.c.b16 %v5291, %v5259
        %v6828 = vpack.c.b16 %v5292, %v5260
        %v6829 = vpack.c.b16 %v5293, %v5261
        %v6830 = vpack.c.b16 %v5294, %v5262
        %v6831 = vpack.c.b16 %v5295, %v5263
        %v6832 = vpack.c.b16 %v5296, %v5264
        %v6833 = vpack.c.b16 %v5297, %v5265
        %v6834 = vpack.c.b16 %v5298, %v5266
        %v6835 = vpack.c.b16 %v5299, %v5267
        %v6836 = vpack.c.b16 %v5300, %v5268
        %v6837 = vpack.c.b16 %v5333, %v5301
        %v6838 = vpack.c.b16 %v5334, %v5302
        %v6839 = vpack.c.b16 %v5335, %v5303
        %v6840 = vpack.c.b16 %v5336, %v5304
        %v6841 = vpack.c.b16 %v5337, %v5305
        %v6842 = vpack.c.b16 %v5338, %v5306
        %v6843 = vpack.c.b16 %v5339, %v5307
        %v6844 = vpack.c.b16 %v5340, %v5308
        %v6845 = vpack.c.b16 %v5341, %v5309
        %v6846 = vpack.c.b16 %v5342, %v5310
        %v6847 = vpack.c.b16 %v5343, %v5311
        %v6848 = vpack.c.b16 %v5344, %v5312
        %v6849 = vpack.c.b16 %v5345, %v5313
        %v6850 = vpack.c.b16 %v5346, %v5314
        %v6851 = vpack.c.b16 %v5347, %v5315
        %v6852 = vpack.c.b16 %v5348, %v5316
        %v6853 = vpack.c.b16 %v5349, %v5317
        %v6854 = vpack.c.b16 %v5350, %v5318
        %v6855 = vpack.c.b16 %v5351, %v5319
        %v6856 = vpack.c.b16 %v5352, %v5320
        %v6857 = vpack.c.b16 %v5353, %v5321
        %v6858 = vpack.c.b16 %v5354, %v5322
        %v6859 = vpack.c.b16 %v5355, %v5323
        %v6860 = vpack.c.b16 %v5356, %v5324
        %v6861 = vpack.c.b16 %v5357, %v5325
        %v6862 = vpack.c.b16 %v5358, %v5326
        %v6863 = vpack.c.b16 %v5359, %v5327
        %v6864 = vpack.c.b16 %v5360, %v5328
        %v6865 = vpack.c.b16 %v5361, %v5329
        %v6866 = vpack.c.b16 %v5362, %v5330
        %v6867 = vpack.c.b16 %v5363, %v5331
        %v6868 = vpack.c.b16 %v5364, %v5332
        %v6869 = vpack.c.b16 %v5397, %v5365
        %v6870 = vpack.c.b16 %v5398, %v5366
        %v6871 = vpack.c.b16 %v5399, %v5367
        %v6872 = vpack.c.b16 %v5400, %v5368
        %v6873 = vpack.c.b16 %v5401, %v5369
        %v6874 = vpack.c.b16 %v5402, %v5370
        %v6875 = vpack.c.b16 %v5403, %v5371
        %v6876 = vpack.c.b16 %v5404, %v5372
        %v6877 = vpack.c.b16 %v5405, %v5373
        %v6878 = vpack.c.b16 %v5406, %v5374
        %v6879 = vpack.c.b16 %v5407, %v5375
        %v6880 = vpack.c.b16 %v5408, %v5376
        %v6881 = vpack.c.b16 %v5409, %v5377
        %v6882 = vpack.c.b16 %v5410, %v5378
        %v6883 = vpack.c.b16 %v5411, %v5379
        %v6884 = vpack.c.b16 %v5412, %v5380
        %v6885 = vpack.c.b16 %v5413, %v5381
        %v6886 = vpack.c.b16 %v5414, %v5382
        %v6887 = vpack.c.b16 %v5415, %v5383
        %v6888 = vpack.c.b16 %v5416, %v5384
        %v6889 = vpack.c.b16 %v5417, %v5385
        %v6890 = vpack.c.b16 %v5418, %v5386
        %v6891 = vpack.c.b16 %v5419, %v5387
        %v6892 = vpack.c.b16 %v5420, %v5388
        %v6893 = vpack.c.b16 %v5421, %v5389
        %v6894 = vpack.c.b16 %v5422, %v5390
        %v6895 = vpack.c.b16 %v5423, %v5391
        %v6896 = vpack.c.b16 %v5424, %v5392
        %v6897 = vpack.c.b16 %v5425, %v5393
        %v6898 = vpack.c.b16 %v5426, %v5394
        %v6899 = vpack.c.b16 %v5427, %v5395
        %v6900 = vpack.c.b16 %v5428, %v5396
        %v6901 = vpack.c.b16 %v5461, %v5429
        %v6902 = vpack.c.b16 %v5462, %v5430
        %v6903 = vpack.c.b16 %v5463, %v5431
        %v6904 = vpack.c.b16 %v5464, %v5432
        %v6905 = vpack.c.b16 %v5465, %v5433
        %v6906 = vpack.c.b16 %v5466, %v5434
        %v6907 = vpack.c.b16 %v5467, %v5435
        %v6908 = vpack.c.b16 %v5468, %v5436
        %v6909 = vpack.c.b16 %v5469, %v5437
        %v6910 = vpack.c.b16 %v5470, %v5438
        %v6911 = vpack.c.b16 %v5471, %v5439
        %v6912 = vpack.c.b16 %v5472, %v5440
        %v6913 = vpack.c.b16 %v5473, %v5441
        %v6914 = vpack.c.b16 %v5474, %v5442
        %v6915 = vpack.c.b16 %v5475, %v5443
        %v6916 = vpack.c.b16 %v5476, %v5444
        %v6917 = vpack.c.b16 %v5477, %v5445
        %v6918 = vpack.c.b16 %v5478, %v5446
        %v6919 = vpack.c.b16 %v5479, %v5447
        %v6920 = vpack.c.b16 %v5480, %v5448
        %v6921 = vpack.c.b16 %v5481, %v5449
        %v6922 = vpack.c.b16 %v5482, %v5450
        %v6923 = vpack.c.b16 %v5483, %v5451
        %v6924 = vpack.c.b16 %v5484, %v5452
        %v6925 = vpack.c.b16 %v5485, %v5453
        %v6926 = vpack.c.b16 %v5486, %v5454
        %v6927 = vpack.c.b16 %v5487, %v5455
        %v6928 = vpack.c.b16 %v5488, %v5456
        %v6929 = vpack.c.b16 %v5489, %v5457
        %v6930 = vpack.c.b16 %v5490, %v5458
        %v6931 = vpack.c.b16 %v5491, %v5459
        %v6932 = vpack.c.b16 %v5492, %v5460
        %v6933 = vpack.c.b16 %v5525, %v5493
        %v6934 = vpack.c.b16 %v5526, %v5494
        %v6935 = vpack.c.b16 %v5527, %v5495
        %v6936 = vpack.c.b16 %v5528, %v5496
        %v6937 = vpack.c.b16 %v5529, %v5497
        %v6938 = vpack.c.b16 %v5530, %v5498
        %v6939 = vpack.c.b16 %v5531, %v5499
        %v6940 = vpack.c.b16 %v5532, %v5500
        %v6941 = vpack.c.b16 %v5533, %v5501
        %v6942 = vpack.c.b16 %v5534, %v5502
        %v6943 = vpack.c.b16 %v5535, %v5503
        %v6944 = vpack.c.b16 %v5536, %v5504
        %v6945 = vpack.c.b16 %v5537, %v5505
        %v6946 = vpack.c.b16 %v5538, %v5506
        %v6947 = vpack.c.b16 %v5539, %v5507
        %v6948 = vpack.c.b16 %v5540, %v5508
        %v6949 = vpack.c.b16 %v5541, %v5509
        %v6950 = vpack.c.b16 %v5542, %v5510
        %v6951 = vpack.c.b16 %v5543, %v5511
        %v6952 = vpack.c.b16 %v5544, %v5512
        %v6953 = vpack.c.b16 %v5545, %v5513
        %v6954 = vpack.c.b16 %v5546, %v5514
        %v6955 = vpack.c.b16 %v5547, %v5515
        %v6956 = vpack.c.b16 %v5548, %v5516
        %v6957 = vpack.c.b16 %v5549, %v5517
        %v6958 = vpack.c.b16 %v5550, %v5518
        %v6959 = vpack.c.b16 %v5551, %v5519
        %v6960 = vpack.c.b16 %v5552, %v5520
        %v6961 = vpack.c.b16 %v5553, %v5521
        %v6962 = vpack.c.b16 %v5554, %v5522
        %v6963 = vpack.c.b16 %v5555, %v5523
        %v6964 = vpack.c.b16 %v5556, %v5524
        %v6965 = vpack.c.b16 %v5589, %v5557
        %v6966 = vpack.c.b16 %v5590, %v5558
        %v6967 = vpack.c.b16 %v5591, %v5559
        %v6968 = vpack.c.b16 %v5592, %v5560
        %v6969 = vpack.c.b16 %v5593, %v5561
        %v6970 = vpack.c.b16 %v5594, %v5562
        %v6971 = vpack.c.b16 %v5595, %v5563
        %v6972 = vpack.c.b16 %v5596, %v5564
        %v6973 = vpack.c.b16 %v5597, %v5565
        %v6974 = vpack.c.b16 %v5598, %v5566
        %v6975 = vpack.c.b16 %v5599, %v5567
        %v6976 = vpack.c.b16 %v5600, %v5568
        %v6977 = vpack.c.b16 %v5601, %v5569
        %v6978 = vpack.c.b16 %v5602, %v5570
        %v6979 = vpack.c.b16 %v5603, %v5571
        %v6980 = vpack.c.b16 %v5604, %v5572
        %v6981 = vpack.c.b16 %v5605, %v5573
        %v6982 = vpack.c.b16 %v5606, %v5574
        %v6983 = vpack.c.b16 %v5607, %v5575
        %v6984 = vpack.c.b16 %v5608, %v5576
        %v6985 = vpack.c.b16 %v5609, %v5577
        %v6986 = vpack.c.b16 %v5610, %v5578
        %v6987 = vpack.c.b16 %v5611, %v5579
        %v6988 = vpack.c.b16 %v5612, %v5580
        %v6989 = vpack.c.b16 %v5613, %v5581
        %v6990 = vpack.c.b16 %v5614, %v5582
        %v6991 = vpack.c.b16 %v5615, %v5583
        %v6992 = vpack.c.b16 %v5616, %v5584
        %v6993 = vpack.c.b16 %v5617, %v5585
        %v6994 = vpack.c.b16 %v5618, %v5586
        %v6995 = vpack.c.b16 %v5619, %v5587
        %v6996 = vpack.c.b16 %v5620, %v5588
        %v6997 = vpack.c.b16 %v5653, %v5621
        %v6998 = vpack.c.b16 %v5654, %v5622
        %v6999 = vpack.c.b16 %v5655, %v5623
        %v7000 = vpack.c.b16 %v5656, %v5624
        %v7001 = vpack.c.b16 %v5657, %v5625
        %v7002 = vpack.c.b16 %v5658, %v5626
        %v7003 = vpack.c.b16 %v5659, %v5627
        %v7004 = vpack.c.b16 %v5660, %v5628
        %v7005 = vpack.c.b16 %v5661, %v5629
        %v7006 = vpack.c.b16 %v5662, %v5630
        %v7007 = vpack.c.b16 %v5663, %v5631
        %v7008 = vpack.c.b16 %v5664, %v5632
        %v7009 = vpack.c.b16 %v5665, %v5633
        %v7010 = vpack.c.b16 %v5666, %v5634
        %v7011 = vpack.c.b16 %v5667, %v5635
        %v7012 = vpack.c.b16 %v5668, %v5636
        %v7013 = vpack.c.b16 %v5669, %v5637
        %v7014 = vpack.c.b16 %v5670, %v5638
        %v7015 = vpack.c.b16 %v5671, %v5639
        %v7016 = vpack.c.b16 %v5672, %v5640
        %v7017 = vpack.c.b16 %v5673, %v5641
        %v7018 = vpack.c.b16 %v5674, %v5642
        %v7019 = vpack.c.b16 %v5675, %v5643
        %v7020 = vpack.c.b16 %v5676, %v5644
        %v7021 = vpack.c.b16 %v5677, %v5645
        %v7022 = vpack.c.b16 %v5678, %v5646
        %v7023 = vpack.c.b16 %v5679, %v5647
        %v7024 = vpack.c.b16 %v5680, %v5648
        %v7025 = vpack.c.b16 %v5681, %v5649
        %v7026 = vpack.c.b16 %v5682, %v5650
        %v7027 = vpack.c.b16 %v5683, %v5651
        %v7028 = vpack.c.b16 %v5684, %v5652
        %v7029 = vpack.c.b16 %v5717, %v5685
        %v7030 = vpack.c.b16 %v5718, %v5686
        %v7031 = vpack.c.b16 %v5719, %v5687
        %v7032 = vpack.c.b16 %v5720, %v5688
        %v7033 = vpack.c.b16 %v5721, %v5689
        %v7034 = vpack.c.b16 %v5722, %v5690
        %v7035 = vpack.c.b16 %v5723, %v5691
        %v7036 = vpack.c.b16 %v5724, %v5692
        %v7037 = vpack.c.b16 %v5725, %v5693
        %v7038 = vpack.c.b16 %v5726, %v5694
        %v7039 = vpack.c.b16 %v5727, %v5695
        %v7040 = vpack.c.b16 %v5728, %v5696
        %v7041 = vpack.c.b16 %v5729, %v5697
        %v7042 = vpack.c.b16 %v5730, %v5698
        %v7043 = vpack.c.b16 %v5731, %v5699
        %v7044 = vpack.c.b16 %v5732, %v5700
        %v7045 = vpack.c.b16 %v5733, %v5701
        %v7046 = vpack.c.b16 %v5734, %v5702
        %v7047 = vpack.c.b16 %v5735, %v5703
        %v7048 = vpack.c.b16 %v5736, %v5704
        %v7049 = vpack.c.b16 %v5737, %v5705
        %v7050 = vpack.c.b16 %v5738, %v5706
        %v7051 = vpack.c.b16 %v5739, %v5707
        %v7052 = vpack.c.b16 %v5740, %v5708
        %v7053 = vpack.c.b16 %v5741, %v5709
        %v7054 = vpack.c.b16 %v5742, %v5710
        %v7055 = vpack.c.b16 %v5743, %v5711
        %v7056 = vpack.c.b16 %v5744, %v5712
        %v7057 = vpack.c.b16 %v5745, %v5713
        %v7058 = vpack.c.b16 %v5746, %v5714
        %v7059 = vpack.c.b16 %v5747, %v5715
        %v7060 = vpack.c.b16 %v5748, %v5716
        %v7061 = vpack.c.b16 %v5781, %v5749
        %v7062 = vpack.c.b16 %v5782, %v5750
        %v7063 = vpack.c.b16 %v5783, %v5751
        %v7064 = vpack.c.b16 %v5784, %v5752
        %v7065 = vpack.c.b16 %v5785, %v5753
        %v7066 = vpack.c.b16 %v5786, %v5754
        %v7067 = vpack.c.b16 %v5787, %v5755
        %v7068 = vpack.c.b16 %v5788, %v5756
        %v7069 = vpack.c.b16 %v5789, %v5757
        %v7070 = vpack.c.b16 %v5790, %v5758
        %v7071 = vpack.c.b16 %v5791, %v5759
        %v7072 = vpack.c.b16 %v5792, %v5760
        %v7073 = vpack.c.b16 %v5793, %v5761
        %v7074 = vpack.c.b16 %v5794, %v5762
        %v7075 = vpack.c.b16 %v5795, %v5763
        %v7076 = vpack.c.b16 %v5796, %v5764
        %v7077 = vpack.c.b16 %v5797, %v5765
        %v7078 = vpack.c.b16 %v5798, %v5766
        %v7079 = vpack.c.b16 %v5799, %v5767
        %v7080 = vpack.c.b16 %v5800, %v5768
        %v7081 = vpack.c.b16 %v5801, %v5769
        %v7082 = vpack.c.b16 %v5802, %v5770
        %v7083 = vpack.c.b16 %v5803, %v5771
        %v7084 = vpack.c.b16 %v5804, %v5772
        %v7085 = vpack.c.b16 %v5805, %v5773
        %v7086 = vpack.c.b16 %v5806, %v5774
        %v7087 = vpack.c.b16 %v5807, %v5775
        %v7088 = vpack.c.b16 %v5808, %v5776
        %v7089 = vpack.c.b16 %v5809, %v5777
        %v7090 = vpack.c.b16 %v5810, %v5778
        %v7091 = vpack.c.b16 %v5811, %v5779
        %v7092 = vpack.c.b16 %v5812, %v5780
        %v7093 = vpack.c.b16 %v5845, %v5813
        %v7094 = vpack.c.b16 %v5846, %v5814
        %v7095 = vpack.c.b16 %v5847, %v5815
        %v7096 = vpack.c.b16 %v5848, %v5816
        %v7097 = vpack.c.b16 %v5849, %v5817
        %v7098 = vpack.c.b16 %v5850, %v5818
        %v7099 = vpack.c.b16 %v5851, %v5819
        %v7100 = vpack.c.b16 %v5852, %v5820
        %v7101 = vpack.c.b16 %v5853, %v5821
        %v7102 = vpack.c.b16 %v5854, %v5822
        %v7103 = vpack.c.b16 %v5855, %v5823
        %v7104 = vpack.c.b16 %v5856, %v5824
        %v7105 = vpack.c.b16 %v5857, %v5825
        %v7106 = vpack.c.b16 %v5858, %v5826
        %v7107 = vpack.c.b16 %v5859, %v5827
        %v7108 = vpack.c.b16 %v5860, %v5828
        %v7109 = vpack.c.b16 %v5861, %v5829
        %v7110 = vpack.c.b16 %v5862, %v5830
        %v7111 = vpack.c.b16 %v5863, %v5831
        %v7112 = vpack.c.b16 %v5864, %v5832
        %v7113 = vpack.c.b16 %v5865, %v5833
        %v7114 = vpack.c.b16 %v5866, %v5834
        %v7115 = vpack.c.b16 %v5867, %v5835
        %v7116 = vpack.c.b16 %v5868, %v5836
        %v7117 = vpack.c.b16 %v5869, %v5837
        %v7118 = vpack.c.b16 %v5870, %v5838
        %v7119 = vpack.c.b16 %v5871, %v5839
        %v7120 = vpack.c.b16 %v5872, %v5840
        %v7121 = vpack.c.b16 %v5873, %v5841
        %v7122 = vpack.c.b16 %v5874, %v5842
        %v7123 = vpack.c.b16 %v5875, %v5843
        %v7124 = vpack.c.b16 %v5876, %v5844
        %v7125 = vpack.c.b16 %v5909, %v5877
        %v7126 = vpack.c.b16 %v5910, %v5878
        %v7127 = vpack.c.b16 %v5911, %v5879
        %v7128 = vpack.c.b16 %v5912, %v5880
        %v7129 = vpack.c.b16 %v5913, %v5881
        %v7130 = vpack.c.b16 %v5914, %v5882
        %v7131 = vpack.c.b16 %v5915, %v5883
        %v7132 = vpack.c.b16 %v5916, %v5884
        %v7133 = vpack.c.b16 %v5917, %v5885
        %v7134 = vpack.c.b16 %v5918, %v5886
        %v7135 = vpack.c.b16 %v5919, %v5887
        %v7136 = vpack.c.b16 %v5920, %v5888
        %v7137 = vpack.c.b16 %v5921, %v5889
        %v7138 = vpack.c.b16 %v5922, %v5890
        %v7139 = vpack.c.b16 %v5923, %v5891
        %v7140 = vpack.c.b16 %v5924, %v5892
        %v7141 = vpack.c.b16 %v5925, %v5893
        %v7142 = vpack.c.b16 %v5926, %v5894
        %v7143 = vpack.c.b16 %v5927, %v5895
        %v7144 = vpack.c.b16 %v5928, %v5896
        %v7145 = vpack.c.b16 %v5929, %v5897
        %v7146 = vpack.c.b16 %v5930, %v5898
        %v7147 = vpack.c.b16 %v5931, %v5899
        %v7148 = vpack.c.b16 %v5932, %v5900
        %v7149 = vpack.c.b16 %v5933, %v5901
        %v7150 = vpack.c.b16 %v5934, %v5902
        %v7151 = vpack.c.b16 %v5935, %v5903
        %v7152 = vpack.c.b16 %v5936, %v5904
        %v7153 = vpack.c.b16 %v5937, %v5905
        %v7154 = vpack.c.b16 %v5938, %v5906
        %v7155 = vpack.c.b16 %v5939, %v5907
        %v7156 = vpack.c.b16 %v5940, %v5908
        %v7157 = vpack.c.b16 %v5973, %v5941
        %v7158 = vpack.c.b16 %v5974, %v5942
        %v7159 = vpack.c.b16 %v5975, %v5943
        %v7160 = vpack.c.b16 %v5976, %v5944
        %v7161 = vpack.c.b16 %v5977, %v5945
        %v7162 = vpack.c.b16 %v5978, %v5946
        %v7163 = vpack.c.b16 %v5979, %v5947
        %v7164 = vpack.c.b16 %v5980, %v5948
        %v7165 = vpack.c.b16 %v5981, %v5949
        %v7166 = vpack.c.b16 %v5982, %v5950
        %v7167 = vpack.c.b16 %v5983, %v5951
        %v7168 = vpack.c.b16 %v5984, %v5952
        %v7169 = vpack.c.b16 %v5985, %v5953
        %v7170 = vpack.c.b16 %v5986, %v5954
        %v7171 = vpack.c.b16 %v5987, %v5955
        %v7172 = vpack.c.b16 %v5988, %v5956
        %v7173 = vpack.c.b16 %v5989, %v5957
        %v7174 = vpack.c.b16 %v5990, %v5958
        %v7175 = vpack.c.b16 %v5991, %v5959
        %v7176 = vpack.c.b16 %v5992, %v5960
        %v7177 = vpack.c.b16 %v5993, %v5961
        %v7178 = vpack.c.b16 %v5994, %v5962
        %v7179 = vpack.c.b16 %v5995, %v5963
        %v7180 = vpack.c.b16 %v5996, %v5964
        %v7181 = vpack.c.b16 %v5997, %v5965
        %v7182 = vpack.c.b16 %v5998, %v5966
        %v7183 = vpack.c.b16 %v5999, %v5967
        %v7184 = vpack.c.b16 %v6000, %v5968
        %v7185 = vpack.c.b16 %v6001, %v5969
        %v7186 = vpack.c.b16 %v6002, %v5970
        %v7187 = vpack.c.b16 %v6003, %v5971
        %v7188 = vpack.c.b16 %v6004, %v5972
        %v7189 = vpack.c.b16 %v6037, %v6005
        %v7190 = vpack.c.b16 %v6038, %v6006
        %v7191 = vpack.c.b16 %v6039, %v6007
        %v7192 = vpack.c.b16 %v6040, %v6008
        %v7193 = vpack.c.b16 %v6041, %v6009
        %v7194 = vpack.c.b16 %v6042, %v6010
        %v7195 = vpack.c.b16 %v6043, %v6011
        %v7196 = vpack.c.b16 %v6044, %v6012
        %v7197 = vpack.c.b16 %v6045, %v6013
        %v7198 = vpack.c.b16 %v6046, %v6014
        %v7199 = vpack.c.b16 %v6047, %v6015
        %v7200 = vpack.c.b16 %v6048, %v6016
        %v7201 = vpack.c.b16 %v6049, %v6017
        %v7202 = vpack.c.b16 %v6050, %v6018
        %v7203 = vpack.c.b16 %v6051, %v6019
        %v7204 = vpack.c.b16 %v6052, %v6020
        %v7205 = vpack.c.b16 %v6053, %v6021
        %v7206 = vpack.c.b16 %v6054, %v6022
        %v7207 = vpack.c.b16 %v6055, %v6023
        %v7208 = vpack.c.b16 %v6056, %v6024
        %v7209 = vpack.c.b16 %v6057, %v6025
        %v7210 = vpack.c.b16 %v6058, %v6026
        %v7211 = vpack.c.b16 %v6059, %v6027
        %v7212 = vpack.c.b16 %v6060, %v6028
        %v7213 = vpack.c.b16 %v6061, %v6029
        %v7214 = vpack.c.b16 %v6062, %v6030
        %v7215 = vpack.c.b16 %v6063, %v6031
        %v7216 = vpack.c.b16 %v6064, %v6032
        %v7217 = vpack.c.b16 %v6065, %v6033
        %v7218 = vpack.c.b16 %v6066, %v6034
        %v7219 = vpack.c.b16 %v6067, %v6035
        %v7220 = vpack.c.b16 %v6068, %v6036
        %v7221 = vpack.c.b16 %v6101, %v6069
        %v7222 = vpack.c.b16 %v6102, %v6070
        %v7223 = vpack.c.b16 %v6103, %v6071
        %v7224 = vpack.c.b16 %v6104, %v6072
        %v7225 = vpack.c.b16 %v6105, %v6073
        %v7226 = vpack.c.b16 %v6106, %v6074
        %v7227 = vpack.c.b16 %v6107, %v6075
        %v7228 = vpack.c.b16 %v6108, %v6076
        %v7229 = vpack.c.b16 %v6109, %v6077
        %v7230 = vpack.c.b16 %v6110, %v6078
        %v7231 = vpack.c.b16 %v6111, %v6079
        %v7232 = vpack.c.b16 %v6112, %v6080
        %v7233 = vpack.c.b16 %v6113, %v6081
        %v7234 = vpack.c.b16 %v6114, %v6082
        %v7235 = vpack.c.b16 %v6115, %v6083
        %v7236 = vpack.c.b16 %v6116, %v6084
        %v7237 = vpack.c.b16 %v6117, %v6085
        %v7238 = vpack.c.b16 %v6118, %v6086
        %v7239 = vpack.c.b16 %v6119, %v6087
        %v7240 = vpack.c.b16 %v6120, %v6088
        %v7241 = vpack.c.b16 %v6121, %v6089
        %v7242 = vpack.c.b16 %v6122, %v6090
        %v7243 = vpack.c.b16 %v6123, %v6091
        %v7244 = vpack.c.b16 %v6124, %v6092
        %v7245 = vpack.c.b16 %v6125, %v6093
        %v7246 = vpack.c.b16 %v6126, %v6094
        %v7247 = vpack.c.b16 %v6127, %v6095
        %v7248 = vpack.c.b16 %v6128, %v6096
        %v7249 = vpack.c.b16 %v6129, %v6097
        %v7250 = vpack.c.b16 %v6130, %v6098
        %v7251 = vpack.c.b16 %v6131, %v6099
        %v7252 = vpack.c.b16 %v6132, %v6100
        %v7253 = vpack.c.b16 %v6165, %v6133
        %v7254 = vpack.c.b16 %v6166, %v6134
        %v7255 = vpack.c.b16 %v6167, %v6135
        %v7256 = vpack.c.b16 %v6168, %v6136
        %v7257 = vpack.c.b16 %v6169, %v6137
        %v7258 = vpack.c.b16 %v6170, %v6138
        %v7259 = vpack.c.b16 %v6171, %v6139
        %v7260 = vpack.c.b16 %v6172, %v6140
        %v7261 = vpack.c.b16 %v6173, %v6141
        %v7262 = vpack.c.b16 %v6174, %v6142
        %v7263 = vpack.c.b16 %v6175, %v6143
        %v7264 = vpack.c.b16 %v6176, %v6144
        %v7265 = vpack.c.b16 %v6177, %v6145
        %v7266 = vpack.c.b16 %v6178, %v6146
        %v7267 = vpack.c.b16 %v6179, %v6147
        %v7268 = vpack.c.b16 %v6180, %v6148
        %v7269 = vpack.c.b16 %v6181, %v6149
        %v7270 = vpack.c.b16 %v6182, %v6150
        %v7271 = vpack.c.b16 %v6183, %v6151
        %v7272 = vpack.c.b16 %v6184, %v6152
        %v7273 = vpack.c.b16 %v6185, %v6153
        %v7274 = vpack.c.b16 %v6186, %v6154
        %v7275 = vpack.c.b16 %v6187, %v6155
        %v7276 = vpack.c.b16 %v6188, %v6156
        %v7277 = vpack.c.b16 %v6189, %v6157
        %v7278 = vpack.c.b16 %v6190, %v6158
        %v7279 = vpack.c.b16 %v6191, %v6159
        %v7280 = vpack.c.b16 %v6192, %v6160
        %v7281 = vpack.c.b16 %v6193, %v6161
        %v7282 = vpack.c.b16 %v6194, %v6162
        %v7283 = vpack.c.b16 %v6195, %v6163
        %v7284 = vpack.c.b16 %v6196, %v6164
        %v7285 = vpack.c.b16 %v6229, %v6197
        %v7286 = vpack.c.b16 %v6230, %v6198
        %v7287 = vpack.c.b16 %v6231, %v6199
        %v7288 = vpack.c.b16 %v6232, %v6200
        %v7289 = vpack.c.b16 %v6233, %v6201
        %v7290 = vpack.c.b16 %v6234, %v6202
        %v7291 = vpack.c.b16 %v6235, %v6203
        %v7292 = vpack.c.b16 %v6236, %v6204
        %v7293 = vpack.c.b16 %v6237, %v6205
        %v7294 = vpack.c.b16 %v6238, %v6206
        %v7295 = vpack.c.b16 %v6239, %v6207
        %v7296 = vpack.c.b16 %v6240, %v6208
        %v7297 = vpack.c.b16 %v6241, %v6209
        %v7298 = vpack.c.b16 %v6242, %v6210
        %v7299 = vpack.c.b16 %v6243, %v6211
        %v7300 = vpack.c.b16 %v6244, %v6212
        %v7301 = vpack.c.b16 %v6245, %v6213
        %v7302 = vpack.c.b16 %v6246, %v6214
        %v7303 = vpack.c.b16 %v6247, %v6215
        %v7304 = vpack.c.b16 %v6248, %v6216
        %v7305 = vpack.c.b16 %v6249, %v6217
        %v7306 = vpack.c.b16 %v6250, %v6218
        %v7307 = vpack.c.b16 %v6251, %v6219
        %v7308 = vpack.c.b16 %v6252, %v6220
        %v7309 = vpack.c.b16 %v6253, %v6221
        %v7310 = vpack.c.b16 %v6254, %v6222
        %v7311 = vpack.c.b16 %v6255, %v6223
        %v7312 = vpack.c.b16 %v6256, %v6224
        %v7313 = vpack.c.b16 %v6257, %v6225
        %v7314 = vpack.c.b16 %v6258, %v6226
        %v7315 = vpack.c.b16 %v6259, %v6227
        %v7316 = vpack.c.b16 %v6260, %v6228
        %v7317 = vpack.c.b16 %v6293, %v6261
        %v7318 = vpack.c.b16 %v6294, %v6262
        %v7319 = vpack.c.b16 %v6295, %v6263
        %v7320 = vpack.c.b16 %v6296, %v6264
        %v7321 = vpack.c.b16 %v6297, %v6265
        %v7322 = vpack.c.b16 %v6298, %v6266
        %v7323 = vpack.c.b16 %v6299, %v6267
        %v7324 = vpack.c.b16 %v6300, %v6268
        %v7325 = vpack.c.b16 %v6301, %v6269
        %v7326 = vpack.c.b16 %v6302, %v6270
        %v7327 = vpack.c.b16 %v6303, %v6271
        %v7328 = vpack.c.b16 %v6304, %v6272
        %v7329 = vpack.c.b16 %v6305, %v6273
        %v7330 = vpack.c.b16 %v6306, %v6274
        %v7331 = vpack.c.b16 %v6307, %v6275
        %v7332 = vpack.c.b16 %v6308, %v6276
        %v7333 = vpack.c.b16 %v6309, %v6277
        %v7334 = vpack.c.b16 %v6310, %v6278
        %v7335 = vpack.c.b16 %v6311, %v6279
        %v7336 = vpack.c.b16 %v6312, %v6280
        %v7337 = vpack.c.b16 %v6313, %v6281
        %v7338 = vpack.c.b16 %v6314, %v6282
        %v7339 = vpack.c.b16 %v6315, %v6283
        %v7340 = vpack.c.b16 %v6316, %v6284
        %v7341 = vpack.c.b16 %v6317, %v6285
        %v7342 = vpack.c.b16 %v6318, %v6286
        %v7343 = vpack.c.b16 %v6319, %v6287
        %v7344 = vpack.c.b16 %v6320, %v6288
        %v7345 = vpack.c.b16 %v6321, %v6289
        %v7346 = vpack.c.b16 %v6322, %v6290
        %v7347 = vpack.c.b16 %v6323, %v6291
        %v7348 = vpack.c.b16 %v6324, %v6292
        %8373 = vmatprep.subr.bf16.mxu0 %v6550
        %8374 = vmatpush1.bf16.msra.mxu0 %v6549
        %8375 = vmatprep.subr.bf16.mxu0 %v6518
        %8376 = vmatpush1.bf16.msra.mxu0 %v6517
        %8377 = vmatprep.subr.bf16.mxu0 %v6486
        %8378 = vmatpush1.bf16.msra.mxu0 %v6485
        %8379 = vmatprep.subr.bf16.mxu0 %v6454
        %8380 = vmatpush1.bf16.msra.mxu0 %v6453
        %8381 = vmatprep.subr.bf16.mxu0 %v6422
        %8382 = vmatpush1.bf16.msra.mxu0 %v6421
        %8383 = vmatprep.subr.bf16.mxu0 %v6390
        %8384 = vmatpush1.bf16.msra.mxu0 %v6389
        %8385 = vmatprep.subr.bf16.mxu0 %v6358
        %8386 = vmatpush1.bf16.msra.mxu0 %v6357
        %8387 = vmatprep.subr.bf16.mxu0 %v6326
        %8388 = vmatpush1.bf16.msra.mxu0 %v6325
        %8389 = vmatprep.subr.bf16.mxu0 %v6806
        %8390 = vmatpush2.bf16.msra.mxu0 %v6805
        %8391 = vmatprep.subr.bf16.mxu0 %v6774
        %8392 = vmatpush2.bf16.msra.mxu0 %v6773
        %8393 = vmatprep.subr.bf16.mxu0 %v6742
        %8394 = vmatpush2.bf16.msra.mxu0 %v6741
        %8395 = vmatprep.subr.bf16.mxu0 %v6710
        %8396 = vmatpush2.bf16.msra.mxu0 %v6709
        %8397 = vmatprep.subr.bf16.mxu0 %v6678
        %8398 = vmatpush2.bf16.msra.mxu0 %v6677
        %8399 = vmatprep.subr.bf16.mxu0 %v6646
        %8400 = vmatpush2.bf16.msra.mxu0 %v6645
        %8401 = vmatprep.subr.bf16.mxu0 %v6614
        %8402 = vmatpush2.bf16.msra.mxu0 %v6613
        %8403 = vmatprep.subr.bf16.mxu0 %v6582
        %8404 = vmatpush2.bf16.msra.mxu0 %v6581
        %8405 = vmatprep.mubr.bf16.mxu0 %v3246
        %8406 = vmatmul.mubr.bf16.gmra.mxu0 %v3245
        %v8407 = vpop.f32.mrf.mxu0
        %v8408 = vadd.f32 0.0, %v8407
        %v8409 = vpop.f32.mrf.mxu0
        %v8410 = vadd.f32 0.0, %v8409
        %v8411 = vpop.f32.mrf.mxu0
        %v8412 = vpop.f32.mrf.mxu0
        %8413 = vdwg.mxu0
        %8414 = vmatprep.subr.bf16.mxu0 %v7062
        %8415 = vmatpush1.bf16.msra.mxu0 %v7061
        %8416 = vmatprep.subr.bf16.mxu0 %v7030
        %8417 = vmatpush1.bf16.msra.mxu0 %v7029
        %8418 = vmatprep.subr.bf16.mxu0 %v6998
        %8419 = vmatpush1.bf16.msra.mxu0 %v6997
        %8420 = vmatprep.subr.bf16.mxu0 %v6966
        %8421 = vmatpush1.bf16.msra.mxu0 %v6965
        %8422 = vmatprep.subr.bf16.mxu0 %v6934
        %8423 = vmatpush1.bf16.msra.mxu0 %v6933
        %8424 = vmatprep.subr.bf16.mxu0 %v6902
        %8425 = vmatpush1.bf16.msra.mxu0 %v6901
        %8426 = vmatprep.subr.bf16.mxu0 %v6870
        %8427 = vmatpush1.bf16.msra.mxu0 %v6869
        %8428 = vmatprep.subr.bf16.mxu0 %v6838
        %8429 = vmatpush1.bf16.msra.mxu0 %v6837
        %8430 = vmatprep.subr.bf16.mxu0 %v7318
        %8431 = vmatpush2.bf16.msra.mxu0 %v7317
        %8432 = vmatprep.subr.bf16.mxu0 %v7286
        %8433 = vmatpush2.bf16.msra.mxu0 %v7285
        %8434 = vmatprep.subr.bf16.mxu0 %v7254
        %8435 = vmatpush2.bf16.msra.mxu0 %v7253
        %8436 = vmatprep.subr.bf16.mxu0 %v7222
        %8437 = vmatpush2.bf16.msra.mxu0 %v7221
        %8438 = vmatprep.subr.bf16.mxu0 %v7190
        %8439 = vmatpush2.bf16.msra.mxu0 %v7189
        %8440 = vmatprep.subr.bf16.mxu0 %v7158
        %8441 = vmatpush2.bf16.msra.mxu0 %v7157
        %8442 = vmatprep.subr.bf16.mxu0 %v7126
        %8443 = vmatpush2.bf16.msra.mxu0 %v7125
        %8444 = vmatprep.subr.bf16.mxu0 %v7094
        %8445 = vmatpush2.bf16.msra.mxu0 %v7093
        %8446 = vmatprep.mubr.bf16.mxu0 %v3248
        %8447 = vmatmul.mubr.bf16.gmra.mxu0 %v3247
        %v8448 = vpop.f32.mrf.mxu0
        %v8449 = vadd.f32 %v8408, %v8448
        %v8450 = vpop.f32.mrf.mxu0
        %v8451 = vadd.f32 %v8410, %v8450
        %v8452 = vpop.f32.mrf.mxu0
        %v8453 = vpop.f32.mrf.mxu0
        %8454 = vdwg.mxu0
        %8455 = vmatprep.subr.bf16.mxu0 %v6552
        %8456 = vmatpush1.bf16.msra.mxu0 %v6551
        %8457 = vmatprep.subr.bf16.mxu0 %v6520
        %8458 = vmatpush1.bf16.msra.mxu0 %v6519
        %8459 = vmatprep.subr.bf16.mxu0 %v6488
        %8460 = vmatpush1.bf16.msra.mxu0 %v6487
        %8461 = vmatprep.subr.bf16.mxu0 %v6456
        %8462 = vmatpush1.bf16.msra.mxu0 %v6455
        %8463 = vmatprep.subr.bf16.mxu0 %v6424
        %8464 = vmatpush1.bf16.msra.mxu0 %v6423
        %8465 = vmatprep.subr.bf16.mxu0 %v6392
        %8466 = vmatpush1.bf16.msra.mxu0 %v6391
        %8467 = vmatprep.subr.bf16.mxu0 %v6360
        %8468 = vmatpush1.bf16.msra.mxu0 %v6359
        %8469 = vmatprep.subr.bf16.mxu0 %v6328
        %8470 = vmatpush1.bf16.msra.mxu0 %v6327
        %8471 = vmatprep.subr.bf16.mxu0 %v6808
        %8472 = vmatpush2.bf16.msra.mxu0 %v6807
        %8473 = vmatprep.subr.bf16.mxu0 %v6776
        %8474 = vmatpush2.bf16.msra.mxu0 %v6775
        %8475 = vmatprep.subr.bf16.mxu0 %v6744
        %8476 = vmatpush2.bf16.msra.mxu0 %v6743
        %8477 = vmatprep.subr.bf16.mxu0 %v6712
        %8478 = vmatpush2.bf16.msra.mxu0 %v6711
        %8479 = vmatprep.subr.bf16.mxu0 %v6680
        %8480 = vmatpush2.bf16.msra.mxu0 %v6679
        %8481 = vmatprep.subr.bf16.mxu0 %v6648
        %8482 = vmatpush2.bf16.msra.mxu0 %v6647
        %8483 = vmatprep.subr.bf16.mxu0 %v6616
        %8484 = vmatpush2.bf16.msra.mxu0 %v6615
        %8485 = vmatprep.subr.bf16.mxu0 %v6584
        %8486 = vmatpush2.bf16.msra.mxu0 %v6583
        %8487 = vmatprep.mubr.bf16.mxu0 %v3246
        %8488 = vmatmul.mubr.bf16.gmra.mxu0 %v3245
        %v8489 = vpop.f32.mrf.mxu0
        %v8490 = vadd.f32 0.0, %v8489
        %v8491 = vpop.f32.mrf.mxu0
        %v8492 = vadd.f32 0.0, %v8491
        %v8493 = vpop.f32.mrf.mxu0
        %v8494 = vpop.f32.mrf.mxu0
        %8495 = vdwg.mxu0
        %8496 = vmatprep.subr.bf16.mxu0 %v7064
        %8497 = vmatpush1.bf16.msra.mxu0 %v7063
        %8498 = vmatprep.subr.bf16.mxu0 %v7032
        %8499 = vmatpush1.bf16.msra.mxu0 %v7031
        %8500 = vmatprep.subr.bf16.mxu0 %v7000
        %8501 = vmatpush1.bf16.msra.mxu0 %v6999
        %8502 = vmatprep.subr.bf16.mxu0 %v6968
        %8503 = vmatpush1.bf16.msra.mxu0 %v6967
        %8504 = vmatprep.subr.bf16.mxu0 %v6936
        %8505 = vmatpush1.bf16.msra.mxu0 %v6935
        %8506 = vmatprep.subr.bf16.mxu0 %v6904
        %8507 = vmatpush1.bf16.msra.mxu0 %v6903
        %8508 = vmatprep.subr.bf16.mxu0 %v6872
        %8509 = vmatpush1.bf16.msra.mxu0 %v6871
        %8510 = vmatprep.subr.bf16.mxu0 %v6840
        %8511 = vmatpush1.bf16.msra.mxu0 %v6839
        %8512 = vmatprep.subr.bf16.mxu0 %v7320
        %8513 = vmatpush2.bf16.msra.mxu0 %v7319
        %8514 = vmatprep.subr.bf16.mxu0 %v7288
        %8515 = vmatpush2.bf16.msra.mxu0 %v7287
        %8516 = vmatprep.subr.bf16.mxu0 %v7256
        %8517 = vmatpush2.bf16.msra.mxu0 %v7255
        %8518 = vmatprep.subr.bf16.mxu0 %v7224
        %8519 = vmatpush2.bf16.msra.mxu0 %v7223
        %8520 = vmatprep.subr.bf16.mxu0 %v7192
        %8521 = vmatpush2.bf16.msra.mxu0 %v7191
        %8522 = vmatprep.subr.bf16.mxu0 %v7160
        %8523 = vmatpush2.bf16.msra.mxu0 %v7159
        %8524 = vmatprep.subr.bf16.mxu0 %v7128
        %8525 = vmatpush2.bf16.msra.mxu0 %v7127
        %8526 = vmatprep.subr.bf16.mxu0 %v7096
        %8527 = vmatpush2.bf16.msra.mxu0 %v7095
        %8528 = vmatprep.mubr.bf16.mxu0 %v3248
        %8529 = vmatmul.mubr.bf16.gmra.mxu0 %v3247
        %v8530 = vpop.f32.mrf.mxu0
        %v8531 = vadd.f32 %v8490, %v8530
        %v8532 = vpop.f32.mrf.mxu0
        %v8533 = vadd.f32 %v8492, %v8532
        %v8534 = vpop.f32.mrf.mxu0
        %v8535 = vpop.f32.mrf.mxu0
        %8536 = vdwg.mxu0
        %8537 = vmatprep.subr.bf16.mxu0 %v6554
        %8538 = vmatpush1.bf16.msra.mxu0 %v6553
        %8539 = vmatprep.subr.bf16.mxu0 %v6522
        %8540 = vmatpush1.bf16.msra.mxu0 %v6521
        %8541 = vmatprep.subr.bf16.mxu0 %v6490
        %8542 = vmatpush1.bf16.msra.mxu0 %v6489
        %8543 = vmatprep.subr.bf16.mxu0 %v6458
        %8544 = vmatpush1.bf16.msra.mxu0 %v6457
        %8545 = vmatprep.subr.bf16.mxu0 %v6426
        %8546 = vmatpush1.bf16.msra.mxu0 %v6425
        %8547 = vmatprep.subr.bf16.mxu0 %v6394
        %8548 = vmatpush1.bf16.msra.mxu0 %v6393
        %8549 = vmatprep.subr.bf16.mxu0 %v6362
        %8550 = vmatpush1.bf16.msra.mxu0 %v6361
        %8551 = vmatprep.subr.bf16.mxu0 %v6330
        %8552 = vmatpush1.bf16.msra.mxu0 %v6329
        %8553 = vmatprep.subr.bf16.mxu0 %v6810
        %8554 = vmatpush2.bf16.msra.mxu0 %v6809
        %8555 = vmatprep.subr.bf16.mxu0 %v6778
        %8556 = vmatpush2.bf16.msra.mxu0 %v6777
        %8557 = vmatprep.subr.bf16.mxu0 %v6746
        %8558 = vmatpush2.bf16.msra.mxu0 %v6745
        %8559 = vmatprep.subr.bf16.mxu0 %v6714
        %8560 = vmatpush2.bf16.msra.mxu0 %v6713
        %8561 = vmatprep.subr.bf16.mxu0 %v6682
        %8562 = vmatpush2.bf16.msra.mxu0 %v6681
        %8563 = vmatprep.subr.bf16.mxu0 %v6650
        %8564 = vmatpush2.bf16.msra.mxu0 %v6649
        %8565 = vmatprep.subr.bf16.mxu0 %v6618
        %8566 = vmatpush2.bf16.msra.mxu0 %v6617
        %8567 = vmatprep.subr.bf16.mxu0 %v6586
        %8568 = vmatpush2.bf16.msra.mxu0 %v6585
        %8569 = vmatprep.mubr.bf16.mxu0 %v3246
        %8570 = vmatmul.mubr.bf16.gmra.mxu0 %v3245
        %v8571 = vpop.f32.mrf.mxu0
        %v8572 = vadd.f32 0.0, %v8571
        %v8573 = vpop.f32.mrf.mxu0
        %v8574 = vadd.f32 0.0, %v8573
        %v8575 = vpop.f32.mrf.mxu0
        %v8576 = vpop.f32.mrf.mxu0
        %8577 = vdwg.mxu0
        %8578 = vmatprep.subr.bf16.mxu0 %v7066
        %8579 = vmatpush1.bf16.msra.mxu0 %v7065
        %8580 = vmatprep.subr.bf16.mxu0 %v7034
        %8581 = vmatpush1.bf16.msra.mxu0 %v7033
        %8582 = vmatprep.subr.bf16.mxu0 %v7002
        %8583 = vmatpush1.bf16.msra.mxu0 %v7001
        %8584 = vmatprep.subr.bf16.mxu0 %v6970
        %8585 = vmatpush1.bf16.msra.mxu0 %v6969
        %8586 = vmatprep.subr.bf16.mxu0 %v6938
        %8587 = vmatpush1.bf16.msra.mxu0 %v6937
        %8588 = vmatprep.subr.bf16.mxu0 %v6906
        %8589 = vmatpush1.bf16.msra.mxu0 %v6905
        %8590 = vmatprep.subr.bf16.mxu0 %v6874
        %8591 = vmatpush1.bf16.msra.mxu0 %v6873
        %8592 = vmatprep.subr.bf16.mxu0 %v6842
        %8593 = vmatpush1.bf16.msra.mxu0 %v6841
        %8594 = vmatprep.subr.bf16.mxu0 %v7322
        %8595 = vmatpush2.bf16.msra.mxu0 %v7321
        %8596 = vmatprep.subr.bf16.mxu0 %v7290
        %8597 = vmatpush2.bf16.msra.mxu0 %v7289
        %8598 = vmatprep.subr.bf16.mxu0 %v7258
        %8599 = vmatpush2.bf16.msra.mxu0 %v7257
        %8600 = vmatprep.subr.bf16.mxu0 %v7226
        %8601 = vmatpush2.bf16.msra.mxu0 %v7225
        %8602 = vmatprep.subr.bf16.mxu0 %v7194
        %8603 = vmatpush2.bf16.msra.mxu0 %v7193
        %8604 = vmatprep.subr.bf16.mxu0 %v7162
        %8605 = vmatpush2.bf16.msra.mxu0 %v7161
        %8606 = vmatprep.subr.bf16.mxu0 %v7130
        %8607 = vmatpush2.bf16.msra.mxu0 %v7129
        %8608 = vmatprep.subr.bf16.mxu0 %v7098
        %8609 = vmatpush2.bf16.msra.mxu0 %v7097
        %8610 = vmatprep.mubr.bf16.mxu0 %v3248
        %8611 = vmatmul.mubr.bf16.gmra.mxu0 %v3247
        %v8612 = vpop.f32.mrf.mxu0
        %v8613 = vadd.f32 %v8572, %v8612
        %v8614 = vpop.f32.mrf.mxu0
        %v8615 = vadd.f32 %v8574, %v8614
        %v8616 = vpop.f32.mrf.mxu0
        %v8617 = vpop.f32.mrf.mxu0
        %8618 = vdwg.mxu0
        %8619 = vmatprep.subr.bf16.mxu0 %v6556
        %8620 = vmatpush1.bf16.msra.mxu0 %v6555
        %8621 = vmatprep.subr.bf16.mxu0 %v6524
        %8622 = vmatpush1.bf16.msra.mxu0 %v6523
        %8623 = vmatprep.subr.bf16.mxu0 %v6492
        %8624 = vmatpush1.bf16.msra.mxu0 %v6491
        %8625 = vmatprep.subr.bf16.mxu0 %v6460
        %8626 = vmatpush1.bf16.msra.mxu0 %v6459
        %8627 = vmatprep.subr.bf16.mxu0 %v6428
        %8628 = vmatpush1.bf16.msra.mxu0 %v6427
        %8629 = vmatprep.subr.bf16.mxu0 %v6396
        %8630 = vmatpush1.bf16.msra.mxu0 %v6395
        %8631 = vmatprep.subr.bf16.mxu0 %v6364
        %8632 = vmatpush1.bf16.msra.mxu0 %v6363
        %8633 = vmatprep.subr.bf16.mxu0 %v6332
        %8634 = vmatpush1.bf16.msra.mxu0 %v6331
        %8635 = vmatprep.subr.bf16.mxu0 %v6812
        %8636 = vmatpush2.bf16.msra.mxu0 %v6811
        %8637 = vmatprep.subr.bf16.mxu0 %v6780
        %8638 = vmatpush2.bf16.msra.mxu0 %v6779
        %8639 = vmatprep.subr.bf16.mxu0 %v6748
        %8640 = vmatpush2.bf16.msra.mxu0 %v6747
        %8641 = vmatprep.subr.bf16.mxu0 %v6716
        %8642 = vmatpush2.bf16.msra.mxu0 %v6715
        %8643 = vmatprep.subr.bf16.mxu0 %v6684
        %8644 = vmatpush2.bf16.msra.mxu0 %v6683
        %8645 = vmatprep.subr.bf16.mxu0 %v6652
        %8646 = vmatpush2.bf16.msra.mxu0 %v6651
        %8647 = vmatprep.subr.bf16.mxu0 %v6620
        %8648 = vmatpush2.bf16.msra.mxu0 %v6619
        %8649 = vmatprep.subr.bf16.mxu0 %v6588
        %8650 = vmatpush2.bf16.msra.mxu0 %v6587
        %8651 = vmatprep.mubr.bf16.mxu0 %v3246
        %8652 = vmatmul.mubr.bf16.gmra.mxu0 %v3245
        %v8653 = vpop.f32.mrf.mxu0
        %v8654 = vadd.f32 0.0, %v8653
        %v8655 = vpop.f32.mrf.mxu0
        %v8656 = vadd.f32 0.0, %v8655
        %v8657 = vpop.f32.mrf.mxu0
        %v8658 = vpop.f32.mrf.mxu0
        %8659 = vdwg.mxu0
        %8660 = vmatprep.subr.bf16.mxu0 %v7068
        %8661 = vmatpush1.bf16.msra.mxu0 %v7067
        %8662 = vmatprep.subr.bf16.mxu0 %v7036
        %8663 = vmatpush1.bf16.msra.mxu0 %v7035
        %8664 = vmatprep.subr.bf16.mxu0 %v7004
        %8665 = vmatpush1.bf16.msra.mxu0 %v7003
        %8666 = vmatprep.subr.bf16.mxu0 %v6972
        %8667 = vmatpush1.bf16.msra.mxu0 %v6971
        %8668 = vmatprep.subr.bf16.mxu0 %v6940
        %8669 = vmatpush1.bf16.msra.mxu0 %v6939
        %8670 = vmatprep.subr.bf16.mxu0 %v6908
        %8671 = vmatpush1.bf16.msra.mxu0 %v6907
        %8672 = vmatprep.subr.bf16.mxu0 %v6876
        %8673 = vmatpush1.bf16.msra.mxu0 %v6875
        %8674 = vmatprep.subr.bf16.mxu0 %v6844
        %8675 = vmatpush1.bf16.msra.mxu0 %v6843
        %8676 = vmatprep.subr.bf16.mxu0 %v7324
        %8677 = vmatpush2.bf16.msra.mxu0 %v7323
        %8678 = vmatprep.subr.bf16.mxu0 %v7292
        %8679 = vmatpush2.bf16.msra.mxu0 %v7291
        %8680 = vmatprep.subr.bf16.mxu0 %v7260
        %8681 = vmatpush2.bf16.msra.mxu0 %v7259
        %8682 = vmatprep.subr.bf16.mxu0 %v7228
        %8683 = vmatpush2.bf16.msra.mxu0 %v7227
        %8684 = vmatprep.subr.bf16.mxu0 %v7196
        %8685 = vmatpush2.bf16.msra.mxu0 %v7195
        %8686 = vmatprep.subr.bf16.mxu0 %v7164
        %8687 = vmatpush2.bf16.msra.mxu0 %v7163
        %8688 = vmatprep.subr.bf16.mxu0 %v7132
        %8689 = vmatpush2.bf16.msra.mxu0 %v7131
        %8690 = vmatprep.subr.bf16.mxu0 %v7100
        %8691 = vmatpush2.bf16.msra.mxu0 %v7099
        %8692 = vmatprep.mubr.bf16.mxu0 %v3248
        %8693 = vmatmul.mubr.bf16.gmra.mxu0 %v3247
        %v8694 = vpop.f32.mrf.mxu0
        %v8695 = vadd.f32 %v8654, %v8694
        %v8696 = vpop.f32.mrf.mxu0
        %v8697 = vadd.f32 %v8656, %v8696
        %v8698 = vpop.f32.mrf.mxu0
        %v8699 = vpop.f32.mrf.mxu0
        %8700 = vdwg.mxu0
        %8701 = vmatprep.subr.bf16.mxu0 %v6558
        %8702 = vmatpush1.bf16.msra.mxu0 %v6557
        %8703 = vmatprep.subr.bf16.mxu0 %v6526
        %8704 = vmatpush1.bf16.msra.mxu0 %v6525
        %8705 = vmatprep.subr.bf16.mxu0 %v6494
        %8706 = vmatpush1.bf16.msra.mxu0 %v6493
        %8707 = vmatprep.subr.bf16.mxu0 %v6462
        %8708 = vmatpush1.bf16.msra.mxu0 %v6461
        %8709 = vmatprep.subr.bf16.mxu0 %v6430
        %8710 = vmatpush1.bf16.msra.mxu0 %v6429
        %8711 = vmatprep.subr.bf16.mxu0 %v6398
        %8712 = vmatpush1.bf16.msra.mxu0 %v6397
        %8713 = vmatprep.subr.bf16.mxu0 %v6366
        %8714 = vmatpush1.bf16.msra.mxu0 %v6365
        %8715 = vmatprep.subr.bf16.mxu0 %v6334
        %8716 = vmatpush1.bf16.msra.mxu0 %v6333
        %8717 = vmatprep.subr.bf16.mxu0 %v6814
        %8718 = vmatpush2.bf16.msra.mxu0 %v6813
        %8719 = vmatprep.subr.bf16.mxu0 %v6782
        %8720 = vmatpush2.bf16.msra.mxu0 %v6781
        %8721 = vmatprep.subr.bf16.mxu0 %v6750
        %8722 = vmatpush2.bf16.msra.mxu0 %v6749
        %8723 = vmatprep.subr.bf16.mxu0 %v6718
        %8724 = vmatpush2.bf16.msra.mxu0 %v6717
        %8725 = vmatprep.subr.bf16.mxu0 %v6686
        %8726 = vmatpush2.bf16.msra.mxu0 %v6685
        %8727 = vmatprep.subr.bf16.mxu0 %v6654
        %8728 = vmatpush2.bf16.msra.mxu0 %v6653
        %8729 = vmatprep.subr.bf16.mxu0 %v6622
        %8730 = vmatpush2.bf16.msra.mxu0 %v6621
        %8731 = vmatprep.subr.bf16.mxu0 %v6590
        %8732 = vmatpush2.bf16.msra.mxu0 %v6589
        %8733 = vmatprep.mubr.bf16.mxu0 %v3246
        %8734 = vmatmul.mubr.bf16.gmra.mxu0 %v3245
        %v8735 = vpop.f32.mrf.mxu0
        %v8736 = vadd.f32 0.0, %v8735
        %v8737 = vpop.f32.mrf.mxu0
        %v8738 = vadd.f32 0.0, %v8737
        %v8739 = vpop.f32.mrf.mxu0
        %v8740 = vpop.f32.mrf.mxu0
        %8741 = vdwg.mxu0
        %8742 = vmatprep.subr.bf16.mxu0 %v7070
        %8743 = vmatpush1.bf16.msra.mxu0 %v7069
        %8744 = vmatprep.subr.bf16.mxu0 %v7038
        %8745 = vmatpush1.bf16.msra.mxu0 %v7037
        %8746 = vmatprep.subr.bf16.mxu0 %v7006
        %8747 = vmatpush1.bf16.msra.mxu0 %v7005
        %8748 = vmatprep.subr.bf16.mxu0 %v6974
        %8749 = vmatpush1.bf16.msra.mxu0 %v6973
        %8750 = vmatprep.subr.bf16.mxu0 %v6942
        %8751 = vmatpush1.bf16.msra.mxu0 %v6941
        %8752 = vmatprep.subr.bf16.mxu0 %v6910
        %8753 = vmatpush1.bf16.msra.mxu0 %v6909
        %8754 = vmatprep.subr.bf16.mxu0 %v6878
        %8755 = vmatpush1.bf16.msra.mxu0 %v6877
        %8756 = vmatprep.subr.bf16.mxu0 %v6846
        %8757 = vmatpush1.bf16.msra.mxu0 %v6845
        %8758 = vmatprep.subr.bf16.mxu0 %v7326
        %8759 = vmatpush2.bf16.msra.mxu0 %v7325
        %8760 = vmatprep.subr.bf16.mxu0 %v7294
        %8761 = vmatpush2.bf16.msra.mxu0 %v7293
        %8762 = vmatprep.subr.bf16.mxu0 %v7262
        %8763 = vmatpush2.bf16.msra.mxu0 %v7261
        %8764 = vmatprep.subr.bf16.mxu0 %v7230
        %8765 = vmatpush2.bf16.msra.mxu0 %v7229
        %8766 = vmatprep.subr.bf16.mxu0 %v7198
        %8767 = vmatpush2.bf16.msra.mxu0 %v7197
        %8768 = vmatprep.subr.bf16.mxu0 %v7166
        %8769 = vmatpush2.bf16.msra.mxu0 %v7165
        %8770 = vmatprep.subr.bf16.mxu0 %v7134
        %8771 = vmatpush2.bf16.msra.mxu0 %v7133
        %8772 = vmatprep.subr.bf16.mxu0 %v7102
        %8773 = vmatpush2.bf16.msra.mxu0 %v7101
        %8774 = vmatprep.mubr.bf16.mxu0 %v3248
        %8775 = vmatmul.mubr.bf16.gmra.mxu0 %v3247
        %v8776 = vpop.f32.mrf.mxu0
        %v8777 = vadd.f32 %v8736, %v8776
        %v8778 = vpop.f32.mrf.mxu0
        %v8779 = vadd.f32 %v8738, %v8778
        %v8780 = vpop.f32.mrf.mxu0
        %v8781 = vpop.f32.mrf.mxu0
        %8782 = vdwg.mxu0
        %8783 = vmatprep.subr.bf16.mxu0 %v6560
        %8784 = vmatpush1.bf16.msra.mxu0 %v6559
        %8785 = vmatprep.subr.bf16.mxu0 %v6528
        %8786 = vmatpush1.bf16.msra.mxu0 %v6527
        %8787 = vmatprep.subr.bf16.mxu0 %v6496
        %8788 = vmatpush1.bf16.msra.mxu0 %v6495
        %8789 = vmatprep.subr.bf16.mxu0 %v6464
        %8790 = vmatpush1.bf16.msra.mxu0 %v6463
        %8791 = vmatprep.subr.bf16.mxu0 %v6432
        %8792 = vmatpush1.bf16.msra.mxu0 %v6431
        %8793 = vmatprep.subr.bf16.mxu0 %v6400
        %8794 = vmatpush1.bf16.msra.mxu0 %v6399
        %8795 = vmatprep.subr.bf16.mxu0 %v6368
        %8796 = vmatpush1.bf16.msra.mxu0 %v6367
        %8797 = vmatprep.subr.bf16.mxu0 %v6336
        %8798 = vmatpush1.bf16.msra.mxu0 %v6335
        %8799 = vmatprep.subr.bf16.mxu0 %v6816
        %8800 = vmatpush2.bf16.msra.mxu0 %v6815
        %8801 = vmatprep.subr.bf16.mxu0 %v6784
        %8802 = vmatpush2.bf16.msra.mxu0 %v6783
        %8803 = vmatprep.subr.bf16.mxu0 %v6752
        %8804 = vmatpush2.bf16.msra.mxu0 %v6751
        %8805 = vmatprep.subr.bf16.mxu0 %v6720
        %8806 = vmatpush2.bf16.msra.mxu0 %v6719
        %8807 = vmatprep.subr.bf16.mxu0 %v6688
        %8808 = vmatpush2.bf16.msra.mxu0 %v6687
        %8809 = vmatprep.subr.bf16.mxu0 %v6656
        %8810 = vmatpush2.bf16.msra.mxu0 %v6655
        %8811 = vmatprep.subr.bf16.mxu0 %v6624
        %8812 = vmatpush2.bf16.msra.mxu0 %v6623
        %8813 = vmatprep.subr.bf16.mxu0 %v6592
        %8814 = vmatpush2.bf16.msra.mxu0 %v6591
        %8815 = vmatprep.mubr.bf16.mxu0 %v3246
        %8816 = vmatmul.mubr.bf16.gmra.mxu0 %v3245
        %v8817 = vpop.f32.mrf.mxu0
        %v8818 = vadd.f32 0.0, %v8817
        %v8819 = vpop.f32.mrf.mxu0
        %v8820 = vadd.f32 0.0, %v8819
        %v8821 = vpop.f32.mrf.mxu0
        %v8822 = vpop.f32.mrf.mxu0
        %8823 = vdwg.mxu0
        %8824 = vmatprep.subr.bf16.mxu0 %v7072
        %8825 = vmatpush1.bf16.msra.mxu0 %v7071
        %8826 = vmatprep.subr.bf16.mxu0 %v7040
        %8827 = vmatpush1.bf16.msra.mxu0 %v7039
        %8828 = vmatprep.subr.bf16.mxu0 %v7008
        %8829 = vmatpush1.bf16.msra.mxu0 %v7007
        %8830 = vmatprep.subr.bf16.mxu0 %v6976
        %8831 = vmatpush1.bf16.msra.mxu0 %v6975
        %8832 = vmatprep.subr.bf16.mxu0 %v6944
        %8833 = vmatpush1.bf16.msra.mxu0 %v6943
        %8834 = vmatprep.subr.bf16.mxu0 %v6912
        %8835 = vmatpush1.bf16.msra.mxu0 %v6911
        %8836 = vmatprep.subr.bf16.mxu0 %v6880
        %8837 = vmatpush1.bf16.msra.mxu0 %v6879
        %8838 = vmatprep.subr.bf16.mxu0 %v6848
        %8839 = vmatpush1.bf16.msra.mxu0 %v6847
        %8840 = vmatprep.subr.bf16.mxu0 %v7328
        %8841 = vmatpush2.bf16.msra.mxu0 %v7327
        %8842 = vmatprep.subr.bf16.mxu0 %v7296
        %8843 = vmatpush2.bf16.msra.mxu0 %v7295
        %8844 = vmatprep.subr.bf16.mxu0 %v7264
        %8845 = vmatpush2.bf16.msra.mxu0 %v7263
        %8846 = vmatprep.subr.bf16.mxu0 %v7232
        %8847 = vmatpush2.bf16.msra.mxu0 %v7231
        %8848 = vmatprep.subr.bf16.mxu0 %v7200
        %8849 = vmatpush2.bf16.msra.mxu0 %v7199
        %8850 = vmatprep.subr.bf16.mxu0 %v7168
        %8851 = vmatpush2.bf16.msra.mxu0 %v7167
        %8852 = vmatprep.subr.bf16.mxu0 %v7136
        %8853 = vmatpush2.bf16.msra.mxu0 %v7135
        %8854 = vmatprep.subr.bf16.mxu0 %v7104
        %8855 = vmatpush2.bf16.msra.mxu0 %v7103
        %8856 = vmatprep.mubr.bf16.mxu0 %v3248
        %8857 = vmatmul.mubr.bf16.gmra.mxu0 %v3247
        %v8858 = vpop.f32.mrf.mxu0
        %v8859 = vadd.f32 %v8818, %v8858
        %v8860 = vpop.f32.mrf.mxu0
        %v8861 = vadd.f32 %v8820, %v8860
        %v8862 = vpop.f32.mrf.mxu0
        %v8863 = vpop.f32.mrf.mxu0
        %8864 = vdwg.mxu0
        %8865 = vmatprep.subr.bf16.mxu0 %v6562
        %8866 = vmatpush1.bf16.msra.mxu0 %v6561
        %8867 = vmatprep.subr.bf16.mxu0 %v6530
        %8868 = vmatpush1.bf16.msra.mxu0 %v6529
        %8869 = vmatprep.subr.bf16.mxu0 %v6498
        %8870 = vmatpush1.bf16.msra.mxu0 %v6497
        %8871 = vmatprep.subr.bf16.mxu0 %v6466
        %8872 = vmatpush1.bf16.msra.mxu0 %v6465
        %8873 = vmatprep.subr.bf16.mxu0 %v6434
        %8874 = vmatpush1.bf16.msra.mxu0 %v6433
        %8875 = vmatprep.subr.bf16.mxu0 %v6402
        %8876 = vmatpush1.bf16.msra.mxu0 %v6401
        %8877 = vmatprep.subr.bf16.mxu0 %v6370
        %8878 = vmatpush1.bf16.msra.mxu0 %v6369
        %8879 = vmatprep.subr.bf16.mxu0 %v6338
        %8880 = vmatpush1.bf16.msra.mxu0 %v6337
        %8881 = vmatprep.subr.bf16.mxu0 %v6818
        %8882 = vmatpush2.bf16.msra.mxu0 %v6817
        %8883 = vmatprep.subr.bf16.mxu0 %v6786
        %8884 = vmatpush2.bf16.msra.mxu0 %v6785
        %8885 = vmatprep.subr.bf16.mxu0 %v6754
        %8886 = vmatpush2.bf16.msra.mxu0 %v6753
        %8887 = vmatprep.subr.bf16.mxu0 %v6722
        %8888 = vmatpush2.bf16.msra.mxu0 %v6721
        %8889 = vmatprep.subr.bf16.mxu0 %v6690
        %8890 = vmatpush2.bf16.msra.mxu0 %v6689
        %8891 = vmatprep.subr.bf16.mxu0 %v6658
        %8892 = vmatpush2.bf16.msra.mxu0 %v6657
        %8893 = vmatprep.subr.bf16.mxu0 %v6626
        %8894 = vmatpush2.bf16.msra.mxu0 %v6625
        %8895 = vmatprep.subr.bf16.mxu0 %v6594
        %8896 = vmatpush2.bf16.msra.mxu0 %v6593
        %8897 = vmatprep.mubr.bf16.mxu0 %v3246
        %8898 = vmatmul.mubr.bf16.gmra.mxu0 %v3245
        %v8899 = vpop.f32.mrf.mxu0
        %v8900 = vadd.f32 0.0, %v8899
        %v8901 = vpop.f32.mrf.mxu0
        %v8902 = vadd.f32 0.0, %v8901
        %v8903 = vpop.f32.mrf.mxu0
        %v8904 = vpop.f32.mrf.mxu0
        %8905 = vdwg.mxu0
        %8906 = vmatprep.subr.bf16.mxu0 %v7074
        %8907 = vmatpush1.bf16.msra.mxu0 %v7073
        %8908 = vmatprep.subr.bf16.mxu0 %v7042
        %8909 = vmatpush1.bf16.msra.mxu0 %v7041
        %8910 = vmatprep.subr.bf16.mxu0 %v7010
        %8911 = vmatpush1.bf16.msra.mxu0 %v7009
        %8912 = vmatprep.subr.bf16.mxu0 %v6978
        %8913 = vmatpush1.bf16.msra.mxu0 %v6977
        %8914 = vmatprep.subr.bf16.mxu0 %v6946
        %8915 = vmatpush1.bf16.msra.mxu0 %v6945
        %8916 = vmatprep.subr.bf16.mxu0 %v6914
        %8917 = vmatpush1.bf16.msra.mxu0 %v6913
        %8918 = vmatprep.subr.bf16.mxu0 %v6882
        %8919 = vmatpush1.bf16.msra.mxu0 %v6881
        %8920 = vmatprep.subr.bf16.mxu0 %v6850
        %8921 = vmatpush1.bf16.msra.mxu0 %v6849
        %8922 = vmatprep.subr.bf16.mxu0 %v7330
        %8923 = vmatpush2.bf16.msra.mxu0 %v7329
        %8924 = vmatprep.subr.bf16.mxu0 %v7298
        %8925 = vmatpush2.bf16.msra.mxu0 %v7297
        %8926 = vmatprep.subr.bf16.mxu0 %v7266
        %8927 = vmatpush2.bf16.msra.mxu0 %v7265
        %8928 = vmatprep.subr.bf16.mxu0 %v7234
        %8929 = vmatpush2.bf16.msra.mxu0 %v7233
        %8930 = vmatprep.subr.bf16.mxu0 %v7202
        %8931 = vmatpush2.bf16.msra.mxu0 %v7201
        %8932 = vmatprep.subr.bf16.mxu0 %v7170
        %8933 = vmatpush2.bf16.msra.mxu0 %v7169
        %8934 = vmatprep.subr.bf16.mxu0 %v7138
        %8935 = vmatpush2.bf16.msra.mxu0 %v7137
        %8936 = vmatprep.subr.bf16.mxu0 %v7106
        %8937 = vmatpush2.bf16.msra.mxu0 %v7105
        %8938 = vmatprep.mubr.bf16.mxu0 %v3248
        %8939 = vmatmul.mubr.bf16.gmra.mxu0 %v3247
        %v8940 = vpop.f32.mrf.mxu0
        %v8941 = vadd.f32 %v8900, %v8940
        %v8942 = vpop.f32.mrf.mxu0
        %v8943 = vadd.f32 %v8902, %v8942
        %v8944 = vpop.f32.mrf.mxu0
        %v8945 = vpop.f32.mrf.mxu0
        %8946 = vdwg.mxu0
        %8947 = vmatprep.subr.bf16.mxu0 %v6564
        %8948 = vmatpush1.bf16.msra.mxu0 %v6563
        %8949 = vmatprep.subr.bf16.mxu0 %v6532
        %8950 = vmatpush1.bf16.msra.mxu0 %v6531
        %8951 = vmatprep.subr.bf16.mxu0 %v6500
        %8952 = vmatpush1.bf16.msra.mxu0 %v6499
        %8953 = vmatprep.subr.bf16.mxu0 %v6468
        %8954 = vmatpush1.bf16.msra.mxu0 %v6467
        %8955 = vmatprep.subr.bf16.mxu0 %v6436
        %8956 = vmatpush1.bf16.msra.mxu0 %v6435
        %8957 = vmatprep.subr.bf16.mxu0 %v6404
        %8958 = vmatpush1.bf16.msra.mxu0 %v6403
        %8959 = vmatprep.subr.bf16.mxu0 %v6372
        %8960 = vmatpush1.bf16.msra.mxu0 %v6371
        %8961 = vmatprep.subr.bf16.mxu0 %v6340
        %8962 = vmatpush1.bf16.msra.mxu0 %v6339
        %8963 = vmatprep.subr.bf16.mxu0 %v6820
        %8964 = vmatpush2.bf16.msra.mxu0 %v6819
        %8965 = vmatprep.subr.bf16.mxu0 %v6788
        %8966 = vmatpush2.bf16.msra.mxu0 %v6787
        %8967 = vmatprep.subr.bf16.mxu0 %v6756
        %8968 = vmatpush2.bf16.msra.mxu0 %v6755
        %8969 = vmatprep.subr.bf16.mxu0 %v6724
        %8970 = vmatpush2.bf16.msra.mxu0 %v6723
        %8971 = vmatprep.subr.bf16.mxu0 %v6692
        %8972 = vmatpush2.bf16.msra.mxu0 %v6691
        %8973 = vmatprep.subr.bf16.mxu0 %v6660
        %8974 = vmatpush2.bf16.msra.mxu0 %v6659
        %8975 = vmatprep.subr.bf16.mxu0 %v6628
        %8976 = vmatpush2.bf16.msra.mxu0 %v6627
        %8977 = vmatprep.subr.bf16.mxu0 %v6596
        %8978 = vmatpush2.bf16.msra.mxu0 %v6595
        %8979 = vmatprep.mubr.bf16.mxu0 %v3246
        %8980 = vmatmul.mubr.bf16.gmra.mxu0 %v3245
        %v8981 = vpop.f32.mrf.mxu0
        %v8982 = vadd.f32 0.0, %v8981
        %v8983 = vpop.f32.mrf.mxu0
        %v8984 = vadd.f32 0.0, %v8983
        %v8985 = vpop.f32.mrf.mxu0
        %v8986 = vpop.f32.mrf.mxu0
        %8987 = vdwg.mxu0
        %8988 = vmatprep.subr.bf16.mxu0 %v7076
        %8989 = vmatpush1.bf16.msra.mxu0 %v7075
        %8990 = vmatprep.subr.bf16.mxu0 %v7044
        %8991 = vmatpush1.bf16.msra.mxu0 %v7043
        %8992 = vmatprep.subr.bf16.mxu0 %v7012
        %8993 = vmatpush1.bf16.msra.mxu0 %v7011
        %8994 = vmatprep.subr.bf16.mxu0 %v6980
        %8995 = vmatpush1.bf16.msra.mxu0 %v6979
        %8996 = vmatprep.subr.bf16.mxu0 %v6948
        %8997 = vmatpush1.bf16.msra.mxu0 %v6947
        %8998 = vmatprep.subr.bf16.mxu0 %v6916
        %8999 = vmatpush1.bf16.msra.mxu0 %v6915
        %9000 = vmatprep.subr.bf16.mxu0 %v6884
        %9001 = vmatpush1.bf16.msra.mxu0 %v6883
        %9002 = vmatprep.subr.bf16.mxu0 %v6852
        %9003 = vmatpush1.bf16.msra.mxu0 %v6851
        %9004 = vmatprep.subr.bf16.mxu0 %v7332
        %9005 = vmatpush2.bf16.msra.mxu0 %v7331
        %9006 = vmatprep.subr.bf16.mxu0 %v7300
        %9007 = vmatpush2.bf16.msra.mxu0 %v7299
        %9008 = vmatprep.subr.bf16.mxu0 %v7268
        %9009 = vmatpush2.bf16.msra.mxu0 %v7267
        %9010 = vmatprep.subr.bf16.mxu0 %v7236
        %9011 = vmatpush2.bf16.msra.mxu0 %v7235
        %9012 = vmatprep.subr.bf16.mxu0 %v7204
        %9013 = vmatpush2.bf16.msra.mxu0 %v7203
        %9014 = vmatprep.subr.bf16.mxu0 %v7172
        %9015 = vmatpush2.bf16.msra.mxu0 %v7171
        %9016 = vmatprep.subr.bf16.mxu0 %v7140
        %9017 = vmatpush2.bf16.msra.mxu0 %v7139
        %9018 = vmatprep.subr.bf16.mxu0 %v7108
        %9019 = vmatpush2.bf16.msra.mxu0 %v7107
        %9020 = vmatprep.mubr.bf16.mxu0 %v3248
        %9021 = vmatmul.mubr.bf16.gmra.mxu0 %v3247
        %v9022 = vpop.f32.mrf.mxu0
        %v9023 = vadd.f32 %v8982, %v9022
        %v9024 = vpop.f32.mrf.mxu0
        %v9025 = vadd.f32 %v8984, %v9024
        %v9026 = vpop.f32.mrf.mxu0
        %v9027 = vpop.f32.mrf.mxu0
        %9028 = vdwg.mxu0
        %9029 = vmatprep.subr.bf16.mxu0 %v6566
        %9030 = vmatpush1.bf16.msra.mxu0 %v6565
        %9031 = vmatprep.subr.bf16.mxu0 %v6534
        %9032 = vmatpush1.bf16.msra.mxu0 %v6533
        %9033 = vmatprep.subr.bf16.mxu0 %v6502
        %9034 = vmatpush1.bf16.msra.mxu0 %v6501
        %9035 = vmatprep.subr.bf16.mxu0 %v6470
        %9036 = vmatpush1.bf16.msra.mxu0 %v6469
        %9037 = vmatprep.subr.bf16.mxu0 %v6438
        %9038 = vmatpush1.bf16.msra.mxu0 %v6437
        %9039 = vmatprep.subr.bf16.mxu0 %v6406
        %9040 = vmatpush1.bf16.msra.mxu0 %v6405
        %9041 = vmatprep.subr.bf16.mxu0 %v6374
        %9042 = vmatpush1.bf16.msra.mxu0 %v6373
        %9043 = vmatprep.subr.bf16.mxu0 %v6342
        %9044 = vmatpush1.bf16.msra.mxu0 %v6341
        %9045 = vmatprep.subr.bf16.mxu0 %v6822
        %9046 = vmatpush2.bf16.msra.mxu0 %v6821
        %9047 = vmatprep.subr.bf16.mxu0 %v6790
        %9048 = vmatpush2.bf16.msra.mxu0 %v6789
        %9049 = vmatprep.subr.bf16.mxu0 %v6758
        %9050 = vmatpush2.bf16.msra.mxu0 %v6757
        %9051 = vmatprep.subr.bf16.mxu0 %v6726
        %9052 = vmatpush2.bf16.msra.mxu0 %v6725
        %9053 = vmatprep.subr.bf16.mxu0 %v6694
        %9054 = vmatpush2.bf16.msra.mxu0 %v6693
        %9055 = vmatprep.subr.bf16.mxu0 %v6662
        %9056 = vmatpush2.bf16.msra.mxu0 %v6661
        %9057 = vmatprep.subr.bf16.mxu0 %v6630
        %9058 = vmatpush2.bf16.msra.mxu0 %v6629
        %9059 = vmatprep.subr.bf16.mxu0 %v6598
        %9060 = vmatpush2.bf16.msra.mxu0 %v6597
        %9061 = vmatprep.mubr.bf16.mxu0 %v3246
        %9062 = vmatmul.mubr.bf16.gmra.mxu0 %v3245
        %v9063 = vpop.f32.mrf.mxu0
        %v9064 = vadd.f32 0.0, %v9063
        %v9065 = vpop.f32.mrf.mxu0
        %v9066 = vadd.f32 0.0, %v9065
        %v9067 = vpop.f32.mrf.mxu0
        %v9068 = vpop.f32.mrf.mxu0
        %9069 = vdwg.mxu0
        %9070 = vmatprep.subr.bf16.mxu0 %v7078
        %9071 = vmatpush1.bf16.msra.mxu0 %v7077
        %9072 = vmatprep.subr.bf16.mxu0 %v7046
        %9073 = vmatpush1.bf16.msra.mxu0 %v7045
        %9074 = vmatprep.subr.bf16.mxu0 %v7014
        %9075 = vmatpush1.bf16.msra.mxu0 %v7013
        %9076 = vmatprep.subr.bf16.mxu0 %v6982
        %9077 = vmatpush1.bf16.msra.mxu0 %v6981
        %9078 = vmatprep.subr.bf16.mxu0 %v6950
        %9079 = vmatpush1.bf16.msra.mxu0 %v6949
        %9080 = vmatprep.subr.bf16.mxu0 %v6918
        %9081 = vmatpush1.bf16.msra.mxu0 %v6917
        %9082 = vmatprep.subr.bf16.mxu0 %v6886
        %9083 = vmatpush1.bf16.msra.mxu0 %v6885
        %9084 = vmatprep.subr.bf16.mxu0 %v6854
        %9085 = vmatpush1.bf16.msra.mxu0 %v6853
        %9086 = vmatprep.subr.bf16.mxu0 %v7334
        %9087 = vmatpush2.bf16.msra.mxu0 %v7333
        %9088 = vmatprep.subr.bf16.mxu0 %v7302
        %9089 = vmatpush2.bf16.msra.mxu0 %v7301
        %9090 = vmatprep.subr.bf16.mxu0 %v7270
        %9091 = vmatpush2.bf16.msra.mxu0 %v7269
        %9092 = vmatprep.subr.bf16.mxu0 %v7238
        %9093 = vmatpush2.bf16.msra.mxu0 %v7237
        %9094 = vmatprep.subr.bf16.mxu0 %v7206
        %9095 = vmatpush2.bf16.msra.mxu0 %v7205
        %9096 = vmatprep.subr.bf16.mxu0 %v7174
        %9097 = vmatpush2.bf16.msra.mxu0 %v7173
        %9098 = vmatprep.subr.bf16.mxu0 %v7142
        %9099 = vmatpush2.bf16.msra.mxu0 %v7141
        %9100 = vmatprep.subr.bf16.mxu0 %v7110
        %9101 = vmatpush2.bf16.msra.mxu0 %v7109
        %9102 = vmatprep.mubr.bf16.mxu0 %v3248
        %9103 = vmatmul.mubr.bf16.gmra.mxu0 %v3247
        %v9104 = vpop.f32.mrf.mxu0
        %v9105 = vadd.f32 %v9064, %v9104
        %v9106 = vpop.f32.mrf.mxu0
        %v9107 = vadd.f32 %v9066, %v9106
        %v9108 = vpop.f32.mrf.mxu0
        %v9109 = vpop.f32.mrf.mxu0
        %9110 = vdwg.mxu0
        %9111 = vmatprep.subr.bf16.mxu0 %v6568
        %9112 = vmatpush1.bf16.msra.mxu0 %v6567
        %9113 = vmatprep.subr.bf16.mxu0 %v6536
        %9114 = vmatpush1.bf16.msra.mxu0 %v6535
        %9115 = vmatprep.subr.bf16.mxu0 %v6504
        %9116 = vmatpush1.bf16.msra.mxu0 %v6503
        %9117 = vmatprep.subr.bf16.mxu0 %v6472
        %9118 = vmatpush1.bf16.msra.mxu0 %v6471
        %9119 = vmatprep.subr.bf16.mxu0 %v6440
        %9120 = vmatpush1.bf16.msra.mxu0 %v6439
        %9121 = vmatprep.subr.bf16.mxu0 %v6408
        %9122 = vmatpush1.bf16.msra.mxu0 %v6407
        %9123 = vmatprep.subr.bf16.mxu0 %v6376
        %9124 = vmatpush1.bf16.msra.mxu0 %v6375
        %9125 = vmatprep.subr.bf16.mxu0 %v6344
        %9126 = vmatpush1.bf16.msra.mxu0 %v6343
        %9127 = vmatprep.subr.bf16.mxu0 %v6824
        %9128 = vmatpush2.bf16.msra.mxu0 %v6823
        %9129 = vmatprep.subr.bf16.mxu0 %v6792
        %9130 = vmatpush2.bf16.msra.mxu0 %v6791
        %9131 = vmatprep.subr.bf16.mxu0 %v6760
        %9132 = vmatpush2.bf16.msra.mxu0 %v6759
        %9133 = vmatprep.subr.bf16.mxu0 %v6728
        %9134 = vmatpush2.bf16.msra.mxu0 %v6727
        %9135 = vmatprep.subr.bf16.mxu0 %v6696
        %9136 = vmatpush2.bf16.msra.mxu0 %v6695
        %9137 = vmatprep.subr.bf16.mxu0 %v6664
        %9138 = vmatpush2.bf16.msra.mxu0 %v6663
        %9139 = vmatprep.subr.bf16.mxu0 %v6632
        %9140 = vmatpush2.bf16.msra.mxu0 %v6631
        %9141 = vmatprep.subr.bf16.mxu0 %v6600
        %9142 = vmatpush2.bf16.msra.mxu0 %v6599
        %9143 = vmatprep.mubr.bf16.mxu0 %v3246
        %9144 = vmatmul.mubr.bf16.gmra.mxu0 %v3245
        %v9145 = vpop.f32.mrf.mxu0
        %v9146 = vadd.f32 0.0, %v9145
        %v9147 = vpop.f32.mrf.mxu0
        %v9148 = vadd.f32 0.0, %v9147
        %v9149 = vpop.f32.mrf.mxu0
        %v9150 = vpop.f32.mrf.mxu0
        %9151 = vdwg.mxu0
        %9152 = vmatprep.subr.bf16.mxu0 %v7080
        %9153 = vmatpush1.bf16.msra.mxu0 %v7079
        %9154 = vmatprep.subr.bf16.mxu0 %v7048
        %9155 = vmatpush1.bf16.msra.mxu0 %v7047
        %9156 = vmatprep.subr.bf16.mxu0 %v7016
        %9157 = vmatpush1.bf16.msra.mxu0 %v7015
        %9158 = vmatprep.subr.bf16.mxu0 %v6984
        %9159 = vmatpush1.bf16.msra.mxu0 %v6983
        %9160 = vmatprep.subr.bf16.mxu0 %v6952
        %9161 = vmatpush1.bf16.msra.mxu0 %v6951
        %9162 = vmatprep.subr.bf16.mxu0 %v6920
        %9163 = vmatpush1.bf16.msra.mxu0 %v6919
        %9164 = vmatprep.subr.bf16.mxu0 %v6888
        %9165 = vmatpush1.bf16.msra.mxu0 %v6887
        %9166 = vmatprep.subr.bf16.mxu0 %v6856
        %9167 = vmatpush1.bf16.msra.mxu0 %v6855
        %9168 = vmatprep.subr.bf16.mxu0 %v7336
        %9169 = vmatpush2.bf16.msra.mxu0 %v7335
        %9170 = vmatprep.subr.bf16.mxu0 %v7304
        %9171 = vmatpush2.bf16.msra.mxu0 %v7303
        %9172 = vmatprep.subr.bf16.mxu0 %v7272
        %9173 = vmatpush2.bf16.msra.mxu0 %v7271
        %9174 = vmatprep.subr.bf16.mxu0 %v7240
        %9175 = vmatpush2.bf16.msra.mxu0 %v7239
        %9176 = vmatprep.subr.bf16.mxu0 %v7208
        %9177 = vmatpush2.bf16.msra.mxu0 %v7207
        %9178 = vmatprep.subr.bf16.mxu0 %v7176
        %9179 = vmatpush2.bf16.msra.mxu0 %v7175
        %9180 = vmatprep.subr.bf16.mxu0 %v7144
        %9181 = vmatpush2.bf16.msra.mxu0 %v7143
        %9182 = vmatprep.subr.bf16.mxu0 %v7112
        %9183 = vmatpush2.bf16.msra.mxu0 %v7111
        %9184 = vmatprep.mubr.bf16.mxu0 %v3248
        %9185 = vmatmul.mubr.bf16.gmra.mxu0 %v3247
        %v9186 = vpop.f32.mrf.mxu0
        %v9187 = vadd.f32 %v9146, %v9186
        %v9188 = vpop.f32.mrf.mxu0
        %v9189 = vadd.f32 %v9148, %v9188
        %v9190 = vpop.f32.mrf.mxu0
        %v9191 = vpop.f32.mrf.mxu0
        %9192 = vdwg.mxu0
        %9193 = vmatprep.subr.bf16.mxu0 %v6570
        %9194 = vmatpush1.bf16.msra.mxu0 %v6569
        %9195 = vmatprep.subr.bf16.mxu0 %v6538
        %9196 = vmatpush1.bf16.msra.mxu0 %v6537
        %9197 = vmatprep.subr.bf16.mxu0 %v6506
        %9198 = vmatpush1.bf16.msra.mxu0 %v6505
        %9199 = vmatprep.subr.bf16.mxu0 %v6474
        %9200 = vmatpush1.bf16.msra.mxu0 %v6473
        %9201 = vmatprep.subr.bf16.mxu0 %v6442
        %9202 = vmatpush1.bf16.msra.mxu0 %v6441
        %9203 = vmatprep.subr.bf16.mxu0 %v6410
        %9204 = vmatpush1.bf16.msra.mxu0 %v6409
        %9205 = vmatprep.subr.bf16.mxu0 %v6378
        %9206 = vmatpush1.bf16.msra.mxu0 %v6377
        %9207 = vmatprep.subr.bf16.mxu0 %v6346
        %9208 = vmatpush1.bf16.msra.mxu0 %v6345
        %9209 = vmatprep.subr.bf16.mxu0 %v6826
        %9210 = vmatpush2.bf16.msra.mxu0 %v6825
        %9211 = vmatprep.subr.bf16.mxu0 %v6794
        %9212 = vmatpush2.bf16.msra.mxu0 %v6793
        %9213 = vmatprep.subr.bf16.mxu0 %v6762
        %9214 = vmatpush2.bf16.msra.mxu0 %v6761
        %9215 = vmatprep.subr.bf16.mxu0 %v6730
        %9216 = vmatpush2.bf16.msra.mxu0 %v6729
        %9217 = vmatprep.subr.bf16.mxu0 %v6698
        %9218 = vmatpush2.bf16.msra.mxu0 %v6697
        %9219 = vmatprep.subr.bf16.mxu0 %v6666
        %9220 = vmatpush2.bf16.msra.mxu0 %v6665
        %9221 = vmatprep.subr.bf16.mxu0 %v6634
        %9222 = vmatpush2.bf16.msra.mxu0 %v6633
        %9223 = vmatprep.subr.bf16.mxu0 %v6602
        %9224 = vmatpush2.bf16.msra.mxu0 %v6601
        %9225 = vmatprep.mubr.bf16.mxu0 %v3246
        %9226 = vmatmul.mubr.bf16.gmra.mxu0 %v3245
        %v9227 = vpop.f32.mrf.mxu0
        %v9228 = vadd.f32 0.0, %v9227
        %v9229 = vpop.f32.mrf.mxu0
        %v9230 = vadd.f32 0.0, %v9229
        %v9231 = vpop.f32.mrf.mxu0
        %v9232 = vpop.f32.mrf.mxu0
        %9233 = vdwg.mxu0
        %9234 = vmatprep.subr.bf16.mxu0 %v7082
        %9235 = vmatpush1.bf16.msra.mxu0 %v7081
        %9236 = vmatprep.subr.bf16.mxu0 %v7050
        %9237 = vmatpush1.bf16.msra.mxu0 %v7049
        %9238 = vmatprep.subr.bf16.mxu0 %v7018
        %9239 = vmatpush1.bf16.msra.mxu0 %v7017
        %9240 = vmatprep.subr.bf16.mxu0 %v6986
        %9241 = vmatpush1.bf16.msra.mxu0 %v6985
        %9242 = vmatprep.subr.bf16.mxu0 %v6954
        %9243 = vmatpush1.bf16.msra.mxu0 %v6953
        %9244 = vmatprep.subr.bf16.mxu0 %v6922
        %9245 = vmatpush1.bf16.msra.mxu0 %v6921
        %9246 = vmatprep.subr.bf16.mxu0 %v6890
        %9247 = vmatpush1.bf16.msra.mxu0 %v6889
        %9248 = vmatprep.subr.bf16.mxu0 %v6858
        %9249 = vmatpush1.bf16.msra.mxu0 %v6857
        %9250 = vmatprep.subr.bf16.mxu0 %v7338
        %9251 = vmatpush2.bf16.msra.mxu0 %v7337
        %9252 = vmatprep.subr.bf16.mxu0 %v7306
        %9253 = vmatpush2.bf16.msra.mxu0 %v7305
        %9254 = vmatprep.subr.bf16.mxu0 %v7274
        %9255 = vmatpush2.bf16.msra.mxu0 %v7273
        %9256 = vmatprep.subr.bf16.mxu0 %v7242
        %9257 = vmatpush2.bf16.msra.mxu0 %v7241
        %9258 = vmatprep.subr.bf16.mxu0 %v7210
        %9259 = vmatpush2.bf16.msra.mxu0 %v7209
        %9260 = vmatprep.subr.bf16.mxu0 %v7178
        %9261 = vmatpush2.bf16.msra.mxu0 %v7177
        %9262 = vmatprep.subr.bf16.mxu0 %v7146
        %9263 = vmatpush2.bf16.msra.mxu0 %v7145
        %9264 = vmatprep.subr.bf16.mxu0 %v7114
        %9265 = vmatpush2.bf16.msra.mxu0 %v7113
        %9266 = vmatprep.mubr.bf16.mxu0 %v3248
        %9267 = vmatmul.mubr.bf16.gmra.mxu0 %v3247
        %v9268 = vpop.f32.mrf.mxu0
        %v9269 = vadd.f32 %v9228, %v9268
        %v9270 = vpop.f32.mrf.mxu0
        %v9271 = vadd.f32 %v9230, %v9270
        %v9272 = vpop.f32.mrf.mxu0
        %v9273 = vpop.f32.mrf.mxu0
        %9274 = vdwg.mxu0
        %9275 = vmatprep.subr.bf16.mxu0 %v6572
        %9276 = vmatpush1.bf16.msra.mxu0 %v6571
        %9277 = vmatprep.subr.bf16.mxu0 %v6540
        %9278 = vmatpush1.bf16.msra.mxu0 %v6539
        %9279 = vmatprep.subr.bf16.mxu0 %v6508
        %9280 = vmatpush1.bf16.msra.mxu0 %v6507
        %9281 = vmatprep.subr.bf16.mxu0 %v6476
        %9282 = vmatpush1.bf16.msra.mxu0 %v6475
        %9283 = vmatprep.subr.bf16.mxu0 %v6444
        %9284 = vmatpush1.bf16.msra.mxu0 %v6443
        %9285 = vmatprep.subr.bf16.mxu0 %v6412
        %9286 = vmatpush1.bf16.msra.mxu0 %v6411
        %9287 = vmatprep.subr.bf16.mxu0 %v6380
        %9288 = vmatpush1.bf16.msra.mxu0 %v6379
        %9289 = vmatprep.subr.bf16.mxu0 %v6348
        %9290 = vmatpush1.bf16.msra.mxu0 %v6347
        %9291 = vmatprep.subr.bf16.mxu0 %v6828
        %9292 = vmatpush2.bf16.msra.mxu0 %v6827
        %9293 = vmatprep.subr.bf16.mxu0 %v6796
        %9294 = vmatpush2.bf16.msra.mxu0 %v6795
        %9295 = vmatprep.subr.bf16.mxu0 %v6764
        %9296 = vmatpush2.bf16.msra.mxu0 %v6763
        %9297 = vmatprep.subr.bf16.mxu0 %v6732
        %9298 = vmatpush2.bf16.msra.mxu0 %v6731
        %9299 = vmatprep.subr.bf16.mxu0 %v6700
        %9300 = vmatpush2.bf16.msra.mxu0 %v6699
        %9301 = vmatprep.subr.bf16.mxu0 %v6668
        %9302 = vmatpush2.bf16.msra.mxu0 %v6667
        %9303 = vmatprep.subr.bf16.mxu0 %v6636
        %9304 = vmatpush2.bf16.msra.mxu0 %v6635
        %9305 = vmatprep.subr.bf16.mxu0 %v6604
        %9306 = vmatpush2.bf16.msra.mxu0 %v6603
        %9307 = vmatprep.mubr.bf16.mxu0 %v3246
        %9308 = vmatmul.mubr.bf16.gmra.mxu0 %v3245
        %v9309 = vpop.f32.mrf.mxu0
        %v9310 = vadd.f32 0.0, %v9309
        %v9311 = vpop.f32.mrf.mxu0
        %v9312 = vadd.f32 0.0, %v9311
        %v9313 = vpop.f32.mrf.mxu0
        %v9314 = vpop.f32.mrf.mxu0
        %9315 = vdwg.mxu0
        %9316 = vmatprep.subr.bf16.mxu0 %v7084
        %9317 = vmatpush1.bf16.msra.mxu0 %v7083
        %9318 = vmatprep.subr.bf16.mxu0 %v7052
        %9319 = vmatpush1.bf16.msra.mxu0 %v7051
        %9320 = vmatprep.subr.bf16.mxu0 %v7020
        %9321 = vmatpush1.bf16.msra.mxu0 %v7019
        %9322 = vmatprep.subr.bf16.mxu0 %v6988
        %9323 = vmatpush1.bf16.msra.mxu0 %v6987
        %9324 = vmatprep.subr.bf16.mxu0 %v6956
        %9325 = vmatpush1.bf16.msra.mxu0 %v6955
        %9326 = vmatprep.subr.bf16.mxu0 %v6924
        %9327 = vmatpush1.bf16.msra.mxu0 %v6923
        %9328 = vmatprep.subr.bf16.mxu0 %v6892
        %9329 = vmatpush1.bf16.msra.mxu0 %v6891
        %9330 = vmatprep.subr.bf16.mxu0 %v6860
        %9331 = vmatpush1.bf16.msra.mxu0 %v6859
        %9332 = vmatprep.subr.bf16.mxu0 %v7340
        %9333 = vmatpush2.bf16.msra.mxu0 %v7339
        %9334 = vmatprep.subr.bf16.mxu0 %v7308
        %9335 = vmatpush2.bf16.msra.mxu0 %v7307
        %9336 = vmatprep.subr.bf16.mxu0 %v7276
        %9337 = vmatpush2.bf16.msra.mxu0 %v7275
        %9338 = vmatprep.subr.bf16.mxu0 %v7244
        %9339 = vmatpush2.bf16.msra.mxu0 %v7243
        %9340 = vmatprep.subr.bf16.mxu0 %v7212
        %9341 = vmatpush2.bf16.msra.mxu0 %v7211
        %9342 = vmatprep.subr.bf16.mxu0 %v7180
        %9343 = vmatpush2.bf16.msra.mxu0 %v7179
        %9344 = vmatprep.subr.bf16.mxu0 %v7148
        %9345 = vmatpush2.bf16.msra.mxu0 %v7147
        %9346 = vmatprep.subr.bf16.mxu0 %v7116
        %9347 = vmatpush2.bf16.msra.mxu0 %v7115
        %9348 = vmatprep.mubr.bf16.mxu0 %v3248
        %9349 = vmatmul.mubr.bf16.gmra.mxu0 %v3247
        %v9350 = vpop.f32.mrf.mxu0
        %v9351 = vadd.f32 %v9310, %v9350
        %v9352 = vpop.f32.mrf.mxu0
        %v9353 = vadd.f32 %v9312, %v9352
        %v9354 = vpop.f32.mrf.mxu0
        %v9355 = vpop.f32.mrf.mxu0
        %9356 = vdwg.mxu0
        %9357 = vmatprep.subr.bf16.mxu0 %v6574
        %9358 = vmatpush1.bf16.msra.mxu0 %v6573
        %9359 = vmatprep.subr.bf16.mxu0 %v6542
        %9360 = vmatpush1.bf16.msra.mxu0 %v6541
        %9361 = vmatprep.subr.bf16.mxu0 %v6510
        %9362 = vmatpush1.bf16.msra.mxu0 %v6509
        %9363 = vmatprep.subr.bf16.mxu0 %v6478
        %9364 = vmatpush1.bf16.msra.mxu0 %v6477
        %9365 = vmatprep.subr.bf16.mxu0 %v6446
        %9366 = vmatpush1.bf16.msra.mxu0 %v6445
        %9367 = vmatprep.subr.bf16.mxu0 %v6414
        %9368 = vmatpush1.bf16.msra.mxu0 %v6413
        %9369 = vmatprep.subr.bf16.mxu0 %v6382
        %9370 = vmatpush1.bf16.msra.mxu0 %v6381
        %9371 = vmatprep.subr.bf16.mxu0 %v6350
        %9372 = vmatpush1.bf16.msra.mxu0 %v6349
        %9373 = vmatprep.subr.bf16.mxu0 %v6830
        %9374 = vmatpush2.bf16.msra.mxu0 %v6829
        %9375 = vmatprep.subr.bf16.mxu0 %v6798
        %9376 = vmatpush2.bf16.msra.mxu0 %v6797
        %9377 = vmatprep.subr.bf16.mxu0 %v6766
        %9378 = vmatpush2.bf16.msra.mxu0 %v6765
        %9379 = vmatprep.subr.bf16.mxu0 %v6734
        %9380 = vmatpush2.bf16.msra.mxu0 %v6733
        %9381 = vmatprep.subr.bf16.mxu0 %v6702
        %9382 = vmatpush2.bf16.msra.mxu0 %v6701
        %9383 = vmatprep.subr.bf16.mxu0 %v6670
        %9384 = vmatpush2.bf16.msra.mxu0 %v6669
        %9385 = vmatprep.subr.bf16.mxu0 %v6638
        %9386 = vmatpush2.bf16.msra.mxu0 %v6637
        %9387 = vmatprep.subr.bf16.mxu0 %v6606
        %9388 = vmatpush2.bf16.msra.mxu0 %v6605
        %9389 = vmatprep.mubr.bf16.mxu0 %v3246
        %9390 = vmatmul.mubr.bf16.gmra.mxu0 %v3245
        %v9391 = vpop.f32.mrf.mxu0
        %v9392 = vadd.f32 0.0, %v9391
        %v9393 = vpop.f32.mrf.mxu0
        %v9394 = vadd.f32 0.0, %v9393
        %v9395 = vpop.f32.mrf.mxu0
        %v9396 = vpop.f32.mrf.mxu0
        %9397 = vdwg.mxu0
        %9398 = vmatprep.subr.bf16.mxu0 %v7086
        %9399 = vmatpush1.bf16.msra.mxu0 %v7085
        %9400 = vmatprep.subr.bf16.mxu0 %v7054
        %9401 = vmatpush1.bf16.msra.mxu0 %v7053
        %9402 = vmatprep.subr.bf16.mxu0 %v7022
        %9403 = vmatpush1.bf16.msra.mxu0 %v7021
        %9404 = vmatprep.subr.bf16.mxu0 %v6990
        %9405 = vmatpush1.bf16.msra.mxu0 %v6989
        %9406 = vmatprep.subr.bf16.mxu0 %v6958
        %9407 = vmatpush1.bf16.msra.mxu0 %v6957
        %9408 = vmatprep.subr.bf16.mxu0 %v6926
        %9409 = vmatpush1.bf16.msra.mxu0 %v6925
        %9410 = vmatprep.subr.bf16.mxu0 %v6894
        %9411 = vmatpush1.bf16.msra.mxu0 %v6893
        %9412 = vmatprep.subr.bf16.mxu0 %v6862
        %9413 = vmatpush1.bf16.msra.mxu0 %v6861
        %9414 = vmatprep.subr.bf16.mxu0 %v7342
        %9415 = vmatpush2.bf16.msra.mxu0 %v7341
        %9416 = vmatprep.subr.bf16.mxu0 %v7310
        %9417 = vmatpush2.bf16.msra.mxu0 %v7309
        %9418 = vmatprep.subr.bf16.mxu0 %v7278
        %9419 = vmatpush2.bf16.msra.mxu0 %v7277
        %9420 = vmatprep.subr.bf16.mxu0 %v7246
        %9421 = vmatpush2.bf16.msra.mxu0 %v7245
        %9422 = vmatprep.subr.bf16.mxu0 %v7214
        %9423 = vmatpush2.bf16.msra.mxu0 %v7213
        %9424 = vmatprep.subr.bf16.mxu0 %v7182
        %9425 = vmatpush2.bf16.msra.mxu0 %v7181
        %9426 = vmatprep.subr.bf16.mxu0 %v7150
        %9427 = vmatpush2.bf16.msra.mxu0 %v7149
        %9428 = vmatprep.subr.bf16.mxu0 %v7118
        %9429 = vmatpush2.bf16.msra.mxu0 %v7117
        %9430 = vmatprep.mubr.bf16.mxu0 %v3248
        %9431 = vmatmul.mubr.bf16.gmra.mxu0 %v3247
        %v9432 = vpop.f32.mrf.mxu0
        %v9433 = vadd.f32 %v9392, %v9432
        %v9434 = vpop.f32.mrf.mxu0
        %v9435 = vadd.f32 %v9394, %v9434
        %v9436 = vpop.f32.mrf.mxu0
        %v9437 = vpop.f32.mrf.mxu0
        %9438 = vdwg.mxu0
        %9439 = vmatprep.subr.bf16.mxu0 %v6576
        %9440 = vmatpush1.bf16.msra.mxu0 %v6575
        %9441 = vmatprep.subr.bf16.mxu0 %v6544
        %9442 = vmatpush1.bf16.msra.mxu0 %v6543
        %9443 = vmatprep.subr.bf16.mxu0 %v6512
        %9444 = vmatpush1.bf16.msra.mxu0 %v6511
        %9445 = vmatprep.subr.bf16.mxu0 %v6480
        %9446 = vmatpush1.bf16.msra.mxu0 %v6479
        %9447 = vmatprep.subr.bf16.mxu0 %v6448
        %9448 = vmatpush1.bf16.msra.mxu0 %v6447
        %9449 = vmatprep.subr.bf16.mxu0 %v6416
        %9450 = vmatpush1.bf16.msra.mxu0 %v6415
        %9451 = vmatprep.subr.bf16.mxu0 %v6384
        %9452 = vmatpush1.bf16.msra.mxu0 %v6383
        %9453 = vmatprep.subr.bf16.mxu0 %v6352
        %9454 = vmatpush1.bf16.msra.mxu0 %v6351
        %9455 = vmatprep.subr.bf16.mxu0 %v6832
        %9456 = vmatpush2.bf16.msra.mxu0 %v6831
        %9457 = vmatprep.subr.bf16.mxu0 %v6800
        %9458 = vmatpush2.bf16.msra.mxu0 %v6799
        %9459 = vmatprep.subr.bf16.mxu0 %v6768
        %9460 = vmatpush2.bf16.msra.mxu0 %v6767
        %9461 = vmatprep.subr.bf16.mxu0 %v6736
        %9462 = vmatpush2.bf16.msra.mxu0 %v6735
        %9463 = vmatprep.subr.bf16.mxu0 %v6704
        %9464 = vmatpush2.bf16.msra.mxu0 %v6703
        %9465 = vmatprep.subr.bf16.mxu0 %v6672
        %9466 = vmatpush2.bf16.msra.mxu0 %v6671
        %9467 = vmatprep.subr.bf16.mxu0 %v6640
        %9468 = vmatpush2.bf16.msra.mxu0 %v6639
        %9469 = vmatprep.subr.bf16.mxu0 %v6608
        %9470 = vmatpush2.bf16.msra.mxu0 %v6607
        %9471 = vmatprep.mubr.bf16.mxu0 %v3246
        %9472 = vmatmul.mubr.bf16.gmra.mxu0 %v3245
        %v9473 = vpop.f32.mrf.mxu0
        %v9474 = vadd.f32 0.0, %v9473
        %v9475 = vpop.f32.mrf.mxu0
        %v9476 = vadd.f32 0.0, %v9475
        %v9477 = vpop.f32.mrf.mxu0
        %v9478 = vpop.f32.mrf.mxu0
        %9479 = vdwg.mxu0
        %9480 = vmatprep.subr.bf16.mxu0 %v7088
        %9481 = vmatpush1.bf16.msra.mxu0 %v7087
        %9482 = vmatprep.subr.bf16.mxu0 %v7056
        %9483 = vmatpush1.bf16.msra.mxu0 %v7055
        %9484 = vmatprep.subr.bf16.mxu0 %v7024
        %9485 = vmatpush1.bf16.msra.mxu0 %v7023
        %9486 = vmatprep.subr.bf16.mxu0 %v6992
        %9487 = vmatpush1.bf16.msra.mxu0 %v6991
        %9488 = vmatprep.subr.bf16.mxu0 %v6960
        %9489 = vmatpush1.bf16.msra.mxu0 %v6959
        %9490 = vmatprep.subr.bf16.mxu0 %v6928
        %9491 = vmatpush1.bf16.msra.mxu0 %v6927
        %9492 = vmatprep.subr.bf16.mxu0 %v6896
        %9493 = vmatpush1.bf16.msra.mxu0 %v6895
        %9494 = vmatprep.subr.bf16.mxu0 %v6864
        %9495 = vmatpush1.bf16.msra.mxu0 %v6863
        %9496 = vmatprep.subr.bf16.mxu0 %v7344
        %9497 = vmatpush2.bf16.msra.mxu0 %v7343
        %9498 = vmatprep.subr.bf16.mxu0 %v7312
        %9499 = vmatpush2.bf16.msra.mxu0 %v7311
        %9500 = vmatprep.subr.bf16.mxu0 %v7280
        %9501 = vmatpush2.bf16.msra.mxu0 %v7279
        %9502 = vmatprep.subr.bf16.mxu0 %v7248
        %9503 = vmatpush2.bf16.msra.mxu0 %v7247
        %9504 = vmatprep.subr.bf16.mxu0 %v7216
        %9505 = vmatpush2.bf16.msra.mxu0 %v7215
        %9506 = vmatprep.subr.bf16.mxu0 %v7184
        %9507 = vmatpush2.bf16.msra.mxu0 %v7183
        %9508 = vmatprep.subr.bf16.mxu0 %v7152
        %9509 = vmatpush2.bf16.msra.mxu0 %v7151
        %9510 = vmatprep.subr.bf16.mxu0 %v7120
        %9511 = vmatpush2.bf16.msra.mxu0 %v7119
        %9512 = vmatprep.mubr.bf16.mxu0 %v3248
        %9513 = vmatmul.mubr.bf16.gmra.mxu0 %v3247
        %v9514 = vpop.f32.mrf.mxu0
        %v9515 = vadd.f32 %v9474, %v9514
        %v9516 = vpop.f32.mrf.mxu0
        %v9517 = vadd.f32 %v9476, %v9516
        %v9518 = vpop.f32.mrf.mxu0
        %v9519 = vpop.f32.mrf.mxu0
        %9520 = vdwg.mxu0
        %9521 = vmatprep.subr.bf16.mxu0 %v6578
        %9522 = vmatpush1.bf16.msra.mxu0 %v6577
        %9523 = vmatprep.subr.bf16.mxu0 %v6546
        %9524 = vmatpush1.bf16.msra.mxu0 %v6545
        %9525 = vmatprep.subr.bf16.mxu0 %v6514
        %9526 = vmatpush1.bf16.msra.mxu0 %v6513
        %9527 = vmatprep.subr.bf16.mxu0 %v6482
        %9528 = vmatpush1.bf16.msra.mxu0 %v6481
        %9529 = vmatprep.subr.bf16.mxu0 %v6450
        %9530 = vmatpush1.bf16.msra.mxu0 %v6449
        %9531 = vmatprep.subr.bf16.mxu0 %v6418
        %9532 = vmatpush1.bf16.msra.mxu0 %v6417
        %9533 = vmatprep.subr.bf16.mxu0 %v6386
        %9534 = vmatpush1.bf16.msra.mxu0 %v6385
        %9535 = vmatprep.subr.bf16.mxu0 %v6354
        %9536 = vmatpush1.bf16.msra.mxu0 %v6353
        %9537 = vmatprep.subr.bf16.mxu0 %v6834
        %9538 = vmatpush2.bf16.msra.mxu0 %v6833
        %9539 = vmatprep.subr.bf16.mxu0 %v6802
        %9540 = vmatpush2.bf16.msra.mxu0 %v6801
        %9541 = vmatprep.subr.bf16.mxu0 %v6770
        %9542 = vmatpush2.bf16.msra.mxu0 %v6769
        %9543 = vmatprep.subr.bf16.mxu0 %v6738
        %9544 = vmatpush2.bf16.msra.mxu0 %v6737
        %9545 = vmatprep.subr.bf16.mxu0 %v6706
        %9546 = vmatpush2.bf16.msra.mxu0 %v6705
        %9547 = vmatprep.subr.bf16.mxu0 %v6674
        %9548 = vmatpush2.bf16.msra.mxu0 %v6673
        %9549 = vmatprep.subr.bf16.mxu0 %v6642
        %9550 = vmatpush2.bf16.msra.mxu0 %v6641
        %9551 = vmatprep.subr.bf16.mxu0 %v6610
        %9552 = vmatpush2.bf16.msra.mxu0 %v6609
        %9553 = vmatprep.mubr.bf16.mxu0 %v3246
        %9554 = vmatmul.mubr.bf16.gmra.mxu0 %v3245
        %v9555 = vpop.f32.mrf.mxu0
        %v9556 = vadd.f32 0.0, %v9555
        %v9557 = vpop.f32.mrf.mxu0
        %v9558 = vadd.f32 0.0, %v9557
        %v9559 = vpop.f32.mrf.mxu0
        %v9560 = vpop.f32.mrf.mxu0
        %9561 = vdwg.mxu0
        %9562 = vmatprep.subr.bf16.mxu0 %v7090
        %9563 = vmatpush1.bf16.msra.mxu0 %v7089
        %9564 = vmatprep.subr.bf16.mxu0 %v7058
        %9565 = vmatpush1.bf16.msra.mxu0 %v7057
        %9566 = vmatprep.subr.bf16.mxu0 %v7026
        %9567 = vmatpush1.bf16.msra.mxu0 %v7025
        %9568 = vmatprep.subr.bf16.mxu0 %v6994
        %9569 = vmatpush1.bf16.msra.mxu0 %v6993
        %9570 = vmatprep.subr.bf16.mxu0 %v6962
        %9571 = vmatpush1.bf16.msra.mxu0 %v6961
        %9572 = vmatprep.subr.bf16.mxu0 %v6930
        %9573 = vmatpush1.bf16.msra.mxu0 %v6929
        %9574 = vmatprep.subr.bf16.mxu0 %v6898
        %9575 = vmatpush1.bf16.msra.mxu0 %v6897
        %9576 = vmatprep.subr.bf16.mxu0 %v6866
        %9577 = vmatpush1.bf16.msra.mxu0 %v6865
        %9578 = vmatprep.subr.bf16.mxu0 %v7346
        %9579 = vmatpush2.bf16.msra.mxu0 %v7345
        %9580 = vmatprep.subr.bf16.mxu0 %v7314
        %9581 = vmatpush2.bf16.msra.mxu0 %v7313
        %9582 = vmatprep.subr.bf16.mxu0 %v7282
        %9583 = vmatpush2.bf16.msra.mxu0 %v7281
        %9584 = vmatprep.subr.bf16.mxu0 %v7250
        %9585 = vmatpush2.bf16.msra.mxu0 %v7249
        %9586 = vmatprep.subr.bf16.mxu0 %v7218
        %9587 = vmatpush2.bf16.msra.mxu0 %v7217
        %9588 = vmatprep.subr.bf16.mxu0 %v7186
        %9589 = vmatpush2.bf16.msra.mxu0 %v7185
        %9590 = vmatprep.subr.bf16.mxu0 %v7154
        %9591 = vmatpush2.bf16.msra.mxu0 %v7153
        %9592 = vmatprep.subr.bf16.mxu0 %v7122
        %9593 = vmatpush2.bf16.msra.mxu0 %v7121
        %9594 = vmatprep.mubr.bf16.mxu0 %v3248
        %9595 = vmatmul.mubr.bf16.gmra.mxu0 %v3247
        %v9596 = vpop.f32.mrf.mxu0
        %v9597 = vadd.f32 %v9556, %v9596
        %v9598 = vpop.f32.mrf.mxu0
        %v9599 = vadd.f32 %v9558, %v9598
        %v9600 = vpop.f32.mrf.mxu0
        %v9601 = vpop.f32.mrf.mxu0
        %9602 = vdwg.mxu0
        %9603 = vmatprep.subr.bf16.mxu0 %v6580
        %9604 = vmatpush1.bf16.msra.mxu0 %v6579
        %9605 = vmatprep.subr.bf16.mxu0 %v6548
        %9606 = vmatpush1.bf16.msra.mxu0 %v6547
        %9607 = vmatprep.subr.bf16.mxu0 %v6516
        %9608 = vmatpush1.bf16.msra.mxu0 %v6515
        %9609 = vmatprep.subr.bf16.mxu0 %v6484
        %9610 = vmatpush1.bf16.msra.mxu0 %v6483
        %9611 = vmatprep.subr.bf16.mxu0 %v6452
        %9612 = vmatpush1.bf16.msra.mxu0 %v6451
        %9613 = vmatprep.subr.bf16.mxu0 %v6420
        %9614 = vmatpush1.bf16.msra.mxu0 %v6419
        %9615 = vmatprep.subr.bf16.mxu0 %v6388
        %9616 = vmatpush1.bf16.msra.mxu0 %v6387
        %9617 = vmatprep.subr.bf16.mxu0 %v6356
        %9618 = vmatpush1.bf16.msra.mxu0 %v6355
        %9619 = vmatprep.subr.bf16.mxu0 %v6836
        %9620 = vmatpush2.bf16.msra.mxu0 %v6835
        %9621 = vmatprep.subr.bf16.mxu0 %v6804
        %9622 = vmatpush2.bf16.msra.mxu0 %v6803
        %9623 = vmatprep.subr.bf16.mxu0 %v6772
        %9624 = vmatpush2.bf16.msra.mxu0 %v6771
        %9625 = vmatprep.subr.bf16.mxu0 %v6740
        %9626 = vmatpush2.bf16.msra.mxu0 %v6739
        %9627 = vmatprep.subr.bf16.mxu0 %v6708
        %9628 = vmatpush2.bf16.msra.mxu0 %v6707
        %9629 = vmatprep.subr.bf16.mxu0 %v6676
        %9630 = vmatpush2.bf16.msra.mxu0 %v6675
        %9631 = vmatprep.subr.bf16.mxu0 %v6644
        %9632 = vmatpush2.bf16.msra.mxu0 %v6643
        %9633 = vmatprep.subr.bf16.mxu0 %v6612
        %9634 = vmatpush2.bf16.msra.mxu0 %v6611
        %9635 = vmatprep.mubr.bf16.mxu0 %v3246
        %9636 = vmatmul.mubr.bf16.gmra.mxu0 %v3245
        %v9637 = vpop.f32.mrf.mxu0
        %v9638 = vadd.f32 0.0, %v9637
        %v9639 = vpop.f32.mrf.mxu0
        %v9640 = vadd.f32 0.0, %v9639
        %v9641 = vpop.f32.mrf.mxu0
        %v9642 = vpop.f32.mrf.mxu0
        %9643 = vdwg.mxu0
        %9644 = vmatprep.subr.bf16.mxu0 %v7092
        %9645 = vmatpush1.bf16.msra.mxu0 %v7091
        %9646 = vmatprep.subr.bf16.mxu0 %v7060
        %9647 = vmatpush1.bf16.msra.mxu0 %v7059
        %9648 = vmatprep.subr.bf16.mxu0 %v7028
        %9649 = vmatpush1.bf16.msra.mxu0 %v7027
        %9650 = vmatprep.subr.bf16.mxu0 %v6996
        %9651 = vmatpush1.bf16.msra.mxu0 %v6995
        %9652 = vmatprep.subr.bf16.mxu0 %v6964
        %9653 = vmatpush1.bf16.msra.mxu0 %v6963
        %9654 = vmatprep.subr.bf16.mxu0 %v6932
        %9655 = vmatpush1.bf16.msra.mxu0 %v6931
        %9656 = vmatprep.subr.bf16.mxu0 %v6900
        %9657 = vmatpush1.bf16.msra.mxu0 %v6899
        %9658 = vmatprep.subr.bf16.mxu0 %v6868
        %9659 = vmatpush1.bf16.msra.mxu0 %v6867
        %9660 = vmatprep.subr.bf16.mxu0 %v7348
        %9661 = vmatpush2.bf16.msra.mxu0 %v7347
        %9662 = vmatprep.subr.bf16.mxu0 %v7316
        %9663 = vmatpush2.bf16.msra.mxu0 %v7315
        %9664 = vmatprep.subr.bf16.mxu0 %v7284
        %9665 = vmatpush2.bf16.msra.mxu0 %v7283
        %9666 = vmatprep.subr.bf16.mxu0 %v7252
        %9667 = vmatpush2.bf16.msra.mxu0 %v7251
        %9668 = vmatprep.subr.bf16.mxu0 %v7220
        %9669 = vmatpush2.bf16.msra.mxu0 %v7219
        %9670 = vmatprep.subr.bf16.mxu0 %v7188
        %9671 = vmatpush2.bf16.msra.mxu0 %v7187
        %9672 = vmatprep.subr.bf16.mxu0 %v7156
        %9673 = vmatpush2.bf16.msra.mxu0 %v7155
        %9674 = vmatprep.subr.bf16.mxu0 %v7124
        %9675 = vmatpush2.bf16.msra.mxu0 %v7123
        %9676 = vmatprep.mubr.bf16.mxu0 %v3248
        %9677 = vmatmul.mubr.bf16.gmra.mxu0 %v3247
        %v9678 = vpop.f32.mrf.mxu0
        %v9679 = vadd.f32 %v9638, %v9678
        %v9680 = vpop.f32.mrf.mxu0
        %v9681 = vadd.f32 %v9640, %v9680
        %v9682 = vpop.f32.mrf.mxu0
        %v9683 = vpop.f32.mrf.mxu0
        %9684 = vdwg.mxu0
        %v9685 = vadd.f32 %v2177, %v8449
        %v9686 = vadd.f32 %v2178, %v8451
        %v9687 = vadd.f32 %v2179, %v8531
        %v9688 = vadd.f32 %v2180, %v8533
        %v9689 = vadd.f32 %v2181, %v8613
        %v9690 = vadd.f32 %v2182, %v8615
        %v9691 = vadd.f32 %v2183, %v8695
        %v9692 = vadd.f32 %v2184, %v8697
        %v9693 = vadd.f32 %v2185, %v8777
        %v9694 = vadd.f32 %v2186, %v8779
        %v9695 = vadd.f32 %v2187, %v8859
        %v9696 = vadd.f32 %v2188, %v8861
        %v9697 = vadd.f32 %v2189, %v8941
        %v9698 = vadd.f32 %v2190, %v8943
        %v9699 = vadd.f32 %v2191, %v9023
        %v9700 = vadd.f32 %v2192, %v9025
        %v9701 = vadd.f32 %v2193, %v9105
        %v9702 = vadd.f32 %v2194, %v9107
        %v9703 = vadd.f32 %v2195, %v9187
        %v9704 = vadd.f32 %v2196, %v9189
        %v9705 = vadd.f32 %v2197, %v9269
        %v9706 = vadd.f32 %v2198, %v9271
        %v9707 = vadd.f32 %v2199, %v9351
        %v9708 = vadd.f32 %v2200, %v9353
        %v9709 = vadd.f32 %v2201, %v9433
        %v9710 = vadd.f32 %v2202, %v9435
        %v9711 = vadd.f32 %v2203, %v9515
        %v9712 = vadd.f32 %v2204, %v9517
        %v9713 = vadd.f32 %v2205, %v9597
        %v9714 = vadd.f32 %v2206, %v9599
        %v9715 = vadd.f32 %v2207, %v9679
        %v9716 = vadd.f32 %v2208, %v9681
        %9717 = vst [vmem:[#allocation3] sm:$0xff] %v9685
        %9718 = vst [vmem:[#allocation3 + $0x8] sm:$0xff] %v9686
        %9719 = vst [vmem:[#allocation3 + $0x10] sm:$0xff] %v9687
        %9720 = vst [vmem:[#allocation3 + $0x18] sm:$0xff] %v9688
        %9721 = vst [vmem:[#allocation3 + $0x20] sm:$0xff] %v9689
        %9722 = vst [vmem:[#allocation3 + $0x28] sm:$0xff] %v9690
        %9723 = vst [vmem:[#allocation3 + $0x30] sm:$0xff] %v9691
        %9724 = vst [vmem:[#allocation3 + $0x38] sm:$0xff] %v9692
        %9725 = vst [vmem:[#allocation3 + $0x40] sm:$0xff] %v9693
        %9726 = vst [vmem:[#allocation3 + $0x48] sm:$0xff] %v9694
        %9727 = vst [vmem:[#allocation3 + $0x50] sm:$0xff] %v9695
        %9728 = vst [vmem:[#allocation3 + $0x58] sm:$0xff] %v9696
        %9729 = vst [vmem:[#allocation3 + $0x60] sm:$0xff] %v9697
        %9730 = vst [vmem:[#allocation3 + $0x68] sm:$0xff] %v9698
        %9731 = vst [vmem:[#allocation3 + $0x70] sm:$0xff] %v9699
        %9732 = vst [vmem:[#allocation3 + $0x78] sm:$0xff] %v9700
        %9733 = vst [vmem:[#allocation3 + $0x80] sm:$0xff] %v9701
        %9734 = vst [vmem:[#allocation3 + $0x88] sm:$0xff] %v9702
        %9735 = vst [vmem:[#allocation3 + $0x90] sm:$0xff] %v9703
        %9736 = vst [vmem:[#allocation3 + $0x98] sm:$0xff] %v9704
        %9737 = vst [vmem:[#allocation3 + $0xa0] sm:$0xff] %v9705
        %9738 = vst [vmem:[#allocation3 + $0xa8] sm:$0xff] %v9706
        %9739 = vst [vmem:[#allocation3 + $0xb0] sm:$0xff] %v9707
        %9740 = vst [vmem:[#allocation3 + $0xb8] sm:$0xff] %v9708
        %9741 = vst [vmem:[#allocation3 + $0xc0] sm:$0xff] %v9709
        %9742 = vst [vmem:[#allocation3 + $0xc8] sm:$0xff] %v9710
        %9743 = vst [vmem:[#allocation3 + $0xd0] sm:$0xff] %v9711
        %9744 = vst [vmem:[#allocation3 + $0xd8] sm:$0xff] %v9712
        %9745 = vst [vmem:[#allocation3 + $0xe0] sm:$0xff] %v9713
        %9746 = vst [vmem:[#allocation3 + $0xe8] sm:$0xff] %v9714
        %9747 = vst [vmem:[#allocation3 + $0xf0] sm:$0xff] %v9715
        %9748 = vst [vmem:[#allocation3 + $0xf8] sm:$0xff] %v9716
        %p9749 = scmp.eq.s32.totalorder %s25, 7
        // Predicated region
        $region81: #{tpu_custom_call.1} parent=47 // pred_check
          %p9750 = pneg %p9749
        $region82: #{tpu_custom_call.1} parent=47 // pred_check_branch
          %9752 = sbr.rel (%p9750) target = $region84
        $region83: #{tpu_custom_call.1} parent=47 // pred_region
          %v9753 = vld [vmem:[#allocation3] sm:$0xff]
          %v9754 = vld [vmem:[#allocation3 + $0x8] sm:$0xff]
          %v9755 = vld [vmem:[#allocation3 + $0x10] sm:$0xff]
          %v9756 = vld [vmem:[#allocation3 + $0x18] sm:$0xff]
          %v9757 = vld [vmem:[#allocation3 + $0x20] sm:$0xff]
          %v9758 = vld [vmem:[#allocation3 + $0x28] sm:$0xff]
          %v9759 = vld [vmem:[#allocation3 + $0x30] sm:$0xff]
          %v9760 = vld [vmem:[#allocation3 + $0x38] sm:$0xff]
          %v9761 = vld [vmem:[#allocation3 + $0x40] sm:$0xff]
          %v9762 = vld [vmem:[#allocation3 + $0x48] sm:$0xff]
          %v9763 = vld [vmem:[#allocation3 + $0x50] sm:$0xff]
          %v9764 = vld [vmem:[#allocation3 + $0x58] sm:$0xff]
          %v9765 = vld [vmem:[#allocation3 + $0x60] sm:$0xff]
          %v9766 = vld [vmem:[#allocation3 + $0x68] sm:$0xff]
          %v9767 = vld [vmem:[#allocation3 + $0x70] sm:$0xff]
          %v9768 = vld [vmem:[#allocation3 + $0x78] sm:$0xff]
          %v9769 = vld [vmem:[#allocation3 + $0x80] sm:$0xff]
          %v9770 = vld [vmem:[#allocation3 + $0x88] sm:$0xff]
          %v9771 = vld [vmem:[#allocation3 + $0x90] sm:$0xff]
          %v9772 = vld [vmem:[#allocation3 + $0x98] sm:$0xff]
          %v9773 = vld [vmem:[#allocation3 + $0xa0] sm:$0xff]
          %v9774 = vld [vmem:[#allocation3 + $0xa8] sm:$0xff]
          %v9775 = vld [vmem:[#allocation3 + $0xb0] sm:$0xff]
          %v9776 = vld [vmem:[#allocation3 + $0xb8] sm:$0xff]
          %v9777 = vld [vmem:[#allocation3 + $0xc0] sm:$0xff]
          %v9778 = vld [vmem:[#allocation3 + $0xc8] sm:$0xff]
          %v9779 = vld [vmem:[#allocation3 + $0xd0] sm:$0xff]
          %v9780 = vld [vmem:[#allocation3 + $0xd8] sm:$0xff]
          %v9781 = vld [vmem:[#allocation3 + $0xe0] sm:$0xff]
          %v9782 = vld [vmem:[#allocation3 + $0xe8] sm:$0xff]
          %v9783 = vld [vmem:[#allocation3 + $0xf0] sm:$0xff]
          %v9784 = vld [vmem:[#allocation3 + $0xf8] sm:$0xff]
          %v9785 = vld [vmem:[#allocation12] sm:$0xff]
          %v9786 = vld [vmem:[#allocation12 + $0x8] sm:$0xff]
          %v9787 = vld [vmem:[#allocation12 + $0x10] sm:$0xff]
          %v9788 = vld [vmem:[#allocation12 + $0x18] sm:$0xff]
          %v9793 = vlaneseq
          %v9794 = vshrl.u32 %v9793, 7
          %v9795 = vsub.s32 0, %v9794
          %v9796 = vrot.slane %v9785, %v9795
          %v9797 = vlaneseq
          %v9798 = vshrl.u32 %v9797, 7
          %v9799 = vsub.s32 1, %v9798
          %v9800 = vrot.slane %v9785, %v9799
          %v9801 = vlaneseq
          %v9802 = vshrl.u32 %v9801, 7
          %v9803 = vsub.s32 2, %v9802
          %v9804 = vrot.slane %v9785, %v9803
          %v9805 = vlaneseq
          %v9806 = vshrl.u32 %v9805, 7
          %v9807 = vsub.s32 3, %v9806
          %v9808 = vrot.slane %v9785, %v9807
          %v9809 = vlaneseq
          %v9810 = vshrl.u32 %v9809, 7
          %v9811 = vsub.s32 4, %v9810
          %v9812 = vrot.slane %v9785, %v9811
          %v9813 = vlaneseq
          %v9814 = vshrl.u32 %v9813, 7
          %v9815 = vsub.s32 5, %v9814
          %v9816 = vrot.slane %v9785, %v9815
          %v9817 = vlaneseq
          %v9818 = vshrl.u32 %v9817, 7
          %v9819 = vsub.s32 6, %v9818
          %v9820 = vrot.slane %v9785, %v9819
          %v9821 = vlaneseq
          %v9822 = vshrl.u32 %v9821, 7
          %v9823 = vsub.s32 7, %v9822
          %v9824 = vrot.slane %v9785, %v9823
          %v9825 = vlaneseq
          %v9826 = vshrl.u32 %v9825, 7
          %v9827 = vsub.s32 0, %v9826
          %v9828 = vrot.slane %v9786, %v9827
          %v9829 = vlaneseq
          %v9830 = vshrl.u32 %v9829, 7
          %v9831 = vsub.s32 1, %v9830
          %v9832 = vrot.slane %v9786, %v9831
          %v9833 = vlaneseq
          %v9834 = vshrl.u32 %v9833, 7
          %v9835 = vsub.s32 2, %v9834
          %v9836 = vrot.slane %v9786, %v9835
          %v9837 = vlaneseq
          %v9838 = vshrl.u32 %v9837, 7
          %v9839 = vsub.s32 3, %v9838
          %v9840 = vrot.slane %v9786, %v9839
          %v9841 = vlaneseq
          %v9842 = vshrl.u32 %v9841, 7
          %v9843 = vsub.s32 4, %v9842
          %v9844 = vrot.slane %v9786, %v9843
          %v9845 = vlaneseq
          %v9846 = vshrl.u32 %v9845, 7
          %v9847 = vsub.s32 5, %v9846
          %v9848 = vrot.slane %v9786, %v9847
          %v9849 = vlaneseq
          %v9850 = vshrl.u32 %v9849, 7
          %v9851 = vsub.s32 6, %v9850
          %v9852 = vrot.slane %v9786, %v9851
          %v9853 = vlaneseq
          %v9854 = vshrl.u32 %v9853, 7
          %v9855 = vsub.s32 7, %v9854
          %v9856 = vrot.slane %v9786, %v9855
          %v9857 = vlaneseq
          %v9858 = vshrl.u32 %v9857, 7
          %v9859 = vsub.s32 0, %v9858
          %v9860 = vrot.slane %v9787, %v9859
          %v9861 = vlaneseq
          %v9862 = vshrl.u32 %v9861, 7
          %v9863 = vsub.s32 1, %v9862
          %v9864 = vrot.slane %v9787, %v9863
          %v9865 = vlaneseq
          %v9866 = vshrl.u32 %v9865, 7
          %v9867 = vsub.s32 2, %v9866
          %v9868 = vrot.slane %v9787, %v9867
          %v9869 = vlaneseq
          %v9870 = vshrl.u32 %v9869, 7
          %v9871 = vsub.s32 3, %v9870
          %v9872 = vrot.slane %v9787, %v9871
          %v9873 = vlaneseq
          %v9874 = vshrl.u32 %v9873, 7
          %v9875 = vsub.s32 4, %v9874
          %v9876 = vrot.slane %v9787, %v9875
          %v9877 = vlaneseq
          %v9878 = vshrl.u32 %v9877, 7
          %v9879 = vsub.s32 5, %v9878
          %v9880 = vrot.slane %v9787, %v9879
          %v9881 = vlaneseq
          %v9882 = vshrl.u32 %v9881, 7
          %v9883 = vsub.s32 6, %v9882
          %v9884 = vrot.slane %v9787, %v9883
          %v9885 = vlaneseq
          %v9886 = vshrl.u32 %v9885, 7
          %v9887 = vsub.s32 7, %v9886
          %v9888 = vrot.slane %v9787, %v9887
          %v9889 = vlaneseq
          %v9890 = vshrl.u32 %v9889, 7
          %v9891 = vsub.s32 0, %v9890
          %v9892 = vrot.slane %v9788, %v9891
          %v9893 = vlaneseq
          %v9894 = vshrl.u32 %v9893, 7
          %v9895 = vsub.s32 1, %v9894
          %v9896 = vrot.slane %v9788, %v9895
          %v9897 = vlaneseq
          %v9898 = vshrl.u32 %v9897, 7
          %v9899 = vsub.s32 2, %v9898
          %v9900 = vrot.slane %v9788, %v9899
          %v9901 = vlaneseq
          %v9902 = vshrl.u32 %v9901, 7
          %v9903 = vsub.s32 3, %v9902
          %v9904 = vrot.slane %v9788, %v9903
          %v9905 = vlaneseq
          %v9906 = vshrl.u32 %v9905, 7
          %v9907 = vsub.s32 4, %v9906
          %v9908 = vrot.slane %v9788, %v9907
          %v9909 = vlaneseq
          %v9910 = vshrl.u32 %v9909, 7
          %v9911 = vsub.s32 5, %v9910
          %v9912 = vrot.slane %v9788, %v9911
          %v9913 = vlaneseq
          %v9914 = vshrl.u32 %v9913, 7
          %v9915 = vsub.s32 6, %v9914
          %v9916 = vrot.slane %v9788, %v9915
          %v9917 = vlaneseq
          %v9918 = vshrl.u32 %v9917, 7
          %v9919 = vsub.s32 7, %v9918
          %v9920 = vrot.slane %v9788, %v9919
          %v9953 = vadd.f32 %v9753, %v9796
          %v9954 = vadd.f32 %v9754, %v9800
          %v9955 = vadd.f32 %v9755, %v9804
          %v9956 = vadd.f32 %v9756, %v9808
          %v9957 = vadd.f32 %v9757, %v9812
          %v9958 = vadd.f32 %v9758, %v9816
          %v9959 = vadd.f32 %v9759, %v9820
          %v9960 = vadd.f32 %v9760, %v9824
          %v9961 = vadd.f32 %v9761, %v9828
          %v9962 = vadd.f32 %v9762, %v9832
          %v9963 = vadd.f32 %v9763, %v9836
          %v9964 = vadd.f32 %v9764, %v9840
          %v9965 = vadd.f32 %v9765, %v9844
          %v9966 = vadd.f32 %v9766, %v9848
          %v9967 = vadd.f32 %v9767, %v9852
          %v9968 = vadd.f32 %v9768, %v9856
          %v9969 = vadd.f32 %v9769, %v9860
          %v9970 = vadd.f32 %v9770, %v9864
          %v9971 = vadd.f32 %v9771, %v9868
          %v9972 = vadd.f32 %v9772, %v9872
          %v9973 = vadd.f32 %v9773, %v9876
          %v9974 = vadd.f32 %v9774, %v9880
          %v9975 = vadd.f32 %v9775, %v9884
          %v9976 = vadd.f32 %v9776, %v9888
          %v9977 = vadd.f32 %v9777, %v9892
          %v9978 = vadd.f32 %v9778, %v9896
          %v9979 = vadd.f32 %v9779, %v9900
          %v9980 = vadd.f32 %v9780, %v9904
          %v9981 = vadd.f32 %v9781, %v9908
          %v9982 = vadd.f32 %v9782, %v9912
          %v9983 = vadd.f32 %v9783, %v9916
          %v9984 = vadd.f32 %v9784, %v9920
          %v9985 = vmax.f32 %v9953, 0.0
          %v9986 = vmax.f32 %v9954, 0.0
          %v9987 = vmax.f32 %v9955, 0.0
          %v9988 = vmax.f32 %v9956, 0.0
          %v9989 = vmax.f32 %v9957, 0.0
          %v9990 = vmax.f32 %v9958, 0.0
          %v9991 = vmax.f32 %v9959, 0.0
          %v9992 = vmax.f32 %v9960, 0.0
          %v9993 = vmax.f32 %v9961, 0.0
          %v9994 = vmax.f32 %v9962, 0.0
          %v9995 = vmax.f32 %v9963, 0.0
          %v9996 = vmax.f32 %v9964, 0.0
          %v9997 = vmax.f32 %v9965, 0.0
          %v9998 = vmax.f32 %v9966, 0.0
          %v9999 = vmax.f32 %v9967, 0.0
          %v10000 = vmax.f32 %v9968, 0.0
          %v10001 = vmax.f32 %v9969, 0.0
          %v10002 = vmax.f32 %v9970, 0.0
          %v10003 = vmax.f32 %v9971, 0.0
          %v10004 = vmax.f32 %v9972, 0.0
          %v10005 = vmax.f32 %v9973, 0.0
          %v10006 = vmax.f32 %v9974, 0.0
          %v10007 = vmax.f32 %v9975, 0.0
          %v10008 = vmax.f32 %v9976, 0.0
          %v10009 = vmax.f32 %v9977, 0.0
          %v10010 = vmax.f32 %v9978, 0.0
          %v10011 = vmax.f32 %v9979, 0.0
          %v10012 = vmax.f32 %v9980, 0.0
          %v10013 = vmax.f32 %v9981, 0.0
          %v10014 = vmax.f32 %v9982, 0.0
          %v10015 = vmax.f32 %v9983, 0.0
          %v10016 = vmax.f32 %v9984, 0.0
          %v10017 = vpack.c.bf16 %v9985, %v9985
          %v10018 = vpack.c.bf16 %v9986, %v9986
          %v10019 = vpack.c.bf16 %v9987, %v9987
          %v10020 = vpack.c.bf16 %v9988, %v9988
          %v10021 = vpack.c.bf16 %v9989, %v9989
          %v10022 = vpack.c.bf16 %v9990, %v9990
          %v10023 = vpack.c.bf16 %v9991, %v9991
          %v10024 = vpack.c.bf16 %v9992, %v9992
          %v10025 = vpack.c.bf16 %v9993, %v9993
          %v10026 = vpack.c.bf16 %v9994, %v9994
          %v10027 = vpack.c.bf16 %v9995, %v9995
          %v10028 = vpack.c.bf16 %v9996, %v9996
          %v10029 = vpack.c.bf16 %v9997, %v9997
          %v10030 = vpack.c.bf16 %v9998, %v9998
          %v10031 = vpack.c.bf16 %v9999, %v9999
          %v10032 = vpack.c.bf16 %v10000, %v10000
          %v10033 = vpack.c.bf16 %v10001, %v10001
          %v10034 = vpack.c.bf16 %v10002, %v10002
          %v10035 = vpack.c.bf16 %v10003, %v10003
          %v10036 = vpack.c.bf16 %v10004, %v10004
          %v10037 = vpack.c.bf16 %v10005, %v10005
          %v10038 = vpack.c.bf16 %v10006, %v10006
          %v10039 = vpack.c.bf16 %v10007, %v10007
          %v10040 = vpack.c.bf16 %v10008, %v10008
          %v10041 = vpack.c.bf16 %v10009, %v10009
          %v10042 = vpack.c.bf16 %v10010, %v10010
          %v10043 = vpack.c.bf16 %v10011, %v10011
          %v10044 = vpack.c.bf16 %v10012, %v10012
          %v10045 = vpack.c.bf16 %v10013, %v10013
          %v10046 = vpack.c.bf16 %v10014, %v10014
          %v10047 = vpack.c.bf16 %v10015, %v10015
          %v10048 = vpack.c.bf16 %v10016, %v10016
          %v10049 = vld [vmem:[#allocation13] sm:$0xf]
          %v10050 = vld [vmem:[#allocation13 + $0x4] sm:$0xf]
          %v10051 = vld [vmem:[#allocation13 + $0x8] sm:$0xf]
          %v10052 = vld [vmem:[#allocation13 + $0xc] sm:$0xf]
          %v10053 = vld [vmem:[#allocation13 + $0x10] sm:$0xf]
          %v10054 = vld [vmem:[#allocation13 + $0x14] sm:$0xf]
          %v10055 = vld [vmem:[#allocation13 + $0x18] sm:$0xf]
          %v10056 = vld [vmem:[#allocation13 + $0x1c] sm:$0xf]
          %v10057 = vld [vmem:[#allocation13 + $0x20] sm:$0xf]
          %v10058 = vld [vmem:[#allocation13 + $0x24] sm:$0xf]
          %v10059 = vld [vmem:[#allocation13 + $0x28] sm:$0xf]
          %v10060 = vld [vmem:[#allocation13 + $0x2c] sm:$0xf]
          %v10061 = vld [vmem:[#allocation13 + $0x30] sm:$0xf]
          %v10062 = vld [vmem:[#allocation13 + $0x34] sm:$0xf]
          %v10063 = vld [vmem:[#allocation13 + $0x38] sm:$0xf]
          %v10064 = vld [vmem:[#allocation13 + $0x3c] sm:$0xf]
          %v10065 = vld [vmem:[#allocation13 + $0x40] sm:$0xf]
          %v10066 = vld [vmem:[#allocation13 + $0x44] sm:$0xf]
          %v10067 = vld [vmem:[#allocation13 + $0x48] sm:$0xf]
          %v10068 = vld [vmem:[#allocation13 + $0x4c] sm:$0xf]
          %v10069 = vld [vmem:[#allocation13 + $0x50] sm:$0xf]
          %v10070 = vld [vmem:[#allocation13 + $0x54] sm:$0xf]
          %v10071 = vld [vmem:[#allocation13 + $0x58] sm:$0xf]
          %v10072 = vld [vmem:[#allocation13 + $0x5c] sm:$0xf]
          %v10073 = vld [vmem:[#allocation13 + $0x60] sm:$0xf]
          %v10074 = vld [vmem:[#allocation13 + $0x64] sm:$0xf]
          %v10075 = vld [vmem:[#allocation13 + $0x68] sm:$0xf]
          %v10076 = vld [vmem:[#allocation13 + $0x6c] sm:$0xf]
          %v10077 = vld [vmem:[#allocation13 + $0x70] sm:$0xf]
          %v10078 = vld [vmem:[#allocation13 + $0x74] sm:$0xf]
          %v10079 = vld [vmem:[#allocation13 + $0x78] sm:$0xf]
          %v10080 = vld [vmem:[#allocation13 + $0x7c] sm:$0xf]
          %v10081 = vld [vmem:[#allocation13 + $0x80] sm:$0xf]
          %v10082 = vld [vmem:[#allocation13 + $0x84] sm:$0xf]
          %v10083 = vld [vmem:[#allocation13 + $0x88] sm:$0xf]
          %v10084 = vld [vmem:[#allocation13 + $0x8c] sm:$0xf]
          %v10085 = vld [vmem:[#allocation13 + $0x90] sm:$0xf]
          %v10086 = vld [vmem:[#allocation13 + $0x94] sm:$0xf]
          %v10087 = vld [vmem:[#allocation13 + $0x98] sm:$0xf]
          %v10088 = vld [vmem:[#allocation13 + $0x9c] sm:$0xf]
          %v10089 = vld [vmem:[#allocation13 + $0xa0] sm:$0xf]
          %v10090 = vld [vmem:[#allocation13 + $0xa4] sm:$0xf]
          %v10091 = vld [vmem:[#allocation13 + $0xa8] sm:$0xf]
          %v10092 = vld [vmem:[#allocation13 + $0xac] sm:$0xf]
          %v10093 = vld [vmem:[#allocation13 + $0xb0] sm:$0xf]
          %v10094 = vld [vmem:[#allocation13 + $0xb4] sm:$0xf]
          %v10095 = vld [vmem:[#allocation13 + $0xb8] sm:$0xf]
          %v10096 = vld [vmem:[#allocation13 + $0xbc] sm:$0xf]
          %v10097 = vld [vmem:[#allocation13 + $0xc0] sm:$0xf]
          %v10098 = vld [vmem:[#allocation13 + $0xc4] sm:$0xf]
          %v10099 = vld [vmem:[#allocation13 + $0xc8] sm:$0xf]
          %v10100 = vld [vmem:[#allocation13 + $0xcc] sm:$0xf]
          %v10101 = vld [vmem:[#allocation13 + $0xd0] sm:$0xf]
          %v10102 = vld [vmem:[#allocation13 + $0xd4] sm:$0xf]
          %v10103 = vld [vmem:[#allocation13 + $0xd8] sm:$0xf]
          %v10104 = vld [vmem:[#allocation13 + $0xdc] sm:$0xf]
          %v10105 = vld [vmem:[#allocation13 + $0xe0] sm:$0xf]
          %v10106 = vld [vmem:[#allocation13 + $0xe4] sm:$0xf]
          %v10107 = vld [vmem:[#allocation13 + $0xe8] sm:$0xf]
          %v10108 = vld [vmem:[#allocation13 + $0xec] sm:$0xf]
          %v10109 = vld [vmem:[#allocation13 + $0xf0] sm:$0xf]
          %v10110 = vld [vmem:[#allocation13 + $0xf4] sm:$0xf]
          %v10111 = vld [vmem:[#allocation13 + $0xf8] sm:$0xf]
          %v10112 = vld [vmem:[#allocation13 + $0xfc] sm:$0xf]
          %v10113 = vld [vmem:[#allocation13 + $0x100] sm:$0xf]
          %v10114 = vld [vmem:[#allocation13 + $0x104] sm:$0xf]
          %v10115 = vld [vmem:[#allocation13 + $0x108] sm:$0xf]
          %v10116 = vld [vmem:[#allocation13 + $0x10c] sm:$0xf]
          %v10117 = vld [vmem:[#allocation13 + $0x110] sm:$0xf]
          %v10118 = vld [vmem:[#allocation13 + $0x114] sm:$0xf]
          %v10119 = vld [vmem:[#allocation13 + $0x118] sm:$0xf]
          %v10120 = vld [vmem:[#allocation13 + $0x11c] sm:$0xf]
          %v10121 = vld [vmem:[#allocation13 + $0x120] sm:$0xf]
          %v10122 = vld [vmem:[#allocation13 + $0x124] sm:$0xf]
          %v10123 = vld [vmem:[#allocation13 + $0x128] sm:$0xf]
          %v10124 = vld [vmem:[#allocation13 + $0x12c] sm:$0xf]
          %v10125 = vld [vmem:[#allocation13 + $0x130] sm:$0xf]
          %v10126 = vld [vmem:[#allocation13 + $0x134] sm:$0xf]
          %v10127 = vld [vmem:[#allocation13 + $0x138] sm:$0xf]
          %v10128 = vld [vmem:[#allocation13 + $0x13c] sm:$0xf]
          %v10129 = vld [vmem:[#allocation13 + $0x140] sm:$0xf]
          %v10130 = vld [vmem:[#allocation13 + $0x144] sm:$0xf]
          %v10131 = vld [vmem:[#allocation13 + $0x148] sm:$0xf]
          %v10132 = vld [vmem:[#allocation13 + $0x14c] sm:$0xf]
          %v10133 = vld [vmem:[#allocation13 + $0x150] sm:$0xf]
          %v10134 = vld [vmem:[#allocation13 + $0x154] sm:$0xf]
          %v10135 = vld [vmem:[#allocation13 + $0x158] sm:$0xf]
          %v10136 = vld [vmem:[#allocation13 + $0x15c] sm:$0xf]
          %v10137 = vld [vmem:[#allocation13 + $0x160] sm:$0xf]
          %v10138 = vld [vmem:[#allocation13 + $0x164] sm:$0xf]
          %v10139 = vld [vmem:[#allocation13 + $0x168] sm:$0xf]
          %v10140 = vld [vmem:[#allocation13 + $0x16c] sm:$0xf]
          %v10141 = vld [vmem:[#allocation13 + $0x170] sm:$0xf]
          %v10142 = vld [vmem:[#allocation13 + $0x174] sm:$0xf]
          %v10143 = vld [vmem:[#allocation13 + $0x178] sm:$0xf]
          %v10144 = vld [vmem:[#allocation13 + $0x17c] sm:$0xf]
          %v10145 = vld [vmem:[#allocation13 + $0x180] sm:$0xf]
          %v10146 = vld [vmem:[#allocation13 + $0x184] sm:$0xf]
          %v10147 = vld [vmem:[#allocation13 + $0x188] sm:$0xf]
          %v10148 = vld [vmem:[#allocation13 + $0x18c] sm:$0xf]
          %v10149 = vld [vmem:[#allocation13 + $0x190] sm:$0xf]
          %v10150 = vld [vmem:[#allocation13 + $0x194] sm:$0xf]
          %v10151 = vld [vmem:[#allocation13 + $0x198] sm:$0xf]
          %v10152 = vld [vmem:[#allocation13 + $0x19c] sm:$0xf]
          %v10153 = vld [vmem:[#allocation13 + $0x1a0] sm:$0xf]
          %v10154 = vld [vmem:[#allocation13 + $0x1a4] sm:$0xf]
          %v10155 = vld [vmem:[#allocation13 + $0x1a8] sm:$0xf]
          %v10156 = vld [vmem:[#allocation13 + $0x1ac] sm:$0xf]
          %v10157 = vld [vmem:[#allocation13 + $0x1b0] sm:$0xf]
          %v10158 = vld [vmem:[#allocation13 + $0x1b4] sm:$0xf]
          %v10159 = vld [vmem:[#allocation13 + $0x1b8] sm:$0xf]
          %v10160 = vld [vmem:[#allocation13 + $0x1bc] sm:$0xf]
          %v10161 = vld [vmem:[#allocation13 + $0x1c0] sm:$0xf]
          %v10162 = vld [vmem:[#allocation13 + $0x1c4] sm:$0xf]
          %v10163 = vld [vmem:[#allocation13 + $0x1c8] sm:$0xf]
          %v10164 = vld [vmem:[#allocation13 + $0x1cc] sm:$0xf]
          %v10165 = vld [vmem:[#allocation13 + $0x1d0] sm:$0xf]
          %v10166 = vld [vmem:[#allocation13 + $0x1d4] sm:$0xf]
          %v10167 = vld [vmem:[#allocation13 + $0x1d8] sm:$0xf]
          %v10168 = vld [vmem:[#allocation13 + $0x1dc] sm:$0xf]
          %v10169 = vld [vmem:[#allocation13 + $0x1e0] sm:$0xf]
          %v10170 = vld [vmem:[#allocation13 + $0x1e4] sm:$0xf]
          %v10171 = vld [vmem:[#allocation13 + $0x1e8] sm:$0xf]
          %v10172 = vld [vmem:[#allocation13 + $0x1ec] sm:$0xf]
          %v10173 = vld [vmem:[#allocation13 + $0x1f0] sm:$0xf]
          %v10174 = vld [vmem:[#allocation13 + $0x1f4] sm:$0xf]
          %v10175 = vld [vmem:[#allocation13 + $0x1f8] sm:$0xf]
          %v10176 = vld [vmem:[#allocation13 + $0x1fc] sm:$0xf]
          %v10177 = vld [vmem:[#allocation13 + $0x200] sm:$0xf]
          %v10178 = vld [vmem:[#allocation13 + $0x204] sm:$0xf]
          %v10179 = vld [vmem:[#allocation13 + $0x208] sm:$0xf]
          %v10180 = vld [vmem:[#allocation13 + $0x20c] sm:$0xf]
          %v10181 = vld [vmem:[#allocation13 + $0x210] sm:$0xf]
          %v10182 = vld [vmem:[#allocation13 + $0x214] sm:$0xf]
          %v10183 = vld [vmem:[#allocation13 + $0x218] sm:$0xf]
          %v10184 = vld [vmem:[#allocation13 + $0x21c] sm:$0xf]
          %v10185 = vld [vmem:[#allocation13 + $0x220] sm:$0xf]
          %v10186 = vld [vmem:[#allocation13 + $0x224] sm:$0xf]
          %v10187 = vld [vmem:[#allocation13 + $0x228] sm:$0xf]
          %v10188 = vld [vmem:[#allocation13 + $0x22c] sm:$0xf]
          %v10189 = vld [vmem:[#allocation13 + $0x230] sm:$0xf]
          %v10190 = vld [vmem:[#allocation13 + $0x234] sm:$0xf]
          %v10191 = vld [vmem:[#allocation13 + $0x238] sm:$0xf]
          %v10192 = vld [vmem:[#allocation13 + $0x23c] sm:$0xf]
          %v10193 = vld [vmem:[#allocation13 + $0x240] sm:$0xf]
          %v10194 = vld [vmem:[#allocation13 + $0x244] sm:$0xf]
          %v10195 = vld [vmem:[#allocation13 + $0x248] sm:$0xf]
          %v10196 = vld [vmem:[#allocation13 + $0x24c] sm:$0xf]
          %v10197 = vld [vmem:[#allocation13 + $0x250] sm:$0xf]
          %v10198 = vld [vmem:[#allocation13 + $0x254] sm:$0xf]
          %v10199 = vld [vmem:[#allocation13 + $0x258] sm:$0xf]
          %v10200 = vld [vmem:[#allocation13 + $0x25c] sm:$0xf]
          %v10201 = vld [vmem:[#allocation13 + $0x260] sm:$0xf]
          %v10202 = vld [vmem:[#allocation13 + $0x264] sm:$0xf]
          %v10203 = vld [vmem:[#allocation13 + $0x268] sm:$0xf]
          %v10204 = vld [vmem:[#allocation13 + $0x26c] sm:$0xf]
          %v10205 = vld [vmem:[#allocation13 + $0x270] sm:$0xf]
          %v10206 = vld [vmem:[#allocation13 + $0x274] sm:$0xf]
          %v10207 = vld [vmem:[#allocation13 + $0x278] sm:$0xf]
          %v10208 = vld [vmem:[#allocation13 + $0x27c] sm:$0xf]
          %v10209 = vld [vmem:[#allocation13 + $0x280] sm:$0xf]
          %v10210 = vld [vmem:[#allocation13 + $0x284] sm:$0xf]
          %v10211 = vld [vmem:[#allocation13 + $0x288] sm:$0xf]
          %v10212 = vld [vmem:[#allocation13 + $0x28c] sm:$0xf]
          %v10213 = vld [vmem:[#allocation13 + $0x290] sm:$0xf]
          %v10214 = vld [vmem:[#allocation13 + $0x294] sm:$0xf]
          %v10215 = vld [vmem:[#allocation13 + $0x298] sm:$0xf]
          %v10216 = vld [vmem:[#allocation13 + $0x29c] sm:$0xf]
          %v10217 = vld [vmem:[#allocation13 + $0x2a0] sm:$0xf]
          %v10218 = vld [vmem:[#allocation13 + $0x2a4] sm:$0xf]
          %v10219 = vld [vmem:[#allocation13 + $0x2a8] sm:$0xf]
          %v10220 = vld [vmem:[#allocation13 + $0x2ac] sm:$0xf]
          %v10221 = vld [vmem:[#allocation13 + $0x2b0] sm:$0xf]
          %v10222 = vld [vmem:[#allocation13 + $0x2b4] sm:$0xf]
          %v10223 = vld [vmem:[#allocation13 + $0x2b8] sm:$0xf]
          %v10224 = vld [vmem:[#allocation13 + $0x2bc] sm:$0xf]
          %v10225 = vld [vmem:[#allocation13 + $0x2c0] sm:$0xf]
          %v10226 = vld [vmem:[#allocation13 + $0x2c4] sm:$0xf]
          %v10227 = vld [vmem:[#allocation13 + $0x2c8] sm:$0xf]
          %v10228 = vld [vmem:[#allocation13 + $0x2cc] sm:$0xf]
          %v10229 = vld [vmem:[#allocation13 + $0x2d0] sm:$0xf]
          %v10230 = vld [vmem:[#allocation13 + $0x2d4] sm:$0xf]
          %v10231 = vld [vmem:[#allocation13 + $0x2d8] sm:$0xf]
          %v10232 = vld [vmem:[#allocation13 + $0x2dc] sm:$0xf]
          %v10233 = vld [vmem:[#allocation13 + $0x2e0] sm:$0xf]
          %v10234 = vld [vmem:[#allocation13 + $0x2e4] sm:$0xf]
          %v10235 = vld [vmem:[#allocation13 + $0x2e8] sm:$0xf]
          %v10236 = vld [vmem:[#allocation13 + $0x2ec] sm:$0xf]
          %v10237 = vld [vmem:[#allocation13 + $0x2f0] sm:$0xf]
          %v10238 = vld [vmem:[#allocation13 + $0x2f4] sm:$0xf]
          %v10239 = vld [vmem:[#allocation13 + $0x2f8] sm:$0xf]
          %v10240 = vld [vmem:[#allocation13 + $0x2fc] sm:$0xf]
          %v10241 = vld [vmem:[#allocation13 + $0x300] sm:$0xf]
          %v10242 = vld [vmem:[#allocation13 + $0x304] sm:$0xf]
          %v10243 = vld [vmem:[#allocation13 + $0x308] sm:$0xf]
          %v10244 = vld [vmem:[#allocation13 + $0x30c] sm:$0xf]
          %v10245 = vld [vmem:[#allocation13 + $0x310] sm:$0xf]
          %v10246 = vld [vmem:[#allocation13 + $0x314] sm:$0xf]
          %v10247 = vld [vmem:[#allocation13 + $0x318] sm:$0xf]
          %v10248 = vld [vmem:[#allocation13 + $0x31c] sm:$0xf]
          %v10249 = vld [vmem:[#allocation13 + $0x320] sm:$0xf]
          %v10250 = vld [vmem:[#allocation13 + $0x324] sm:$0xf]
          %v10251 = vld [vmem:[#allocation13 + $0x328] sm:$0xf]
          %v10252 = vld [vmem:[#allocation13 + $0x32c] sm:$0xf]
          %v10253 = vld [vmem:[#allocation13 + $0x330] sm:$0xf]
          %v10254 = vld [vmem:[#allocation13 + $0x334] sm:$0xf]
          %v10255 = vld [vmem:[#allocation13 + $0x338] sm:$0xf]
          %v10256 = vld [vmem:[#allocation13 + $0x33c] sm:$0xf]
          %v10257 = vld [vmem:[#allocation13 + $0x340] sm:$0xf]
          %v10258 = vld [vmem:[#allocation13 + $0x344] sm:$0xf]
          %v10259 = vld [vmem:[#allocation13 + $0x348] sm:$0xf]
          %v10260 = vld [vmem:[#allocation13 + $0x34c] sm:$0xf]
          %v10261 = vld [vmem:[#allocation13 + $0x350] sm:$0xf]
          %v10262 = vld [vmem:[#allocation13 + $0x354] sm:$0xf]
          %v10263 = vld [vmem:[#allocation13 + $0x358] sm:$0xf]
          %v10264 = vld [vmem:[#allocation13 + $0x35c] sm:$0xf]
          %v10265 = vld [vmem:[#allocation13 + $0x360] sm:$0xf]
          %v10266 = vld [vmem:[#allocation13 + $0x364] sm:$0xf]
          %v10267 = vld [vmem:[#allocation13 + $0x368] sm:$0xf]
          %v10268 = vld [vmem:[#allocation13 + $0x36c] sm:$0xf]
          %v10269 = vld [vmem:[#allocation13 + $0x370] sm:$0xf]
          %v10270 = vld [vmem:[#allocation13 + $0x374] sm:$0xf]
          %v10271 = vld [vmem:[#allocation13 + $0x378] sm:$0xf]
          %v10272 = vld [vmem:[#allocation13 + $0x37c] sm:$0xf]
          %v10273 = vld [vmem:[#allocation13 + $0x380] sm:$0xf]
          %v10274 = vld [vmem:[#allocation13 + $0x384] sm:$0xf]
          %v10275 = vld [vmem:[#allocation13 + $0x388] sm:$0xf]
          %v10276 = vld [vmem:[#allocation13 + $0x38c] sm:$0xf]
          %v10277 = vld [vmem:[#allocation13 + $0x390] sm:$0xf]
          %v10278 = vld [vmem:[#allocation13 + $0x394] sm:$0xf]
          %v10279 = vld [vmem:[#allocation13 + $0x398] sm:$0xf]
          %v10280 = vld [vmem:[#allocation13 + $0x39c] sm:$0xf]
          %v10281 = vld [vmem:[#allocation13 + $0x3a0] sm:$0xf]
          %v10282 = vld [vmem:[#allocation13 + $0x3a4] sm:$0xf]
          %v10283 = vld [vmem:[#allocation13 + $0x3a8] sm:$0xf]
          %v10284 = vld [vmem:[#allocation13 + $0x3ac] sm:$0xf]
          %v10285 = vld [vmem:[#allocation13 + $0x3b0] sm:$0xf]
          %v10286 = vld [vmem:[#allocation13 + $0x3b4] sm:$0xf]
          %v10287 = vld [vmem:[#allocation13 + $0x3b8] sm:$0xf]
          %v10288 = vld [vmem:[#allocation13 + $0x3bc] sm:$0xf]
          %v10289 = vld [vmem:[#allocation13 + $0x3c0] sm:$0xf]
          %v10290 = vld [vmem:[#allocation13 + $0x3c4] sm:$0xf]
          %v10291 = vld [vmem:[#allocation13 + $0x3c8] sm:$0xf]
          %v10292 = vld [vmem:[#allocation13 + $0x3cc] sm:$0xf]
          %v10293 = vld [vmem:[#allocation13 + $0x3d0] sm:$0xf]
          %v10294 = vld [vmem:[#allocation13 + $0x3d4] sm:$0xf]
          %v10295 = vld [vmem:[#allocation13 + $0x3d8] sm:$0xf]
          %v10296 = vld [vmem:[#allocation13 + $0x3dc] sm:$0xf]
          %v10297 = vld [vmem:[#allocation13 + $0x3e0] sm:$0xf]
          %v10298 = vld [vmem:[#allocation13 + $0x3e4] sm:$0xf]
          %v10299 = vld [vmem:[#allocation13 + $0x3e8] sm:$0xf]
          %v10300 = vld [vmem:[#allocation13 + $0x3ec] sm:$0xf]
          %v10301 = vld [vmem:[#allocation13 + $0x3f0] sm:$0xf]
          %v10302 = vld [vmem:[#allocation13 + $0x3f4] sm:$0xf]
          %v10303 = vld [vmem:[#allocation13 + $0x3f8] sm:$0xf]
          %v10304 = vld [vmem:[#allocation13 + $0x3fc] sm:$0xf]
          %v10305 = vld [vmem:[#allocation13 + $0x400] sm:$0xf]
          %v10306 = vld [vmem:[#allocation13 + $0x404] sm:$0xf]
          %v10307 = vld [vmem:[#allocation13 + $0x408] sm:$0xf]
          %v10308 = vld [vmem:[#allocation13 + $0x40c] sm:$0xf]
          %v10309 = vld [vmem:[#allocation13 + $0x410] sm:$0xf]
          %v10310 = vld [vmem:[#allocation13 + $0x414] sm:$0xf]
          %v10311 = vld [vmem:[#allocation13 + $0x418] sm:$0xf]
          %v10312 = vld [vmem:[#allocation13 + $0x41c] sm:$0xf]
          %v10313 = vld [vmem:[#allocation13 + $0x420] sm:$0xf]
          %v10314 = vld [vmem:[#allocation13 + $0x424] sm:$0xf]
          %v10315 = vld [vmem:[#allocation13 + $0x428] sm:$0xf]
          %v10316 = vld [vmem:[#allocation13 + $0x42c] sm:$0xf]
          %v10317 = vld [vmem:[#allocation13 + $0x430] sm:$0xf]
          %v10318 = vld [vmem:[#allocation13 + $0x434] sm:$0xf]
          %v10319 = vld [vmem:[#allocation13 + $0x438] sm:$0xf]
          %v10320 = vld [vmem:[#allocation13 + $0x43c] sm:$0xf]
          %v10321 = vld [vmem:[#allocation13 + $0x440] sm:$0xf]
          %v10322 = vld [vmem:[#allocation13 + $0x444] sm:$0xf]
          %v10323 = vld [vmem:[#allocation13 + $0x448] sm:$0xf]
          %v10324 = vld [vmem:[#allocation13 + $0x44c] sm:$0xf]
          %v10325 = vld [vmem:[#allocation13 + $0x450] sm:$0xf]
          %v10326 = vld [vmem:[#allocation13 + $0x454] sm:$0xf]
          %v10327 = vld [vmem:[#allocation13 + $0x458] sm:$0xf]
          %v10328 = vld [vmem:[#allocation13 + $0x45c] sm:$0xf]
          %v10329 = vld [vmem:[#allocation13 + $0x460] sm:$0xf]
          %v10330 = vld [vmem:[#allocation13 + $0x464] sm:$0xf]
          %v10331 = vld [vmem:[#allocation13 + $0x468] sm:$0xf]
          %v10332 = vld [vmem:[#allocation13 + $0x46c] sm:$0xf]
          %v10333 = vld [vmem:[#allocation13 + $0x470] sm:$0xf]
          %v10334 = vld [vmem:[#allocation13 + $0x474] sm:$0xf]
          %v10335 = vld [vmem:[#allocation13 + $0x478] sm:$0xf]
          %v10336 = vld [vmem:[#allocation13 + $0x47c] sm:$0xf]
          %v10337 = vld [vmem:[#allocation13 + $0x480] sm:$0xf]
          %v10338 = vld [vmem:[#allocation13 + $0x484] sm:$0xf]
          %v10339 = vld [vmem:[#allocation13 + $0x488] sm:$0xf]
          %v10340 = vld [vmem:[#allocation13 + $0x48c] sm:$0xf]
          %v10341 = vld [vmem:[#allocation13 + $0x490] sm:$0xf]
          %v10342 = vld [vmem:[#allocation13 + $0x494] sm:$0xf]
          %v10343 = vld [vmem:[#allocation13 + $0x498] sm:$0xf]
          %v10344 = vld [vmem:[#allocation13 + $0x49c] sm:$0xf]
          %v10345 = vld [vmem:[#allocation13 + $0x4a0] sm:$0xf]
          %v10346 = vld [vmem:[#allocation13 + $0x4a4] sm:$0xf]
          %v10347 = vld [vmem:[#allocation13 + $0x4a8] sm:$0xf]
          %v10348 = vld [vmem:[#allocation13 + $0x4ac] sm:$0xf]
          %v10349 = vld [vmem:[#allocation13 + $0x4b0] sm:$0xf]
          %v10350 = vld [vmem:[#allocation13 + $0x4b4] sm:$0xf]
          %v10351 = vld [vmem:[#allocation13 + $0x4b8] sm:$0xf]
          %v10352 = vld [vmem:[#allocation13 + $0x4bc] sm:$0xf]
          %v10353 = vld [vmem:[#allocation13 + $0x4c0] sm:$0xf]
          %v10354 = vld [vmem:[#allocation13 + $0x4c4] sm:$0xf]
          %v10355 = vld [vmem:[#allocation13 + $0x4c8] sm:$0xf]
          %v10356 = vld [vmem:[#allocation13 + $0x4cc] sm:$0xf]
          %v10357 = vld [vmem:[#allocation13 + $0x4d0] sm:$0xf]
          %v10358 = vld [vmem:[#allocation13 + $0x4d4] sm:$0xf]
          %v10359 = vld [vmem:[#allocation13 + $0x4d8] sm:$0xf]
          %v10360 = vld [vmem:[#allocation13 + $0x4dc] sm:$0xf]
          %v10361 = vld [vmem:[#allocation13 + $0x4e0] sm:$0xf]
          %v10362 = vld [vmem:[#allocation13 + $0x4e4] sm:$0xf]
          %v10363 = vld [vmem:[#allocation13 + $0x4e8] sm:$0xf]
          %v10364 = vld [vmem:[#allocation13 + $0x4ec] sm:$0xf]
          %v10365 = vld [vmem:[#allocation13 + $0x4f0] sm:$0xf]
          %v10366 = vld [vmem:[#allocation13 + $0x4f4] sm:$0xf]
          %v10367 = vld [vmem:[#allocation13 + $0x4f8] sm:$0xf]
          %v10368 = vld [vmem:[#allocation13 + $0x4fc] sm:$0xf]
          %v10369 = vld [vmem:[#allocation13 + $0x500] sm:$0xf]
          %v10370 = vld [vmem:[#allocation13 + $0x504] sm:$0xf]
          %v10371 = vld [vmem:[#allocation13 + $0x508] sm:$0xf]
          %v10372 = vld [vmem:[#allocation13 + $0x50c] sm:$0xf]
          %v10373 = vld [vmem:[#allocation13 + $0x510] sm:$0xf]
          %v10374 = vld [vmem:[#allocation13 + $0x514] sm:$0xf]
          %v10375 = vld [vmem:[#allocation13 + $0x518] sm:$0xf]
          %v10376 = vld [vmem:[#allocation13 + $0x51c] sm:$0xf]
          %v10377 = vld [vmem:[#allocation13 + $0x520] sm:$0xf]
          %v10378 = vld [vmem:[#allocation13 + $0x524] sm:$0xf]
          %v10379 = vld [vmem:[#allocation13 + $0x528] sm:$0xf]
          %v10380 = vld [vmem:[#allocation13 + $0x52c] sm:$0xf]
          %v10381 = vld [vmem:[#allocation13 + $0x530] sm:$0xf]
          %v10382 = vld [vmem:[#allocation13 + $0x534] sm:$0xf]
          %v10383 = vld [vmem:[#allocation13 + $0x538] sm:$0xf]
          %v10384 = vld [vmem:[#allocation13 + $0x53c] sm:$0xf]
          %v10385 = vld [vmem:[#allocation13 + $0x540] sm:$0xf]
          %v10386 = vld [vmem:[#allocation13 + $0x544] sm:$0xf]
          %v10387 = vld [vmem:[#allocation13 + $0x548] sm:$0xf]
          %v10388 = vld [vmem:[#allocation13 + $0x54c] sm:$0xf]
          %v10389 = vld [vmem:[#allocation13 + $0x550] sm:$0xf]
          %v10390 = vld [vmem:[#allocation13 + $0x554] sm:$0xf]
          %v10391 = vld [vmem:[#allocation13 + $0x558] sm:$0xf]
          %v10392 = vld [vmem:[#allocation13 + $0x55c] sm:$0xf]
          %v10393 = vld [vmem:[#allocation13 + $0x560] sm:$0xf]
          %v10394 = vld [vmem:[#allocation13 + $0x564] sm:$0xf]
          %v10395 = vld [vmem:[#allocation13 + $0x568] sm:$0xf]
          %v10396 = vld [vmem:[#allocation13 + $0x56c] sm:$0xf]
          %v10397 = vld [vmem:[#allocation13 + $0x570] sm:$0xf]
          %v10398 = vld [vmem:[#allocation13 + $0x574] sm:$0xf]
          %v10399 = vld [vmem:[#allocation13 + $0x578] sm:$0xf]
          %v10400 = vld [vmem:[#allocation13 + $0x57c] sm:$0xf]
          %v10401 = vld [vmem:[#allocation13 + $0x580] sm:$0xf]
          %v10402 = vld [vmem:[#allocation13 + $0x584] sm:$0xf]
          %v10403 = vld [vmem:[#allocation13 + $0x588] sm:$0xf]
          %v10404 = vld [vmem:[#allocation13 + $0x58c] sm:$0xf]
          %v10405 = vld [vmem:[#allocation13 + $0x590] sm:$0xf]
          %v10406 = vld [vmem:[#allocation13 + $0x594] sm:$0xf]
          %v10407 = vld [vmem:[#allocation13 + $0x598] sm:$0xf]
          %v10408 = vld [vmem:[#allocation13 + $0x59c] sm:$0xf]
          %v10409 = vld [vmem:[#allocation13 + $0x5a0] sm:$0xf]
          %v10410 = vld [vmem:[#allocation13 + $0x5a4] sm:$0xf]
          %v10411 = vld [vmem:[#allocation13 + $0x5a8] sm:$0xf]
          %v10412 = vld [vmem:[#allocation13 + $0x5ac] sm:$0xf]
          %v10413 = vld [vmem:[#allocation13 + $0x5b0] sm:$0xf]
          %v10414 = vld [vmem:[#allocation13 + $0x5b4] sm:$0xf]
          %v10415 = vld [vmem:[#allocation13 + $0x5b8] sm:$0xf]
          %v10416 = vld [vmem:[#allocation13 + $0x5bc] sm:$0xf]
          %v10417 = vld [vmem:[#allocation13 + $0x5c0] sm:$0xf]
          %v10418 = vld [vmem:[#allocation13 + $0x5c4] sm:$0xf]
          %v10419 = vld [vmem:[#allocation13 + $0x5c8] sm:$0xf]
          %v10420 = vld [vmem:[#allocation13 + $0x5cc] sm:$0xf]
          %v10421 = vld [vmem:[#allocation13 + $0x5d0] sm:$0xf]
          %v10422 = vld [vmem:[#allocation13 + $0x5d4] sm:$0xf]
          %v10423 = vld [vmem:[#allocation13 + $0x5d8] sm:$0xf]
          %v10424 = vld [vmem:[#allocation13 + $0x5dc] sm:$0xf]
          %v10425 = vld [vmem:[#allocation13 + $0x5e0] sm:$0xf]
          %v10426 = vld [vmem:[#allocation13 + $0x5e4] sm:$0xf]
          %v10427 = vld [vmem:[#allocation13 + $0x5e8] sm:$0xf]
          %v10428 = vld [vmem:[#allocation13 + $0x5ec] sm:$0xf]
          %v10429 = vld [vmem:[#allocation13 + $0x5f0] sm:$0xf]
          %v10430 = vld [vmem:[#allocation13 + $0x5f4] sm:$0xf]
          %v10431 = vld [vmem:[#allocation13 + $0x5f8] sm:$0xf]
          %v10432 = vld [vmem:[#allocation13 + $0x5fc] sm:$0xf]
          %v10433 = vld [vmem:[#allocation13 + $0x600] sm:$0xf]
          %v10434 = vld [vmem:[#allocation13 + $0x604] sm:$0xf]
          %v10435 = vld [vmem:[#allocation13 + $0x608] sm:$0xf]
          %v10436 = vld [vmem:[#allocation13 + $0x60c] sm:$0xf]
          %v10437 = vld [vmem:[#allocation13 + $0x610] sm:$0xf]
          %v10438 = vld [vmem:[#allocation13 + $0x614] sm:$0xf]
          %v10439 = vld [vmem:[#allocation13 + $0x618] sm:$0xf]
          %v10440 = vld [vmem:[#allocation13 + $0x61c] sm:$0xf]
          %v10441 = vld [vmem:[#allocation13 + $0x620] sm:$0xf]
          %v10442 = vld [vmem:[#allocation13 + $0x624] sm:$0xf]
          %v10443 = vld [vmem:[#allocation13 + $0x628] sm:$0xf]
          %v10444 = vld [vmem:[#allocation13 + $0x62c] sm:$0xf]
          %v10445 = vld [vmem:[#allocation13 + $0x630] sm:$0xf]
          %v10446 = vld [vmem:[#allocation13 + $0x634] sm:$0xf]
          %v10447 = vld [vmem:[#allocation13 + $0x638] sm:$0xf]
          %v10448 = vld [vmem:[#allocation13 + $0x63c] sm:$0xf]
          %v10449 = vld [vmem:[#allocation13 + $0x640] sm:$0xf]
          %v10450 = vld [vmem:[#allocation13 + $0x644] sm:$0xf]
          %v10451 = vld [vmem:[#allocation13 + $0x648] sm:$0xf]
          %v10452 = vld [vmem:[#allocation13 + $0x64c] sm:$0xf]
          %v10453 = vld [vmem:[#allocation13 + $0x650] sm:$0xf]
          %v10454 = vld [vmem:[#allocation13 + $0x654] sm:$0xf]
          %v10455 = vld [vmem:[#allocation13 + $0x658] sm:$0xf]
          %v10456 = vld [vmem:[#allocation13 + $0x65c] sm:$0xf]
          %v10457 = vld [vmem:[#allocation13 + $0x660] sm:$0xf]
          %v10458 = vld [vmem:[#allocation13 + $0x664] sm:$0xf]
          %v10459 = vld [vmem:[#allocation13 + $0x668] sm:$0xf]
          %v10460 = vld [vmem:[#allocation13 + $0x66c] sm:$0xf]
          %v10461 = vld [vmem:[#allocation13 + $0x670] sm:$0xf]
          %v10462 = vld [vmem:[#allocation13 + $0x674] sm:$0xf]
          %v10463 = vld [vmem:[#allocation13 + $0x678] sm:$0xf]
          %v10464 = vld [vmem:[#allocation13 + $0x67c] sm:$0xf]
          %v10465 = vld [vmem:[#allocation13 + $0x680] sm:$0xf]
          %v10466 = vld [vmem:[#allocation13 + $0x684] sm:$0xf]
          %v10467 = vld [vmem:[#allocation13 + $0x688] sm:$0xf]
          %v10468 = vld [vmem:[#allocation13 + $0x68c] sm:$0xf]
          %v10469 = vld [vmem:[#allocation13 + $0x690] sm:$0xf]
          %v10470 = vld [vmem:[#allocation13 + $0x694] sm:$0xf]
          %v10471 = vld [vmem:[#allocation13 + $0x698] sm:$0xf]
          %v10472 = vld [vmem:[#allocation13 + $0x69c] sm:$0xf]
          %v10473 = vld [vmem:[#allocation13 + $0x6a0] sm:$0xf]
          %v10474 = vld [vmem:[#allocation13 + $0x6a4] sm:$0xf]
          %v10475 = vld [vmem:[#allocation13 + $0x6a8] sm:$0xf]
          %v10476 = vld [vmem:[#allocation13 + $0x6ac] sm:$0xf]
          %v10477 = vld [vmem:[#allocation13 + $0x6b0] sm:$0xf]
          %v10478 = vld [vmem:[#allocation13 + $0x6b4] sm:$0xf]
          %v10479 = vld [vmem:[#allocation13 + $0x6b8] sm:$0xf]
          %v10480 = vld [vmem:[#allocation13 + $0x6bc] sm:$0xf]
          %v10481 = vld [vmem:[#allocation13 + $0x6c0] sm:$0xf]
          %v10482 = vld [vmem:[#allocation13 + $0x6c4] sm:$0xf]
          %v10483 = vld [vmem:[#allocation13 + $0x6c8] sm:$0xf]
          %v10484 = vld [vmem:[#allocation13 + $0x6cc] sm:$0xf]
          %v10485 = vld [vmem:[#allocation13 + $0x6d0] sm:$0xf]
          %v10486 = vld [vmem:[#allocation13 + $0x6d4] sm:$0xf]
          %v10487 = vld [vmem:[#allocation13 + $0x6d8] sm:$0xf]
          %v10488 = vld [vmem:[#allocation13 + $0x6dc] sm:$0xf]
          %v10489 = vld [vmem:[#allocation13 + $0x6e0] sm:$0xf]
          %v10490 = vld [vmem:[#allocation13 + $0x6e4] sm:$0xf]
          %v10491 = vld [vmem:[#allocation13 + $0x6e8] sm:$0xf]
          %v10492 = vld [vmem:[#allocation13 + $0x6ec] sm:$0xf]
          %v10493 = vld [vmem:[#allocation13 + $0x6f0] sm:$0xf]
          %v10494 = vld [vmem:[#allocation13 + $0x6f4] sm:$0xf]
          %v10495 = vld [vmem:[#allocation13 + $0x6f8] sm:$0xf]
          %v10496 = vld [vmem:[#allocation13 + $0x6fc] sm:$0xf]
          %v10497 = vld [vmem:[#allocation13 + $0x700] sm:$0xf]
          %v10498 = vld [vmem:[#allocation13 + $0x704] sm:$0xf]
          %v10499 = vld [vmem:[#allocation13 + $0x708] sm:$0xf]
          %v10500 = vld [vmem:[#allocation13 + $0x70c] sm:$0xf]
          %v10501 = vld [vmem:[#allocation13 + $0x710] sm:$0xf]
          %v10502 = vld [vmem:[#allocation13 + $0x714] sm:$0xf]
          %v10503 = vld [vmem:[#allocation13 + $0x718] sm:$0xf]
          %v10504 = vld [vmem:[#allocation13 + $0x71c] sm:$0xf]
          %v10505 = vld [vmem:[#allocation13 + $0x720] sm:$0xf]
          %v10506 = vld [vmem:[#allocation13 + $0x724] sm:$0xf]
          %v10507 = vld [vmem:[#allocation13 + $0x728] sm:$0xf]
          %v10508 = vld [vmem:[#allocation13 + $0x72c] sm:$0xf]
          %v10509 = vld [vmem:[#allocation13 + $0x730] sm:$0xf]
          %v10510 = vld [vmem:[#allocation13 + $0x734] sm:$0xf]
          %v10511 = vld [vmem:[#allocation13 + $0x738] sm:$0xf]
          %v10512 = vld [vmem:[#allocation13 + $0x73c] sm:$0xf]
          %v10513 = vld [vmem:[#allocation13 + $0x740] sm:$0xf]
          %v10514 = vld [vmem:[#allocation13 + $0x744] sm:$0xf]
          %v10515 = vld [vmem:[#allocation13 + $0x748] sm:$0xf]
          %v10516 = vld [vmem:[#allocation13 + $0x74c] sm:$0xf]
          %v10517 = vld [vmem:[#allocation13 + $0x750] sm:$0xf]
          %v10518 = vld [vmem:[#allocation13 + $0x754] sm:$0xf]
          %v10519 = vld [vmem:[#allocation13 + $0x758] sm:$0xf]
          %v10520 = vld [vmem:[#allocation13 + $0x75c] sm:$0xf]
          %v10521 = vld [vmem:[#allocation13 + $0x760] sm:$0xf]
          %v10522 = vld [vmem:[#allocation13 + $0x764] sm:$0xf]
          %v10523 = vld [vmem:[#allocation13 + $0x768] sm:$0xf]
          %v10524 = vld [vmem:[#allocation13 + $0x76c] sm:$0xf]
          %v10525 = vld [vmem:[#allocation13 + $0x770] sm:$0xf]
          %v10526 = vld [vmem:[#allocation13 + $0x774] sm:$0xf]
          %v10527 = vld [vmem:[#allocation13 + $0x778] sm:$0xf]
          %v10528 = vld [vmem:[#allocation13 + $0x77c] sm:$0xf]
          %v10529 = vld [vmem:[#allocation13 + $0x780] sm:$0xf]
          %v10530 = vld [vmem:[#allocation13 + $0x784] sm:$0xf]
          %v10531 = vld [vmem:[#allocation13 + $0x788] sm:$0xf]
          %v10532 = vld [vmem:[#allocation13 + $0x78c] sm:$0xf]
          %v10533 = vld [vmem:[#allocation13 + $0x790] sm:$0xf]
          %v10534 = vld [vmem:[#allocation13 + $0x794] sm:$0xf]
          %v10535 = vld [vmem:[#allocation13 + $0x798] sm:$0xf]
          %v10536 = vld [vmem:[#allocation13 + $0x79c] sm:$0xf]
          %v10537 = vld [vmem:[#allocation13 + $0x7a0] sm:$0xf]
          %v10538 = vld [vmem:[#allocation13 + $0x7a4] sm:$0xf]
          %v10539 = vld [vmem:[#allocation13 + $0x7a8] sm:$0xf]
          %v10540 = vld [vmem:[#allocation13 + $0x7ac] sm:$0xf]
          %v10541 = vld [vmem:[#allocation13 + $0x7b0] sm:$0xf]
          %v10542 = vld [vmem:[#allocation13 + $0x7b4] sm:$0xf]
          %v10543 = vld [vmem:[#allocation13 + $0x7b8] sm:$0xf]
          %v10544 = vld [vmem:[#allocation13 + $0x7bc] sm:$0xf]
          %v10545 = vld [vmem:[#allocation13 + $0x7c0] sm:$0xf]
          %v10546 = vld [vmem:[#allocation13 + $0x7c4] sm:$0xf]
          %v10547 = vld [vmem:[#allocation13 + $0x7c8] sm:$0xf]
          %v10548 = vld [vmem:[#allocation13 + $0x7cc] sm:$0xf]
          %v10549 = vld [vmem:[#allocation13 + $0x7d0] sm:$0xf]
          %v10550 = vld [vmem:[#allocation13 + $0x7d4] sm:$0xf]
          %v10551 = vld [vmem:[#allocation13 + $0x7d8] sm:$0xf]
          %v10552 = vld [vmem:[#allocation13 + $0x7dc] sm:$0xf]
          %v10553 = vld [vmem:[#allocation13 + $0x7e0] sm:$0xf]
          %v10554 = vld [vmem:[#allocation13 + $0x7e4] sm:$0xf]
          %v10555 = vld [vmem:[#allocation13 + $0x7e8] sm:$0xf]
          %v10556 = vld [vmem:[#allocation13 + $0x7ec] sm:$0xf]
          %v10557 = vld [vmem:[#allocation13 + $0x7f0] sm:$0xf]
          %v10558 = vld [vmem:[#allocation13 + $0x7f4] sm:$0xf]
          %v10559 = vld [vmem:[#allocation13 + $0x7f8] sm:$0xf]
          %v10560 = vld [vmem:[#allocation13 + $0x7fc] sm:$0xf]
          %v10561 = vld [vmem:[#allocation15] sm:$0x1]
          %v10563 = vlaneseq
          %v10564 = vshrl.u32 %v10563, 7
          %v10565 = vsub.s32 0, %v10564
          %v10566 = vrot.slane %v10561, %v10565
          %v11080 = vunpack.c.l.b16 %v10049
          %v11081 = vunpack.c.l.b16 %v10050
          %v11082 = vunpack.c.l.b16 %v10051
          %v11083 = vunpack.c.l.b16 %v10052
          %v11084 = vunpack.c.l.b16 %v10053
          %v11085 = vunpack.c.l.b16 %v10054
          %v11086 = vunpack.c.l.b16 %v10055
          %v11087 = vunpack.c.l.b16 %v10056
          %v11088 = vunpack.c.l.b16 %v10057
          %v11089 = vunpack.c.l.b16 %v10058
          %v11090 = vunpack.c.l.b16 %v10059
          %v11091 = vunpack.c.l.b16 %v10060
          %v11092 = vunpack.c.l.b16 %v10061
          %v11093 = vunpack.c.l.b16 %v10062
          %v11094 = vunpack.c.l.b16 %v10063
          %v11095 = vunpack.c.l.b16 %v10064
          %v11096 = vunpack.c.l.b16 %v10065
          %v11097 = vunpack.c.l.b16 %v10066
          %v11098 = vunpack.c.l.b16 %v10067
          %v11099 = vunpack.c.l.b16 %v10068
          %v11100 = vunpack.c.l.b16 %v10069
          %v11101 = vunpack.c.l.b16 %v10070
          %v11102 = vunpack.c.l.b16 %v10071
          %v11103 = vunpack.c.l.b16 %v10072
          %v11104 = vunpack.c.l.b16 %v10073
          %v11105 = vunpack.c.l.b16 %v10074
          %v11106 = vunpack.c.l.b16 %v10075
          %v11107 = vunpack.c.l.b16 %v10076
          %v11108 = vunpack.c.l.b16 %v10077
          %v11109 = vunpack.c.l.b16 %v10078
          %v11110 = vunpack.c.l.b16 %v10079
          %v11111 = vunpack.c.l.b16 %v10080
          %v11112 = vunpack.c.l.b16 %v10081
          %v11113 = vunpack.c.l.b16 %v10082
          %v11114 = vunpack.c.l.b16 %v10083
          %v11115 = vunpack.c.l.b16 %v10084
          %v11116 = vunpack.c.l.b16 %v10085
          %v11117 = vunpack.c.l.b16 %v10086
          %v11118 = vunpack.c.l.b16 %v10087
          %v11119 = vunpack.c.l.b16 %v10088
          %v11120 = vunpack.c.l.b16 %v10089
          %v11121 = vunpack.c.l.b16 %v10090
          %v11122 = vunpack.c.l.b16 %v10091
          %v11123 = vunpack.c.l.b16 %v10092
          %v11124 = vunpack.c.l.b16 %v10093
          %v11125 = vunpack.c.l.b16 %v10094
          %v11126 = vunpack.c.l.b16 %v10095
          %v11127 = vunpack.c.l.b16 %v10096
          %v11128 = vunpack.c.l.b16 %v10097
          %v11129 = vunpack.c.l.b16 %v10098
          %v11130 = vunpack.c.l.b16 %v10099
          %v11131 = vunpack.c.l.b16 %v10100
          %v11132 = vunpack.c.l.b16 %v10101
          %v11133 = vunpack.c.l.b16 %v10102
          %v11134 = vunpack.c.l.b16 %v10103
          %v11135 = vunpack.c.l.b16 %v10104
          %v11136 = vunpack.c.l.b16 %v10105
          %v11137 = vunpack.c.l.b16 %v10106
          %v11138 = vunpack.c.l.b16 %v10107
          %v11139 = vunpack.c.l.b16 %v10108
          %v11140 = vunpack.c.l.b16 %v10109
          %v11141 = vunpack.c.l.b16 %v10110
          %v11142 = vunpack.c.l.b16 %v10111
          %v11143 = vunpack.c.l.b16 %v10112
          %v11144 = vunpack.c.l.b16 %v10113
          %v11145 = vunpack.c.l.b16 %v10114
          %v11146 = vunpack.c.l.b16 %v10115
          %v11147 = vunpack.c.l.b16 %v10116
          %v11148 = vunpack.c.l.b16 %v10117
          %v11149 = vunpack.c.l.b16 %v10118
          %v11150 = vunpack.c.l.b16 %v10119
          %v11151 = vunpack.c.l.b16 %v10120
          %v11152 = vunpack.c.l.b16 %v10121
          %v11153 = vunpack.c.l.b16 %v10122
          %v11154 = vunpack.c.l.b16 %v10123
          %v11155 = vunpack.c.l.b16 %v10124
          %v11156 = vunpack.c.l.b16 %v10125
          %v11157 = vunpack.c.l.b16 %v10126
          %v11158 = vunpack.c.l.b16 %v10127
          %v11159 = vunpack.c.l.b16 %v10128
          %v11160 = vunpack.c.l.b16 %v10129
          %v11161 = vunpack.c.l.b16 %v10130
          %v11162 = vunpack.c.l.b16 %v10131
          %v11163 = vunpack.c.l.b16 %v10132
          %v11164 = vunpack.c.l.b16 %v10133
          %v11165 = vunpack.c.l.b16 %v10134
          %v11166 = vunpack.c.l.b16 %v10135
          %v11167 = vunpack.c.l.b16 %v10136
          %v11168 = vunpack.c.l.b16 %v10137
          %v11169 = vunpack.c.l.b16 %v10138
          %v11170 = vunpack.c.l.b16 %v10139
          %v11171 = vunpack.c.l.b16 %v10140
          %v11172 = vunpack.c.l.b16 %v10141
          %v11173 = vunpack.c.l.b16 %v10142
          %v11174 = vunpack.c.l.b16 %v10143
          %v11175 = vunpack.c.l.b16 %v10144
          %v11176 = vunpack.c.l.b16 %v10145
          %v11177 = vunpack.c.l.b16 %v10146
          %v11178 = vunpack.c.l.b16 %v10147
          %v11179 = vunpack.c.l.b16 %v10148
          %v11180 = vunpack.c.l.b16 %v10149
          %v11181 = vunpack.c.l.b16 %v10150
          %v11182 = vunpack.c.l.b16 %v10151
          %v11183 = vunpack.c.l.b16 %v10152
          %v11184 = vunpack.c.l.b16 %v10153
          %v11185 = vunpack.c.l.b16 %v10154
          %v11186 = vunpack.c.l.b16 %v10155
          %v11187 = vunpack.c.l.b16 %v10156
          %v11188 = vunpack.c.l.b16 %v10157
          %v11189 = vunpack.c.l.b16 %v10158
          %v11190 = vunpack.c.l.b16 %v10159
          %v11191 = vunpack.c.l.b16 %v10160
          %v11192 = vunpack.c.l.b16 %v10161
          %v11193 = vunpack.c.l.b16 %v10162
          %v11194 = vunpack.c.l.b16 %v10163
          %v11195 = vunpack.c.l.b16 %v10164
          %v11196 = vunpack.c.l.b16 %v10165
          %v11197 = vunpack.c.l.b16 %v10166
          %v11198 = vunpack.c.l.b16 %v10167
          %v11199 = vunpack.c.l.b16 %v10168
          %v11200 = vunpack.c.l.b16 %v10169
          %v11201 = vunpack.c.l.b16 %v10170
          %v11202 = vunpack.c.l.b16 %v10171
          %v11203 = vunpack.c.l.b16 %v10172
          %v11204 = vunpack.c.l.b16 %v10173
          %v11205 = vunpack.c.l.b16 %v10174
          %v11206 = vunpack.c.l.b16 %v10175
          %v11207 = vunpack.c.l.b16 %v10176
          %v11208 = vunpack.c.l.b16 %v10177
          %v11209 = vunpack.c.l.b16 %v10178
          %v11210 = vunpack.c.l.b16 %v10179
          %v11211 = vunpack.c.l.b16 %v10180
          %v11212 = vunpack.c.l.b16 %v10181
          %v11213 = vunpack.c.l.b16 %v10182
          %v11214 = vunpack.c.l.b16 %v10183
          %v11215 = vunpack.c.l.b16 %v10184
          %v11216 = vunpack.c.l.b16 %v10185
          %v11217 = vunpack.c.l.b16 %v10186
          %v11218 = vunpack.c.l.b16 %v10187
          %v11219 = vunpack.c.l.b16 %v10188
          %v11220 = vunpack.c.l.b16 %v10189
          %v11221 = vunpack.c.l.b16 %v10190
          %v11222 = vunpack.c.l.b16 %v10191
          %v11223 = vunpack.c.l.b16 %v10192
          %v11224 = vunpack.c.l.b16 %v10193
          %v11225 = vunpack.c.l.b16 %v10194
          %v11226 = vunpack.c.l.b16 %v10195
          %v11227 = vunpack.c.l.b16 %v10196
          %v11228 = vunpack.c.l.b16 %v10197
          %v11229 = vunpack.c.l.b16 %v10198
          %v11230 = vunpack.c.l.b16 %v10199
          %v11231 = vunpack.c.l.b16 %v10200
          %v11232 = vunpack.c.l.b16 %v10201
          %v11233 = vunpack.c.l.b16 %v10202
          %v11234 = vunpack.c.l.b16 %v10203
          %v11235 = vunpack.c.l.b16 %v10204
          %v11236 = vunpack.c.l.b16 %v10205
          %v11237 = vunpack.c.l.b16 %v10206
          %v11238 = vunpack.c.l.b16 %v10207
          %v11239 = vunpack.c.l.b16 %v10208
          %v11240 = vunpack.c.l.b16 %v10209
          %v11241 = vunpack.c.l.b16 %v10210
          %v11242 = vunpack.c.l.b16 %v10211
          %v11243 = vunpack.c.l.b16 %v10212
          %v11244 = vunpack.c.l.b16 %v10213
          %v11245 = vunpack.c.l.b16 %v10214
          %v11246 = vunpack.c.l.b16 %v10215
          %v11247 = vunpack.c.l.b16 %v10216
          %v11248 = vunpack.c.l.b16 %v10217
          %v11249 = vunpack.c.l.b16 %v10218
          %v11250 = vunpack.c.l.b16 %v10219
          %v11251 = vunpack.c.l.b16 %v10220
          %v11252 = vunpack.c.l.b16 %v10221
          %v11253 = vunpack.c.l.b16 %v10222
          %v11254 = vunpack.c.l.b16 %v10223
          %v11255 = vunpack.c.l.b16 %v10224
          %v11256 = vunpack.c.l.b16 %v10225
          %v11257 = vunpack.c.l.b16 %v10226
          %v11258 = vunpack.c.l.b16 %v10227
          %v11259 = vunpack.c.l.b16 %v10228
          %v11260 = vunpack.c.l.b16 %v10229
          %v11261 = vunpack.c.l.b16 %v10230
          %v11262 = vunpack.c.l.b16 %v10231
          %v11263 = vunpack.c.l.b16 %v10232
          %v11264 = vunpack.c.l.b16 %v10233
          %v11265 = vunpack.c.l.b16 %v10234
          %v11266 = vunpack.c.l.b16 %v10235
          %v11267 = vunpack.c.l.b16 %v10236
          %v11268 = vunpack.c.l.b16 %v10237
          %v11269 = vunpack.c.l.b16 %v10238
          %v11270 = vunpack.c.l.b16 %v10239
          %v11271 = vunpack.c.l.b16 %v10240
          %v11272 = vunpack.c.l.b16 %v10241
          %v11273 = vunpack.c.l.b16 %v10242
          %v11274 = vunpack.c.l.b16 %v10243
          %v11275 = vunpack.c.l.b16 %v10244
          %v11276 = vunpack.c.l.b16 %v10245
          %v11277 = vunpack.c.l.b16 %v10246
          %v11278 = vunpack.c.l.b16 %v10247
          %v11279 = vunpack.c.l.b16 %v10248
          %v11280 = vunpack.c.l.b16 %v10249
          %v11281 = vunpack.c.l.b16 %v10250
          %v11282 = vunpack.c.l.b16 %v10251
          %v11283 = vunpack.c.l.b16 %v10252
          %v11284 = vunpack.c.l.b16 %v10253
          %v11285 = vunpack.c.l.b16 %v10254
          %v11286 = vunpack.c.l.b16 %v10255
          %v11287 = vunpack.c.l.b16 %v10256
          %v11288 = vunpack.c.l.b16 %v10257
          %v11289 = vunpack.c.l.b16 %v10258
          %v11290 = vunpack.c.l.b16 %v10259
          %v11291 = vunpack.c.l.b16 %v10260
          %v11292 = vunpack.c.l.b16 %v10261
          %v11293 = vunpack.c.l.b16 %v10262
          %v11294 = vunpack.c.l.b16 %v10263
          %v11295 = vunpack.c.l.b16 %v10264
          %v11296 = vunpack.c.l.b16 %v10265
          %v11297 = vunpack.c.l.b16 %v10266
          %v11298 = vunpack.c.l.b16 %v10267
          %v11299 = vunpack.c.l.b16 %v10268
          %v11300 = vunpack.c.l.b16 %v10269
          %v11301 = vunpack.c.l.b16 %v10270
          %v11302 = vunpack.c.l.b16 %v10271
          %v11303 = vunpack.c.l.b16 %v10272
          %v11304 = vunpack.c.l.b16 %v10273
          %v11305 = vunpack.c.l.b16 %v10274
          %v11306 = vunpack.c.l.b16 %v10275
          %v11307 = vunpack.c.l.b16 %v10276
          %v11308 = vunpack.c.l.b16 %v10277
          %v11309 = vunpack.c.l.b16 %v10278
          %v11310 = vunpack.c.l.b16 %v10279
          %v11311 = vunpack.c.l.b16 %v10280
          %v11312 = vunpack.c.l.b16 %v10281
          %v11313 = vunpack.c.l.b16 %v10282
          %v11314 = vunpack.c.l.b16 %v10283
          %v11315 = vunpack.c.l.b16 %v10284
          %v11316 = vunpack.c.l.b16 %v10285
          %v11317 = vunpack.c.l.b16 %v10286
          %v11318 = vunpack.c.l.b16 %v10287
          %v11319 = vunpack.c.l.b16 %v10288
          %v11320 = vunpack.c.l.b16 %v10289
          %v11321 = vunpack.c.l.b16 %v10290
          %v11322 = vunpack.c.l.b16 %v10291
          %v11323 = vunpack.c.l.b16 %v10292
          %v11324 = vunpack.c.l.b16 %v10293
          %v11325 = vunpack.c.l.b16 %v10294
          %v11326 = vunpack.c.l.b16 %v10295
          %v11327 = vunpack.c.l.b16 %v10296
          %v11328 = vunpack.c.l.b16 %v10297
          %v11329 = vunpack.c.l.b16 %v10298
          %v11330 = vunpack.c.l.b16 %v10299
          %v11331 = vunpack.c.l.b16 %v10300
          %v11332 = vunpack.c.l.b16 %v10301
          %v11333 = vunpack.c.l.b16 %v10302
          %v11334 = vunpack.c.l.b16 %v10303
          %v11335 = vunpack.c.l.b16 %v10304
          %v11336 = vunpack.c.l.b16 %v10305
          %v11337 = vunpack.c.l.b16 %v10306
          %v11338 = vunpack.c.l.b16 %v10307
          %v11339 = vunpack.c.l.b16 %v10308
          %v11340 = vunpack.c.l.b16 %v10309
          %v11341 = vunpack.c.l.b16 %v10310
          %v11342 = vunpack.c.l.b16 %v10311
          %v11343 = vunpack.c.l.b16 %v10312
          %v11344 = vunpack.c.l.b16 %v10313
          %v11345 = vunpack.c.l.b16 %v10314
          %v11346 = vunpack.c.l.b16 %v10315
          %v11347 = vunpack.c.l.b16 %v10316
          %v11348 = vunpack.c.l.b16 %v10317
          %v11349 = vunpack.c.l.b16 %v10318
          %v11350 = vunpack.c.l.b16 %v10319
          %v11351 = vunpack.c.l.b16 %v10320
          %v11352 = vunpack.c.l.b16 %v10321
          %v11353 = vunpack.c.l.b16 %v10322
          %v11354 = vunpack.c.l.b16 %v10323
          %v11355 = vunpack.c.l.b16 %v10324
          %v11356 = vunpack.c.l.b16 %v10325
          %v11357 = vunpack.c.l.b16 %v10326
          %v11358 = vunpack.c.l.b16 %v10327
          %v11359 = vunpack.c.l.b16 %v10328
          %v11360 = vunpack.c.l.b16 %v10329
          %v11361 = vunpack.c.l.b16 %v10330
          %v11362 = vunpack.c.l.b16 %v10331
          %v11363 = vunpack.c.l.b16 %v10332
          %v11364 = vunpack.c.l.b16 %v10333
          %v11365 = vunpack.c.l.b16 %v10334
          %v11366 = vunpack.c.l.b16 %v10335
          %v11367 = vunpack.c.l.b16 %v10336
          %v11368 = vunpack.c.l.b16 %v10337
          %v11369 = vunpack.c.l.b16 %v10338
          %v11370 = vunpack.c.l.b16 %v10339
          %v11371 = vunpack.c.l.b16 %v10340
          %v11372 = vunpack.c.l.b16 %v10341
          %v11373 = vunpack.c.l.b16 %v10342
          %v11374 = vunpack.c.l.b16 %v10343
          %v11375 = vunpack.c.l.b16 %v10344
          %v11376 = vunpack.c.l.b16 %v10345
          %v11377 = vunpack.c.l.b16 %v10346
          %v11378 = vunpack.c.l.b16 %v10347
          %v11379 = vunpack.c.l.b16 %v10348
          %v11380 = vunpack.c.l.b16 %v10349
          %v11381 = vunpack.c.l.b16 %v10350
          %v11382 = vunpack.c.l.b16 %v10351
          %v11383 = vunpack.c.l.b16 %v10352
          %v11384 = vunpack.c.l.b16 %v10353
          %v11385 = vunpack.c.l.b16 %v10354
          %v11386 = vunpack.c.l.b16 %v10355
          %v11387 = vunpack.c.l.b16 %v10356
          %v11388 = vunpack.c.l.b16 %v10357
          %v11389 = vunpack.c.l.b16 %v10358
          %v11390 = vunpack.c.l.b16 %v10359
          %v11391 = vunpack.c.l.b16 %v10360
          %v11392 = vunpack.c.l.b16 %v10361
          %v11393 = vunpack.c.l.b16 %v10362
          %v11394 = vunpack.c.l.b16 %v10363
          %v11395 = vunpack.c.l.b16 %v10364
          %v11396 = vunpack.c.l.b16 %v10365
          %v11397 = vunpack.c.l.b16 %v10366
          %v11398 = vunpack.c.l.b16 %v10367
          %v11399 = vunpack.c.l.b16 %v10368
          %v11400 = vunpack.c.l.b16 %v10369
          %v11401 = vunpack.c.l.b16 %v10370
          %v11402 = vunpack.c.l.b16 %v10371
          %v11403 = vunpack.c.l.b16 %v10372
          %v11404 = vunpack.c.l.b16 %v10373
          %v11405 = vunpack.c.l.b16 %v10374
          %v11406 = vunpack.c.l.b16 %v10375
          %v11407 = vunpack.c.l.b16 %v10376
          %v11408 = vunpack.c.l.b16 %v10377
          %v11409 = vunpack.c.l.b16 %v10378
          %v11410 = vunpack.c.l.b16 %v10379
          %v11411 = vunpack.c.l.b16 %v10380
          %v11412 = vunpack.c.l.b16 %v10381
          %v11413 = vunpack.c.l.b16 %v10382
          %v11414 = vunpack.c.l.b16 %v10383
          %v11415 = vunpack.c.l.b16 %v10384
          %v11416 = vunpack.c.l.b16 %v10385
          %v11417 = vunpack.c.l.b16 %v10386
          %v11418 = vunpack.c.l.b16 %v10387
          %v11419 = vunpack.c.l.b16 %v10388
          %v11420 = vunpack.c.l.b16 %v10389
          %v11421 = vunpack.c.l.b16 %v10390
          %v11422 = vunpack.c.l.b16 %v10391
          %v11423 = vunpack.c.l.b16 %v10392
          %v11424 = vunpack.c.l.b16 %v10393
          %v11425 = vunpack.c.l.b16 %v10394
          %v11426 = vunpack.c.l.b16 %v10395
          %v11427 = vunpack.c.l.b16 %v10396
          %v11428 = vunpack.c.l.b16 %v10397
          %v11429 = vunpack.c.l.b16 %v10398
          %v11430 = vunpack.c.l.b16 %v10399
          %v11431 = vunpack.c.l.b16 %v10400
          %v11432 = vunpack.c.l.b16 %v10401
          %v11433 = vunpack.c.l.b16 %v10402
          %v11434 = vunpack.c.l.b16 %v10403
          %v11435 = vunpack.c.l.b16 %v10404
          %v11436 = vunpack.c.l.b16 %v10405
          %v11437 = vunpack.c.l.b16 %v10406
          %v11438 = vunpack.c.l.b16 %v10407
          %v11439 = vunpack.c.l.b16 %v10408
          %v11440 = vunpack.c.l.b16 %v10409
          %v11441 = vunpack.c.l.b16 %v10410
          %v11442 = vunpack.c.l.b16 %v10411
          %v11443 = vunpack.c.l.b16 %v10412
          %v11444 = vunpack.c.l.b16 %v10413
          %v11445 = vunpack.c.l.b16 %v10414
          %v11446 = vunpack.c.l.b16 %v10415
          %v11447 = vunpack.c.l.b16 %v10416
          %v11448 = vunpack.c.l.b16 %v10417
          %v11449 = vunpack.c.l.b16 %v10418
          %v11450 = vunpack.c.l.b16 %v10419
          %v11451 = vunpack.c.l.b16 %v10420
          %v11452 = vunpack.c.l.b16 %v10421
          %v11453 = vunpack.c.l.b16 %v10422
          %v11454 = vunpack.c.l.b16 %v10423
          %v11455 = vunpack.c.l.b16 %v10424
          %v11456 = vunpack.c.l.b16 %v10425
          %v11457 = vunpack.c.l.b16 %v10426
          %v11458 = vunpack.c.l.b16 %v10427
          %v11459 = vunpack.c.l.b16 %v10428
          %v11460 = vunpack.c.l.b16 %v10429
          %v11461 = vunpack.c.l.b16 %v10430
          %v11462 = vunpack.c.l.b16 %v10431
          %v11463 = vunpack.c.l.b16 %v10432
          %v11464 = vunpack.c.l.b16 %v10433
          %v11465 = vunpack.c.l.b16 %v10434
          %v11466 = vunpack.c.l.b16 %v10435
          %v11467 = vunpack.c.l.b16 %v10436
          %v11468 = vunpack.c.l.b16 %v10437
          %v11469 = vunpack.c.l.b16 %v10438
          %v11470 = vunpack.c.l.b16 %v10439
          %v11471 = vunpack.c.l.b16 %v10440
          %v11472 = vunpack.c.l.b16 %v10441
          %v11473 = vunpack.c.l.b16 %v10442
          %v11474 = vunpack.c.l.b16 %v10443
          %v11475 = vunpack.c.l.b16 %v10444
          %v11476 = vunpack.c.l.b16 %v10445
          %v11477 = vunpack.c.l.b16 %v10446
          %v11478 = vunpack.c.l.b16 %v10447
          %v11479 = vunpack.c.l.b16 %v10448
          %v11480 = vunpack.c.l.b16 %v10449
          %v11481 = vunpack.c.l.b16 %v10450
          %v11482 = vunpack.c.l.b16 %v10451
          %v11483 = vunpack.c.l.b16 %v10452
          %v11484 = vunpack.c.l.b16 %v10453
          %v11485 = vunpack.c.l.b16 %v10454
          %v11486 = vunpack.c.l.b16 %v10455
          %v11487 = vunpack.c.l.b16 %v10456
          %v11488 = vunpack.c.l.b16 %v10457
          %v11489 = vunpack.c.l.b16 %v10458
          %v11490 = vunpack.c.l.b16 %v10459
          %v11491 = vunpack.c.l.b16 %v10460
          %v11492 = vunpack.c.l.b16 %v10461
          %v11493 = vunpack.c.l.b16 %v10462
          %v11494 = vunpack.c.l.b16 %v10463
          %v11495 = vunpack.c.l.b16 %v10464
          %v11496 = vunpack.c.l.b16 %v10465
          %v11497 = vunpack.c.l.b16 %v10466
          %v11498 = vunpack.c.l.b16 %v10467
          %v11499 = vunpack.c.l.b16 %v10468
          %v11500 = vunpack.c.l.b16 %v10469
          %v11501 = vunpack.c.l.b16 %v10470
          %v11502 = vunpack.c.l.b16 %v10471
          %v11503 = vunpack.c.l.b16 %v10472
          %v11504 = vunpack.c.l.b16 %v10473
          %v11505 = vunpack.c.l.b16 %v10474
          %v11506 = vunpack.c.l.b16 %v10475
          %v11507 = vunpack.c.l.b16 %v10476
          %v11508 = vunpack.c.l.b16 %v10477
          %v11509 = vunpack.c.l.b16 %v10478
          %v11510 = vunpack.c.l.b16 %v10479
          %v11511 = vunpack.c.l.b16 %v10480
          %v11512 = vunpack.c.l.b16 %v10481
          %v11513 = vunpack.c.l.b16 %v10482
          %v11514 = vunpack.c.l.b16 %v10483
          %v11515 = vunpack.c.l.b16 %v10484
          %v11516 = vunpack.c.l.b16 %v10485
          %v11517 = vunpack.c.l.b16 %v10486
          %v11518 = vunpack.c.l.b16 %v10487
          %v11519 = vunpack.c.l.b16 %v10488
          %v11520 = vunpack.c.l.b16 %v10489
          %v11521 = vunpack.c.l.b16 %v10490
          %v11522 = vunpack.c.l.b16 %v10491
          %v11523 = vunpack.c.l.b16 %v10492
          %v11524 = vunpack.c.l.b16 %v10493
          %v11525 = vunpack.c.l.b16 %v10494
          %v11526 = vunpack.c.l.b16 %v10495
          %v11527 = vunpack.c.l.b16 %v10496
          %v11528 = vunpack.c.l.b16 %v10497
          %v11529 = vunpack.c.l.b16 %v10498
          %v11530 = vunpack.c.l.b16 %v10499
          %v11531 = vunpack.c.l.b16 %v10500
          %v11532 = vunpack.c.l.b16 %v10501
          %v11533 = vunpack.c.l.b16 %v10502
          %v11534 = vunpack.c.l.b16 %v10503
          %v11535 = vunpack.c.l.b16 %v10504
          %v11536 = vunpack.c.l.b16 %v10505
          %v11537 = vunpack.c.l.b16 %v10506
          %v11538 = vunpack.c.l.b16 %v10507
          %v11539 = vunpack.c.l.b16 %v10508
          %v11540 = vunpack.c.l.b16 %v10509
          %v11541 = vunpack.c.l.b16 %v10510
          %v11542 = vunpack.c.l.b16 %v10511
          %v11543 = vunpack.c.l.b16 %v10512
          %v11544 = vunpack.c.l.b16 %v10513
          %v11545 = vunpack.c.l.b16 %v10514
          %v11546 = vunpack.c.l.b16 %v10515
          %v11547 = vunpack.c.l.b16 %v10516
          %v11548 = vunpack.c.l.b16 %v10517
          %v11549 = vunpack.c.l.b16 %v10518
          %v11550 = vunpack.c.l.b16 %v10519
          %v11551 = vunpack.c.l.b16 %v10520
          %v11552 = vunpack.c.l.b16 %v10521
          %v11553 = vunpack.c.l.b16 %v10522
          %v11554 = vunpack.c.l.b16 %v10523
          %v11555 = vunpack.c.l.b16 %v10524
          %v11556 = vunpack.c.l.b16 %v10525
          %v11557 = vunpack.c.l.b16 %v10526
          %v11558 = vunpack.c.l.b16 %v10527
          %v11559 = vunpack.c.l.b16 %v10528
          %v11560 = vunpack.c.l.b16 %v10529
          %v11561 = vunpack.c.l.b16 %v10530
          %v11562 = vunpack.c.l.b16 %v10531
          %v11563 = vunpack.c.l.b16 %v10532
          %v11564 = vunpack.c.l.b16 %v10533
          %v11565 = vunpack.c.l.b16 %v10534
          %v11566 = vunpack.c.l.b16 %v10535
          %v11567 = vunpack.c.l.b16 %v10536
          %v11568 = vunpack.c.l.b16 %v10537
          %v11569 = vunpack.c.l.b16 %v10538
          %v11570 = vunpack.c.l.b16 %v10539
          %v11571 = vunpack.c.l.b16 %v10540
          %v11572 = vunpack.c.l.b16 %v10541
          %v11573 = vunpack.c.l.b16 %v10542
          %v11574 = vunpack.c.l.b16 %v10543
          %v11575 = vunpack.c.l.b16 %v10544
          %v11576 = vunpack.c.l.b16 %v10545
          %v11577 = vunpack.c.l.b16 %v10546
          %v11578 = vunpack.c.l.b16 %v10547
          %v11579 = vunpack.c.l.b16 %v10548
          %v11580 = vunpack.c.l.b16 %v10549
          %v11581 = vunpack.c.l.b16 %v10550
          %v11582 = vunpack.c.l.b16 %v10551
          %v11583 = vunpack.c.l.b16 %v10552
          %v11584 = vunpack.c.l.b16 %v10553
          %v11585 = vunpack.c.l.b16 %v10554
          %v11586 = vunpack.c.l.b16 %v10555
          %v11587 = vunpack.c.l.b16 %v10556
          %v11588 = vunpack.c.l.b16 %v10557
          %v11589 = vunpack.c.l.b16 %v10558
          %v11590 = vunpack.c.l.b16 %v10559
          %v11591 = vunpack.c.l.b16 %v10560
          %v11592 = vpack.c.b16 %v11081, %v11080
          %v11593 = vpack.c.b16 %v11083, %v11082
          %v11594 = vpack.c.b16 %v11085, %v11084
          %v11595 = vpack.c.b16 %v11087, %v11086
          %v11596 = vpack.c.b16 %v11089, %v11088
          %v11597 = vpack.c.b16 %v11091, %v11090
          %v11598 = vpack.c.b16 %v11093, %v11092
          %v11599 = vpack.c.b16 %v11095, %v11094
          %v11600 = vpack.c.b16 %v11097, %v11096
          %v11601 = vpack.c.b16 %v11099, %v11098
          %v11602 = vpack.c.b16 %v11101, %v11100
          %v11603 = vpack.c.b16 %v11103, %v11102
          %v11604 = vpack.c.b16 %v11105, %v11104
          %v11605 = vpack.c.b16 %v11107, %v11106
          %v11606 = vpack.c.b16 %v11109, %v11108
          %v11607 = vpack.c.b16 %v11111, %v11110
          %v11608 = vpack.c.b16 %v11113, %v11112
          %v11609 = vpack.c.b16 %v11115, %v11114
          %v11610 = vpack.c.b16 %v11117, %v11116
          %v11611 = vpack.c.b16 %v11119, %v11118
          %v11612 = vpack.c.b16 %v11121, %v11120
          %v11613 = vpack.c.b16 %v11123, %v11122
          %v11614 = vpack.c.b16 %v11125, %v11124
          %v11615 = vpack.c.b16 %v11127, %v11126
          %v11616 = vpack.c.b16 %v11129, %v11128
          %v11617 = vpack.c.b16 %v11131, %v11130
          %v11618 = vpack.c.b16 %v11133, %v11132
          %v11619 = vpack.c.b16 %v11135, %v11134
          %v11620 = vpack.c.b16 %v11137, %v11136
          %v11621 = vpack.c.b16 %v11139, %v11138
          %v11622 = vpack.c.b16 %v11141, %v11140
          %v11623 = vpack.c.b16 %v11143, %v11142
          %v11624 = vpack.c.b16 %v11145, %v11144
          %v11625 = vpack.c.b16 %v11147, %v11146
          %v11626 = vpack.c.b16 %v11149, %v11148
          %v11627 = vpack.c.b16 %v11151, %v11150
          %v11628 = vpack.c.b16 %v11153, %v11152
          %v11629 = vpack.c.b16 %v11155, %v11154
          %v11630 = vpack.c.b16 %v11157, %v11156
          %v11631 = vpack.c.b16 %v11159, %v11158
          %v11632 = vpack.c.b16 %v11161, %v11160
          %v11633 = vpack.c.b16 %v11163, %v11162
          %v11634 = vpack.c.b16 %v11165, %v11164
          %v11635 = vpack.c.b16 %v11167, %v11166
          %v11636 = vpack.c.b16 %v11169, %v11168
          %v11637 = vpack.c.b16 %v11171, %v11170
          %v11638 = vpack.c.b16 %v11173, %v11172
          %v11639 = vpack.c.b16 %v11175, %v11174
          %v11640 = vpack.c.b16 %v11177, %v11176
          %v11641 = vpack.c.b16 %v11179, %v11178
          %v11642 = vpack.c.b16 %v11181, %v11180
          %v11643 = vpack.c.b16 %v11183, %v11182
          %v11644 = vpack.c.b16 %v11185, %v11184
          %v11645 = vpack.c.b16 %v11187, %v11186
          %v11646 = vpack.c.b16 %v11189, %v11188
          %v11647 = vpack.c.b16 %v11191, %v11190
          %v11648 = vpack.c.b16 %v11193, %v11192
          %v11649 = vpack.c.b16 %v11195, %v11194
          %v11650 = vpack.c.b16 %v11197, %v11196
          %v11651 = vpack.c.b16 %v11199, %v11198
          %v11652 = vpack.c.b16 %v11201, %v11200
          %v11653 = vpack.c.b16 %v11203, %v11202
          %v11654 = vpack.c.b16 %v11205, %v11204
          %v11655 = vpack.c.b16 %v11207, %v11206
          %v11656 = vpack.c.b16 %v11209, %v11208
          %v11657 = vpack.c.b16 %v11211, %v11210
          %v11658 = vpack.c.b16 %v11213, %v11212
          %v11659 = vpack.c.b16 %v11215, %v11214
          %v11660 = vpack.c.b16 %v11217, %v11216
          %v11661 = vpack.c.b16 %v11219, %v11218
          %v11662 = vpack.c.b16 %v11221, %v11220
          %v11663 = vpack.c.b16 %v11223, %v11222
          %v11664 = vpack.c.b16 %v11225, %v11224
          %v11665 = vpack.c.b16 %v11227, %v11226
          %v11666 = vpack.c.b16 %v11229, %v11228
          %v11667 = vpack.c.b16 %v11231, %v11230
          %v11668 = vpack.c.b16 %v11233, %v11232
          %v11669 = vpack.c.b16 %v11235, %v11234
          %v11670 = vpack.c.b16 %v11237, %v11236
          %v11671 = vpack.c.b16 %v11239, %v11238
          %v11672 = vpack.c.b16 %v11241, %v11240
          %v11673 = vpack.c.b16 %v11243, %v11242
          %v11674 = vpack.c.b16 %v11245, %v11244
          %v11675 = vpack.c.b16 %v11247, %v11246
          %v11676 = vpack.c.b16 %v11249, %v11248
          %v11677 = vpack.c.b16 %v11251, %v11250
          %v11678 = vpack.c.b16 %v11253, %v11252
          %v11679 = vpack.c.b16 %v11255, %v11254
          %v11680 = vpack.c.b16 %v11257, %v11256
          %v11681 = vpack.c.b16 %v11259, %v11258
          %v11682 = vpack.c.b16 %v11261, %v11260
          %v11683 = vpack.c.b16 %v11263, %v11262
          %v11684 = vpack.c.b16 %v11265, %v11264
          %v11685 = vpack.c.b16 %v11267, %v11266
          %v11686 = vpack.c.b16 %v11269, %v11268
          %v11687 = vpack.c.b16 %v11271, %v11270
          %v11688 = vpack.c.b16 %v11273, %v11272
          %v11689 = vpack.c.b16 %v11275, %v11274
          %v11690 = vpack.c.b16 %v11277, %v11276
          %v11691 = vpack.c.b16 %v11279, %v11278
          %v11692 = vpack.c.b16 %v11281, %v11280
          %v11693 = vpack.c.b16 %v11283, %v11282
          %v11694 = vpack.c.b16 %v11285, %v11284
          %v11695 = vpack.c.b16 %v11287, %v11286
          %v11696 = vpack.c.b16 %v11289, %v11288
          %v11697 = vpack.c.b16 %v11291, %v11290
          %v11698 = vpack.c.b16 %v11293, %v11292
          %v11699 = vpack.c.b16 %v11295, %v11294
          %v11700 = vpack.c.b16 %v11297, %v11296
          %v11701 = vpack.c.b16 %v11299, %v11298
          %v11702 = vpack.c.b16 %v11301, %v11300
          %v11703 = vpack.c.b16 %v11303, %v11302
          %v11704 = vpack.c.b16 %v11305, %v11304
          %v11705 = vpack.c.b16 %v11307, %v11306
          %v11706 = vpack.c.b16 %v11309, %v11308
          %v11707 = vpack.c.b16 %v11311, %v11310
          %v11708 = vpack.c.b16 %v11313, %v11312
          %v11709 = vpack.c.b16 %v11315, %v11314
          %v11710 = vpack.c.b16 %v11317, %v11316
          %v11711 = vpack.c.b16 %v11319, %v11318
          %v11712 = vpack.c.b16 %v11321, %v11320
          %v11713 = vpack.c.b16 %v11323, %v11322
          %v11714 = vpack.c.b16 %v11325, %v11324
          %v11715 = vpack.c.b16 %v11327, %v11326
          %v11716 = vpack.c.b16 %v11329, %v11328
          %v11717 = vpack.c.b16 %v11331, %v11330
          %v11718 = vpack.c.b16 %v11333, %v11332
          %v11719 = vpack.c.b16 %v11335, %v11334
          %v11720 = vpack.c.b16 %v11337, %v11336
          %v11721 = vpack.c.b16 %v11339, %v11338
          %v11722 = vpack.c.b16 %v11341, %v11340
          %v11723 = vpack.c.b16 %v11343, %v11342
          %v11724 = vpack.c.b16 %v11345, %v11344
          %v11725 = vpack.c.b16 %v11347, %v11346
          %v11726 = vpack.c.b16 %v11349, %v11348
          %v11727 = vpack.c.b16 %v11351, %v11350
          %v11728 = vpack.c.b16 %v11353, %v11352
          %v11729 = vpack.c.b16 %v11355, %v11354
          %v11730 = vpack.c.b16 %v11357, %v11356
          %v11731 = vpack.c.b16 %v11359, %v11358
          %v11732 = vpack.c.b16 %v11361, %v11360
          %v11733 = vpack.c.b16 %v11363, %v11362
          %v11734 = vpack.c.b16 %v11365, %v11364
          %v11735 = vpack.c.b16 %v11367, %v11366
          %v11736 = vpack.c.b16 %v11369, %v11368
          %v11737 = vpack.c.b16 %v11371, %v11370
          %v11738 = vpack.c.b16 %v11373, %v11372
          %v11739 = vpack.c.b16 %v11375, %v11374
          %v11740 = vpack.c.b16 %v11377, %v11376
          %v11741 = vpack.c.b16 %v11379, %v11378
          %v11742 = vpack.c.b16 %v11381, %v11380
          %v11743 = vpack.c.b16 %v11383, %v11382
          %v11744 = vpack.c.b16 %v11385, %v11384
          %v11745 = vpack.c.b16 %v11387, %v11386
          %v11746 = vpack.c.b16 %v11389, %v11388
          %v11747 = vpack.c.b16 %v11391, %v11390
          %v11748 = vpack.c.b16 %v11393, %v11392
          %v11749 = vpack.c.b16 %v11395, %v11394
          %v11750 = vpack.c.b16 %v11397, %v11396
          %v11751 = vpack.c.b16 %v11399, %v11398
          %v11752 = vpack.c.b16 %v11401, %v11400
          %v11753 = vpack.c.b16 %v11403, %v11402
          %v11754 = vpack.c.b16 %v11405, %v11404
          %v11755 = vpack.c.b16 %v11407, %v11406
          %v11756 = vpack.c.b16 %v11409, %v11408
          %v11757 = vpack.c.b16 %v11411, %v11410
          %v11758 = vpack.c.b16 %v11413, %v11412
          %v11759 = vpack.c.b16 %v11415, %v11414
          %v11760 = vpack.c.b16 %v11417, %v11416
          %v11761 = vpack.c.b16 %v11419, %v11418
          %v11762 = vpack.c.b16 %v11421, %v11420
          %v11763 = vpack.c.b16 %v11423, %v11422
          %v11764 = vpack.c.b16 %v11425, %v11424
          %v11765 = vpack.c.b16 %v11427, %v11426
          %v11766 = vpack.c.b16 %v11429, %v11428
          %v11767 = vpack.c.b16 %v11431, %v11430
          %v11768 = vpack.c.b16 %v11433, %v11432
          %v11769 = vpack.c.b16 %v11435, %v11434
          %v11770 = vpack.c.b16 %v11437, %v11436
          %v11771 = vpack.c.b16 %v11439, %v11438
          %v11772 = vpack.c.b16 %v11441, %v11440
          %v11773 = vpack.c.b16 %v11443, %v11442
          %v11774 = vpack.c.b16 %v11445, %v11444
          %v11775 = vpack.c.b16 %v11447, %v11446
          %v11776 = vpack.c.b16 %v11449, %v11448
          %v11777 = vpack.c.b16 %v11451, %v11450
          %v11778 = vpack.c.b16 %v11453, %v11452
          %v11779 = vpack.c.b16 %v11455, %v11454
          %v11780 = vpack.c.b16 %v11457, %v11456
          %v11781 = vpack.c.b16 %v11459, %v11458
          %v11782 = vpack.c.b16 %v11461, %v11460
          %v11783 = vpack.c.b16 %v11463, %v11462
          %v11784 = vpack.c.b16 %v11465, %v11464
          %v11785 = vpack.c.b16 %v11467, %v11466
          %v11786 = vpack.c.b16 %v11469, %v11468
          %v11787 = vpack.c.b16 %v11471, %v11470
          %v11788 = vpack.c.b16 %v11473, %v11472
          %v11789 = vpack.c.b16 %v11475, %v11474
          %v11790 = vpack.c.b16 %v11477, %v11476
          %v11791 = vpack.c.b16 %v11479, %v11478
          %v11792 = vpack.c.b16 %v11481, %v11480
          %v11793 = vpack.c.b16 %v11483, %v11482
          %v11794 = vpack.c.b16 %v11485, %v11484
          %v11795 = vpack.c.b16 %v11487, %v11486
          %v11796 = vpack.c.b16 %v11489, %v11488
          %v11797 = vpack.c.b16 %v11491, %v11490
          %v11798 = vpack.c.b16 %v11493, %v11492
          %v11799 = vpack.c.b16 %v11495, %v11494
          %v11800 = vpack.c.b16 %v11497, %v11496
          %v11801 = vpack.c.b16 %v11499, %v11498
          %v11802 = vpack.c.b16 %v11501, %v11500
          %v11803 = vpack.c.b16 %v11503, %v11502
          %v11804 = vpack.c.b16 %v11505, %v11504
          %v11805 = vpack.c.b16 %v11507, %v11506
          %v11806 = vpack.c.b16 %v11509, %v11508
          %v11807 = vpack.c.b16 %v11511, %v11510
          %v11808 = vpack.c.b16 %v11513, %v11512
          %v11809 = vpack.c.b16 %v11515, %v11514
          %v11810 = vpack.c.b16 %v11517, %v11516
          %v11811 = vpack.c.b16 %v11519, %v11518
          %v11812 = vpack.c.b16 %v11521, %v11520
          %v11813 = vpack.c.b16 %v11523, %v11522
          %v11814 = vpack.c.b16 %v11525, %v11524
          %v11815 = vpack.c.b16 %v11527, %v11526
          %v11816 = vpack.c.b16 %v11529, %v11528
          %v11817 = vpack.c.b16 %v11531, %v11530
          %v11818 = vpack.c.b16 %v11533, %v11532
          %v11819 = vpack.c.b16 %v11535, %v11534
          %v11820 = vpack.c.b16 %v11537, %v11536
          %v11821 = vpack.c.b16 %v11539, %v11538
          %v11822 = vpack.c.b16 %v11541, %v11540
          %v11823 = vpack.c.b16 %v11543, %v11542
          %v11824 = vpack.c.b16 %v11545, %v11544
          %v11825 = vpack.c.b16 %v11547, %v11546
          %v11826 = vpack.c.b16 %v11549, %v11548
          %v11827 = vpack.c.b16 %v11551, %v11550
          %v11828 = vpack.c.b16 %v11553, %v11552
          %v11829 = vpack.c.b16 %v11555, %v11554
          %v11830 = vpack.c.b16 %v11557, %v11556
          %v11831 = vpack.c.b16 %v11559, %v11558
          %v11832 = vpack.c.b16 %v11561, %v11560
          %v11833 = vpack.c.b16 %v11563, %v11562
          %v11834 = vpack.c.b16 %v11565, %v11564
          %v11835 = vpack.c.b16 %v11567, %v11566
          %v11836 = vpack.c.b16 %v11569, %v11568
          %v11837 = vpack.c.b16 %v11571, %v11570
          %v11838 = vpack.c.b16 %v11573, %v11572
          %v11839 = vpack.c.b16 %v11575, %v11574
          %v11840 = vpack.c.b16 %v11577, %v11576
          %v11841 = vpack.c.b16 %v11579, %v11578
          %v11842 = vpack.c.b16 %v11581, %v11580
          %v11843 = vpack.c.b16 %v11583, %v11582
          %v11844 = vpack.c.b16 %v11585, %v11584
          %v11845 = vpack.c.b16 %v11587, %v11586
          %v11846 = vpack.c.b16 %v11589, %v11588
          %v11847 = vpack.c.b16 %v11591, %v11590
          %12104 = vmatprep.subr.bf16.mxu0 0
          %12105 = vmatpush1.bf16.msra.mxu0 %v11599
          %12106 = vmatprep.subr.bf16.mxu0 0
          %12107 = vmatpush1.bf16.msra.mxu0 %v11598
          %12108 = vmatprep.subr.bf16.mxu0 0
          %12109 = vmatpush1.bf16.msra.mxu0 %v11597
          %12110 = vmatprep.subr.bf16.mxu0 0
          %12111 = vmatpush1.bf16.msra.mxu0 %v11596
          %12112 = vmatprep.subr.bf16.mxu0 0
          %12113 = vmatpush1.bf16.msra.mxu0 %v11595
          %12114 = vmatprep.subr.bf16.mxu0 0
          %12115 = vmatpush1.bf16.msra.mxu0 %v11594
          %12116 = vmatprep.subr.bf16.mxu0 0
          %12117 = vmatpush1.bf16.msra.mxu0 %v11593
          %12118 = vmatprep.subr.bf16.mxu0 0
          %12119 = vmatpush1.bf16.msra.mxu0 %v11592
          %12120 = vmatprep.subr.bf16.mxu0 0
          %12121 = vmatpush2.bf16.msra.mxu0 %v11607
          %12122 = vmatprep.subr.bf16.mxu0 0
          %12123 = vmatpush2.bf16.msra.mxu0 %v11606
          %12124 = vmatprep.subr.bf16.mxu0 0
          %12125 = vmatpush2.bf16.msra.mxu0 %v11605
          %12126 = vmatprep.subr.bf16.mxu0 0
          %12127 = vmatpush2.bf16.msra.mxu0 %v11604
          %12128 = vmatprep.subr.bf16.mxu0 0
          %12129 = vmatpush2.bf16.msra.mxu0 %v11603
          %12130 = vmatprep.subr.bf16.mxu0 0
          %12131 = vmatpush2.bf16.msra.mxu0 %v11602
          %12132 = vmatprep.subr.bf16.mxu0 0
          %12133 = vmatpush2.bf16.msra.mxu0 %v11601
          %12134 = vmatprep.subr.bf16.mxu0 0
          %12135 = vmatpush2.bf16.msra.mxu0 %v11600
          %12136 = vmatprep.mubr.bf16.mxu0 %v10018
          %12137 = vmatmul.mubr.bf16.gmra.mxu0 %v10017
          %v12138 = vpop.f32.mrf.mxu0
          %v12139 = vadd.f32 %v10566, %v12138
          %v12140 = vpop.f32.mrf.mxu0
          %v12141 = vpop.f32.mrf.mxu0
          %v12142 = vpop.f32.mrf.mxu0
          %12143 = vdwg.mxu0
          %12144 = vmatprep.subr.bf16.mxu0 0
          %12145 = vmatpush1.bf16.msra.mxu0 %v11615
          %12146 = vmatprep.subr.bf16.mxu0 0
          %12147 = vmatpush1.bf16.msra.mxu0 %v11614
          %12148 = vmatprep.subr.bf16.mxu0 0
          %12149 = vmatpush1.bf16.msra.mxu0 %v11613
          %12150 = vmatprep.subr.bf16.mxu0 0
          %12151 = vmatpush1.bf16.msra.mxu0 %v11612
          %12152 = vmatprep.subr.bf16.mxu0 0
          %12153 = vmatpush1.bf16.msra.mxu0 %v11611
          %12154 = vmatprep.subr.bf16.mxu0 0
          %12155 = vmatpush1.bf16.msra.mxu0 %v11610
          %12156 = vmatprep.subr.bf16.mxu0 0
          %12157 = vmatpush1.bf16.msra.mxu0 %v11609
          %12158 = vmatprep.subr.bf16.mxu0 0
          %12159 = vmatpush1.bf16.msra.mxu0 %v11608
          %12160 = vmatprep.subr.bf16.mxu0 0
          %12161 = vmatpush2.bf16.msra.mxu0 %v11623
          %12162 = vmatprep.subr.bf16.mxu0 0
          %12163 = vmatpush2.bf16.msra.mxu0 %v11622
          %12164 = vmatprep.subr.bf16.mxu0 0
          %12165 = vmatpush2.bf16.msra.mxu0 %v11621
          %12166 = vmatprep.subr.bf16.mxu0 0
          %12167 = vmatpush2.bf16.msra.mxu0 %v11620
          %12168 = vmatprep.subr.bf16.mxu0 0
          %12169 = vmatpush2.bf16.msra.mxu0 %v11619
          %12170 = vmatprep.subr.bf16.mxu0 0
          %12171 = vmatpush2.bf16.msra.mxu0 %v11618
          %12172 = vmatprep.subr.bf16.mxu0 0
          %12173 = vmatpush2.bf16.msra.mxu0 %v11617
          %12174 = vmatprep.subr.bf16.mxu0 0
          %12175 = vmatpush2.bf16.msra.mxu0 %v11616
          %12176 = vmatprep.mubr.bf16.mxu0 %v10020
          %12177 = vmatmul.mubr.bf16.gmra.mxu0 %v10019
          %v12178 = vpop.f32.mrf.mxu0
          %v12179 = vadd.f32 %v12139, %v12178
          %v12180 = vpop.f32.mrf.mxu0
          %v12181 = vpop.f32.mrf.mxu0
          %v12182 = vpop.f32.mrf.mxu0
          %12183 = vdwg.mxu0
          %12184 = vmatprep.subr.bf16.mxu0 0
          %12185 = vmatpush1.bf16.msra.mxu0 %v11631
          %12186 = vmatprep.subr.bf16.mxu0 0
          %12187 = vmatpush1.bf16.msra.mxu0 %v11630
          %12188 = vmatprep.subr.bf16.mxu0 0
          %12189 = vmatpush1.bf16.msra.mxu0 %v11629
          %12190 = vmatprep.subr.bf16.mxu0 0
          %12191 = vmatpush1.bf16.msra.mxu0 %v11628
          %12192 = vmatprep.subr.bf16.mxu0 0
          %12193 = vmatpush1.bf16.msra.mxu0 %v11627
          %12194 = vmatprep.subr.bf16.mxu0 0
          %12195 = vmatpush1.bf16.msra.mxu0 %v11626
          %12196 = vmatprep.subr.bf16.mxu0 0
          %12197 = vmatpush1.bf16.msra.mxu0 %v11625
          %12198 = vmatprep.subr.bf16.mxu0 0
          %12199 = vmatpush1.bf16.msra.mxu0 %v11624
          %12200 = vmatprep.subr.bf16.mxu0 0
          %12201 = vmatpush2.bf16.msra.mxu0 %v11639
          %12202 = vmatprep.subr.bf16.mxu0 0
          %12203 = vmatpush2.bf16.msra.mxu0 %v11638
          %12204 = vmatprep.subr.bf16.mxu0 0
          %12205 = vmatpush2.bf16.msra.mxu0 %v11637
          %12206 = vmatprep.subr.bf16.mxu0 0
          %12207 = vmatpush2.bf16.msra.mxu0 %v11636
          %12208 = vmatprep.subr.bf16.mxu0 0
          %12209 = vmatpush2.bf16.msra.mxu0 %v11635
          %12210 = vmatprep.subr.bf16.mxu0 0
          %12211 = vmatpush2.bf16.msra.mxu0 %v11634
          %12212 = vmatprep.subr.bf16.mxu0 0
          %12213 = vmatpush2.bf16.msra.mxu0 %v11633
          %12214 = vmatprep.subr.bf16.mxu0 0
          %12215 = vmatpush2.bf16.msra.mxu0 %v11632
          %12216 = vmatprep.mubr.bf16.mxu0 %v10022
          %12217 = vmatmul.mubr.bf16.gmra.mxu0 %v10021
          %v12218 = vpop.f32.mrf.mxu0
          %v12219 = vadd.f32 %v12179, %v12218
          %v12220 = vpop.f32.mrf.mxu0
          %v12221 = vpop.f32.mrf.mxu0
          %v12222 = vpop.f32.mrf.mxu0
          %12223 = vdwg.mxu0
          %12224 = vmatprep.subr.bf16.mxu0 0
          %12225 = vmatpush1.bf16.msra.mxu0 %v11647
          %12226 = vmatprep.subr.bf16.mxu0 0
          %12227 = vmatpush1.bf16.msra.mxu0 %v11646
          %12228 = vmatprep.subr.bf16.mxu0 0
          %12229 = vmatpush1.bf16.msra.mxu0 %v11645
          %12230 = vmatprep.subr.bf16.mxu0 0
          %12231 = vmatpush1.bf16.msra.mxu0 %v11644
          %12232 = vmatprep.subr.bf16.mxu0 0
          %12233 = vmatpush1.bf16.msra.mxu0 %v11643
          %12234 = vmatprep.subr.bf16.mxu0 0
          %12235 = vmatpush1.bf16.msra.mxu0 %v11642
          %12236 = vmatprep.subr.bf16.mxu0 0
          %12237 = vmatpush1.bf16.msra.mxu0 %v11641
          %12238 = vmatprep.subr.bf16.mxu0 0
          %12239 = vmatpush1.bf16.msra.mxu0 %v11640
          %12240 = vmatprep.subr.bf16.mxu0 0
          %12241 = vmatpush2.bf16.msra.mxu0 %v11655
          %12242 = vmatprep.subr.bf16.mxu0 0
          %12243 = vmatpush2.bf16.msra.mxu0 %v11654
          %12244 = vmatprep.subr.bf16.mxu0 0
          %12245 = vmatpush2.bf16.msra.mxu0 %v11653
          %12246 = vmatprep.subr.bf16.mxu0 0
          %12247 = vmatpush2.bf16.msra.mxu0 %v11652
          %12248 = vmatprep.subr.bf16.mxu0 0
          %12249 = vmatpush2.bf16.msra.mxu0 %v11651
          %12250 = vmatprep.subr.bf16.mxu0 0
          %12251 = vmatpush2.bf16.msra.mxu0 %v11650
          %12252 = vmatprep.subr.bf16.mxu0 0
          %12253 = vmatpush2.bf16.msra.mxu0 %v11649
          %12254 = vmatprep.subr.bf16.mxu0 0
          %12255 = vmatpush2.bf16.msra.mxu0 %v11648
          %12256 = vmatprep.mubr.bf16.mxu0 %v10024
          %12257 = vmatmul.mubr.bf16.gmra.mxu0 %v10023
          %v12258 = vpop.f32.mrf.mxu0
          %v12259 = vadd.f32 %v12219, %v12258
          %v12260 = vpop.f32.mrf.mxu0
          %v12261 = vpop.f32.mrf.mxu0
          %v12262 = vpop.f32.mrf.mxu0
          %12263 = vdwg.mxu0
          %12264 = vmatprep.subr.bf16.mxu0 0
          %12265 = vmatpush1.bf16.msra.mxu0 %v11663
          %12266 = vmatprep.subr.bf16.mxu0 0
          %12267 = vmatpush1.bf16.msra.mxu0 %v11662
          %12268 = vmatprep.subr.bf16.mxu0 0
          %12269 = vmatpush1.bf16.msra.mxu0 %v11661
          %12270 = vmatprep.subr.bf16.mxu0 0
          %12271 = vmatpush1.bf16.msra.mxu0 %v11660
          %12272 = vmatprep.subr.bf16.mxu0 0
          %12273 = vmatpush1.bf16.msra.mxu0 %v11659
          %12274 = vmatprep.subr.bf16.mxu0 0
          %12275 = vmatpush1.bf16.msra.mxu0 %v11658
          %12276 = vmatprep.subr.bf16.mxu0 0
          %12277 = vmatpush1.bf16.msra.mxu0 %v11657
          %12278 = vmatprep.subr.bf16.mxu0 0
          %12279 = vmatpush1.bf16.msra.mxu0 %v11656
          %12280 = vmatprep.subr.bf16.mxu0 0
          %12281 = vmatpush2.bf16.msra.mxu0 %v11671
          %12282 = vmatprep.subr.bf16.mxu0 0
          %12283 = vmatpush2.bf16.msra.mxu0 %v11670
          %12284 = vmatprep.subr.bf16.mxu0 0
          %12285 = vmatpush2.bf16.msra.mxu0 %v11669
          %12286 = vmatprep.subr.bf16.mxu0 0
          %12287 = vmatpush2.bf16.msra.mxu0 %v11668
          %12288 = vmatprep.subr.bf16.mxu0 0
          %12289 = vmatpush2.bf16.msra.mxu0 %v11667
          %12290 = vmatprep.subr.bf16.mxu0 0
          %12291 = vmatpush2.bf16.msra.mxu0 %v11666
          %12292 = vmatprep.subr.bf16.mxu0 0
          %12293 = vmatpush2.bf16.msra.mxu0 %v11665
          %12294 = vmatprep.subr.bf16.mxu0 0
          %12295 = vmatpush2.bf16.msra.mxu0 %v11664
          %12296 = vmatprep.mubr.bf16.mxu0 %v10026
          %12297 = vmatmul.mubr.bf16.gmra.mxu0 %v10025
          %v12298 = vpop.f32.mrf.mxu0
          %v12299 = vadd.f32 %v12259, %v12298
          %v12300 = vpop.f32.mrf.mxu0
          %v12301 = vpop.f32.mrf.mxu0
          %v12302 = vpop.f32.mrf.mxu0
          %12303 = vdwg.mxu0
          %12304 = vmatprep.subr.bf16.mxu0 0
          %12305 = vmatpush1.bf16.msra.mxu0 %v11679
          %12306 = vmatprep.subr.bf16.mxu0 0
          %12307 = vmatpush1.bf16.msra.mxu0 %v11678
          %12308 = vmatprep.subr.bf16.mxu0 0
          %12309 = vmatpush1.bf16.msra.mxu0 %v11677
          %12310 = vmatprep.subr.bf16.mxu0 0
          %12311 = vmatpush1.bf16.msra.mxu0 %v11676
          %12312 = vmatprep.subr.bf16.mxu0 0
          %12313 = vmatpush1.bf16.msra.mxu0 %v11675
          %12314 = vmatprep.subr.bf16.mxu0 0
          %12315 = vmatpush1.bf16.msra.mxu0 %v11674
          %12316 = vmatprep.subr.bf16.mxu0 0
          %12317 = vmatpush1.bf16.msra.mxu0 %v11673
          %12318 = vmatprep.subr.bf16.mxu0 0
          %12319 = vmatpush1.bf16.msra.mxu0 %v11672
          %12320 = vmatprep.subr.bf16.mxu0 0
          %12321 = vmatpush2.bf16.msra.mxu0 %v11687
          %12322 = vmatprep.subr.bf16.mxu0 0
          %12323 = vmatpush2.bf16.msra.mxu0 %v11686
          %12324 = vmatprep.subr.bf16.mxu0 0
          %12325 = vmatpush2.bf16.msra.mxu0 %v11685
          %12326 = vmatprep.subr.bf16.mxu0 0
          %12327 = vmatpush2.bf16.msra.mxu0 %v11684
          %12328 = vmatprep.subr.bf16.mxu0 0
          %12329 = vmatpush2.bf16.msra.mxu0 %v11683
          %12330 = vmatprep.subr.bf16.mxu0 0
          %12331 = vmatpush2.bf16.msra.mxu0 %v11682
          %12332 = vmatprep.subr.bf16.mxu0 0
          %12333 = vmatpush2.bf16.msra.mxu0 %v11681
          %12334 = vmatprep.subr.bf16.mxu0 0
          %12335 = vmatpush2.bf16.msra.mxu0 %v11680
          %12336 = vmatprep.mubr.bf16.mxu0 %v10028
          %12337 = vmatmul.mubr.bf16.gmra.mxu0 %v10027
          %v12338 = vpop.f32.mrf.mxu0
          %v12339 = vadd.f32 %v12299, %v12338
          %v12340 = vpop.f32.mrf.mxu0
          %v12341 = vpop.f32.mrf.mxu0
          %v12342 = vpop.f32.mrf.mxu0
          %12343 = vdwg.mxu0
          %12344 = vmatprep.subr.bf16.mxu0 0
          %12345 = vmatpush1.bf16.msra.mxu0 %v11695
          %12346 = vmatprep.subr.bf16.mxu0 0
          %12347 = vmatpush1.bf16.msra.mxu0 %v11694
          %12348 = vmatprep.subr.bf16.mxu0 0
          %12349 = vmatpush1.bf16.msra.mxu0 %v11693
          %12350 = vmatprep.subr.bf16.mxu0 0
          %12351 = vmatpush1.bf16.msra.mxu0 %v11692
          %12352 = vmatprep.subr.bf16.mxu0 0
          %12353 = vmatpush1.bf16.msra.mxu0 %v11691
          %12354 = vmatprep.subr.bf16.mxu0 0
          %12355 = vmatpush1.bf16.msra.mxu0 %v11690
          %12356 = vmatprep.subr.bf16.mxu0 0
          %12357 = vmatpush1.bf16.msra.mxu0 %v11689
          %12358 = vmatprep.subr.bf16.mxu0 0
          %12359 = vmatpush1.bf16.msra.mxu0 %v11688
          %12360 = vmatprep.subr.bf16.mxu0 0
          %12361 = vmatpush2.bf16.msra.mxu0 %v11703
          %12362 = vmatprep.subr.bf16.mxu0 0
          %12363 = vmatpush2.bf16.msra.mxu0 %v11702
          %12364 = vmatprep.subr.bf16.mxu0 0
          %12365 = vmatpush2.bf16.msra.mxu0 %v11701
          %12366 = vmatprep.subr.bf16.mxu0 0
          %12367 = vmatpush2.bf16.msra.mxu0 %v11700
          %12368 = vmatprep.subr.bf16.mxu0 0
          %12369 = vmatpush2.bf16.msra.mxu0 %v11699
          %12370 = vmatprep.subr.bf16.mxu0 0
          %12371 = vmatpush2.bf16.msra.mxu0 %v11698
          %12372 = vmatprep.subr.bf16.mxu0 0
          %12373 = vmatpush2.bf16.msra.mxu0 %v11697
          %12374 = vmatprep.subr.bf16.mxu0 0
          %12375 = vmatpush2.bf16.msra.mxu0 %v11696
          %12376 = vmatprep.mubr.bf16.mxu0 %v10030
          %12377 = vmatmul.mubr.bf16.gmra.mxu0 %v10029
          %v12378 = vpop.f32.mrf.mxu0
          %v12379 = vadd.f32 %v12339, %v12378
          %v12380 = vpop.f32.mrf.mxu0
          %v12381 = vpop.f32.mrf.mxu0
          %v12382 = vpop.f32.mrf.mxu0
          %12383 = vdwg.mxu0
          %12384 = vmatprep.subr.bf16.mxu0 0
          %12385 = vmatpush1.bf16.msra.mxu0 %v11711
          %12386 = vmatprep.subr.bf16.mxu0 0
          %12387 = vmatpush1.bf16.msra.mxu0 %v11710
          %12388 = vmatprep.subr.bf16.mxu0 0
          %12389 = vmatpush1.bf16.msra.mxu0 %v11709
          %12390 = vmatprep.subr.bf16.mxu0 0
          %12391 = vmatpush1.bf16.msra.mxu0 %v11708
          %12392 = vmatprep.subr.bf16.mxu0 0
          %12393 = vmatpush1.bf16.msra.mxu0 %v11707
          %12394 = vmatprep.subr.bf16.mxu0 0
          %12395 = vmatpush1.bf16.msra.mxu0 %v11706
          %12396 = vmatprep.subr.bf16.mxu0 0
          %12397 = vmatpush1.bf16.msra.mxu0 %v11705
          %12398 = vmatprep.subr.bf16.mxu0 0
          %12399 = vmatpush1.bf16.msra.mxu0 %v11704
          %12400 = vmatprep.subr.bf16.mxu0 0
          %12401 = vmatpush2.bf16.msra.mxu0 %v11719
          %12402 = vmatprep.subr.bf16.mxu0 0
          %12403 = vmatpush2.bf16.msra.mxu0 %v11718
          %12404 = vmatprep.subr.bf16.mxu0 0
          %12405 = vmatpush2.bf16.msra.mxu0 %v11717
          %12406 = vmatprep.subr.bf16.mxu0 0
          %12407 = vmatpush2.bf16.msra.mxu0 %v11716
          %12408 = vmatprep.subr.bf16.mxu0 0
          %12409 = vmatpush2.bf16.msra.mxu0 %v11715
          %12410 = vmatprep.subr.bf16.mxu0 0
          %12411 = vmatpush2.bf16.msra.mxu0 %v11714
          %12412 = vmatprep.subr.bf16.mxu0 0
          %12413 = vmatpush2.bf16.msra.mxu0 %v11713
          %12414 = vmatprep.subr.bf16.mxu0 0
          %12415 = vmatpush2.bf16.msra.mxu0 %v11712
          %12416 = vmatprep.mubr.bf16.mxu0 %v10032
          %12417 = vmatmul.mubr.bf16.gmra.mxu0 %v10031
          %v12418 = vpop.f32.mrf.mxu0
          %v12419 = vadd.f32 %v12379, %v12418
          %v12420 = vpop.f32.mrf.mxu0
          %v12421 = vpop.f32.mrf.mxu0
          %v12422 = vpop.f32.mrf.mxu0
          %12423 = vdwg.mxu0
          %12424 = vmatprep.subr.bf16.mxu0 0
          %12425 = vmatpush1.bf16.msra.mxu0 %v11727
          %12426 = vmatprep.subr.bf16.mxu0 0
          %12427 = vmatpush1.bf16.msra.mxu0 %v11726
          %12428 = vmatprep.subr.bf16.mxu0 0
          %12429 = vmatpush1.bf16.msra.mxu0 %v11725
          %12430 = vmatprep.subr.bf16.mxu0 0
          %12431 = vmatpush1.bf16.msra.mxu0 %v11724
          %12432 = vmatprep.subr.bf16.mxu0 0
          %12433 = vmatpush1.bf16.msra.mxu0 %v11723
          %12434 = vmatprep.subr.bf16.mxu0 0
          %12435 = vmatpush1.bf16.msra.mxu0 %v11722
          %12436 = vmatprep.subr.bf16.mxu0 0
          %12437 = vmatpush1.bf16.msra.mxu0 %v11721
          %12438 = vmatprep.subr.bf16.mxu0 0
          %12439 = vmatpush1.bf16.msra.mxu0 %v11720
          %12440 = vmatprep.subr.bf16.mxu0 0
          %12441 = vmatpush2.bf16.msra.mxu0 %v11735
          %12442 = vmatprep.subr.bf16.mxu0 0
          %12443 = vmatpush2.bf16.msra.mxu0 %v11734
          %12444 = vmatprep.subr.bf16.mxu0 0
          %12445 = vmatpush2.bf16.msra.mxu0 %v11733
          %12446 = vmatprep.subr.bf16.mxu0 0
          %12447 = vmatpush2.bf16.msra.mxu0 %v11732
          %12448 = vmatprep.subr.bf16.mxu0 0
          %12449 = vmatpush2.bf16.msra.mxu0 %v11731
          %12450 = vmatprep.subr.bf16.mxu0 0
          %12451 = vmatpush2.bf16.msra.mxu0 %v11730
          %12452 = vmatprep.subr.bf16.mxu0 0
          %12453 = vmatpush2.bf16.msra.mxu0 %v11729
          %12454 = vmatprep.subr.bf16.mxu0 0
          %12455 = vmatpush2.bf16.msra.mxu0 %v11728
          %12456 = vmatprep.mubr.bf16.mxu0 %v10034
          %12457 = vmatmul.mubr.bf16.gmra.mxu0 %v10033
          %v12458 = vpop.f32.mrf.mxu0
          %v12459 = vadd.f32 %v12419, %v12458
          %v12460 = vpop.f32.mrf.mxu0
          %v12461 = vpop.f32.mrf.mxu0
          %v12462 = vpop.f32.mrf.mxu0
          %12463 = vdwg.mxu0
          %12464 = vmatprep.subr.bf16.mxu0 0
          %12465 = vmatpush1.bf16.msra.mxu0 %v11743
          %12466 = vmatprep.subr.bf16.mxu0 0
          %12467 = vmatpush1.bf16.msra.mxu0 %v11742
          %12468 = vmatprep.subr.bf16.mxu0 0
          %12469 = vmatpush1.bf16.msra.mxu0 %v11741
          %12470 = vmatprep.subr.bf16.mxu0 0
          %12471 = vmatpush1.bf16.msra.mxu0 %v11740
          %12472 = vmatprep.subr.bf16.mxu0 0
          %12473 = vmatpush1.bf16.msra.mxu0 %v11739
          %12474 = vmatprep.subr.bf16.mxu0 0
          %12475 = vmatpush1.bf16.msra.mxu0 %v11738
          %12476 = vmatprep.subr.bf16.mxu0 0
          %12477 = vmatpush1.bf16.msra.mxu0 %v11737
          %12478 = vmatprep.subr.bf16.mxu0 0
          %12479 = vmatpush1.bf16.msra.mxu0 %v11736
          %12480 = vmatprep.subr.bf16.mxu0 0
          %12481 = vmatpush2.bf16.msra.mxu0 %v11751
          %12482 = vmatprep.subr.bf16.mxu0 0
          %12483 = vmatpush2.bf16.msra.mxu0 %v11750
          %12484 = vmatprep.subr.bf16.mxu0 0
          %12485 = vmatpush2.bf16.msra.mxu0 %v11749
          %12486 = vmatprep.subr.bf16.mxu0 0
          %12487 = vmatpush2.bf16.msra.mxu0 %v11748
          %12488 = vmatprep.subr.bf16.mxu0 0
          %12489 = vmatpush2.bf16.msra.mxu0 %v11747
          %12490 = vmatprep.subr.bf16.mxu0 0
          %12491 = vmatpush2.bf16.msra.mxu0 %v11746
          %12492 = vmatprep.subr.bf16.mxu0 0
          %12493 = vmatpush2.bf16.msra.mxu0 %v11745
          %12494 = vmatprep.subr.bf16.mxu0 0
          %12495 = vmatpush2.bf16.msra.mxu0 %v11744
          %12496 = vmatprep.mubr.bf16.mxu0 %v10036
          %12497 = vmatmul.mubr.bf16.gmra.mxu0 %v10035
          %v12498 = vpop.f32.mrf.mxu0
          %v12499 = vadd.f32 %v12459, %v12498
          %v12500 = vpop.f32.mrf.mxu0
          %v12501 = vpop.f32.mrf.mxu0
          %v12502 = vpop.f32.mrf.mxu0
          %12503 = vdwg.mxu0
          %12504 = vmatprep.subr.bf16.mxu0 0
          %12505 = vmatpush1.bf16.msra.mxu0 %v11759
          %12506 = vmatprep.subr.bf16.mxu0 0
          %12507 = vmatpush1.bf16.msra.mxu0 %v11758
          %12508 = vmatprep.subr.bf16.mxu0 0
          %12509 = vmatpush1.bf16.msra.mxu0 %v11757
          %12510 = vmatprep.subr.bf16.mxu0 0
          %12511 = vmatpush1.bf16.msra.mxu0 %v11756
          %12512 = vmatprep.subr.bf16.mxu0 0
          %12513 = vmatpush1.bf16.msra.mxu0 %v11755
          %12514 = vmatprep.subr.bf16.mxu0 0
          %12515 = vmatpush1.bf16.msra.mxu0 %v11754
          %12516 = vmatprep.subr.bf16.mxu0 0
          %12517 = vmatpush1.bf16.msra.mxu0 %v11753
          %12518 = vmatprep.subr.bf16.mxu0 0
          %12519 = vmatpush1.bf16.msra.mxu0 %v11752
          %12520 = vmatprep.subr.bf16.mxu0 0
          %12521 = vmatpush2.bf16.msra.mxu0 %v11767
          %12522 = vmatprep.subr.bf16.mxu0 0
          %12523 = vmatpush2.bf16.msra.mxu0 %v11766
          %12524 = vmatprep.subr.bf16.mxu0 0
          %12525 = vmatpush2.bf16.msra.mxu0 %v11765
          %12526 = vmatprep.subr.bf16.mxu0 0
          %12527 = vmatpush2.bf16.msra.mxu0 %v11764
          %12528 = vmatprep.subr.bf16.mxu0 0
          %12529 = vmatpush2.bf16.msra.mxu0 %v11763
          %12530 = vmatprep.subr.bf16.mxu0 0
          %12531 = vmatpush2.bf16.msra.mxu0 %v11762
          %12532 = vmatprep.subr.bf16.mxu0 0
          %12533 = vmatpush2.bf16.msra.mxu0 %v11761
          %12534 = vmatprep.subr.bf16.mxu0 0
          %12535 = vmatpush2.bf16.msra.mxu0 %v11760
          %12536 = vmatprep.mubr.bf16.mxu0 %v10038
          %12537 = vmatmul.mubr.bf16.gmra.mxu0 %v10037
          %v12538 = vpop.f32.mrf.mxu0
          %v12539 = vadd.f32 %v12499, %v12538
          %v12540 = vpop.f32.mrf.mxu0
          %v12541 = vpop.f32.mrf.mxu0
          %v12542 = vpop.f32.mrf.mxu0
          %12543 = vdwg.mxu0
          %12544 = vmatprep.subr.bf16.mxu0 0
          %12545 = vmatpush1.bf16.msra.mxu0 %v11775
          %12546 = vmatprep.subr.bf16.mxu0 0
          %12547 = vmatpush1.bf16.msra.mxu0 %v11774
          %12548 = vmatprep.subr.bf16.mxu0 0
          %12549 = vmatpush1.bf16.msra.mxu0 %v11773
          %12550 = vmatprep.subr.bf16.mxu0 0
          %12551 = vmatpush1.bf16.msra.mxu0 %v11772
          %12552 = vmatprep.subr.bf16.mxu0 0
          %12553 = vmatpush1.bf16.msra.mxu0 %v11771
          %12554 = vmatprep.subr.bf16.mxu0 0
          %12555 = vmatpush1.bf16.msra.mxu0 %v11770
          %12556 = vmatprep.subr.bf16.mxu0 0
          %12557 = vmatpush1.bf16.msra.mxu0 %v11769
          %12558 = vmatprep.subr.bf16.mxu0 0
          %12559 = vmatpush1.bf16.msra.mxu0 %v11768
          %12560 = vmatprep.subr.bf16.mxu0 0
          %12561 = vmatpush2.bf16.msra.mxu0 %v11783
          %12562 = vmatprep.subr.bf16.mxu0 0
          %12563 = vmatpush2.bf16.msra.mxu0 %v11782
          %12564 = vmatprep.subr.bf16.mxu0 0
          %12565 = vmatpush2.bf16.msra.mxu0 %v11781
          %12566 = vmatprep.subr.bf16.mxu0 0
          %12567 = vmatpush2.bf16.msra.mxu0 %v11780
          %12568 = vmatprep.subr.bf16.mxu0 0
          %12569 = vmatpush2.bf16.msra.mxu0 %v11779
          %12570 = vmatprep.subr.bf16.mxu0 0
          %12571 = vmatpush2.bf16.msra.mxu0 %v11778
          %12572 = vmatprep.subr.bf16.mxu0 0
          %12573 = vmatpush2.bf16.msra.mxu0 %v11777
          %12574 = vmatprep.subr.bf16.mxu0 0
          %12575 = vmatpush2.bf16.msra.mxu0 %v11776
          %12576 = vmatprep.mubr.bf16.mxu0 %v10040
          %12577 = vmatmul.mubr.bf16.gmra.mxu0 %v10039
          %v12578 = vpop.f32.mrf.mxu0
          %v12579 = vadd.f32 %v12539, %v12578
          %v12580 = vpop.f32.mrf.mxu0
          %v12581 = vpop.f32.mrf.mxu0
          %v12582 = vpop.f32.mrf.mxu0
          %12583 = vdwg.mxu0
          %12584 = vmatprep.subr.bf16.mxu0 0
          %12585 = vmatpush1.bf16.msra.mxu0 %v11791
          %12586 = vmatprep.subr.bf16.mxu0 0
          %12587 = vmatpush1.bf16.msra.mxu0 %v11790
          %12588 = vmatprep.subr.bf16.mxu0 0
          %12589 = vmatpush1.bf16.msra.mxu0 %v11789
          %12590 = vmatprep.subr.bf16.mxu0 0
          %12591 = vmatpush1.bf16.msra.mxu0 %v11788
          %12592 = vmatprep.subr.bf16.mxu0 0
          %12593 = vmatpush1.bf16.msra.mxu0 %v11787
          %12594 = vmatprep.subr.bf16.mxu0 0
          %12595 = vmatpush1.bf16.msra.mxu0 %v11786
          %12596 = vmatprep.subr.bf16.mxu0 0
          %12597 = vmatpush1.bf16.msra.mxu0 %v11785
          %12598 = vmatprep.subr.bf16.mxu0 0
          %12599 = vmatpush1.bf16.msra.mxu0 %v11784
          %12600 = vmatprep.subr.bf16.mxu0 0
          %12601 = vmatpush2.bf16.msra.mxu0 %v11799
          %12602 = vmatprep.subr.bf16.mxu0 0
          %12603 = vmatpush2.bf16.msra.mxu0 %v11798
          %12604 = vmatprep.subr.bf16.mxu0 0
          %12605 = vmatpush2.bf16.msra.mxu0 %v11797
          %12606 = vmatprep.subr.bf16.mxu0 0
          %12607 = vmatpush2.bf16.msra.mxu0 %v11796
          %12608 = vmatprep.subr.bf16.mxu0 0
          %12609 = vmatpush2.bf16.msra.mxu0 %v11795
          %12610 = vmatprep.subr.bf16.mxu0 0
          %12611 = vmatpush2.bf16.msra.mxu0 %v11794
          %12612 = vmatprep.subr.bf16.mxu0 0
          %12613 = vmatpush2.bf16.msra.mxu0 %v11793
          %12614 = vmatprep.subr.bf16.mxu0 0
          %12615 = vmatpush2.bf16.msra.mxu0 %v11792
          %12616 = vmatprep.mubr.bf16.mxu0 %v10042
          %12617 = vmatmul.mubr.bf16.gmra.mxu0 %v10041
          %v12618 = vpop.f32.mrf.mxu0
          %v12619 = vadd.f32 %v12579, %v12618
          %v12620 = vpop.f32.mrf.mxu0
          %v12621 = vpop.f32.mrf.mxu0
          %v12622 = vpop.f32.mrf.mxu0
          %12623 = vdwg.mxu0
          %12624 = vmatprep.subr.bf16.mxu0 0
          %12625 = vmatpush1.bf16.msra.mxu0 %v11807
          %12626 = vmatprep.subr.bf16.mxu0 0
          %12627 = vmatpush1.bf16.msra.mxu0 %v11806
          %12628 = vmatprep.subr.bf16.mxu0 0
          %12629 = vmatpush1.bf16.msra.mxu0 %v11805
          %12630 = vmatprep.subr.bf16.mxu0 0
          %12631 = vmatpush1.bf16.msra.mxu0 %v11804
          %12632 = vmatprep.subr.bf16.mxu0 0
          %12633 = vmatpush1.bf16.msra.mxu0 %v11803
          %12634 = vmatprep.subr.bf16.mxu0 0
          %12635 = vmatpush1.bf16.msra.mxu0 %v11802
          %12636 = vmatprep.subr.bf16.mxu0 0
          %12637 = vmatpush1.bf16.msra.mxu0 %v11801
          %12638 = vmatprep.subr.bf16.mxu0 0
          %12639 = vmatpush1.bf16.msra.mxu0 %v11800
          %12640 = vmatprep.subr.bf16.mxu0 0
          %12641 = vmatpush2.bf16.msra.mxu0 %v11815
          %12642 = vmatprep.subr.bf16.mxu0 0
          %12643 = vmatpush2.bf16.msra.mxu0 %v11814
          %12644 = vmatprep.subr.bf16.mxu0 0
          %12645 = vmatpush2.bf16.msra.mxu0 %v11813
          %12646 = vmatprep.subr.bf16.mxu0 0
          %12647 = vmatpush2.bf16.msra.mxu0 %v11812
          %12648 = vmatprep.subr.bf16.mxu0 0
          %12649 = vmatpush2.bf16.msra.mxu0 %v11811
          %12650 = vmatprep.subr.bf16.mxu0 0
          %12651 = vmatpush2.bf16.msra.mxu0 %v11810
          %12652 = vmatprep.subr.bf16.mxu0 0
          %12653 = vmatpush2.bf16.msra.mxu0 %v11809
          %12654 = vmatprep.subr.bf16.mxu0 0
          %12655 = vmatpush2.bf16.msra.mxu0 %v11808
          %12656 = vmatprep.mubr.bf16.mxu0 %v10044
          %12657 = vmatmul.mubr.bf16.gmra.mxu0 %v10043
          %v12658 = vpop.f32.mrf.mxu0
          %v12659 = vadd.f32 %v12619, %v12658
          %v12660 = vpop.f32.mrf.mxu0
          %v12661 = vpop.f32.mrf.mxu0
          %v12662 = vpop.f32.mrf.mxu0
          %12663 = vdwg.mxu0
          %12664 = vmatprep.subr.bf16.mxu0 0
          %12665 = vmatpush1.bf16.msra.mxu0 %v11823
          %12666 = vmatprep.subr.bf16.mxu0 0
          %12667 = vmatpush1.bf16.msra.mxu0 %v11822
          %12668 = vmatprep.subr.bf16.mxu0 0
          %12669 = vmatpush1.bf16.msra.mxu0 %v11821
          %12670 = vmatprep.subr.bf16.mxu0 0
          %12671 = vmatpush1.bf16.msra.mxu0 %v11820
          %12672 = vmatprep.subr.bf16.mxu0 0
          %12673 = vmatpush1.bf16.msra.mxu0 %v11819
          %12674 = vmatprep.subr.bf16.mxu0 0
          %12675 = vmatpush1.bf16.msra.mxu0 %v11818
          %12676 = vmatprep.subr.bf16.mxu0 0
          %12677 = vmatpush1.bf16.msra.mxu0 %v11817
          %12678 = vmatprep.subr.bf16.mxu0 0
          %12679 = vmatpush1.bf16.msra.mxu0 %v11816
          %12680 = vmatprep.subr.bf16.mxu0 0
          %12681 = vmatpush2.bf16.msra.mxu0 %v11831
          %12682 = vmatprep.subr.bf16.mxu0 0
          %12683 = vmatpush2.bf16.msra.mxu0 %v11830
          %12684 = vmatprep.subr.bf16.mxu0 0
          %12685 = vmatpush2.bf16.msra.mxu0 %v11829
          %12686 = vmatprep.subr.bf16.mxu0 0
          %12687 = vmatpush2.bf16.msra.mxu0 %v11828
          %12688 = vmatprep.subr.bf16.mxu0 0
          %12689 = vmatpush2.bf16.msra.mxu0 %v11827
          %12690 = vmatprep.subr.bf16.mxu0 0
          %12691 = vmatpush2.bf16.msra.mxu0 %v11826
          %12692 = vmatprep.subr.bf16.mxu0 0
          %12693 = vmatpush2.bf16.msra.mxu0 %v11825
          %12694 = vmatprep.subr.bf16.mxu0 0
          %12695 = vmatpush2.bf16.msra.mxu0 %v11824
          %12696 = vmatprep.mubr.bf16.mxu0 %v10046
          %12697 = vmatmul.mubr.bf16.gmra.mxu0 %v10045
          %v12698 = vpop.f32.mrf.mxu0
          %v12699 = vadd.f32 %v12659, %v12698
          %v12700 = vpop.f32.mrf.mxu0
          %v12701 = vpop.f32.mrf.mxu0
          %v12702 = vpop.f32.mrf.mxu0
          %12703 = vdwg.mxu0
          %12704 = vmatprep.subr.bf16.mxu0 0
          %12705 = vmatpush1.bf16.msra.mxu0 %v11839
          %12706 = vmatprep.subr.bf16.mxu0 0
          %12707 = vmatpush1.bf16.msra.mxu0 %v11838
          %12708 = vmatprep.subr.bf16.mxu0 0
          %12709 = vmatpush1.bf16.msra.mxu0 %v11837
          %12710 = vmatprep.subr.bf16.mxu0 0
          %12711 = vmatpush1.bf16.msra.mxu0 %v11836
          %12712 = vmatprep.subr.bf16.mxu0 0
          %12713 = vmatpush1.bf16.msra.mxu0 %v11835
          %12714 = vmatprep.subr.bf16.mxu0 0
          %12715 = vmatpush1.bf16.msra.mxu0 %v11834
          %12716 = vmatprep.subr.bf16.mxu0 0
          %12717 = vmatpush1.bf16.msra.mxu0 %v11833
          %12718 = vmatprep.subr.bf16.mxu0 0
          %12719 = vmatpush1.bf16.msra.mxu0 %v11832
          %12720 = vmatprep.subr.bf16.mxu0 0
          %12721 = vmatpush2.bf16.msra.mxu0 %v11847
          %12722 = vmatprep.subr.bf16.mxu0 0
          %12723 = vmatpush2.bf16.msra.mxu0 %v11846
          %12724 = vmatprep.subr.bf16.mxu0 0
          %12725 = vmatpush2.bf16.msra.mxu0 %v11845
          %12726 = vmatprep.subr.bf16.mxu0 0
          %12727 = vmatpush2.bf16.msra.mxu0 %v11844
          %12728 = vmatprep.subr.bf16.mxu0 0
          %12729 = vmatpush2.bf16.msra.mxu0 %v11843
          %12730 = vmatprep.subr.bf16.mxu0 0
          %12731 = vmatpush2.bf16.msra.mxu0 %v11842
          %12732 = vmatprep.subr.bf16.mxu0 0
          %12733 = vmatpush2.bf16.msra.mxu0 %v11841
          %12734 = vmatprep.subr.bf16.mxu0 0
          %12735 = vmatpush2.bf16.msra.mxu0 %v11840
          %12736 = vmatprep.mubr.bf16.mxu0 %v10048
          %12737 = vmatmul.mubr.bf16.gmra.mxu0 %v10047
          %v12738 = vpop.f32.mrf.mxu0
          %v12739 = vadd.f32 %v12699, %v12738
          %v12740 = vpop.f32.mrf.mxu0
          %v12741 = vpop.f32.mrf.mxu0
          %v12742 = vpop.f32.mrf.mxu0
          %12743 = vdwg.mxu0
          %12744 = vst [vmem:[#allocation16] sm:$0xff] %v12739
        $region84: #{tpu_custom_call.1} parent=47 // pred_fallthru
          _
        // Predicated region
        $region85: #{tpu_custom_call.1} parent=47 // pred_check
          %p12745 = pneg %p190
        $region86: #{tpu_custom_call.1} parent=47 // pred_check_branch
          %12747 = sbr.rel (%p12745) target = $region88
        $region87: #{tpu_custom_call.1} parent=47 // pred_region
          %s12749 = ssub.s32 128, 128
          %12750 = vsyncadd [#allocation6], %s12749
          %s12752 = sshll.u32 [#allocation16], 4
          %s12753 = int_to_ptr.vmem [resolvable:$true] %s12752
          %12755 = dma.vmem_to_hbm [thread:$0]  %s12753, 128, %s7, [#allocation6]
        $region88: #{tpu_custom_call.1} parent=47 // pred_fallthru
          _
        // Predicated region
        $region89: #{tpu_custom_call.1} parent=47 // pred_check
          %p12756 = pneg %p190
        $region90: #{tpu_custom_call.1} parent=47 // pred_check_branch
          %12758 = sbr.rel (%p12756) target = $region92
        $region91: #{tpu_custom_call.1} parent=47 // pred_region
          %12759 = dma.done [#allocation6], 128
        $region92: #{tpu_custom_call.1} parent=47 // pred_fallthru
          _
      $region48: #{tpu_custom_call.1} parent=5 // pred_fallthru
        _
      %p12760 = scmp.le.s32.totalorder 2, %s20
      // Predicated region
      $region93: #{tpu_custom_call.1} parent=5 // pred_check
        %p12761 = pneg %p12760
      $region94: #{tpu_custom_call.1} parent=5 // pred_check_branch
        %12763 = sbr.rel (%p12761) target = $region96
      $region95: #{tpu_custom_call.1} parent=5 // pred_region
        %s12764 = ssub.s32 %s20, 2
      $region96: #{tpu_custom_call.1} parent=5 // pred_fallthru
        _
    $region6: #{tpu_custom_call.1} parent=1 // loop_footer
      %s24 = sadd.s32 1, %s20
    $region7: #{tpu_custom_call.1} parent=1 // loop_footer_branch
      %19 = sbr.rel target = $region3
    $region8: #{tpu_custom_call.1} parent=1 // loop_exit
      _
    %12765 = vsyncpa [#allocation5], 1
    %s12766 = scalar_lea.sflag [#allocation5], 1
    %12767 = vsyncpa %s12766, 1
    %12768 = vsyncpa [#allocation8], 1
    %12769 = vsyncpa [#allocation11], 1
    %s12770 = scalar_lea.sflag [#allocation11], 1
    %12771 = vsyncpa %s12770, 1
    %12772 = vsyncpa [#allocation14], 1
    %12773 = vsyncpa [#allocation6], 1
    %s12774 = scalar_lea.sflag [#allocation6], 1
    %12775 = vsyncpa %s12774, 1

</llo_original>
